<compile_context>
chip_gen: v7x
topology: tpu7x:2x2x1
jax: 0.10.0
libtpu: 0.0.40
codegen_flags: <defaults>
</compile_context>

<pallas_src>
import numpy as np

import jax
import jax.numpy as jnp
from jax.experimental import pallas as pl
from jax.experimental.pallas import tpu as pltpu

NZ = 32                      # latent size ('nz' undefined in reference)
LABEL_DIM = 3
SIG_LEN = 93                 # signal length (93 + 3 label -> 96 -> enc length 12)
L_ENC_IN = SIG_LEN + LABEL_DIM
L_OUT = 86                   # true decoder output length
BATCH_TILE = 128             # rows per grid step once B > BATCH_TILE

# lane-dense padded decoder widths for the intermediate activations
W_DEC0 = 384                 # 32*12
W_DEC1 = 384                 # 16*22 = 352 -> 384
W_DEC2 = 768                 # 16*43 = 688 -> 768

PARAM_ORDER = (
    "m1x", "m1l", "b1", "m2", "b2", "m3", "b3",
    "wm", "bm", "ws", "bs",
    "wz", "wl", "bd0",
    "d1", "bd1", "d2", "bd2", "d3", "bd3",
)
# Large lowered matrices live in HBM as bf16 (halves the dominant weight DMA);
# tiny weights / biases / all elementwise math stay f32.
BF16_KEYS = frozenset({"m1x", "m2", "m3", "d1", "d2", "d3"})


# ----------------------------------------------------------------------------
# Host-side (init-time) lowering of conv / deconv to dense NCW-flat matrices
# ----------------------------------------------------------------------------
def conv1d_matrix(w, b, Lin, stride, padding):
    """PyTorch Conv1d weight (Cout, Cin, K) -> dense M (Cin*Lin, Cout*Lout)
    acting on NCW-flattened vectors (index = c*L + l), plus flat bias."""
    Cout, Cin, K = w.shape
    Lout = (Lin + 2 * padding - K) // stride + 1
    M = np.zeros((Cin * Lin, Cout * Lout), np.float32)
    lout = np.arange(Lout)
    for k in range(K):
        lin = lout * stride - padding + k
        valid = (lin >= 0) & (lin < Lin)
        lo, li = lout[valid], lin[valid]
        for cout in range(Cout):
            for cin in range(Cin):
                M[cin * Lin + li, cout * Lout + lo] += w[cout, cin, k]
    bias = np.repeat(np.asarray(b, np.float32), Lout)
    return M, bias, Lout


def deconv1d_matrix(w, b, Lin, stride, padding):
    """PyTorch ConvTranspose1d weight (Cin, Cout, K) -> dense (Cin*Lin, Cout*Lout)."""
    Cin, Cout, K = w.shape
    Lout = (Lin - 1) * stride - 2 * padding + K
    M = np.zeros((Cin * Lin, Cout * Lout), np.float32)
    lin = np.arange(Lin)
    for k in range(K):
        lout = lin * stride - padding + k
        valid = (lout >= 0) & (lout < Lout)
        li, lo = lin[valid], lout[valid]
        for cin in range(Cin):
            for cout in range(Cout):
                M[cin * Lin + li, cout * Lout + lo] += w[cin, cout, k]
    bias = np.repeat(np.asarray(b, np.float32), Lout)
    return M, bias, Lout


# ----------------------------------------------------------------------------
# The single fused Pallas kernel (one batch tile per grid step)
# ----------------------------------------------------------------------------
def _vae_fused_kernel(
    x_ref, lab_ref, eps_ref,
    m1x_ref, m1l_ref, b1_ref, m2_ref, b2_ref, m3_ref, b3_ref,
    wm_ref, bm_ref, ws_ref, bs_ref,
    wz_ref, wl_ref, bd0_ref,
    d1_ref, bd1_ref, d2_ref, bd2_ref, d3_ref, bd3_ref,
    out_ref,
):
    f32 = jnp.float32

    def mm(a, w_ref):
        # Cast the activation to the weight's storage dtype (bf16 for the big
        # matrices) right before the dot; accumulate in f32 on the MXU.
        w = w_ref[...]
        return jnp.dot(a.astype(w.dtype), w, preferred_element_type=f32)

    def lrelu(y):                          # LeakyReLU(0.2), f32 on the VPU
        return jnp.where(y > 0, y, 0.2 * y)

    def relu(y):
        return jnp.maximum(y, 0.0)

    x = x_ref[...]                                  # (TB, 93)  f32
    lab = lab_ref[...]                              # (TB, 3)   f32

    # ---- encoder: conv stack as NCW-flat Toeplitz matmuls (MXU) -------------
    # cat(x, label) @ m1  ==  x @ m1x + label @ m1l   (no concat needed)
    h = lrelu(mm(x, m1x_ref) + mm(lab, m1l_ref) + b1_ref[...])   # (TB, 768)
    h = lrelu(mm(h, m2_ref) + b2_ref[...])                        # (TB, 768)
    h = lrelu(mm(h, m3_ref) + b3_ref[...])                        # (TB, 384)

    mean = mm(h, wm_ref) + bm_ref[...]              # (TB, NZ)  encoder_fc1
    logstd = mm(h, ws_ref) + bs_ref[...]            # (TB, NZ)  encoder_fc2

    # ---- reparameterize: z = mean + eps * exp(logstd)   (exp -> EUP, f32) ---
    z = mean + eps_ref[...] * jnp.exp(logstd)

    # ---- decoder: cat(z, label) @ W as two dots, then deconv stack ----------
    d = relu(mm(z, wz_ref) + mm(lab, wl_ref) + bd0_ref[...])      # (TB, 384)
    d = relu(mm(d, d1_ref) + bd1_ref[...])          # (TB, 384)  ConvT(32->16) [352 real]
    d = relu(mm(d, d2_ref) + bd2_ref[...])          # (TB, 768)  ConvT(16->16) [688 real]
    d = relu(mm(d, d3_ref) + bd3_ref[...])          # (TB, 86)   ConvT(16->1)
    out_ref[...] = d.astype(out_ref.dtype)


# ----------------------------------------------------------------------------
# Wrapper
# ----------------------------------------------------------------------------
def vae_forward(params, x_ncw, label, eps):
    """x_ncw: (B, 1, 93), label: (B, 3), eps: (B, NZ) -> (B, 1, 86)."""
    B = x_ncw.shape[0]
    x2 = x_ncw.reshape(B, SIG_LEN).astype(jnp.float32)    # metadata reshape, no copy
    lab = label.astype(jnp.float32)
    eps = eps.astype(jnp.float32)

    # Batch tiling: any B works.  Small B -> one full-extent block (Mosaic
    # sublane-pads it for free).  Large B -> a "parallel" grid over batch
    # tiles; weight index_maps are constant so weights are fetched once and
    # stay VMEM-resident while activation tiles pipeline (and on v7x the
    # parallel axis can be sharded across both TensorCores).
    tb = B if B <= BATCH_TILE else BATCH_TILE
    grid = (pl.cdiv(B, tb),)

    def row_spec(*tail):          # batch-tiled activations / output
        return pl.BlockSpec((tb,) + tail, lambda i, _t=tail: (i,) + (0,) * len(_t))

    def const_spec(arr):          # full-extent, VMEM-resident weights/biases
        nd = arr.ndim
        return pl.BlockSpec(arr.shape, lambda i, _n=nd: (0,) * _n)

    weights = tuple(params[k] for k in PARAM_ORDER)
    in_specs = [row_spec(SIG_LEN), row_spec(LABEL_DIM), row_spec(NZ)]
    in_specs += [const_spec(w) for w in weights]

    out = pl.pallas_call(
        _vae_fused_kernel,
        out_shape=jax.ShapeDtypeStruct((B, L_OUT), jnp.float32),
        grid_spec=pltpu.PrefetchScalarGridSpec(
            num_scalar_prefetch=0,
            grid=grid,
            in_specs=in_specs,
            out_specs=row_spec(L_OUT),
        ),
        compiler_params=pltpu.CompilerParams(
            dimension_semantics=("parallel",),        # batch tiles independent
            vmem_limit_bytes=24 * 1024 * 1024,        # footprint ~3-7 MiB; headroom
        ),
    )(x2, lab, eps, *weights)

    return out.reshape(B, 1, L_OUT)                   # free reshape -> NCW


# ----------------------------------------------------------------------------
# Parameters (deterministic synthetic init, PyTorch-style uniform bounds),
# lowered once to dense NCW-flat matmul matrices, big ones stored in bf16.
# ----------------------------------------------------------------------------
def init_params(key):
    ks = jax.random.split(key, 18)

    def u(k, shape, fan_in):
        bound = 1.0 / np.sqrt(float(fan_in))
        return np.asarray(jax.random.uniform(k, shape, jnp.float32, -bound, bound))

    # raw PyTorch-layout weights
    ec1_w, ec1_b = u(ks[0], (16, 1, 3), 3), u(ks[1], (16,), 3)
    ec2_w, ec2_b = u(ks[2], (32, 16, 3), 48), u(ks[3], (32,), 48)
    ec3_w, ec3_b = u(ks[4], (32, 32, 3), 96), u(ks[5], (32,), 96)
    fc1_w, fc1_b = u(ks[6], (384, NZ), 384), u(ks[7], (NZ,), 384)      # (in, out)
    fc2_w, fc2_b = u(ks[8], (384, NZ), 384), u(ks[9], (NZ,), 384)
    dfc_w, dfc_b = (u(ks[10], (NZ + LABEL_DIM, 384), NZ + LABEL_DIM),
                    u(ks[11], (384,), NZ + LABEL_DIM))
    dc1_w, dc1_b = u(ks[12], (32, 16, 2), 64), u(ks[13], (16,), 64)    # (Cin,Cout,K)
    dc2_w, dc2_b = u(ks[14], (16, 16, 3), 48), u(ks[15], (16,), 48)
    dc3_w, dc3_b = u(ks[16], (16, 1, 2), 32), u(ks[17], (1,), 32)

    # lower conv stack to dense NCW-flat matrices
    m1, bb1, L1 = conv1d_matrix(ec1_w, ec1_b, Lin=L_ENC_IN, stride=2, padding=1)
    m2, bb2, L2 = conv1d_matrix(ec2_w, ec2_b, Lin=L1, stride=2, padding=1)
    m3, bb3, L3 = conv1d_matrix(ec3_w, ec3_b, Lin=L2, stride=2, padding=1)
    assert (L1, L2, L3) == (48, 24, 12) and m3.shape[1] == 384

    d1, bd1, Ld1 = deconv1d_matrix(dc1_w, dc1_b, Lin=L3, stride=2, padding=1)   # 16*22
    d2, bd2, Ld2 = deconv1d_matrix(dc2_w, dc2_b, Lin=Ld1, stride=2, padding=1)  # 16*43
    d3, bd3, Ld3 = deconv1d_matrix(dc3_w, dc3_b, Lin=Ld2, stride=2, padding=0)  # 1*86
    assert (Ld1, Ld2, Ld3) == (22, 43, L_OUT)

    def pad_mat(a, rows, cols):
        return np.pad(a, ((0, rows - a.shape[0]), (0, cols - a.shape[1])))

    def pad_bias(b, cols):
        return np.pad(b, (0, cols - b.shape[0]))[None, :]     # (1, cols)

    raw = dict(
        # encoder conv 1 split into x rows and label rows (cat folded into kernel)
        m1x=m1[:SIG_LEN], m1l=m1[SIG_LEN:], b1=bb1[None, :],
        m2=m2, b2=bb2[None, :], m3=m3, b3=bb3[None, :],
        # encoder FCs
        wm=fc1_w, bm=fc1_b[None, :], ws=fc2_w, bs=fc2_b[None, :],
        # decoder FC split so cat(z, label) becomes two dots
        wz=dfc_w[:NZ], wl=dfc_w[NZ:], bd0=dfc_b[None, :],
        # deconvs, zero-padded to lane-dense intermediate widths (padded rows,
        # cols and bias entries are exactly zero; ReLU preserves zero)
        d1=pad_mat(d1, W_DEC0, W_DEC1), bd1=pad_bias(bd1, W_DEC1),
        d2=pad_mat(d2, W_DEC1, W_DEC2), bd2=pad_bias(bd2, W_DEC2),
        d3=pad_mat(d3, W_DEC2, L_OUT),  bd3=bd3[None, :],
    )
    return {k: jnp.asarray(v, jnp.bfloat16 if k in BF16_KEYS else jnp.float32)
            for k, v in raw.items()}


if __name__ == "__main__":
    key = jax.random.PRNGKey(0)
    kp, kx, kl, ke = jax.random.split(key, 4)
    params = init_params(kp)

    B = 2
    x = jax.random.normal(kx, (B, 1, SIG_LEN), jnp.float32)
    label = jax.random.normal(kl, (B, LABEL_DIM), jnp.float32)
    eps = jax.random.normal(ke, (B, NZ), jnp.float32)   # torch.randn drawn host-side

    fwd = jax.jit(vae_forward)
    out = fwd(params, x, label, eps)
    jax.block_until_ready(out)
    assert out.shape == (B, 1, L_OUT), out.shape
    assert bool(jnp.all(jnp.isfinite(out)))
    print("KERNEL_OK")
</pallas_src>

<mosaic_0001>
module attributes {stable_mosaic.version = 11 : i64} {
  func.func @_vae_fused_kernel(%arg0: i32, %arg1: memref<2x93xf32, #tpu.memory_space<vmem>>, %arg2: memref<2x3xf32, #tpu.memory_space<vmem>>, %arg3: memref<2x32xf32, #tpu.memory_space<vmem>>, %arg4: memref<93x768xbf16, #tpu.memory_space<vmem>>, %arg5: memref<3x768xf32, #tpu.memory_space<vmem>>, %arg6: memref<1x768xf32, #tpu.memory_space<vmem>>, %arg7: memref<768x768xbf16, #tpu.memory_space<vmem>>, %arg8: memref<1x768xf32, #tpu.memory_space<vmem>>, %arg9: memref<768x384xbf16, #tpu.memory_space<vmem>>, %arg10: memref<1x384xf32, #tpu.memory_space<vmem>>, %arg11: memref<384x32xf32, #tpu.memory_space<vmem>>, %arg12: memref<1x32xf32, #tpu.memory_space<vmem>>, %arg13: memref<384x32xf32, #tpu.memory_space<vmem>>, %arg14: memref<1x32xf32, #tpu.memory_space<vmem>>, %arg15: memref<32x384xf32, #tpu.memory_space<vmem>>, %arg16: memref<3x384xf32, #tpu.memory_space<vmem>>, %arg17: memref<1x384xf32, #tpu.memory_space<vmem>>, %arg18: memref<384x384xbf16, #tpu.memory_space<vmem>>, %arg19: memref<1x384xf32, #tpu.memory_space<vmem>>, %arg20: memref<384x768xbf16, #tpu.memory_space<vmem>>, %arg21: memref<1x768xf32, #tpu.memory_space<vmem>>, %arg22: memref<768x86xbf16, #tpu.memory_space<vmem>>, %arg23: memref<1x86xf32, #tpu.memory_space<vmem>>, %arg24: memref<2x86xf32, #tpu.memory_space<vmem>>) attributes {dimension_semantics = [#tpu.dimension_semantics<parallel>], iteration_bounds = array<i64: 1>, scalar_prefetch = 0 : i64, scratch_operands = 0 : i64, tpu.core_type = #tpu.core_type<tc>, window_params = [{transform_indices = @transform_0, window_bounds = array<i64: 2, 93>}, {transform_indices = @transform_1, window_bounds = array<i64: 2, 3>}, {transform_indices = @transform_2, window_bounds = array<i64: 2, 32>}, {pipeline_mode = #tpu.pipeline_mode<synchronous>, transform_indices = @transform_3, window_bounds = array<i64: 93, 768>}, {pipeline_mode = #tpu.pipeline_mode<synchronous>, transform_indices = @transform_4, window_bounds = array<i64: 3, 768>}, {pipeline_mode = #tpu.pipeline_mode<synchronous>, transform_indices = @transform_5, window_bounds = array<i64: 1, 768>}, {pipeline_mode = #tpu.pipeline_mode<synchronous>, transform_indices = @transform_6, window_bounds = array<i64: 768, 768>}, {pipeline_mode = #tpu.pipeline_mode<synchronous>, transform_indices = @transform_7, window_bounds = array<i64: 1, 768>}, {pipeline_mode = #tpu.pipeline_mode<synchronous>, transform_indices = @transform_8, window_bounds = array<i64: 768, 384>}, {pipeline_mode = #tpu.pipeline_mode<synchronous>, transform_indices = @transform_9, window_bounds = array<i64: 1, 384>}, {pipeline_mode = #tpu.pipeline_mode<synchronous>, transform_indices = @transform_10, window_bounds = array<i64: 384, 32>}, {pipeline_mode = #tpu.pipeline_mode<synchronous>, transform_indices = @transform_11, window_bounds = array<i64: 1, 32>}, {pipeline_mode = #tpu.pipeline_mode<synchronous>, transform_indices = @transform_12, window_bounds = array<i64: 384, 32>}, {pipeline_mode = #tpu.pipeline_mode<synchronous>, transform_indices = @transform_13, window_bounds = array<i64: 1, 32>}, {pipeline_mode = #tpu.pipeline_mode<synchronous>, transform_indices = @transform_14, window_bounds = array<i64: 32, 384>}, {pipeline_mode = #tpu.pipeline_mode<synchronous>, transform_indices = @transform_15, window_bounds = array<i64: 3, 384>}, {pipeline_mode = #tpu.pipeline_mode<synchronous>, transform_indices = @transform_16, window_bounds = array<i64: 1, 384>}, {pipeline_mode = #tpu.pipeline_mode<synchronous>, transform_indices = @transform_17, window_bounds = array<i64: 384, 384>}, {pipeline_mode = #tpu.pipeline_mode<synchronous>, transform_indices = @transform_18, window_bounds = array<i64: 1, 384>}, {pipeline_mode = #tpu.pipeline_mode<synchronous>, transform_indices = @transform_19, window_bounds = array<i64: 384, 768>}, {pipeline_mode = #tpu.pipeline_mode<synchronous>, transform_indices = @transform_20, window_bounds = array<i64: 1, 768>}, {pipeline_mode = #tpu.pipeline_mode<synchronous>, transform_indices = @transform_21, window_bounds = array<i64: 768, 86>}, {pipeline_mode = #tpu.pipeline_mode<synchronous>, transform_indices = @transform_22, window_bounds = array<i64: 1, 86>}, {transform_indices = @transform_23, window_bounds = array<i64: 2, 86>}]} {
    %c0 = arith.constant 0 : index
    %c0_0 = arith.constant 0 : index
    %0 = vector.load %arg1[%c0, %c0_0] : memref<2x93xf32, #tpu.memory_space<vmem>>, vector<2x93xf32>
    %c0_1 = arith.constant 0 : index
    %c0_2 = arith.constant 0 : index
    %1 = vector.load %arg2[%c0_1, %c0_2] : memref<2x3xf32, #tpu.memory_space<vmem>>, vector<2x3xf32>
    %c0_3 = arith.constant 0 : index
    %c0_4 = arith.constant 0 : index
    %2 = vector.load %arg4[%c0_3, %c0_4] : memref<93x768xbf16, #tpu.memory_space<vmem>>, vector<93x768xbf16>
    %3 = arith.truncf %0 : vector<2x93xf32> to vector<2x93xbf16>
    %cst = arith.constant dense<0.000000e+00> : vector<2x768xf32>
    %4 = tpu.matmul %3, %2, %cst {dimension_numbers = #tpu.dot_dimension_numbers<[1], [0], [0], [1], [0, 0, 1, 1], [], []>} : vector<2x93xbf16>, vector<93x768xbf16>, vector<2x768xf32> -> vector<2x768xf32>
    %c0_5 = arith.constant 0 : index
    %c0_6 = arith.constant 0 : index
    %5 = vector.load %arg5[%c0_5, %c0_6] : memref<3x768xf32, #tpu.memory_space<vmem>>, vector<3x768xf32>
    %cst_7 = arith.constant dense<0.000000e+00> : vector<2x768xf32>
    %6 = tpu.matmul %1, %5, %cst_7 {dimension_numbers = #tpu.dot_dimension_numbers<[1], [0], [0], [1], [0, 0, 1, 1], [], []>} : vector<2x3xf32>, vector<3x768xf32>, vector<2x768xf32> -> vector<2x768xf32>
    %7 = arith.addf %4, %6 : vector<2x768xf32>
    %c0_8 = arith.constant 0 : index
    %c0_9 = arith.constant 0 : index
    %8 = vector.load %arg6[%c0_8, %c0_9] : memref<1x768xf32, #tpu.memory_space<vmem>>, vector<1x768xf32>
    %9 = vector.broadcast %8 : vector<1x768xf32> to vector<2x768xf32>
    %10 = arith.addf %7, %9 : vector<2x768xf32>
    %cst_10 = arith.constant 0.000000e+00 : f32
    %11 = vector.broadcast %cst_10 : f32 to vector<2x768xf32>
    %12 = arith.cmpf ogt, %10, %11 : vector<2x768xf32>
    %cst_11 = arith.constant 2.000000e-01 : f32
    %13 = vector.broadcast %cst_11 : f32 to vector<2x768xf32>
    %14 = arith.mulf %13, %10 : vector<2x768xf32>
    %15 = arith.select %12, %10, %14 : vector<2x768xi1>, vector<2x768xf32>
    %c0_12 = arith.constant 0 : index
    %c0_13 = arith.constant 0 : index
    %16 = vector.load %arg7[%c0_12, %c0_13] : memref<768x768xbf16, #tpu.memory_space<vmem>>, vector<768x768xbf16>
    %17 = arith.truncf %15 : vector<2x768xf32> to vector<2x768xbf16>
    %cst_14 = arith.constant dense<0.000000e+00> : vector<2x768xf32>
    %18 = tpu.matmul %17, %16, %cst_14 {dimension_numbers = #tpu.dot_dimension_numbers<[1], [0], [0], [1], [0, 0, 1, 1], [], []>} : vector<2x768xbf16>, vector<768x768xbf16>, vector<2x768xf32> -> vector<2x768xf32>
    %c0_15 = arith.constant 0 : index
    %c0_16 = arith.constant 0 : index
    %19 = vector.load %arg8[%c0_15, %c0_16] : memref<1x768xf32, #tpu.memory_space<vmem>>, vector<1x768xf32>
    %20 = vector.broadcast %19 : vector<1x768xf32> to vector<2x768xf32>
    %21 = arith.addf %18, %20 : vector<2x768xf32>
    %cst_17 = arith.constant 0.000000e+00 : f32
    %22 = vector.broadcast %cst_17 : f32 to vector<2x768xf32>
    %23 = arith.cmpf ogt, %21, %22 : vector<2x768xf32>
    %cst_18 = arith.constant 2.000000e-01 : f32
    %24 = vector.broadcast %cst_18 : f32 to vector<2x768xf32>
    %25 = arith.mulf %24, %21 : vector<2x768xf32>
    %26 = arith.select %23, %21, %25 : vector<2x768xi1>, vector<2x768xf32>
    %c0_19 = arith.constant 0 : index
    %c0_20 = arith.constant 0 : index
    %27 = vector.load %arg9[%c0_19, %c0_20] : memref<768x384xbf16, #tpu.memory_space<vmem>>, vector<768x384xbf16>
    %28 = arith.truncf %26 : vector<2x768xf32> to vector<2x768xbf16>
    %cst_21 = arith.constant dense<0.000000e+00> : vector<2x384xf32>
    %29 = tpu.matmul %28, %27, %cst_21 {dimension_numbers = #tpu.dot_dimension_numbers<[1], [0], [0], [1], [0, 0, 1, 1], [], []>} : vector<2x768xbf16>, vector<768x384xbf16>, vector<2x384xf32> -> vector<2x384xf32>
    %c0_22 = arith.constant 0 : index
    %c0_23 = arith.constant 0 : index
    %30 = vector.load %arg10[%c0_22, %c0_23] : memref<1x384xf32, #tpu.memory_space<vmem>>, vector<1x384xf32>
    %31 = vector.broadcast %30 : vector<1x384xf32> to vector<2x384xf32>
    %32 = arith.addf %29, %31 : vector<2x384xf32>
    %cst_24 = arith.constant 0.000000e+00 : f32
    %33 = vector.broadcast %cst_24 : f32 to vector<2x384xf32>
    %34 = arith.cmpf ogt, %32, %33 : vector<2x384xf32>
    %cst_25 = arith.constant 2.000000e-01 : f32
    %35 = vector.broadcast %cst_25 : f32 to vector<2x384xf32>
    %36 = arith.mulf %35, %32 : vector<2x384xf32>
    %37 = arith.select %34, %32, %36 : vector<2x384xi1>, vector<2x384xf32>
    %c0_26 = arith.constant 0 : index
    %c0_27 = arith.constant 0 : index
    %38 = vector.load %arg11[%c0_26, %c0_27] : memref<384x32xf32, #tpu.memory_space<vmem>>, vector<384x32xf32>
    %cst_28 = arith.constant dense<0.000000e+00> : vector<2x32xf32>
    %39 = tpu.matmul %37, %38, %cst_28 {dimension_numbers = #tpu.dot_dimension_numbers<[1], [0], [0], [1], [0, 0, 1, 1], [], []>} : vector<2x384xf32>, vector<384x32xf32>, vector<2x32xf32> -> vector<2x32xf32>
    %c0_29 = arith.constant 0 : index
    %c0_30 = arith.constant 0 : index
    %40 = vector.load %arg12[%c0_29, %c0_30] : memref<1x32xf32, #tpu.memory_space<vmem>>, vector<1x32xf32>
    %41 = vector.broadcast %40 : vector<1x32xf32> to vector<2x32xf32>
    %42 = arith.addf %39, %41 : vector<2x32xf32>
    %c0_31 = arith.constant 0 : index
    %c0_32 = arith.constant 0 : index
    %43 = vector.load %arg13[%c0_31, %c0_32] : memref<384x32xf32, #tpu.memory_space<vmem>>, vector<384x32xf32>
    %cst_33 = arith.constant dense<0.000000e+00> : vector<2x32xf32>
    %44 = tpu.matmul %37, %43, %cst_33 {dimension_numbers = #tpu.dot_dimension_numbers<[1], [0], [0], [1], [0, 0, 1, 1], [], []>} : vector<2x384xf32>, vector<384x32xf32>, vector<2x32xf32> -> vector<2x32xf32>
    %c0_34 = arith.constant 0 : index
    %c0_35 = arith.constant 0 : index
    %45 = vector.load %arg14[%c0_34, %c0_35] : memref<1x32xf32, #tpu.memory_space<vmem>>, vector<1x32xf32>
    %46 = vector.broadcast %45 : vector<1x32xf32> to vector<2x32xf32>
    %47 = arith.addf %44, %46 : vector<2x32xf32>
    %c0_36 = arith.constant 0 : index
    %c0_37 = arith.constant 0 : index
    %48 = vector.load %arg3[%c0_36, %c0_37] : memref<2x32xf32, #tpu.memory_space<vmem>>, vector<2x32xf32>
    %49 = math.exp %47 : vector<2x32xf32>
    %50 = arith.mulf %48, %49 : vector<2x32xf32>
    %51 = arith.addf %42, %50 : vector<2x32xf32>
    %c0_38 = arith.constant 0 : index
    %c0_39 = arith.constant 0 : index
    %52 = vector.load %arg15[%c0_38, %c0_39] : memref<32x384xf32, #tpu.memory_space<vmem>>, vector<32x384xf32>
    %cst_40 = arith.constant dense<0.000000e+00> : vector<2x384xf32>
    %53 = tpu.matmul %51, %52, %cst_40 {dimension_numbers = #tpu.dot_dimension_numbers<[1], [0], [0], [1], [0, 0, 1, 1], [], []>} : vector<2x32xf32>, vector<32x384xf32>, vector<2x384xf32> -> vector<2x384xf32>
    %c0_41 = arith.constant 0 : index
    %c0_42 = arith.constant 0 : index
    %54 = vector.load %arg16[%c0_41, %c0_42] : memref<3x384xf32, #tpu.memory_space<vmem>>, vector<3x384xf32>
    %cst_43 = arith.constant dense<0.000000e+00> : vector<2x384xf32>
    %55 = tpu.matmul %1, %54, %cst_43 {dimension_numbers = #tpu.dot_dimension_numbers<[1], [0], [0], [1], [0, 0, 1, 1], [], []>} : vector<2x3xf32>, vector<3x384xf32>, vector<2x384xf32> -> vector<2x384xf32>
    %56 = arith.addf %53, %55 : vector<2x384xf32>
    %c0_44 = arith.constant 0 : index
    %c0_45 = arith.constant 0 : index
    %57 = vector.load %arg17[%c0_44, %c0_45] : memref<1x384xf32, #tpu.memory_space<vmem>>, vector<1x384xf32>
    %58 = vector.broadcast %57 : vector<1x384xf32> to vector<2x384xf32>
    %59 = arith.addf %56, %58 : vector<2x384xf32>
    %cst_46 = arith.constant 0.000000e+00 : f32
    %60 = vector.broadcast %cst_46 : f32 to vector<2x384xf32>
    %61 = arith.maximumf %59, %60 : vector<2x384xf32>
    %c0_47 = arith.constant 0 : index
    %c0_48 = arith.constant 0 : index
    %62 = vector.load %arg18[%c0_47, %c0_48] : memref<384x384xbf16, #tpu.memory_space<vmem>>, vector<384x384xbf16>
    %63 = arith.truncf %61 : vector<2x384xf32> to vector<2x384xbf16>
    %cst_49 = arith.constant dense<0.000000e+00> : vector<2x384xf32>
    %64 = tpu.matmul %63, %62, %cst_49 {dimension_numbers = #tpu.dot_dimension_numbers<[1], [0], [0], [1], [0, 0, 1, 1], [], []>} : vector<2x384xbf16>, vector<384x384xbf16>, vector<2x384xf32> -> vector<2x384xf32>
    %c0_50 = arith.constant 0 : index
    %c0_51 = arith.constant 0 : index
    %65 = vector.load %arg19[%c0_50, %c0_51] : memref<1x384xf32, #tpu.memory_space<vmem>>, vector<1x384xf32>
    %66 = vector.broadcast %65 : vector<1x384xf32> to vector<2x384xf32>
    %67 = arith.addf %64, %66 : vector<2x384xf32>
    %cst_52 = arith.constant 0.000000e+00 : f32
    %68 = vector.broadcast %cst_52 : f32 to vector<2x384xf32>
    %69 = arith.maximumf %67, %68 : vector<2x384xf32>
    %c0_53 = arith.constant 0 : index
    %c0_54 = arith.constant 0 : index
    %70 = vector.load %arg20[%c0_53, %c0_54] : memref<384x768xbf16, #tpu.memory_space<vmem>>, vector<384x768xbf16>
    %71 = arith.truncf %69 : vector<2x384xf32> to vector<2x384xbf16>
    %cst_55 = arith.constant dense<0.000000e+00> : vector<2x768xf32>
    %72 = tpu.matmul %71, %70, %cst_55 {dimension_numbers = #tpu.dot_dimension_numbers<[1], [0], [0], [1], [0, 0, 1, 1], [], []>} : vector<2x384xbf16>, vector<384x768xbf16>, vector<2x768xf32> -> vector<2x768xf32>
    %c0_56 = arith.constant 0 : index
    %c0_57 = arith.constant 0 : index
    %73 = vector.load %arg21[%c0_56, %c0_57] : memref<1x768xf32, #tpu.memory_space<vmem>>, vector<1x768xf32>
    %74 = vector.broadcast %73 : vector<1x768xf32> to vector<2x768xf32>
    %75 = arith.addf %72, %74 : vector<2x768xf32>
    %cst_58 = arith.constant 0.000000e+00 : f32
    %76 = vector.broadcast %cst_58 : f32 to vector<2x768xf32>
    %77 = arith.maximumf %75, %76 : vector<2x768xf32>
    %c0_59 = arith.constant 0 : index
    %c0_60 = arith.constant 0 : index
    %78 = vector.load %arg22[%c0_59, %c0_60] : memref<768x86xbf16, #tpu.memory_space<vmem>>, vector<768x86xbf16>
    %79 = arith.truncf %77 : vector<2x768xf32> to vector<2x768xbf16>
    %cst_61 = arith.constant dense<0.000000e+00> : vector<2x86xf32>
    %80 = tpu.matmul %79, %78, %cst_61 {dimension_numbers = #tpu.dot_dimension_numbers<[1], [0], [0], [1], [0, 0, 1, 1], [], []>} : vector<2x768xbf16>, vector<768x86xbf16>, vector<2x86xf32> -> vector<2x86xf32>
    %c0_62 = arith.constant 0 : index
    %c0_63 = arith.constant 0 : index
    %81 = vector.load %arg23[%c0_62, %c0_63] : memref<1x86xf32, #tpu.memory_space<vmem>>, vector<1x86xf32>
    %82 = vector.broadcast %81 : vector<1x86xf32> to vector<2x86xf32>
    %83 = arith.addf %80, %82 : vector<2x86xf32>
    %cst_64 = arith.constant 0.000000e+00 : f32
    %84 = vector.broadcast %cst_64 : f32 to vector<2x86xf32>
    %85 = arith.maximumf %83, %84 : vector<2x86xf32>
    %c0_65 = arith.constant 0 : index
    %c0_66 = arith.constant 0 : index
    %86 = vector.load %arg24[%c0_65, %c0_66] : memref<2x86xf32, #tpu.memory_space<vmem>>, vector<2x86xf32>
    tpu.vector_store %arg24[%c0_65, %c0_66], %85 {strides = array<i32>} : memref<2x86xf32, #tpu.memory_space<vmem>>, vector<2x86xf32>,
    return
  }
  func.func @transform_0(%arg0: i32) -> (i32, i32) {
    %c0_i32 = arith.constant 0 : i32
    %c0_i32_0 = arith.constant 0 : i32
    return %arg0, %c0_i32 : i32, i32
  }
  func.func @transform_1(%arg0: i32) -> (i32, i32) {
    %c0_i32 = arith.constant 0 : i32
    %c0_i32_0 = arith.constant 0 : i32
    return %arg0, %c0_i32 : i32, i32
  }
  func.func @transform_2(%arg0: i32) -> (i32, i32) {
    %c0_i32 = arith.constant 0 : i32
    %c0_i32_0 = arith.constant 0 : i32
    return %arg0, %c0_i32 : i32, i32
  }
  func.func @transform_3(%arg0: i32) -> (i32, i32) {
    %c0_i32 = arith.constant 0 : i32
    %c0_i32_0 = arith.constant 0 : i32
    %c0_i32_1 = arith.constant 0 : i32
    return %c0_i32, %c0_i32_0 : i32, i32
  }
  func.func @transform_4(%arg0: i32) -> (i32, i32) {
    %c0_i32 = arith.constant 0 : i32
    %c0_i32_0 = arith.constant 0 : i32
    %c0_i32_1 = arith.constant 0 : i32
    return %c0_i32, %c0_i32_0 : i32, i32
  }
  func.func @transform_5(%arg0: i32) -> (i32, i32) {
    %c0_i32 = arith.constant 0 : i32
    %c0_i32_0 = arith.constant 0 : i32
    %c0_i32_1 = arith.constant 0 : i32
    return %c0_i32, %c0_i32_0 : i32, i32
  }
  func.func @transform_6(%arg0: i32) -> (i32, i32) {
    %c0_i32 = arith.constant 0 : i32
    %c0_i32_0 = arith.constant 0 : i32
    %c0_i32_1 = arith.constant 0 : i32
    return %c0_i32, %c0_i32_0 : i32, i32
  }
  func.func @transform_7(%arg0: i32) -> (i32, i32) {
    %c0_i32 = arith.constant 0 : i32
    %c0_i32_0 = arith.constant 0 : i32
    %c0_i32_1 = arith.constant 0 : i32
    return %c0_i32, %c0_i32_0 : i32, i32
  }
  func.func @transform_8(%arg0: i32) -> (i32, i32) {
    %c0_i32 = arith.constant 0 : i32
    %c0_i32_0 = arith.constant 0 : i32
    %c0_i32_1 = arith.constant 0 : i32
    return %c0_i32, %c0_i32_0 : i32, i32
  }
  func.func @transform_9(%arg0: i32) -> (i32, i32) {
    %c0_i32 = arith.constant 0 : i32
    %c0_i32_0 = arith.constant 0 : i32
    %c0_i32_1 = arith.constant 0 : i32
    return %c0_i32, %c0_i32_0 : i32, i32
  }
  func.func @transform_10(%arg0: i32) -> (i32, i32) {
    %c0_i32 = arith.constant 0 : i32
    %c0_i32_0 = arith.constant 0 : i32
    %c0_i32_1 = arith.constant 0 : i32
    return %c0_i32, %c0_i32_0 : i32, i32
  }
  func.func @transform_11(%arg0: i32) -> (i32, i32) {
    %c0_i32 = arith.constant 0 : i32
    %c0_i32_0 = arith.constant 0 : i32
    %c0_i32_1 = arith.constant 0 : i32
    return %c0_i32, %c0_i32_0 : i32, i32
  }
  func.func @transform_12(%arg0: i32) -> (i32, i32) {
    %c0_i32 = arith.constant 0 : i32
    %c0_i32_0 = arith.constant 0 : i32
    %c0_i32_1 = arith.constant 0 : i32
    return %c0_i32, %c0_i32_0 : i32, i32
  }
  func.func @transform_13(%arg0: i32) -> (i32, i32) {
    %c0_i32 = arith.constant 0 : i32
    %c0_i32_0 = arith.constant 0 : i32
    %c0_i32_1 = arith.constant 0 : i32
    return %c0_i32, %c0_i32_0 : i32, i32
  }
  func.func @transform_14(%arg0: i32) -> (i32, i32) {
    %c0_i32 = arith.constant 0 : i32
    %c0_i32_0 = arith.constant 0 : i32
    %c0_i32_1 = arith.constant 0 : i32
    return %c0_i32, %c0_i32_0 : i32, i32
  }
  func.func @transform_15(%arg0: i32) -> (i32, i32) {
    %c0_i32 = arith.constant 0 : i32
    %c0_i32_0 = arith.constant 0 : i32
    %c0_i32_1 = arith.constant 0 : i32
    return %c0_i32, %c0_i32_0 : i32, i32
  }
  func.func @transform_16(%arg0: i32) -> (i32, i32) {
    %c0_i32 = arith.constant 0 : i32
    %c0_i32_0 = arith.constant 0 : i32
    %c0_i32_1 = arith.constant 0 : i32
    return %c0_i32, %c0_i32_0 : i32, i32
  }
  func.func @transform_17(%arg0: i32) -> (i32, i32) {
    %c0_i32 = arith.constant 0 : i32
    %c0_i32_0 = arith.constant 0 : i32
    %c0_i32_1 = arith.constant 0 : i32
    return %c0_i32, %c0_i32_0 : i32, i32
  }
  func.func @transform_18(%arg0: i32) -> (i32, i32) {
    %c0_i32 = arith.constant 0 : i32
    %c0_i32_0 = arith.constant 0 : i32
    %c0_i32_1 = arith.constant 0 : i32
    return %c0_i32, %c0_i32_0 : i32, i32
  }
  func.func @transform_19(%arg0: i32) -> (i32, i32) {
    %c0_i32 = arith.constant 0 : i32
    %c0_i32_0 = arith.constant 0 : i32
    %c0_i32_1 = arith.constant 0 : i32
    return %c0_i32, %c0_i32_0 : i32, i32
  }
  func.func @transform_20(%arg0: i32) -> (i32, i32) {
    %c0_i32 = arith.constant 0 : i32
    %c0_i32_0 = arith.constant 0 : i32
    %c0_i32_1 = arith.constant 0 : i32
    return %c0_i32, %c0_i32_0 : i32, i32
  }
  func.func @transform_21(%arg0: i32) -> (i32, i32) {
    %c0_i32 = arith.constant 0 : i32
    %c0_i32_0 = arith.constant 0 : i32
    %c0_i32_1 = arith.constant 0 : i32
    return %c0_i32, %c0_i32_0 : i32, i32
  }
  func.func @transform_22(%arg0: i32) -> (i32, i32) {
    %c0_i32 = arith.constant 0 : i32
    %c0_i32_0 = arith.constant 0 : i32
    %c0_i32_1 = arith.constant 0 : i32
    return %c0_i32, %c0_i32_0 : i32, i32
  }
  func.func @transform_23(%arg0: i32) -> (i32, i32) {
    %c0_i32 = arith.constant 0 : i32
    %c0_i32_0 = arith.constant 0 : i32
    return %arg0, %c0_i32 : i32, i32
  }
}

</mosaic_0001>

<llo_original>
// kernel: vae_forward.1
$region0: #{vae_forward.1}
  #allocation0 [shape = 'u32[]', space=smem, size = 0x4, offset = 0x4, fixed_abs, tag = 'smem constant byte address 0x4 - core index']
  #allocation1 [shape = 'u32[144,128]{1,0:T(1,128)}', space=vmem, size = 0x12000, scoped, tag = 'internal scratch']
  %s0 = inlined_call_operand.hbm [shape: f32[2,93], index: 0, kind: input, shape index: {}]
  %s1 = inlined_call_operand.hbm [shape: f32[2,3], index: 1, kind: input, shape index: {}]
  %s2 = inlined_call_operand.hbm [shape: f32[2,32], index: 2, kind: input, shape index: {}]
  %s3 = inlined_call_operand.hbm [shape: bf16[93,768], index: 3, kind: input, shape index: {}]
  %s4 = inlined_call_operand.hbm [shape: f32[3,768], index: 4, kind: input, shape index: {}]
  %s5 = inlined_call_operand.hbm [shape: f32[1,768], index: 5, kind: input, shape index: {}]
  %s6 = inlined_call_operand.hbm [shape: bf16[768,768], index: 6, kind: input, shape index: {}]
  %s7 = inlined_call_operand.hbm [shape: f32[1,768], index: 7, kind: input, shape index: {}]
  %s8 = inlined_call_operand.vmem [shape: bf16[768,384], index: 8, kind: input, shape index: {}]
  %s9 = inlined_call_operand.hbm [shape: f32[1,384], index: 9, kind: input, shape index: {}]
  %s10 = inlined_call_operand.vmem [shape: f32[384,32], index: 10, kind: input, shape index: {}]
  %s11 = inlined_call_operand.hbm [shape: f32[1,32], index: 11, kind: input, shape index: {}]
  %s12 = inlined_call_operand.vmem [shape: f32[384,32], index: 12, kind: input, shape index: {}]
  %s13 = inlined_call_operand.hbm [shape: f32[1,32], index: 13, kind: input, shape index: {}]
  %s14 = inlined_call_operand.hbm [shape: f32[32,384], index: 14, kind: input, shape index: {}]
  %s15 = inlined_call_operand.hbm [shape: f32[3,384], index: 15, kind: input, shape index: {}]
  %s16 = inlined_call_operand.hbm [shape: f32[1,384], index: 16, kind: input, shape index: {}]
  %s17 = inlined_call_operand.hbm [shape: bf16[384,384], index: 17, kind: input, shape index: {}]
  %s18 = inlined_call_operand.hbm [shape: f32[1,384], index: 18, kind: input, shape index: {}]
  %s19 = inlined_call_operand.hbm [shape: bf16[384,768], index: 19, kind: input, shape index: {}]
  %s20 = inlined_call_operand.hbm [shape: f32[1,768], index: 20, kind: input, shape index: {}]
  %s21 = inlined_call_operand.vmem [shape: bf16[768,86], index: 21, kind: input, shape index: {}]
  %s22 = inlined_call_operand.hbm [shape: f32[1,86], index: 22, kind: input, shape index: {}]
  %s23 = inlined_call_operand.hbm [shape: f32[2,86], index: 23, kind: output, shape index: {}]
  %s24 = sld [smem:[#allocation0]]
  $region178: #{vae_forward.1} parent=0
    _
  %s26 = ssub.s32 1, %s24
  %s27 = scalar_select 0, %s26, %s24
  $region1: #{vae_forward.1} parent=0
    #allocation2 [shape = 'u8[1024]{0}', space=vmem, size = 0x400, scoped, tag = 'input window, operand 0, single buffered']
    #allocation3 [shape = 's32[1]{0}', space=sflag, size = 0x4, scoped, tag = 'scoped memory for vae_forward.1']
    #allocation4 [shape = 's32[1]{0}', space=sflag, size = 0x4, scoped, tag = 'scoped memory for vae_forward.1']
    #allocation5 [shape = 'u8[1024]{0}', space=vmem, size = 0x400, scoped, tag = 'input window, operand 1, single buffered']
    #allocation6 [shape = 's32[1]{0}', space=sflag, size = 0x4, scoped, tag = 'scoped memory for vae_forward.1']
    #allocation7 [shape = 'u8[1024]{0}', space=vmem, size = 0x400, scoped, tag = 'input window, operand 2, single buffered']
    #allocation8 [shape = 'u8[147456]{0}', space=vmem, size = 0x24000, scoped, tag = 'input window, operand 3, single buffered']
    #allocation9 [shape = 's32[1]{0}', space=sflag, size = 0x4, scoped, tag = 'scoped memory for vae_forward.1']
    #allocation10 [shape = 'u8[12288]{0}', space=vmem, size = 0x3000, scoped, tag = 'input window, operand 4, single buffered']
    #allocation11 [shape = 'u8[3072]{0}', space=vmem, size = 0xc00, scoped, tag = 'input window, operand 5, single buffered']
    #allocation12 [shape = 's32[1]{0}', space=sflag, size = 0x4, scoped, tag = 'scoped memory for vae_forward.1']
    #allocation13 [shape = 'u8[1179648]{0}', space=vmem, size = 0x120000, scoped, tag = 'input window, operand 6, single buffered']
    #allocation14 [shape = 'u8[3072]{0}', space=vmem, size = 0xc00, scoped, tag = 'input window, operand 7, single buffered']
    #allocation15 [shape = 's32[1]{0}', space=sflag, size = 0x4, scoped, tag = 'scoped memory for vae_forward.1']
    #allocation16 [shape = 'u8[1536]{0}', space=vmem, size = 0x800, scoped, tag = 'input window, operand 9, single buffered']
    #allocation17 [shape = 'u8[512]{0}', space=vmem, size = 0x400, scoped, tag = 'input window, operand 11, single buffered']
    #allocation18 [shape = 's32[1]{0}', space=sflag, size = 0x4, scoped, tag = 'scoped memory for vae_forward.1']
    #allocation19 [shape = 'u8[512]{0}', space=vmem, size = 0x400, scoped, tag = 'input window, operand 13, single buffered']
    #allocation20 [shape = 'u8[49152]{0}', space=vmem, size = 0xc000, scoped, tag = 'input window, operand 14, single buffered']
    #allocation21 [shape = 's32[1]{0}', space=sflag, size = 0x4, scoped, tag = 'scoped memory for vae_forward.1']
    #allocation22 [shape = 'u8[6144]{0}', space=vmem, size = 0x1800, scoped, tag = 'input window, operand 15, single buffered']
    #allocation23 [shape = 'u8[1536]{0}', space=vmem, size = 0x800, scoped, tag = 'input window, operand 16, single buffered']
    #allocation24 [shape = 's32[1]{0}', space=sflag, size = 0x4, scoped, tag = 'scoped memory for vae_forward.1']
    #allocation25 [shape = 'u8[294912]{0}', space=vmem, size = 0x48000, scoped, tag = 'input window, operand 17, single buffered']
    #allocation26 [shape = 'u8[1536]{0}', space=vmem, size = 0x800, scoped, tag = 'input window, operand 18, single buffered']
    #allocation27 [shape = 's32[1]{0}', space=sflag, size = 0x4, scoped, tag = 'scoped memory for vae_forward.1']
    #allocation28 [shape = 'u8[589824]{0}', space=vmem, size = 0x90000, scoped, tag = 'input window, operand 19, single buffered']
    #allocation29 [shape = 'u8[3072]{0}', space=vmem, size = 0xc00, scoped, tag = 'input window, operand 20, single buffered']
    #allocation30 [shape = 's32[1]{0}', space=sflag, size = 0x4, scoped, tag = 'scoped memory for vae_forward.1']
    #allocation31 [shape = 'u8[512]{0}', space=vmem, size = 0x400, scoped, tag = 'input window, operand 22, single buffered']
    #allocation32 [shape = 'u8[1024]{0}', space=vmem, size = 0x400, scoped, tag = 'output window, operand 0, single buffered']
    %28 = vsyncpa [#allocation3], 0
    %29 = vsyncpa [#allocation6], 0
    %30 = vsyncpa [#allocation9], 0
    %31 = vsyncpa [#allocation12], 0
    %32 = vsyncpa [#allocation15], 0
    %33 = vsyncpa [#allocation18], 0
    %34 = vsyncpa [#allocation21], 0
    %35 = vsyncpa [#allocation24], 0
    %36 = vsyncpa [#allocation27], 0
    %37 = vsyncpa [#allocation30], 0
    %38 = vsyncpa [#allocation4], 0
    // Predicated region
    $region2: #{vae_forward.1} parent=1 // pred_check
      _
    $region3: #{vae_forward.1} parent=1 // pred_check_branch
      %40 = sbr.rel (0) target = $region5
    $region4: #{vae_forward.1} parent=1 // pred_region
      %s42 = ssub.s32 32, 32
      %43 = vsyncadd [#allocation3], %s42
      %s45 = sshll.u32 [#allocation2], 4
      %s46 = int_to_ptr.vmem [resolvable:$true] %s45
      %48 = dma.hbm_to_vmem [thread:$0]  %s0, 32, %s46, [#allocation3]
    $region5: #{vae_forward.1} parent=1 // pred_fallthru
      _
    // Predicated region
    $region6: #{vae_forward.1} parent=1 // pred_check
      _
    $region7: #{vae_forward.1} parent=1 // pred_check_branch
      %50 = sbr.rel (0) target = $region9
    $region8: #{vae_forward.1} parent=1 // pred_region
      %s52 = ssub.s32 32, 32
      %53 = vsyncadd [#allocation6], %s52
      %s55 = sshll.u32 [#allocation5], 4
      %s56 = int_to_ptr.vmem [resolvable:$true] %s55
      %58 = dma.hbm_to_vmem [thread:$0]  %s1, 32, %s56, [#allocation6]
    $region9: #{vae_forward.1} parent=1 // pred_fallthru
      _
    // Predicated region
    $region10: #{vae_forward.1} parent=1 // pred_check
      _
    $region11: #{vae_forward.1} parent=1 // pred_check_branch
      %60 = sbr.rel (0) target = $region13
    $region12: #{vae_forward.1} parent=1 // pred_region
      %s62 = ssub.s32 32, 32
      %63 = vsyncadd [#allocation6], %s62
      %s65 = sshll.u32 [#allocation7], 4
      %s66 = int_to_ptr.vmem [resolvable:$true] %s65
      %68 = dma.hbm_to_vmem [thread:$0]  %s2, 32, %s66, [#allocation6]
    $region13: #{vae_forward.1} parent=1 // pred_fallthru
      _
    // Predicated region
    $region14: #{vae_forward.1} parent=1 // pred_check
      _
    $region15: #{vae_forward.1} parent=1 // pred_check_branch
      %70 = sbr.rel (0) target = $region17
    $region16: #{vae_forward.1} parent=1 // pred_region
      %s72 = ssub.s32 4608, 4608
      %73 = vsyncadd [#allocation9], %s72
      %s74 = sshll.u32 [#allocation8], 4
      %s75 = int_to_ptr.vmem [resolvable:$true] %s74
      %80 = dma.hbm_to_vmem [thread:$0]  %s3, 4608, %s75, [#allocation9], 384, 384, 24
    $region17: #{vae_forward.1} parent=1 // pred_fallthru
      _
    // Predicated region
    $region18: #{vae_forward.1} parent=1 // pred_check
      _
    $region19: #{vae_forward.1} parent=1 // pred_check_branch
      %82 = sbr.rel (0) target = $region21
    $region20: #{vae_forward.1} parent=1 // pred_region
      %s84 = ssub.s32 384, 384
      %85 = vsyncadd [#allocation9], %s84
      %s87 = sshll.u32 [#allocation10], 4
      %s88 = int_to_ptr.vmem [resolvable:$true] %s87
      %90 = dma.hbm_to_vmem [thread:$0]  %s4, 384, %s88, [#allocation9]
    $region21: #{vae_forward.1} parent=1 // pred_fallthru
      _
    // Predicated region
    $region22: #{vae_forward.1} parent=1 // pred_check
      _
    $region23: #{vae_forward.1} parent=1 // pred_check_branch
      %92 = sbr.rel (0) target = $region25
    $region24: #{vae_forward.1} parent=1 // pred_region
      %s94 = ssub.s32 96, 96
      %95 = vsyncadd [#allocation12], %s94
      %s97 = sshll.u32 [#allocation11], 4
      %s98 = int_to_ptr.vmem [resolvable:$true] %s97
      %100 = dma.hbm_to_vmem [thread:$0]  %s5, 96, %s98, [#allocation12]
    $region25: #{vae_forward.1} parent=1 // pred_fallthru
      _
    // Predicated region
    $region26: #{vae_forward.1} parent=1 // pred_check
      _
    $region27: #{vae_forward.1} parent=1 // pred_check_branch
      %102 = sbr.rel (0) target = $region29
    $region28: #{vae_forward.1} parent=1 // pred_region
      %s104 = ssub.s32 36864, 36864
      %105 = vsyncadd [#allocation12], %s104
      %s106 = sshll.u32 [#allocation13], 4
      %s107 = int_to_ptr.vmem [resolvable:$true] %s106
      %112 = dma.hbm_to_vmem [thread:$0]  %s6, 36864, %s107, [#allocation12], 384, 384, 24
    $region29: #{vae_forward.1} parent=1 // pred_fallthru
      _
    // Predicated region
    $region30: #{vae_forward.1} parent=1 // pred_check
      _
    $region31: #{vae_forward.1} parent=1 // pred_check_branch
      %114 = sbr.rel (0) target = $region33
    $region32: #{vae_forward.1} parent=1 // pred_region
      %s116 = ssub.s32 96, 96
      %117 = vsyncadd [#allocation15], %s116
      %s119 = sshll.u32 [#allocation14], 4
      %s120 = int_to_ptr.vmem [resolvable:$true] %s119
      %122 = dma.hbm_to_vmem [thread:$0]  %s7, 96, %s120, [#allocation15]
    $region33: #{vae_forward.1} parent=1 // pred_fallthru
      _
    // Predicated region
    $region34: #{vae_forward.1} parent=1 // pred_check
      _
    $region35: #{vae_forward.1} parent=1 // pred_check_branch
      %124 = sbr.rel (0) target = $region37
    $region36: #{vae_forward.1} parent=1 // pred_region
      _
    $region37: #{vae_forward.1} parent=1 // pred_fallthru
      _
    // Predicated region
    $region38: #{vae_forward.1} parent=1 // pred_check
      _
    $region39: #{vae_forward.1} parent=1 // pred_check_branch
      %126 = sbr.rel (0) target = $region41
    $region40: #{vae_forward.1} parent=1 // pred_region
      %s128 = ssub.s32 48, 48
      %129 = vsyncadd [#allocation15], %s128
      %s131 = sshll.u32 [#allocation16], 4
      %s132 = int_to_ptr.vmem [resolvable:$true] %s131
      %134 = dma.hbm_to_vmem [thread:$0]  %s9, 48, %s132, [#allocation15]
    $region41: #{vae_forward.1} parent=1 // pred_fallthru
      _
    // Predicated region
    $region42: #{vae_forward.1} parent=1 // pred_check
      _
    $region43: #{vae_forward.1} parent=1 // pred_check_branch
      %136 = sbr.rel (0) target = $region45
    $region44: #{vae_forward.1} parent=1 // pred_region
      _
    $region45: #{vae_forward.1} parent=1 // pred_fallthru
      _
    // Predicated region
    $region46: #{vae_forward.1} parent=1 // pred_check
      _
    $region47: #{vae_forward.1} parent=1 // pred_check_branch
      %138 = sbr.rel (0) target = $region49
    $region48: #{vae_forward.1} parent=1 // pred_region
      %s140 = ssub.s32 16, 16
      %141 = vsyncadd [#allocation18], %s140
      %s143 = sshll.u32 [#allocation17], 4
      %s144 = int_to_ptr.vmem [resolvable:$true] %s143
      %146 = dma.hbm_to_vmem [thread:$0]  %s11, 16, %s144, [#allocation18]
    $region49: #{vae_forward.1} parent=1 // pred_fallthru
      _
    // Predicated region
    $region50: #{vae_forward.1} parent=1 // pred_check
      _
    $region51: #{vae_forward.1} parent=1 // pred_check_branch
      %148 = sbr.rel (0) target = $region53
    $region52: #{vae_forward.1} parent=1 // pred_region
      _
    $region53: #{vae_forward.1} parent=1 // pred_fallthru
      _
    // Predicated region
    $region54: #{vae_forward.1} parent=1 // pred_check
      _
    $region55: #{vae_forward.1} parent=1 // pred_check_branch
      %150 = sbr.rel (0) target = $region57
    $region56: #{vae_forward.1} parent=1 // pred_region
      %s152 = ssub.s32 16, 16
      %153 = vsyncadd [#allocation18], %s152
      %s155 = sshll.u32 [#allocation19], 4
      %s156 = int_to_ptr.vmem [resolvable:$true] %s155
      %158 = dma.hbm_to_vmem [thread:$0]  %s13, 16, %s156, [#allocation18]
    $region57: #{vae_forward.1} parent=1 // pred_fallthru
      _
    // Predicated region
    $region58: #{vae_forward.1} parent=1 // pred_check
      _
    $region59: #{vae_forward.1} parent=1 // pred_check_branch
      %160 = sbr.rel (0) target = $region61
    $region60: #{vae_forward.1} parent=1 // pred_region
      %s162 = ssub.s32 1536, 1536
      %163 = vsyncadd [#allocation21], %s162
      %s164 = sshll.u32 [#allocation20], 4
      %s165 = int_to_ptr.vmem [resolvable:$true] %s164
      %170 = dma.hbm_to_vmem [thread:$0]  %s14, 1536, %s165, [#allocation21], 384, 384, 24
    $region61: #{vae_forward.1} parent=1 // pred_fallthru
      _
    // Predicated region
    $region62: #{vae_forward.1} parent=1 // pred_check
      _
    $region63: #{vae_forward.1} parent=1 // pred_check_branch
      %172 = sbr.rel (0) target = $region65
    $region64: #{vae_forward.1} parent=1 // pred_region
      %s174 = ssub.s32 192, 192
      %175 = vsyncadd [#allocation21], %s174
      %s177 = sshll.u32 [#allocation22], 4
      %s178 = int_to_ptr.vmem [resolvable:$true] %s177
      %180 = dma.hbm_to_vmem [thread:$0]  %s15, 192, %s178, [#allocation21]
    $region65: #{vae_forward.1} parent=1 // pred_fallthru
      _
    // Predicated region
    $region66: #{vae_forward.1} parent=1 // pred_check
      _
    $region67: #{vae_forward.1} parent=1 // pred_check_branch
      %182 = sbr.rel (0) target = $region69
    $region68: #{vae_forward.1} parent=1 // pred_region
      %s184 = ssub.s32 48, 48
      %185 = vsyncadd [#allocation24], %s184
      %s187 = sshll.u32 [#allocation23], 4
      %s188 = int_to_ptr.vmem [resolvable:$true] %s187
      %190 = dma.hbm_to_vmem [thread:$0]  %s16, 48, %s188, [#allocation24]
    $region69: #{vae_forward.1} parent=1 // pred_fallthru
      _
    // Predicated region
    $region70: #{vae_forward.1} parent=1 // pred_check
      _
    $region71: #{vae_forward.1} parent=1 // pred_check_branch
      %192 = sbr.rel (0) target = $region73
    $region72: #{vae_forward.1} parent=1 // pred_region
      %s194 = ssub.s32 9216, 9216
      %195 = vsyncadd [#allocation24], %s194
      %s196 = sshll.u32 [#allocation25], 4
      %s197 = int_to_ptr.vmem [resolvable:$true] %s196
      %202 = dma.hbm_to_vmem [thread:$0]  %s17, 9216, %s197, [#allocation24], 192, 192, 12
    $region73: #{vae_forward.1} parent=1 // pred_fallthru
      _
    // Predicated region
    $region74: #{vae_forward.1} parent=1 // pred_check
      _
    $region75: #{vae_forward.1} parent=1 // pred_check_branch
      %204 = sbr.rel (0) target = $region77
    $region76: #{vae_forward.1} parent=1 // pred_region
      %s206 = ssub.s32 48, 48
      %207 = vsyncadd [#allocation27], %s206
      %s209 = sshll.u32 [#allocation26], 4
      %s210 = int_to_ptr.vmem [resolvable:$true] %s209
      %212 = dma.hbm_to_vmem [thread:$0]  %s18, 48, %s210, [#allocation27]
    $region77: #{vae_forward.1} parent=1 // pred_fallthru
      _
    // Predicated region
    $region78: #{vae_forward.1} parent=1 // pred_check
      _
    $region79: #{vae_forward.1} parent=1 // pred_check_branch
      %214 = sbr.rel (0) target = $region81
    $region80: #{vae_forward.1} parent=1 // pred_region
      %s216 = ssub.s32 18432, 18432
      %217 = vsyncadd [#allocation27], %s216
      %s218 = sshll.u32 [#allocation28], 4
      %s219 = int_to_ptr.vmem [resolvable:$true] %s218
      %224 = dma.hbm_to_vmem [thread:$0]  %s19, 18432, %s219, [#allocation27], 384, 384, 24
    $region81: #{vae_forward.1} parent=1 // pred_fallthru
      _
    // Predicated region
    $region82: #{vae_forward.1} parent=1 // pred_check
      _
    $region83: #{vae_forward.1} parent=1 // pred_check_branch
      %226 = sbr.rel (0) target = $region85
    $region84: #{vae_forward.1} parent=1 // pred_region
      %s228 = ssub.s32 96, 96
      %229 = vsyncadd [#allocation30], %s228
      %s231 = sshll.u32 [#allocation29], 4
      %s232 = int_to_ptr.vmem [resolvable:$true] %s231
      %234 = dma.hbm_to_vmem [thread:$0]  %s20, 96, %s232, [#allocation30]
    $region85: #{vae_forward.1} parent=1 // pred_fallthru
      _
    // Predicated region
    $region86: #{vae_forward.1} parent=1 // pred_check
      _
    $region87: #{vae_forward.1} parent=1 // pred_check_branch
      %236 = sbr.rel (0) target = $region89
    $region88: #{vae_forward.1} parent=1 // pred_region
      _
    $region89: #{vae_forward.1} parent=1 // pred_fallthru
      _
    // Predicated region
    $region90: #{vae_forward.1} parent=1 // pred_check
      _
    $region91: #{vae_forward.1} parent=1 // pred_check_branch
      %238 = sbr.rel (0) target = $region93
    $region92: #{vae_forward.1} parent=1 // pred_region
      %s240 = ssub.s32 16, 16
      %241 = vsyncadd [#allocation30], %s240
      %s243 = sshll.u32 [#allocation31], 4
      %s244 = int_to_ptr.vmem [resolvable:$true] %s243
      %246 = dma.hbm_to_vmem [thread:$0]  %s22, 16, %s244, [#allocation30]
    $region93: #{vae_forward.1} parent=1 // pred_fallthru
      _
    // Predicated region
    $region94: #{vae_forward.1} parent=1 // pred_check
      _
    $region95: #{vae_forward.1} parent=1 // pred_check_branch
      %248 = sbr.rel (0) target = $region97
    $region96: #{vae_forward.1} parent=1 // pred_region
      %249 = dma.done [#allocation3], 32
    $region97: #{vae_forward.1} parent=1 // pred_fallthru
      _
    // Predicated region
    $region98: #{vae_forward.1} parent=1 // pred_check
      _
    $region99: #{vae_forward.1} parent=1 // pred_check_branch
      %251 = sbr.rel (0) target = $region101
    $region100: #{vae_forward.1} parent=1 // pred_region
      %252 = dma.done [#allocation6], 32
    $region101: #{vae_forward.1} parent=1 // pred_fallthru
      _
    // Predicated region
    $region102: #{vae_forward.1} parent=1 // pred_check
      _
    $region103: #{vae_forward.1} parent=1 // pred_check_branch
      %254 = sbr.rel (0) target = $region105
    $region104: #{vae_forward.1} parent=1 // pred_region
      %255 = dma.done [#allocation6], 32
    $region105: #{vae_forward.1} parent=1 // pred_fallthru
      _
    // Predicated region
    $region106: #{vae_forward.1} parent=1 // pred_check
      _
    $region107: #{vae_forward.1} parent=1 // pred_check_branch
      %257 = sbr.rel (0) target = $region109
    $region108: #{vae_forward.1} parent=1 // pred_region
      %258 = dma.done [#allocation9], 4608
    $region109: #{vae_forward.1} parent=1 // pred_fallthru
      _
    // Predicated region
    $region110: #{vae_forward.1} parent=1 // pred_check
      _
    $region111: #{vae_forward.1} parent=1 // pred_check_branch
      %260 = sbr.rel (0) target = $region113
    $region112: #{vae_forward.1} parent=1 // pred_region
      %261 = dma.done [#allocation9], 384
    $region113: #{vae_forward.1} parent=1 // pred_fallthru
      _
    // Predicated region
    $region114: #{vae_forward.1} parent=1 // pred_check
      _
    $region115: #{vae_forward.1} parent=1 // pred_check_branch
      %263 = sbr.rel (0) target = $region117
    $region116: #{vae_forward.1} parent=1 // pred_region
      %264 = dma.done [#allocation12], 96
    $region117: #{vae_forward.1} parent=1 // pred_fallthru
      _
    // Predicated region
    $region118: #{vae_forward.1} parent=1 // pred_check
      _
    $region119: #{vae_forward.1} parent=1 // pred_check_branch
      %266 = sbr.rel (0) target = $region121
    $region120: #{vae_forward.1} parent=1 // pred_region
      %267 = dma.done [#allocation12], 36864
    $region121: #{vae_forward.1} parent=1 // pred_fallthru
      _
    // Predicated region
    $region122: #{vae_forward.1} parent=1 // pred_check
      _
    $region123: #{vae_forward.1} parent=1 // pred_check_branch
      %269 = sbr.rel (0) target = $region125
    $region124: #{vae_forward.1} parent=1 // pred_region
      %270 = dma.done [#allocation15], 96
    $region125: #{vae_forward.1} parent=1 // pred_fallthru
      _
    // Predicated region
    $region126: #{vae_forward.1} parent=1 // pred_check
      _
    $region127: #{vae_forward.1} parent=1 // pred_check_branch
      %272 = sbr.rel (0) target = $region129
    $region128: #{vae_forward.1} parent=1 // pred_region
      %273 = dma.done [#allocation15], 48
    $region129: #{vae_forward.1} parent=1 // pred_fallthru
      _
    // Predicated region
    $region130: #{vae_forward.1} parent=1 // pred_check
      _
    $region131: #{vae_forward.1} parent=1 // pred_check_branch
      %275 = sbr.rel (0) target = $region133
    $region132: #{vae_forward.1} parent=1 // pred_region
      %276 = dma.done [#allocation18], 16
    $region133: #{vae_forward.1} parent=1 // pred_fallthru
      _
    // Predicated region
    $region134: #{vae_forward.1} parent=1 // pred_check
      _
    $region135: #{vae_forward.1} parent=1 // pred_check_branch
      %278 = sbr.rel (0) target = $region137
    $region136: #{vae_forward.1} parent=1 // pred_region
      %279 = dma.done [#allocation18], 16
    $region137: #{vae_forward.1} parent=1 // pred_fallthru
      _
    // Predicated region
    $region138: #{vae_forward.1} parent=1 // pred_check
      _
    $region139: #{vae_forward.1} parent=1 // pred_check_branch
      %281 = sbr.rel (0) target = $region141
    $region140: #{vae_forward.1} parent=1 // pred_region
      %282 = dma.done [#allocation21], 1536
    $region141: #{vae_forward.1} parent=1 // pred_fallthru
      _
    // Predicated region
    $region142: #{vae_forward.1} parent=1 // pred_check
      _
    $region143: #{vae_forward.1} parent=1 // pred_check_branch
      %284 = sbr.rel (0) target = $region145
    $region144: #{vae_forward.1} parent=1 // pred_region
      %285 = dma.done [#allocation21], 192
    $region145: #{vae_forward.1} parent=1 // pred_fallthru
      _
    // Predicated region
    $region146: #{vae_forward.1} parent=1 // pred_check
      _
    $region147: #{vae_forward.1} parent=1 // pred_check_branch
      %287 = sbr.rel (0) target = $region149
    $region148: #{vae_forward.1} parent=1 // pred_region
      %288 = dma.done [#allocation24], 48
    $region149: #{vae_forward.1} parent=1 // pred_fallthru
      _
    // Predicated region
    $region150: #{vae_forward.1} parent=1 // pred_check
      _
    $region151: #{vae_forward.1} parent=1 // pred_check_branch
      %290 = sbr.rel (0) target = $region153
    $region152: #{vae_forward.1} parent=1 // pred_region
      %291 = dma.done [#allocation24], 9216
    $region153: #{vae_forward.1} parent=1 // pred_fallthru
      _
    // Predicated region
    $region154: #{vae_forward.1} parent=1 // pred_check
      _
    $region155: #{vae_forward.1} parent=1 // pred_check_branch
      %293 = sbr.rel (0) target = $region157
    $region156: #{vae_forward.1} parent=1 // pred_region
      %294 = dma.done [#allocation27], 48
    $region157: #{vae_forward.1} parent=1 // pred_fallthru
      _
    // Predicated region
    $region158: #{vae_forward.1} parent=1 // pred_check
      _
    $region159: #{vae_forward.1} parent=1 // pred_check_branch
      %296 = sbr.rel (0) target = $region161
    $region160: #{vae_forward.1} parent=1 // pred_region
      %297 = dma.done [#allocation27], 18432
    $region161: #{vae_forward.1} parent=1 // pred_fallthru
      _
    // Predicated region
    $region162: #{vae_forward.1} parent=1 // pred_check
      _
    $region163: #{vae_forward.1} parent=1 // pred_check_branch
      %299 = sbr.rel (0) target = $region165
    $region164: #{vae_forward.1} parent=1 // pred_region
      %300 = dma.done [#allocation30], 96
    $region165: #{vae_forward.1} parent=1 // pred_fallthru
      _
    // Predicated region
    $region166: #{vae_forward.1} parent=1 // pred_check
      _
    $region167: #{vae_forward.1} parent=1 // pred_check_branch
      %302 = sbr.rel (0) target = $region169
    $region168: #{vae_forward.1} parent=1 // pred_region
      %303 = dma.done [#allocation30], 16
    $region169: #{vae_forward.1} parent=1 // pred_fallthru
      _
    %v305 = vld [vmem:[#allocation2] sm:$0x3]
    %v306 = vld [vmem:[#allocation5] sm:$0x3]
    %v307 = vld [vmem:[#allocation8] sm:$0xff]
    %v308 = vld [vmem:[#allocation8 + $0x8] sm:$0xff]
    %v309 = vld [vmem:[#allocation8 + $0x10] sm:$0xff]
    %v310 = vld [vmem:[#allocation8 + $0x18] sm:$0xff]
    %v311 = vld [vmem:[#allocation8 + $0x20] sm:$0xff]
    %v312 = vld [vmem:[#allocation8 + $0x28] sm:$0xff]
    %v313 = vld [vmem:[#allocation8 + $0x30] sm:$0xff]
    %v314 = vld [vmem:[#allocation8 + $0x38] sm:$0xff]
    %v315 = vld [vmem:[#allocation8 + $0x40] sm:$0xff]
    %v316 = vld [vmem:[#allocation8 + $0x48] sm:$0xff]
    %v317 = vld [vmem:[#allocation8 + $0x50] sm:$0xff]
    %v318 = vld [vmem:[#allocation8 + $0x58] sm:$0xff]
    %v319 = vld [vmem:[#allocation8 + $0x60] sm:$0xff]
    %v320 = vld [vmem:[#allocation8 + $0x68] sm:$0xff]
    %v321 = vld [vmem:[#allocation8 + $0x70] sm:$0xff]
    %v322 = vld [vmem:[#allocation8 + $0x78] sm:$0xff]
    %v323 = vld [vmem:[#allocation8 + $0x80] sm:$0xff]
    %v324 = vld [vmem:[#allocation8 + $0x88] sm:$0xff]
    %v325 = vld [vmem:[#allocation8 + $0x90] sm:$0xff]
    %v326 = vld [vmem:[#allocation8 + $0x98] sm:$0xff]
    %v327 = vld [vmem:[#allocation8 + $0xa0] sm:$0xff]
    %v328 = vld [vmem:[#allocation8 + $0xa8] sm:$0xff]
    %v329 = vld [vmem:[#allocation8 + $0xb0] sm:$0xff]
    %v330 = vld [vmem:[#allocation8 + $0xb8] sm:$0xff]
    %v331 = vld [vmem:[#allocation8 + $0xc0] sm:$0xff]
    %v332 = vld [vmem:[#allocation8 + $0xc8] sm:$0xff]
    %v333 = vld [vmem:[#allocation8 + $0xd0] sm:$0xff]
    %v334 = vld [vmem:[#allocation8 + $0xd8] sm:$0xff]
    %v335 = vld [vmem:[#allocation8 + $0xe0] sm:$0xff]
    %v336 = vld [vmem:[#allocation8 + $0xe8] sm:$0xff]
    %v337 = vld [vmem:[#allocation8 + $0xf0] sm:$0xff]
    %v338 = vld [vmem:[#allocation8 + $0xf8] sm:$0xff]
    %v339 = vld [vmem:[#allocation8 + $0x100] sm:$0xff]
    %v340 = vld [vmem:[#allocation8 + $0x108] sm:$0x77]
    %v341 = vld [vmem:[#allocation8 + $0x110] sm:$0x77]
    %v342 = vld [vmem:[#allocation8 + $0x118] sm:$0x77]
    %v343 = vpack.c.bf16 %v305, %v305
    %v344 = vld [vmem:[#allocation10] sm:$0x77]
    %v345 = vld [vmem:[#allocation10 + $0x8] sm:$0x77]
    %v346 = vld [vmem:[#allocation10 + $0x10] sm:$0x77]
    %v350 = vcombine.high %v344, %v344
    %v351 = vcombine.high %v345, %v345
    %v352 = vcombine.high %v346, %v346
    %vm353 = vcmask 23552
    %v355 = vsel %vm353, %v306, 0
    %vm357 = vcmask 1042432
    %v358 = vsel %vm357, %v344, 0
    %v360 = vsel %vm357, %v350, 0
    %v362 = vsel %vm357, %v345, 0
    %v364 = vsel %vm357, %v351, 0
    %v366 = vsel %vm357, %v346, 0
    %v368 = vsel %vm357, %v352, 0
    %370 = vmatprep.subr.mxu0 %v360
    %371 = vmatpush1.msra.mxu0 %v358
    %372 = vmatprep.subr.mxu0 0.0
    %373 = vmatpush1.msra.mxu0 0.0
    %374 = vmatprep.subr.mxu0 0.0
    %375 = vmatpush1.msra.mxu0 0.0
    %376 = vmatprep.subr.mxu0 0.0
    %377 = vmatpush1.msra.mxu0 0.0
    %378 = vmatprep.subr.mxu0 0.0
    %379 = vmatpush1.msra.mxu0 0.0
    %380 = vmatprep.subr.mxu0 0.0
    %381 = vmatpush1.msra.mxu0 0.0
    %382 = vmatprep.subr.mxu0 0.0
    %383 = vmatpush1.msra.mxu0 0.0
    %384 = vmatprep.subr.mxu0 0.0
    %385 = vmatpush1.msra.mxu0 0.0
    %386 = vmatprep.subr.mxu0 0.0
    %387 = vmatpush1.msra.mxu0 0.0
    %388 = vmatprep.subr.mxu0 0.0
    %389 = vmatpush1.msra.mxu0 0.0
    %390 = vmatprep.subr.mxu0 0.0
    %391 = vmatpush1.msra.mxu0 0.0
    %392 = vmatprep.subr.mxu0 0.0
    %393 = vmatpush1.msra.mxu0 0.0
    %394 = vmatprep.subr.mxu0 0.0
    %395 = vmatpush1.msra.mxu0 0.0
    %396 = vmatprep.subr.mxu0 0.0
    %397 = vmatpush1.msra.mxu0 0.0
    %398 = vmatprep.subr.mxu0 0.0
    %399 = vmatpush1.msra.mxu0 0.0
    %400 = vmatprep.subr.mxu0 0.0
    %401 = vmatpush1.msra.mxu0 0.0
    %402 = vmatprep.subr.mxu0 0.0
    %403 = vmatpush1.msra.mxu0 0.0
    %404 = vmatprep.subr.mxu0 0.0
    %405 = vmatpush1.msra.mxu0 0.0
    %406 = vmatprep.subr.mxu0 0.0
    %407 = vmatpush1.msra.mxu0 0.0
    %408 = vmatprep.subr.mxu0 0.0
    %409 = vmatpush1.msra.mxu0 0.0
    %410 = vmatprep.subr.mxu0 0.0
    %411 = vmatpush1.msra.mxu0 0.0
    %412 = vmatprep.subr.mxu0 0.0
    %413 = vmatpush1.msra.mxu0 0.0
    %414 = vmatprep.subr.mxu0 0.0
    %415 = vmatpush1.msra.mxu0 0.0
    %416 = vmatprep.subr.mxu0 0.0
    %417 = vmatpush1.msra.mxu0 0.0
    %418 = vmatprep.subr.mxu0 0.0
    %419 = vmatpush1.msra.mxu0 0.0
    %420 = vmatprep.subr.mxu0 0.0
    %421 = vmatpush1.msra.mxu0 0.0
    %422 = vmatprep.subr.mxu0 0.0
    %423 = vmatpush1.msra.mxu0 0.0
    %424 = vmatprep.subr.mxu0 0.0
    %425 = vmatpush1.msra.mxu0 0.0
    %426 = vmatprep.subr.mxu0 0.0
    %427 = vmatpush1.msra.mxu0 0.0
    %428 = vmatprep.subr.mxu0 0.0
    %429 = vmatpush1.msra.mxu0 0.0
    %430 = vmatprep.subr.mxu0 0.0
    %431 = vmatpush1.msra.mxu0 0.0
    %432 = vmatprep.subr.mxu0 0.0
    %433 = vmatpush1.msra.mxu0 0.0
    %434 = vmatprep.mubr.f32.mxu0 0.0
    %435 = vmatmul.mubr.f32.gmra.mrb[0].mxu0 %v355
    %v436 = vpop.f32.mrb[0].mxu0
    %v437 = vadd.f32 0.0, %v436
    %v438 = vpop.f32.mrb[0].mxu0
    %v439 = vadd.f32 0.0, %v438
    %440 = vdwg.mxu0
    %441 = vmatprep.subr.mxu0 %v364
    %442 = vmatpush1.msra.mxu0 %v362
    %443 = vmatprep.subr.mxu0 0.0
    %444 = vmatpush1.msra.mxu0 0.0
    %445 = vmatprep.subr.mxu0 0.0
    %446 = vmatpush1.msra.mxu0 0.0
    %447 = vmatprep.subr.mxu0 0.0
    %448 = vmatpush1.msra.mxu0 0.0
    %449 = vmatprep.subr.mxu0 0.0
    %450 = vmatpush1.msra.mxu0 0.0
    %451 = vmatprep.subr.mxu0 0.0
    %452 = vmatpush1.msra.mxu0 0.0
    %453 = vmatprep.subr.mxu0 0.0
    %454 = vmatpush1.msra.mxu0 0.0
    %455 = vmatprep.subr.mxu0 0.0
    %456 = vmatpush1.msra.mxu0 0.0
    %457 = vmatprep.subr.mxu0 0.0
    %458 = vmatpush1.msra.mxu0 0.0
    %459 = vmatprep.subr.mxu0 0.0
    %460 = vmatpush1.msra.mxu0 0.0
    %461 = vmatprep.subr.mxu0 0.0
    %462 = vmatpush1.msra.mxu0 0.0
    %463 = vmatprep.subr.mxu0 0.0
    %464 = vmatpush1.msra.mxu0 0.0
    %465 = vmatprep.subr.mxu0 0.0
    %466 = vmatpush1.msra.mxu0 0.0
    %467 = vmatprep.subr.mxu0 0.0
    %468 = vmatpush1.msra.mxu0 0.0
    %469 = vmatprep.subr.mxu0 0.0
    %470 = vmatpush1.msra.mxu0 0.0
    %471 = vmatprep.subr.mxu0 0.0
    %472 = vmatpush1.msra.mxu0 0.0
    %473 = vmatprep.subr.mxu0 0.0
    %474 = vmatpush1.msra.mxu0 0.0
    %475 = vmatprep.subr.mxu0 0.0
    %476 = vmatpush1.msra.mxu0 0.0
    %477 = vmatprep.subr.mxu0 0.0
    %478 = vmatpush1.msra.mxu0 0.0
    %479 = vmatprep.subr.mxu0 0.0
    %480 = vmatpush1.msra.mxu0 0.0
    %481 = vmatprep.subr.mxu0 0.0
    %482 = vmatpush1.msra.mxu0 0.0
    %483 = vmatprep.subr.mxu0 0.0
    %484 = vmatpush1.msra.mxu0 0.0
    %485 = vmatprep.subr.mxu0 0.0
    %486 = vmatpush1.msra.mxu0 0.0
    %487 = vmatprep.subr.mxu0 0.0
    %488 = vmatpush1.msra.mxu0 0.0
    %489 = vmatprep.subr.mxu0 0.0
    %490 = vmatpush1.msra.mxu0 0.0
    %491 = vmatprep.subr.mxu0 0.0
    %492 = vmatpush1.msra.mxu0 0.0
    %493 = vmatprep.subr.mxu0 0.0
    %494 = vmatpush1.msra.mxu0 0.0
    %495 = vmatprep.subr.mxu0 0.0
    %496 = vmatpush1.msra.mxu0 0.0
    %497 = vmatprep.subr.mxu0 0.0
    %498 = vmatpush1.msra.mxu0 0.0
    %499 = vmatprep.subr.mxu0 0.0
    %500 = vmatpush1.msra.mxu0 0.0
    %501 = vmatprep.subr.mxu0 0.0
    %502 = vmatpush1.msra.mxu0 0.0
    %503 = vmatprep.subr.mxu0 0.0
    %504 = vmatpush1.msra.mxu0 0.0
    %505 = vmatprep.mubr.f32.mxu0 0.0
    %506 = vmatmul.mubr.f32.gmra.mrb[0].mxu0 %v355
    %v507 = vpop.f32.mrb[0].mxu0
    %v508 = vadd.f32 0.0, %v507
    %v509 = vpop.f32.mrb[0].mxu0
    %v510 = vadd.f32 0.0, %v509
    %511 = vdwg.mxu0
    %512 = vmatprep.subr.mxu0 %v368
    %513 = vmatpush1.msra.mxu0 %v366
    %514 = vmatprep.subr.mxu0 0.0
    %515 = vmatpush1.msra.mxu0 0.0
    %516 = vmatprep.subr.mxu0 0.0
    %517 = vmatpush1.msra.mxu0 0.0
    %518 = vmatprep.subr.mxu0 0.0
    %519 = vmatpush1.msra.mxu0 0.0
    %520 = vmatprep.subr.mxu0 0.0
    %521 = vmatpush1.msra.mxu0 0.0
    %522 = vmatprep.subr.mxu0 0.0
    %523 = vmatpush1.msra.mxu0 0.0
    %524 = vmatprep.subr.mxu0 0.0
    %525 = vmatpush1.msra.mxu0 0.0
    %526 = vmatprep.subr.mxu0 0.0
    %527 = vmatpush1.msra.mxu0 0.0
    %528 = vmatprep.subr.mxu0 0.0
    %529 = vmatpush1.msra.mxu0 0.0
    %530 = vmatprep.subr.mxu0 0.0
    %531 = vmatpush1.msra.mxu0 0.0
    %532 = vmatprep.subr.mxu0 0.0
    %533 = vmatpush1.msra.mxu0 0.0
    %534 = vmatprep.subr.mxu0 0.0
    %535 = vmatpush1.msra.mxu0 0.0
    %536 = vmatprep.subr.mxu0 0.0
    %537 = vmatpush1.msra.mxu0 0.0
    %538 = vmatprep.subr.mxu0 0.0
    %539 = vmatpush1.msra.mxu0 0.0
    %540 = vmatprep.subr.mxu0 0.0
    %541 = vmatpush1.msra.mxu0 0.0
    %542 = vmatprep.subr.mxu0 0.0
    %543 = vmatpush1.msra.mxu0 0.0
    %544 = vmatprep.subr.mxu0 0.0
    %545 = vmatpush1.msra.mxu0 0.0
    %546 = vmatprep.subr.mxu0 0.0
    %547 = vmatpush1.msra.mxu0 0.0
    %548 = vmatprep.subr.mxu0 0.0
    %549 = vmatpush1.msra.mxu0 0.0
    %550 = vmatprep.subr.mxu0 0.0
    %551 = vmatpush1.msra.mxu0 0.0
    %552 = vmatprep.subr.mxu0 0.0
    %553 = vmatpush1.msra.mxu0 0.0
    %554 = vmatprep.subr.mxu0 0.0
    %555 = vmatpush1.msra.mxu0 0.0
    %556 = vmatprep.subr.mxu0 0.0
    %557 = vmatpush1.msra.mxu0 0.0
    %558 = vmatprep.subr.mxu0 0.0
    %559 = vmatpush1.msra.mxu0 0.0
    %560 = vmatprep.subr.mxu0 0.0
    %561 = vmatpush1.msra.mxu0 0.0
    %562 = vmatprep.subr.mxu0 0.0
    %563 = vmatpush1.msra.mxu0 0.0
    %564 = vmatprep.subr.mxu0 0.0
    %565 = vmatpush1.msra.mxu0 0.0
    %566 = vmatprep.subr.mxu0 0.0
    %567 = vmatpush1.msra.mxu0 0.0
    %568 = vmatprep.subr.mxu0 0.0
    %569 = vmatpush1.msra.mxu0 0.0
    %570 = vmatprep.subr.mxu0 0.0
    %571 = vmatpush1.msra.mxu0 0.0
    %572 = vmatprep.subr.mxu0 0.0
    %573 = vmatpush1.msra.mxu0 0.0
    %574 = vmatprep.subr.mxu0 0.0
    %575 = vmatpush1.msra.mxu0 0.0
    %576 = vmatprep.mubr.f32.mxu0 0.0
    %577 = vmatmul.mubr.f32.gmra.mrb[0].mxu0 %v355
    %v578 = vpop.f32.mrb[0].mxu0
    %v579 = vadd.f32 0.0, %v578
    %v580 = vpop.f32.mrb[0].mxu0
    %v581 = vadd.f32 0.0, %v580
    %582 = vdwg.mxu0
    %v619 = vunpack.c.l.b16 %v307
    %v620 = vunpack.c.h.b16 %v307
    %v621 = vunpack.c.l.b16 %v308
    %v622 = vunpack.c.h.b16 %v308
    %v623 = vunpack.c.l.b16 %v309
    %v624 = vunpack.c.h.b16 %v309
    %v625 = vunpack.c.l.b16 %v310
    %v626 = vunpack.c.h.b16 %v310
    %v627 = vunpack.c.l.b16 %v311
    %v628 = vunpack.c.h.b16 %v311
    %v629 = vunpack.c.l.b16 %v312
    %v630 = vunpack.c.h.b16 %v312
    %v631 = vunpack.c.l.b16 %v313
    %v632 = vunpack.c.h.b16 %v313
    %v633 = vunpack.c.l.b16 %v314
    %v634 = vunpack.c.h.b16 %v314
    %v635 = vunpack.c.l.b16 %v315
    %v636 = vunpack.c.h.b16 %v315
    %v637 = vunpack.c.l.b16 %v316
    %v638 = vunpack.c.h.b16 %v316
    %v639 = vunpack.c.l.b16 %v317
    %v640 = vunpack.c.h.b16 %v317
    %v641 = vunpack.c.l.b16 %v318
    %v642 = vunpack.c.h.b16 %v318
    %v643 = vunpack.c.l.b16 %v319
    %v644 = vunpack.c.h.b16 %v319
    %v645 = vunpack.c.l.b16 %v320
    %v646 = vunpack.c.h.b16 %v320
    %v647 = vunpack.c.l.b16 %v321
    %v648 = vunpack.c.h.b16 %v321
    %v649 = vunpack.c.l.b16 %v322
    %v650 = vunpack.c.h.b16 %v322
    %v651 = vunpack.c.l.b16 %v323
    %v652 = vunpack.c.h.b16 %v323
    %v653 = vunpack.c.l.b16 %v324
    %v654 = vunpack.c.h.b16 %v324
    %v655 = vunpack.c.l.b16 %v325
    %v656 = vunpack.c.h.b16 %v325
    %v657 = vunpack.c.l.b16 %v326
    %v658 = vunpack.c.h.b16 %v326
    %v659 = vunpack.c.l.b16 %v327
    %v660 = vunpack.c.h.b16 %v327
    %v661 = vunpack.c.l.b16 %v328
    %v662 = vunpack.c.h.b16 %v328
    %v663 = vunpack.c.l.b16 %v329
    %v664 = vunpack.c.h.b16 %v329
    %v665 = vunpack.c.l.b16 %v330
    %v666 = vunpack.c.h.b16 %v330
    %v667 = vunpack.c.l.b16 %v331
    %v668 = vunpack.c.h.b16 %v331
    %v669 = vunpack.c.l.b16 %v332
    %v670 = vunpack.c.h.b16 %v332
    %v671 = vunpack.c.l.b16 %v333
    %v672 = vunpack.c.h.b16 %v333
    %v673 = vunpack.c.l.b16 %v334
    %v674 = vunpack.c.h.b16 %v334
    %v675 = vunpack.c.l.b16 %v335
    %v676 = vunpack.c.h.b16 %v335
    %v677 = vunpack.c.l.b16 %v336
    %v678 = vunpack.c.h.b16 %v336
    %v679 = vunpack.c.l.b16 %v337
    %v680 = vunpack.c.h.b16 %v337
    %v681 = vunpack.c.l.b16 %v338
    %v682 = vunpack.c.h.b16 %v338
    %v683 = vunpack.c.l.b16 %v339
    %v684 = vunpack.c.h.b16 %v339
    %v685 = vunpack.c.l.b16 %v340
    %v686 = vunpack.c.h.b16 %v340
    %v687 = vunpack.c.l.b16 %v341
    %v688 = vunpack.c.h.b16 %v341
    %v689 = vunpack.c.l.b16 %v342
    %v690 = vunpack.c.h.b16 %v342
    %v691 = vpack.c.b16 %v625, %v619
    %v692 = vpack.c.b16 %v626, %v620
    %v693 = vpack.c.b16 %v627, %v621
    %v694 = vpack.c.b16 %v628, %v622
    %v695 = vpack.c.b16 %v629, %v623
    %v696 = vpack.c.b16 %v630, %v624
    %v697 = vpack.c.b16 %v637, %v631
    %v698 = vpack.c.b16 %v638, %v632
    %v699 = vpack.c.b16 %v639, %v633
    %v700 = vpack.c.b16 %v640, %v634
    %v701 = vpack.c.b16 %v641, %v635
    %v702 = vpack.c.b16 %v642, %v636
    %v703 = vpack.c.b16 %v649, %v643
    %v704 = vpack.c.b16 %v650, %v644
    %v705 = vpack.c.b16 %v651, %v645
    %v706 = vpack.c.b16 %v652, %v646
    %v707 = vpack.c.b16 %v653, %v647
    %v708 = vpack.c.b16 %v654, %v648
    %v709 = vpack.c.b16 %v661, %v655
    %v710 = vpack.c.b16 %v662, %v656
    %v711 = vpack.c.b16 %v663, %v657
    %v712 = vpack.c.b16 %v664, %v658
    %v713 = vpack.c.b16 %v665, %v659
    %v714 = vpack.c.b16 %v666, %v660
    %v715 = vpack.c.b16 %v673, %v667
    %v716 = vpack.c.b16 %v674, %v668
    %v717 = vpack.c.b16 %v675, %v669
    %v718 = vpack.c.b16 %v676, %v670
    %v719 = vpack.c.b16 %v677, %v671
    %v720 = vpack.c.b16 %v678, %v672
    %v721 = vpack.c.b16 %v685, %v679
    %v722 = vpack.c.b16 %v686, %v680
    %v723 = vpack.c.b16 %v687, %v681
    %v724 = vpack.c.b16 %v688, %v682
    %v725 = vpack.c.b16 %v689, %v683
    %v726 = vpack.c.b16 %v690, %v684
    %vm757 = vcmask 760832
    %v759 = vsel %vm757, %v343, 0
    %vm761 = vcmask 1045504
    %vm762 = vcmask 1046528
    %v763 = vsel %vm761, 4294967295, 65535
    %v764 = vsel %vm762, %v763, 0
    %v766 = vand.u32 %v721, %v764
    %v769 = vand.u32 %v722, %v764
    %v772 = vand.u32 %v723, %v764
    %v775 = vand.u32 %v724, %v764
    %v778 = vand.u32 %v725, %v764
    %v781 = vand.u32 %v726, %v764
    %783 = vmatprep.subr.bf16.mxu0 %v692
    %784 = vmatpush1.bf16.msra.mxu0 %v691
    %785 = vmatprep.subr.bf16.mxu0 %v698
    %786 = vmatpush1.bf16.msra.mxu0 %v697
    %787 = vmatprep.subr.bf16.mxu0 %v704
    %788 = vmatpush1.bf16.msra.mxu0 %v703
    %789 = vmatprep.subr.bf16.mxu0 %v710
    %790 = vmatpush1.bf16.msra.mxu0 %v709
    %791 = vmatprep.subr.bf16.mxu0 %v716
    %792 = vmatpush1.bf16.msra.mxu0 %v715
    %793 = vmatprep.subr.bf16.mxu0 %v769
    %794 = vmatpush1.bf16.msra.mxu0 %v766
    %795 = vmatprep.subr.bf16.mxu0 0
    %796 = vmatpush1.bf16.msra.mxu0 0
    %797 = vmatprep.subr.bf16.mxu0 0
    %798 = vmatpush1.bf16.msra.mxu0 0
    %799 = vmatprep.subr.bf16.mxu0 0
    %800 = vmatpush1.bf16.msra.mxu0 0
    %801 = vmatprep.subr.bf16.mxu0 0
    %802 = vmatpush1.bf16.msra.mxu0 0
    %803 = vmatprep.subr.bf16.mxu0 0
    %804 = vmatpush1.bf16.msra.mxu0 0
    %805 = vmatprep.subr.bf16.mxu0 0
    %806 = vmatpush1.bf16.msra.mxu0 0
    %807 = vmatprep.subr.bf16.mxu0 0
    %808 = vmatpush1.bf16.msra.mxu0 0
    %809 = vmatprep.subr.bf16.mxu0 0
    %810 = vmatpush1.bf16.msra.mxu0 0
    %811 = vmatprep.subr.bf16.mxu0 0
    %812 = vmatpush1.bf16.msra.mxu0 0
    %813 = vmatprep.subr.bf16.mxu0 0
    %814 = vmatpush1.bf16.msra.mxu0 0
    %815 = vmatprep.mubr.bf16.mxu0 0
    %816 = vmatmul.mubr.bf16.gmra.mrb[0].mxu0 %v759
    %v817 = vpop.f32.mrb[0].mxu0
    %v818 = vadd.f32 %v437, %v817
    %v819 = vpop.f32.mrb[0].mxu0
    %v820 = vadd.f32 %v439, %v819
    %v821 = vpop.f32.mrb[0].mxu0
    %v822 = vpop.f32.mrb[0].mxu0
    %823 = vdwg.mxu0
    %824 = vmatprep.subr.bf16.mxu0 %v694
    %825 = vmatpush1.bf16.msra.mxu0 %v693
    %826 = vmatprep.subr.bf16.mxu0 %v700
    %827 = vmatpush1.bf16.msra.mxu0 %v699
    %828 = vmatprep.subr.bf16.mxu0 %v706
    %829 = vmatpush1.bf16.msra.mxu0 %v705
    %830 = vmatprep.subr.bf16.mxu0 %v712
    %831 = vmatpush1.bf16.msra.mxu0 %v711
    %832 = vmatprep.subr.bf16.mxu0 %v718
    %833 = vmatpush1.bf16.msra.mxu0 %v717
    %834 = vmatprep.subr.bf16.mxu0 %v775
    %835 = vmatpush1.bf16.msra.mxu0 %v772
    %836 = vmatprep.subr.bf16.mxu0 0
    %837 = vmatpush1.bf16.msra.mxu0 0
    %838 = vmatprep.subr.bf16.mxu0 0
    %839 = vmatpush1.bf16.msra.mxu0 0
    %840 = vmatprep.subr.bf16.mxu0 0
    %841 = vmatpush1.bf16.msra.mxu0 0
    %842 = vmatprep.subr.bf16.mxu0 0
    %843 = vmatpush1.bf16.msra.mxu0 0
    %844 = vmatprep.subr.bf16.mxu0 0
    %845 = vmatpush1.bf16.msra.mxu0 0
    %846 = vmatprep.subr.bf16.mxu0 0
    %847 = vmatpush1.bf16.msra.mxu0 0
    %848 = vmatprep.subr.bf16.mxu0 0
    %849 = vmatpush1.bf16.msra.mxu0 0
    %850 = vmatprep.subr.bf16.mxu0 0
    %851 = vmatpush1.bf16.msra.mxu0 0
    %852 = vmatprep.subr.bf16.mxu0 0
    %853 = vmatpush1.bf16.msra.mxu0 0
    %854 = vmatprep.subr.bf16.mxu0 0
    %855 = vmatpush1.bf16.msra.mxu0 0
    %856 = vmatprep.mubr.bf16.mxu0 0
    %857 = vmatmul.mubr.bf16.gmra.mrb[0].mxu0 %v759
    %v858 = vpop.f32.mrb[0].mxu0
    %v859 = vadd.f32 %v508, %v858
    %v860 = vpop.f32.mrb[0].mxu0
    %v861 = vadd.f32 %v510, %v860
    %v862 = vpop.f32.mrb[0].mxu0
    %v863 = vpop.f32.mrb[0].mxu0
    %864 = vdwg.mxu0
    %865 = vmatprep.subr.bf16.mxu0 %v696
    %866 = vmatpush1.bf16.msra.mxu0 %v695
    %867 = vmatprep.subr.bf16.mxu0 %v702
    %868 = vmatpush1.bf16.msra.mxu0 %v701
    %869 = vmatprep.subr.bf16.mxu0 %v708
    %870 = vmatpush1.bf16.msra.mxu0 %v707
    %871 = vmatprep.subr.bf16.mxu0 %v714
    %872 = vmatpush1.bf16.msra.mxu0 %v713
    %873 = vmatprep.subr.bf16.mxu0 %v720
    %874 = vmatpush1.bf16.msra.mxu0 %v719
    %875 = vmatprep.subr.bf16.mxu0 %v781
    %876 = vmatpush1.bf16.msra.mxu0 %v778
    %877 = vmatprep.subr.bf16.mxu0 0
    %878 = vmatpush1.bf16.msra.mxu0 0
    %879 = vmatprep.subr.bf16.mxu0 0
    %880 = vmatpush1.bf16.msra.mxu0 0
    %881 = vmatprep.subr.bf16.mxu0 0
    %882 = vmatpush1.bf16.msra.mxu0 0
    %883 = vmatprep.subr.bf16.mxu0 0
    %884 = vmatpush1.bf16.msra.mxu0 0
    %885 = vmatprep.subr.bf16.mxu0 0
    %886 = vmatpush1.bf16.msra.mxu0 0
    %887 = vmatprep.subr.bf16.mxu0 0
    %888 = vmatpush1.bf16.msra.mxu0 0
    %889 = vmatprep.subr.bf16.mxu0 0
    %890 = vmatpush1.bf16.msra.mxu0 0
    %891 = vmatprep.subr.bf16.mxu0 0
    %892 = vmatpush1.bf16.msra.mxu0 0
    %893 = vmatprep.subr.bf16.mxu0 0
    %894 = vmatpush1.bf16.msra.mxu0 0
    %895 = vmatprep.subr.bf16.mxu0 0
    %896 = vmatpush1.bf16.msra.mxu0 0
    %897 = vmatprep.mubr.bf16.mxu0 0
    %898 = vmatmul.mubr.bf16.gmra.mrb[0].mxu0 %v759
    %v899 = vpop.f32.mrb[0].mxu0
    %v900 = vadd.f32 %v579, %v899
    %v901 = vpop.f32.mrb[0].mxu0
    %v902 = vadd.f32 %v581, %v901
    %v903 = vpop.f32.mrb[0].mxu0
    %v904 = vpop.f32.mrb[0].mxu0
    %905 = vdwg.mxu0
    %v906 = vld [vmem:[#allocation11] sm:$0x3f]
    %v908 = vlaneseq
    %v909 = vshrl.u32 %v908, 7
    %v910 = vsub.s32 0, %v909
    %v911 = vrot.slane %v906, %v910
    %v912 = vlaneseq
    %v913 = vshrl.u32 %v912, 7
    %v914 = vsub.s32 1, %v913
    %v915 = vrot.slane %v906, %v914
    %v916 = vlaneseq
    %v917 = vshrl.u32 %v916, 7
    %v918 = vsub.s32 2, %v917
    %v919 = vrot.slane %v906, %v918
    %v920 = vlaneseq
    %v921 = vshrl.u32 %v920, 7
    %v922 = vsub.s32 3, %v921
    %v923 = vrot.slane %v906, %v922
    %v924 = vlaneseq
    %v925 = vshrl.u32 %v924, 7
    %v926 = vsub.s32 4, %v925
    %v927 = vrot.slane %v906, %v926
    %v928 = vlaneseq
    %v929 = vshrl.u32 %v928, 7
    %v930 = vsub.s32 5, %v929
    %v931 = vrot.slane %v906, %v930
    %v938 = vadd.f32 %v818, %v911
    %v939 = vadd.f32 %v820, %v915
    %v940 = vadd.f32 %v859, %v919
    %v941 = vadd.f32 %v861, %v923
    %v942 = vadd.f32 %v900, %v927
    %v943 = vadd.f32 %v902, %v931
    %vm944 = vcmp.gt.f32.partialorder %v938, 0.0
    %vm945 = vcmp.gt.f32.partialorder %v939, 0.0
    %vm946 = vcmp.gt.f32.partialorder %v940, 0.0
    %vm947 = vcmp.gt.f32.partialorder %v941, 0.0
    %vm948 = vcmp.gt.f32.partialorder %v942, 0.0
    %vm949 = vcmp.gt.f32.partialorder %v943, 0.0
    %v950 = vmul.f32 %v938, 0.2
    %v951 = vmul.f32 %v939, 0.2
    %v952 = vmul.f32 %v940, 0.2
    %v953 = vmul.f32 %v941, 0.2
    %v954 = vmul.f32 %v942, 0.2
    %v955 = vmul.f32 %v943, 0.2
    %v956 = vsel %vm944, %v938, %v950
    %v957 = vsel %vm945, %v939, %v951
    %v958 = vsel %vm946, %v940, %v952
    %v959 = vsel %vm947, %v941, %v953
    %v960 = vsel %vm948, %v942, %v954
    %v961 = vsel %vm949, %v943, %v955
    %v962 = vld [vmem:[#allocation13] sm:$0xff]
    %v963 = vld [vmem:[#allocation13 + $0x8] sm:$0xff]
    %v964 = vld [vmem:[#allocation13 + $0x10] sm:$0xff]
    %v965 = vld [vmem:[#allocation13 + $0x18] sm:$0xff]
    %v966 = vld [vmem:[#allocation13 + $0x20] sm:$0xff]
    %v967 = vld [vmem:[#allocation13 + $0x28] sm:$0xff]
    %v968 = vld [vmem:[#allocation13 + $0x30] sm:$0xff]
    %v969 = vld [vmem:[#allocation13 + $0x38] sm:$0xff]
    %v970 = vld [vmem:[#allocation13 + $0x40] sm:$0xff]
    %v971 = vld [vmem:[#allocation13 + $0x48] sm:$0xff]
    %v972 = vld [vmem:[#allocation13 + $0x50] sm:$0xff]
    %v973 = vld [vmem:[#allocation13 + $0x58] sm:$0xff]
    %v974 = vld [vmem:[#allocation13 + $0x60] sm:$0xff]
    %v975 = vld [vmem:[#allocation13 + $0x68] sm:$0xff]
    %v976 = vld [vmem:[#allocation13 + $0x70] sm:$0xff]
    %v977 = vld [vmem:[#allocation13 + $0x78] sm:$0xff]
    %v978 = vld [vmem:[#allocation13 + $0x80] sm:$0xff]
    %v979 = vld [vmem:[#allocation13 + $0x88] sm:$0xff]
    %v980 = vld [vmem:[#allocation13 + $0x90] sm:$0xff]
    %v981 = vld [vmem:[#allocation13 + $0x98] sm:$0xff]
    %v982 = vld [vmem:[#allocation13 + $0xa0] sm:$0xff]
    %v983 = vld [vmem:[#allocation13 + $0xa8] sm:$0xff]
    %v984 = vld [vmem:[#allocation13 + $0xb0] sm:$0xff]
    %v985 = vld [vmem:[#allocation13 + $0xb8] sm:$0xff]
    %v986 = vld [vmem:[#allocation13 + $0xc0] sm:$0xff]
    %v987 = vld [vmem:[#allocation13 + $0xc8] sm:$0xff]
    %v988 = vld [vmem:[#allocation13 + $0xd0] sm:$0xff]
    %v989 = vld [vmem:[#allocation13 + $0xd8] sm:$0xff]
    %v990 = vld [vmem:[#allocation13 + $0xe0] sm:$0xff]
    %v991 = vld [vmem:[#allocation13 + $0xe8] sm:$0xff]
    %v992 = vld [vmem:[#allocation13 + $0xf0] sm:$0xff]
    %v993 = vld [vmem:[#allocation13 + $0xf8] sm:$0xff]
    %v994 = vld [vmem:[#allocation13 + $0x100] sm:$0xff]
    %v995 = vld [vmem:[#allocation13 + $0x108] sm:$0xff]
    %v996 = vld [vmem:[#allocation13 + $0x110] sm:$0xff]
    %v997 = vld [vmem:[#allocation13 + $0x118] sm:$0xff]
    %v998 = vld [vmem:[#allocation13 + $0x120] sm:$0xff]
    %v999 = vld [vmem:[#allocation13 + $0x128] sm:$0xff]
    %v1000 = vld [vmem:[#allocation13 + $0x130] sm:$0xff]
    %v1001 = vld [vmem:[#allocation13 + $0x138] sm:$0xff]
    %v1002 = vld [vmem:[#allocation13 + $0x140] sm:$0xff]
    %v1003 = vld [vmem:[#allocation13 + $0x148] sm:$0xff]
    %v1004 = vld [vmem:[#allocation13 + $0x150] sm:$0xff]
    %v1005 = vld [vmem:[#allocation13 + $0x158] sm:$0xff]
    %v1006 = vld [vmem:[#allocation13 + $0x160] sm:$0xff]
    %v1007 = vld [vmem:[#allocation13 + $0x168] sm:$0xff]
    %v1008 = vld [vmem:[#allocation13 + $0x170] sm:$0xff]
    %v1009 = vld [vmem:[#allocation13 + $0x178] sm:$0xff]
    %v1010 = vld [vmem:[#allocation13 + $0x180] sm:$0xff]
    %v1011 = vld [vmem:[#allocation13 + $0x188] sm:$0xff]
    %v1012 = vld [vmem:[#allocation13 + $0x190] sm:$0xff]
    %v1013 = vld [vmem:[#allocation13 + $0x198] sm:$0xff]
    %v1014 = vld [vmem:[#allocation13 + $0x1a0] sm:$0xff]
    %v1015 = vld [vmem:[#allocation13 + $0x1a8] sm:$0xff]
    %v1016 = vld [vmem:[#allocation13 + $0x1b0] sm:$0xff]
    %v1017 = vld [vmem:[#allocation13 + $0x1b8] sm:$0xff]
    %v1018 = vld [vmem:[#allocation13 + $0x1c0] sm:$0xff]
    %v1019 = vld [vmem:[#allocation13 + $0x1c8] sm:$0xff]
    %v1020 = vld [vmem:[#allocation13 + $0x1d0] sm:$0xff]
    %v1021 = vld [vmem:[#allocation13 + $0x1d8] sm:$0xff]
    %v1022 = vld [vmem:[#allocation13 + $0x1e0] sm:$0xff]
    %v1023 = vld [vmem:[#allocation13 + $0x1e8] sm:$0xff]
    %v1024 = vld [vmem:[#allocation13 + $0x1f0] sm:$0xff]
    %v1025 = vld [vmem:[#allocation13 + $0x1f8] sm:$0xff]
    %v1026 = vld [vmem:[#allocation13 + $0x200] sm:$0xff]
    %v1027 = vld [vmem:[#allocation13 + $0x208] sm:$0xff]
    %v1028 = vld [vmem:[#allocation13 + $0x210] sm:$0xff]
    %v1029 = vld [vmem:[#allocation13 + $0x218] sm:$0xff]
    %v1030 = vld [vmem:[#allocation13 + $0x220] sm:$0xff]
    %v1031 = vld [vmem:[#allocation13 + $0x228] sm:$0xff]
    %v1032 = vld [vmem:[#allocation13 + $0x230] sm:$0xff]
    %v1033 = vld [vmem:[#allocation13 + $0x238] sm:$0xff]
    %v1034 = vld [vmem:[#allocation13 + $0x240] sm:$0xff]
    %v1035 = vld [vmem:[#allocation13 + $0x248] sm:$0xff]
    %v1036 = vld [vmem:[#allocation13 + $0x250] sm:$0xff]
    %v1037 = vld [vmem:[#allocation13 + $0x258] sm:$0xff]
    %v1038 = vld [vmem:[#allocation13 + $0x260] sm:$0xff]
    %v1039 = vld [vmem:[#allocation13 + $0x268] sm:$0xff]
    %v1040 = vld [vmem:[#allocation13 + $0x270] sm:$0xff]
    %v1041 = vld [vmem:[#allocation13 + $0x278] sm:$0xff]
    %v1042 = vld [vmem:[#allocation13 + $0x280] sm:$0xff]
    %v1043 = vld [vmem:[#allocation13 + $0x288] sm:$0xff]
    %v1044 = vld [vmem:[#allocation13 + $0x290] sm:$0xff]
    %v1045 = vld [vmem:[#allocation13 + $0x298] sm:$0xff]
    %v1046 = vld [vmem:[#allocation13 + $0x2a0] sm:$0xff]
    %v1047 = vld [vmem:[#allocation13 + $0x2a8] sm:$0xff]
    %v1048 = vld [vmem:[#allocation13 + $0x2b0] sm:$0xff]
    %v1049 = vld [vmem:[#allocation13 + $0x2b8] sm:$0xff]
    %v1050 = vld [vmem:[#allocation13 + $0x2c0] sm:$0xff]
    %v1051 = vld [vmem:[#allocation13 + $0x2c8] sm:$0xff]
    %v1052 = vld [vmem:[#allocation13 + $0x2d0] sm:$0xff]
    %v1053 = vld [vmem:[#allocation13 + $0x2d8] sm:$0xff]
    %v1054 = vld [vmem:[#allocation13 + $0x2e0] sm:$0xff]
    %v1055 = vld [vmem:[#allocation13 + $0x2e8] sm:$0xff]
    %v1056 = vld [vmem:[#allocation13 + $0x2f0] sm:$0xff]
    %v1057 = vld [vmem:[#allocation13 + $0x2f8] sm:$0xff]
    %v1058 = vld [vmem:[#allocation13 + $0x300] sm:$0xff]
    %v1059 = vld [vmem:[#allocation13 + $0x308] sm:$0xff]
    %v1060 = vld [vmem:[#allocation13 + $0x310] sm:$0xff]
    %v1061 = vld [vmem:[#allocation13 + $0x318] sm:$0xff]
    %v1062 = vld [vmem:[#allocation13 + $0x320] sm:$0xff]
    %v1063 = vld [vmem:[#allocation13 + $0x328] sm:$0xff]
    %v1064 = vld [vmem:[#allocation13 + $0x330] sm:$0xff]
    %v1065 = vld [vmem:[#allocation13 + $0x338] sm:$0xff]
    %v1066 = vld [vmem:[#allocation13 + $0x340] sm:$0xff]
    %v1067 = vld [vmem:[#allocation13 + $0x348] sm:$0xff]
    %v1068 = vld [vmem:[#allocation13 + $0x350] sm:$0xff]
    %v1069 = vld [vmem:[#allocation13 + $0x358] sm:$0xff]
    %v1070 = vld [vmem:[#allocation13 + $0x360] sm:$0xff]
    %v1071 = vld [vmem:[#allocation13 + $0x368] sm:$0xff]
    %v1072 = vld [vmem:[#allocation13 + $0x370] sm:$0xff]
    %v1073 = vld [vmem:[#allocation13 + $0x378] sm:$0xff]
    %v1074 = vld [vmem:[#allocation13 + $0x380] sm:$0xff]
    %v1075 = vld [vmem:[#allocation13 + $0x388] sm:$0xff]
    %v1076 = vld [vmem:[#allocation13 + $0x390] sm:$0xff]
    %v1077 = vld [vmem:[#allocation13 + $0x398] sm:$0xff]
    %v1078 = vld [vmem:[#allocation13 + $0x3a0] sm:$0xff]
    %v1079 = vld [vmem:[#allocation13 + $0x3a8] sm:$0xff]
    %v1080 = vld [vmem:[#allocation13 + $0x3b0] sm:$0xff]
    %v1081 = vld [vmem:[#allocation13 + $0x3b8] sm:$0xff]
    %v1082 = vld [vmem:[#allocation13 + $0x3c0] sm:$0xff]
    %v1083 = vld [vmem:[#allocation13 + $0x3c8] sm:$0xff]
    %v1084 = vld [vmem:[#allocation13 + $0x3d0] sm:$0xff]
    %v1085 = vld [vmem:[#allocation13 + $0x3d8] sm:$0xff]
    %v1086 = vld [vmem:[#allocation13 + $0x3e0] sm:$0xff]
    %v1087 = vld [vmem:[#allocation13 + $0x3e8] sm:$0xff]
    %v1088 = vld [vmem:[#allocation13 + $0x3f0] sm:$0xff]
    %v1089 = vld [vmem:[#allocation13 + $0x3f8] sm:$0xff]
    %v1090 = vld [vmem:[#allocation13 + $0x400] sm:$0xff]
    %v1091 = vld [vmem:[#allocation13 + $0x408] sm:$0xff]
    %v1092 = vld [vmem:[#allocation13 + $0x410] sm:$0xff]
    %v1093 = vld [vmem:[#allocation13 + $0x418] sm:$0xff]
    %v1094 = vld [vmem:[#allocation13 + $0x420] sm:$0xff]
    %v1095 = vld [vmem:[#allocation13 + $0x428] sm:$0xff]
    %v1096 = vld [vmem:[#allocation13 + $0x430] sm:$0xff]
    %v1097 = vld [vmem:[#allocation13 + $0x438] sm:$0xff]
    %v1098 = vld [vmem:[#allocation13 + $0x440] sm:$0xff]
    %v1099 = vld [vmem:[#allocation13 + $0x448] sm:$0xff]
    %v1100 = vld [vmem:[#allocation13 + $0x450] sm:$0xff]
    %v1101 = vld [vmem:[#allocation13 + $0x458] sm:$0xff]
    %v1102 = vld [vmem:[#allocation13 + $0x460] sm:$0xff]
    %v1103 = vld [vmem:[#allocation13 + $0x468] sm:$0xff]
    %v1104 = vld [vmem:[#allocation13 + $0x470] sm:$0xff]
    %v1105 = vld [vmem:[#allocation13 + $0x478] sm:$0xff]
    %v1106 = vld [vmem:[#allocation13 + $0x480] sm:$0xff]
    %v1107 = vld [vmem:[#allocation13 + $0x488] sm:$0xff]
    %v1108 = vld [vmem:[#allocation13 + $0x490] sm:$0xff]
    %v1109 = vld [vmem:[#allocation13 + $0x498] sm:$0xff]
    %v1110 = vld [vmem:[#allocation13 + $0x4a0] sm:$0xff]
    %v1111 = vld [vmem:[#allocation13 + $0x4a8] sm:$0xff]
    %v1112 = vld [vmem:[#allocation13 + $0x4b0] sm:$0xff]
    %v1113 = vld [vmem:[#allocation13 + $0x4b8] sm:$0xff]
    %v1114 = vld [vmem:[#allocation13 + $0x4c0] sm:$0xff]
    %v1115 = vld [vmem:[#allocation13 + $0x4c8] sm:$0xff]
    %v1116 = vld [vmem:[#allocation13 + $0x4d0] sm:$0xff]
    %v1117 = vld [vmem:[#allocation13 + $0x4d8] sm:$0xff]
    %v1118 = vld [vmem:[#allocation13 + $0x4e0] sm:$0xff]
    %v1119 = vld [vmem:[#allocation13 + $0x4e8] sm:$0xff]
    %v1120 = vld [vmem:[#allocation13 + $0x4f0] sm:$0xff]
    %v1121 = vld [vmem:[#allocation13 + $0x4f8] sm:$0xff]
    %v1122 = vld [vmem:[#allocation13 + $0x500] sm:$0xff]
    %v1123 = vld [vmem:[#allocation13 + $0x508] sm:$0xff]
    %v1124 = vld [vmem:[#allocation13 + $0x510] sm:$0xff]
    %v1125 = vld [vmem:[#allocation13 + $0x518] sm:$0xff]
    %v1126 = vld [vmem:[#allocation13 + $0x520] sm:$0xff]
    %v1127 = vld [vmem:[#allocation13 + $0x528] sm:$0xff]
    %v1128 = vld [vmem:[#allocation13 + $0x530] sm:$0xff]
    %v1129 = vld [vmem:[#allocation13 + $0x538] sm:$0xff]
    %v1130 = vld [vmem:[#allocation13 + $0x540] sm:$0xff]
    %v1131 = vld [vmem:[#allocation13 + $0x548] sm:$0xff]
    %v1132 = vld [vmem:[#allocation13 + $0x550] sm:$0xff]
    %v1133 = vld [vmem:[#allocation13 + $0x558] sm:$0xff]
    %v1134 = vld [vmem:[#allocation13 + $0x560] sm:$0xff]
    %v1135 = vld [vmem:[#allocation13 + $0x568] sm:$0xff]
    %v1136 = vld [vmem:[#allocation13 + $0x570] sm:$0xff]
    %v1137 = vld [vmem:[#allocation13 + $0x578] sm:$0xff]
    %v1138 = vld [vmem:[#allocation13 + $0x580] sm:$0xff]
    %v1139 = vld [vmem:[#allocation13 + $0x588] sm:$0xff]
    %v1140 = vld [vmem:[#allocation13 + $0x590] sm:$0xff]
    %v1141 = vld [vmem:[#allocation13 + $0x598] sm:$0xff]
    %v1142 = vld [vmem:[#allocation13 + $0x5a0] sm:$0xff]
    %v1143 = vld [vmem:[#allocation13 + $0x5a8] sm:$0xff]
    %v1144 = vld [vmem:[#allocation13 + $0x5b0] sm:$0xff]
    %v1145 = vld [vmem:[#allocation13 + $0x5b8] sm:$0xff]
    %v1146 = vld [vmem:[#allocation13 + $0x5c0] sm:$0xff]
    %v1147 = vld [vmem:[#allocation13 + $0x5c8] sm:$0xff]
    %v1148 = vld [vmem:[#allocation13 + $0x5d0] sm:$0xff]
    %v1149 = vld [vmem:[#allocation13 + $0x5d8] sm:$0xff]
    %v1150 = vld [vmem:[#allocation13 + $0x5e0] sm:$0xff]
    %v1151 = vld [vmem:[#allocation13 + $0x5e8] sm:$0xff]
    %v1152 = vld [vmem:[#allocation13 + $0x5f0] sm:$0xff]
    %v1153 = vld [vmem:[#allocation13 + $0x5f8] sm:$0xff]
    %v1154 = vld [vmem:[#allocation13 + $0x600] sm:$0xff]
    %v1155 = vld [vmem:[#allocation13 + $0x608] sm:$0xff]
    %v1156 = vld [vmem:[#allocation13 + $0x610] sm:$0xff]
    %v1157 = vld [vmem:[#allocation13 + $0x618] sm:$0xff]
    %v1158 = vld [vmem:[#allocation13 + $0x620] sm:$0xff]
    %v1159 = vld [vmem:[#allocation13 + $0x628] sm:$0xff]
    %v1160 = vld [vmem:[#allocation13 + $0x630] sm:$0xff]
    %v1161 = vld [vmem:[#allocation13 + $0x638] sm:$0xff]
    %v1162 = vld [vmem:[#allocation13 + $0x640] sm:$0xff]
    %v1163 = vld [vmem:[#allocation13 + $0x648] sm:$0xff]
    %v1164 = vld [vmem:[#allocation13 + $0x650] sm:$0xff]
    %v1165 = vld [vmem:[#allocation13 + $0x658] sm:$0xff]
    %v1166 = vld [vmem:[#allocation13 + $0x660] sm:$0xff]
    %v1167 = vld [vmem:[#allocation13 + $0x668] sm:$0xff]
    %v1168 = vld [vmem:[#allocation13 + $0x670] sm:$0xff]
    %v1169 = vld [vmem:[#allocation13 + $0x678] sm:$0xff]
    %v1170 = vld [vmem:[#allocation13 + $0x680] sm:$0xff]
    %v1171 = vld [vmem:[#allocation13 + $0x688] sm:$0xff]
    %v1172 = vld [vmem:[#allocation13 + $0x690] sm:$0xff]
    %v1173 = vld [vmem:[#allocation13 + $0x698] sm:$0xff]
    %v1174 = vld [vmem:[#allocation13 + $0x6a0] sm:$0xff]
    %v1175 = vld [vmem:[#allocation13 + $0x6a8] sm:$0xff]
    %v1176 = vld [vmem:[#allocation13 + $0x6b0] sm:$0xff]
    %v1177 = vld [vmem:[#allocation13 + $0x6b8] sm:$0xff]
    %v1178 = vld [vmem:[#allocation13 + $0x6c0] sm:$0xff]
    %v1179 = vld [vmem:[#allocation13 + $0x6c8] sm:$0xff]
    %v1180 = vld [vmem:[#allocation13 + $0x6d0] sm:$0xff]
    %v1181 = vld [vmem:[#allocation13 + $0x6d8] sm:$0xff]
    %v1182 = vld [vmem:[#allocation13 + $0x6e0] sm:$0xff]
    %v1183 = vld [vmem:[#allocation13 + $0x6e8] sm:$0xff]
    %v1184 = vld [vmem:[#allocation13 + $0x6f0] sm:$0xff]
    %v1185 = vld [vmem:[#allocation13 + $0x6f8] sm:$0xff]
    %v1186 = vld [vmem:[#allocation13 + $0x700] sm:$0xff]
    %v1187 = vld [vmem:[#allocation13 + $0x708] sm:$0xff]
    %v1188 = vld [vmem:[#allocation13 + $0x710] sm:$0xff]
    %v1189 = vld [vmem:[#allocation13 + $0x718] sm:$0xff]
    %v1190 = vld [vmem:[#allocation13 + $0x720] sm:$0xff]
    %v1191 = vld [vmem:[#allocation13 + $0x728] sm:$0xff]
    %v1192 = vld [vmem:[#allocation13 + $0x730] sm:$0xff]
    %v1193 = vld [vmem:[#allocation13 + $0x738] sm:$0xff]
    %v1194 = vld [vmem:[#allocation13 + $0x740] sm:$0xff]
    %v1195 = vld [vmem:[#allocation13 + $0x748] sm:$0xff]
    %v1196 = vld [vmem:[#allocation13 + $0x750] sm:$0xff]
    %v1197 = vld [vmem:[#allocation13 + $0x758] sm:$0xff]
    %v1198 = vld [vmem:[#allocation13 + $0x760] sm:$0xff]
    %v1199 = vld [vmem:[#allocation13 + $0x768] sm:$0xff]
    %v1200 = vld [vmem:[#allocation13 + $0x770] sm:$0xff]
    %v1201 = vld [vmem:[#allocation13 + $0x778] sm:$0xff]
    %v1202 = vld [vmem:[#allocation13 + $0x780] sm:$0xff]
    %v1203 = vld [vmem:[#allocation13 + $0x788] sm:$0xff]
    %v1204 = vld [vmem:[#allocation13 + $0x790] sm:$0xff]
    %v1205 = vld [vmem:[#allocation13 + $0x798] sm:$0xff]
    %v1206 = vld [vmem:[#allocation13 + $0x7a0] sm:$0xff]
    %v1207 = vld [vmem:[#allocation13 + $0x7a8] sm:$0xff]
    %v1208 = vld [vmem:[#allocation13 + $0x7b0] sm:$0xff]
    %v1209 = vld [vmem:[#allocation13 + $0x7b8] sm:$0xff]
    %v1210 = vld [vmem:[#allocation13 + $0x7c0] sm:$0xff]
    %v1211 = vld [vmem:[#allocation13 + $0x7c8] sm:$0xff]
    %v1212 = vld [vmem:[#allocation13 + $0x7d0] sm:$0xff]
    %v1213 = vld [vmem:[#allocation13 + $0x7d8] sm:$0xff]
    %v1214 = vld [vmem:[#allocation13 + $0x7e0] sm:$0xff]
    %v1215 = vld [vmem:[#allocation13 + $0x7e8] sm:$0xff]
    %v1216 = vld [vmem:[#allocation13 + $0x7f0] sm:$0xff]
    %v1217 = vld [vmem:[#allocation13 + $0x7f8] sm:$0xff]
    %v1218 = vld [vmem:[#allocation13 + $0x800] sm:$0xff]
    %v1219 = vld [vmem:[#allocation13 + $0x808] sm:$0xff]
    %v1220 = vld [vmem:[#allocation13 + $0x810] sm:$0xff]
    %v1221 = vld [vmem:[#allocation13 + $0x818] sm:$0xff]
    %v1222 = vld [vmem:[#allocation13 + $0x820] sm:$0xff]
    %v1223 = vld [vmem:[#allocation13 + $0x828] sm:$0xff]
    %v1224 = vld [vmem:[#allocation13 + $0x830] sm:$0xff]
    %v1225 = vld [vmem:[#allocation13 + $0x838] sm:$0xff]
    %v1226 = vld [vmem:[#allocation13 + $0x840] sm:$0xff]
    %v1227 = vld [vmem:[#allocation13 + $0x848] sm:$0xff]
    %v1228 = vld [vmem:[#allocation13 + $0x850] sm:$0xff]
    %v1229 = vld [vmem:[#allocation13 + $0x858] sm:$0xff]
    %v1230 = vld [vmem:[#allocation13 + $0x860] sm:$0xff]
    %v1231 = vld [vmem:[#allocation13 + $0x868] sm:$0xff]
    %v1232 = vld [vmem:[#allocation13 + $0x870] sm:$0xff]
    %v1233 = vld [vmem:[#allocation13 + $0x878] sm:$0xff]
    %v1234 = vld [vmem:[#allocation13 + $0x880] sm:$0xff]
    %v1235 = vld [vmem:[#allocation13 + $0x888] sm:$0xff]
    %v1236 = vld [vmem:[#allocation13 + $0x890] sm:$0xff]
    %v1237 = vld [vmem:[#allocation13 + $0x898] sm:$0xff]
    %v1238 = vld [vmem:[#allocation13 + $0x8a0] sm:$0xff]
    %v1239 = vld [vmem:[#allocation13 + $0x8a8] sm:$0xff]
    %v1240 = vld [vmem:[#allocation13 + $0x8b0] sm:$0xff]
    %v1241 = vld [vmem:[#allocation13 + $0x8b8] sm:$0xff]
    %v1242 = vld [vmem:[#allocation13 + $0x8c0] sm:$0xff]
    %v1243 = vld [vmem:[#allocation13 + $0x8c8] sm:$0xff]
    %v1244 = vld [vmem:[#allocation13 + $0x8d0] sm:$0xff]
    %v1245 = vld [vmem:[#allocation13 + $0x8d8] sm:$0xff]
    %v1246 = vld [vmem:[#allocation13 + $0x8e0] sm:$0xff]
    %v1247 = vld [vmem:[#allocation13 + $0x8e8] sm:$0xff]
    %v1248 = vld [vmem:[#allocation13 + $0x8f0] sm:$0xff]
    %v1249 = vld [vmem:[#allocation13 + $0x8f8] sm:$0xff]
    %v1250 = vpack.c.bf16 %v956, %v956
    %v1251 = vpack.c.bf16 %v957, %v957
    %v1252 = vpack.c.bf16 %v958, %v958
    %v1253 = vpack.c.bf16 %v959, %v959
    %v1254 = vpack.c.bf16 %v960, %v960
    %v1255 = vpack.c.bf16 %v961, %v961
    %v1256 = vld [vmem:[#allocation14] sm:$0x3f]
    %v1258 = vlaneseq
    %v1259 = vshrl.u32 %v1258, 7
    %v1260 = vsub.s32 0, %v1259
    %v1261 = vrot.slane %v1256, %v1260
    %v1262 = vlaneseq
    %v1263 = vshrl.u32 %v1262, 7
    %v1264 = vsub.s32 1, %v1263
    %v1265 = vrot.slane %v1256, %v1264
    %v1266 = vlaneseq
    %v1267 = vshrl.u32 %v1266, 7
    %v1268 = vsub.s32 2, %v1267
    %v1269 = vrot.slane %v1256, %v1268
    %v1270 = vlaneseq
    %v1271 = vshrl.u32 %v1270, 7
    %v1272 = vsub.s32 3, %v1271
    %v1273 = vrot.slane %v1256, %v1272
    %v1274 = vlaneseq
    %v1275 = vshrl.u32 %v1274, 7
    %v1276 = vsub.s32 4, %v1275
    %v1277 = vrot.slane %v1256, %v1276
    %v1278 = vlaneseq
    %v1279 = vshrl.u32 %v1278, 7
    %v1280 = vsub.s32 5, %v1279
    %v1281 = vrot.slane %v1256, %v1280
    %v1576 = vunpack.c.l.b16 %v962
    %v1577 = vunpack.c.h.b16 %v962
    %v1578 = vunpack.c.l.b16 %v963
    %v1579 = vunpack.c.h.b16 %v963
    %v1580 = vunpack.c.l.b16 %v964
    %v1581 = vunpack.c.h.b16 %v964
    %v1582 = vunpack.c.l.b16 %v965
    %v1583 = vunpack.c.h.b16 %v965
    %v1584 = vunpack.c.l.b16 %v966
    %v1585 = vunpack.c.h.b16 %v966
    %v1586 = vunpack.c.l.b16 %v967
    %v1587 = vunpack.c.h.b16 %v967
    %v1588 = vunpack.c.l.b16 %v968
    %v1589 = vunpack.c.h.b16 %v968
    %v1590 = vunpack.c.l.b16 %v969
    %v1591 = vunpack.c.h.b16 %v969
    %v1592 = vunpack.c.l.b16 %v970
    %v1593 = vunpack.c.h.b16 %v970
    %v1594 = vunpack.c.l.b16 %v971
    %v1595 = vunpack.c.h.b16 %v971
    %v1596 = vunpack.c.l.b16 %v972
    %v1597 = vunpack.c.h.b16 %v972
    %v1598 = vunpack.c.l.b16 %v973
    %v1599 = vunpack.c.h.b16 %v973
    %v1600 = vunpack.c.l.b16 %v974
    %v1601 = vunpack.c.h.b16 %v974
    %v1602 = vunpack.c.l.b16 %v975
    %v1603 = vunpack.c.h.b16 %v975
    %v1604 = vunpack.c.l.b16 %v976
    %v1605 = vunpack.c.h.b16 %v976
    %v1606 = vunpack.c.l.b16 %v977
    %v1607 = vunpack.c.h.b16 %v977
    %v1608 = vunpack.c.l.b16 %v978
    %v1609 = vunpack.c.h.b16 %v978
    %v1610 = vunpack.c.l.b16 %v979
    %v1611 = vunpack.c.h.b16 %v979
    %v1612 = vunpack.c.l.b16 %v980
    %v1613 = vunpack.c.h.b16 %v980
    %v1614 = vunpack.c.l.b16 %v981
    %v1615 = vunpack.c.h.b16 %v981
    %v1616 = vunpack.c.l.b16 %v982
    %v1617 = vunpack.c.h.b16 %v982
    %v1618 = vunpack.c.l.b16 %v983
    %v1619 = vunpack.c.h.b16 %v983
    %v1620 = vunpack.c.l.b16 %v984
    %v1621 = vunpack.c.h.b16 %v984
    %v1622 = vunpack.c.l.b16 %v985
    %v1623 = vunpack.c.h.b16 %v985
    %v1624 = vunpack.c.l.b16 %v986
    %v1625 = vunpack.c.h.b16 %v986
    %v1626 = vunpack.c.l.b16 %v987
    %v1627 = vunpack.c.h.b16 %v987
    %v1628 = vunpack.c.l.b16 %v988
    %v1629 = vunpack.c.h.b16 %v988
    %v1630 = vunpack.c.l.b16 %v989
    %v1631 = vunpack.c.h.b16 %v989
    %v1632 = vunpack.c.l.b16 %v990
    %v1633 = vunpack.c.h.b16 %v990
    %v1634 = vunpack.c.l.b16 %v991
    %v1635 = vunpack.c.h.b16 %v991
    %v1636 = vunpack.c.l.b16 %v992
    %v1637 = vunpack.c.h.b16 %v992
    %v1638 = vunpack.c.l.b16 %v993
    %v1639 = vunpack.c.h.b16 %v993
    %v1640 = vunpack.c.l.b16 %v994
    %v1641 = vunpack.c.h.b16 %v994
    %v1642 = vunpack.c.l.b16 %v995
    %v1643 = vunpack.c.h.b16 %v995
    %v1644 = vunpack.c.l.b16 %v996
    %v1645 = vunpack.c.h.b16 %v996
    %v1646 = vunpack.c.l.b16 %v997
    %v1647 = vunpack.c.h.b16 %v997
    %v1648 = vunpack.c.l.b16 %v998
    %v1649 = vunpack.c.h.b16 %v998
    %v1650 = vunpack.c.l.b16 %v999
    %v1651 = vunpack.c.h.b16 %v999
    %v1652 = vunpack.c.l.b16 %v1000
    %v1653 = vunpack.c.h.b16 %v1000
    %v1654 = vunpack.c.l.b16 %v1001
    %v1655 = vunpack.c.h.b16 %v1001
    %v1656 = vunpack.c.l.b16 %v1002
    %v1657 = vunpack.c.h.b16 %v1002
    %v1658 = vunpack.c.l.b16 %v1003
    %v1659 = vunpack.c.h.b16 %v1003
    %v1660 = vunpack.c.l.b16 %v1004
    %v1661 = vunpack.c.h.b16 %v1004
    %v1662 = vunpack.c.l.b16 %v1005
    %v1663 = vunpack.c.h.b16 %v1005
    %v1664 = vunpack.c.l.b16 %v1006
    %v1665 = vunpack.c.h.b16 %v1006
    %v1666 = vunpack.c.l.b16 %v1007
    %v1667 = vunpack.c.h.b16 %v1007
    %v1668 = vunpack.c.l.b16 %v1008
    %v1669 = vunpack.c.h.b16 %v1008
    %v1670 = vunpack.c.l.b16 %v1009
    %v1671 = vunpack.c.h.b16 %v1009
    %v1672 = vunpack.c.l.b16 %v1010
    %v1673 = vunpack.c.h.b16 %v1010
    %v1674 = vunpack.c.l.b16 %v1011
    %v1675 = vunpack.c.h.b16 %v1011
    %v1676 = vunpack.c.l.b16 %v1012
    %v1677 = vunpack.c.h.b16 %v1012
    %v1678 = vunpack.c.l.b16 %v1013
    %v1679 = vunpack.c.h.b16 %v1013
    %v1680 = vunpack.c.l.b16 %v1014
    %v1681 = vunpack.c.h.b16 %v1014
    %v1682 = vunpack.c.l.b16 %v1015
    %v1683 = vunpack.c.h.b16 %v1015
    %v1684 = vunpack.c.l.b16 %v1016
    %v1685 = vunpack.c.h.b16 %v1016
    %v1686 = vunpack.c.l.b16 %v1017
    %v1687 = vunpack.c.h.b16 %v1017
    %v1688 = vunpack.c.l.b16 %v1018
    %v1689 = vunpack.c.h.b16 %v1018
    %v1690 = vunpack.c.l.b16 %v1019
    %v1691 = vunpack.c.h.b16 %v1019
    %v1692 = vunpack.c.l.b16 %v1020
    %v1693 = vunpack.c.h.b16 %v1020
    %v1694 = vunpack.c.l.b16 %v1021
    %v1695 = vunpack.c.h.b16 %v1021
    %v1696 = vunpack.c.l.b16 %v1022
    %v1697 = vunpack.c.h.b16 %v1022
    %v1698 = vunpack.c.l.b16 %v1023
    %v1699 = vunpack.c.h.b16 %v1023
    %v1700 = vunpack.c.l.b16 %v1024
    %v1701 = vunpack.c.h.b16 %v1024
    %v1702 = vunpack.c.l.b16 %v1025
    %v1703 = vunpack.c.h.b16 %v1025
    %v1704 = vunpack.c.l.b16 %v1026
    %v1705 = vunpack.c.h.b16 %v1026
    %v1706 = vunpack.c.l.b16 %v1027
    %v1707 = vunpack.c.h.b16 %v1027
    %v1708 = vunpack.c.l.b16 %v1028
    %v1709 = vunpack.c.h.b16 %v1028
    %v1710 = vunpack.c.l.b16 %v1029
    %v1711 = vunpack.c.h.b16 %v1029
    %v1712 = vunpack.c.l.b16 %v1030
    %v1713 = vunpack.c.h.b16 %v1030
    %v1714 = vunpack.c.l.b16 %v1031
    %v1715 = vunpack.c.h.b16 %v1031
    %v1716 = vunpack.c.l.b16 %v1032
    %v1717 = vunpack.c.h.b16 %v1032
    %v1718 = vunpack.c.l.b16 %v1033
    %v1719 = vunpack.c.h.b16 %v1033
    %v1720 = vunpack.c.l.b16 %v1034
    %v1721 = vunpack.c.h.b16 %v1034
    %v1722 = vunpack.c.l.b16 %v1035
    %v1723 = vunpack.c.h.b16 %v1035
    %v1724 = vunpack.c.l.b16 %v1036
    %v1725 = vunpack.c.h.b16 %v1036
    %v1726 = vunpack.c.l.b16 %v1037
    %v1727 = vunpack.c.h.b16 %v1037
    %v1728 = vunpack.c.l.b16 %v1038
    %v1729 = vunpack.c.h.b16 %v1038
    %v1730 = vunpack.c.l.b16 %v1039
    %v1731 = vunpack.c.h.b16 %v1039
    %v1732 = vunpack.c.l.b16 %v1040
    %v1733 = vunpack.c.h.b16 %v1040
    %v1734 = vunpack.c.l.b16 %v1041
    %v1735 = vunpack.c.h.b16 %v1041
    %v1736 = vunpack.c.l.b16 %v1042
    %v1737 = vunpack.c.h.b16 %v1042
    %v1738 = vunpack.c.l.b16 %v1043
    %v1739 = vunpack.c.h.b16 %v1043
    %v1740 = vunpack.c.l.b16 %v1044
    %v1741 = vunpack.c.h.b16 %v1044
    %v1742 = vunpack.c.l.b16 %v1045
    %v1743 = vunpack.c.h.b16 %v1045
    %v1744 = vunpack.c.l.b16 %v1046
    %v1745 = vunpack.c.h.b16 %v1046
    %v1746 = vunpack.c.l.b16 %v1047
    %v1747 = vunpack.c.h.b16 %v1047
    %v1748 = vunpack.c.l.b16 %v1048
    %v1749 = vunpack.c.h.b16 %v1048
    %v1750 = vunpack.c.l.b16 %v1049
    %v1751 = vunpack.c.h.b16 %v1049
    %v1752 = vunpack.c.l.b16 %v1050
    %v1753 = vunpack.c.h.b16 %v1050
    %v1754 = vunpack.c.l.b16 %v1051
    %v1755 = vunpack.c.h.b16 %v1051
    %v1756 = vunpack.c.l.b16 %v1052
    %v1757 = vunpack.c.h.b16 %v1052
    %v1758 = vunpack.c.l.b16 %v1053
    %v1759 = vunpack.c.h.b16 %v1053
    %v1760 = vunpack.c.l.b16 %v1054
    %v1761 = vunpack.c.h.b16 %v1054
    %v1762 = vunpack.c.l.b16 %v1055
    %v1763 = vunpack.c.h.b16 %v1055
    %v1764 = vunpack.c.l.b16 %v1056
    %v1765 = vunpack.c.h.b16 %v1056
    %v1766 = vunpack.c.l.b16 %v1057
    %v1767 = vunpack.c.h.b16 %v1057
    %v1768 = vunpack.c.l.b16 %v1058
    %v1769 = vunpack.c.h.b16 %v1058
    %v1770 = vunpack.c.l.b16 %v1059
    %v1771 = vunpack.c.h.b16 %v1059
    %v1772 = vunpack.c.l.b16 %v1060
    %v1773 = vunpack.c.h.b16 %v1060
    %v1774 = vunpack.c.l.b16 %v1061
    %v1775 = vunpack.c.h.b16 %v1061
    %v1776 = vunpack.c.l.b16 %v1062
    %v1777 = vunpack.c.h.b16 %v1062
    %v1778 = vunpack.c.l.b16 %v1063
    %v1779 = vunpack.c.h.b16 %v1063
    %v1780 = vunpack.c.l.b16 %v1064
    %v1781 = vunpack.c.h.b16 %v1064
    %v1782 = vunpack.c.l.b16 %v1065
    %v1783 = vunpack.c.h.b16 %v1065
    %v1784 = vunpack.c.l.b16 %v1066
    %v1785 = vunpack.c.h.b16 %v1066
    %v1786 = vunpack.c.l.b16 %v1067
    %v1787 = vunpack.c.h.b16 %v1067
    %v1788 = vunpack.c.l.b16 %v1068
    %v1789 = vunpack.c.h.b16 %v1068
    %v1790 = vunpack.c.l.b16 %v1069
    %v1791 = vunpack.c.h.b16 %v1069
    %v1792 = vunpack.c.l.b16 %v1070
    %v1793 = vunpack.c.h.b16 %v1070
    %v1794 = vunpack.c.l.b16 %v1071
    %v1795 = vunpack.c.h.b16 %v1071
    %v1796 = vunpack.c.l.b16 %v1072
    %v1797 = vunpack.c.h.b16 %v1072
    %v1798 = vunpack.c.l.b16 %v1073
    %v1799 = vunpack.c.h.b16 %v1073
    %v1800 = vunpack.c.l.b16 %v1074
    %v1801 = vunpack.c.h.b16 %v1074
    %v1802 = vunpack.c.l.b16 %v1075
    %v1803 = vunpack.c.h.b16 %v1075
    %v1804 = vunpack.c.l.b16 %v1076
    %v1805 = vunpack.c.h.b16 %v1076
    %v1806 = vunpack.c.l.b16 %v1077
    %v1807 = vunpack.c.h.b16 %v1077
    %v1808 = vunpack.c.l.b16 %v1078
    %v1809 = vunpack.c.h.b16 %v1078
    %v1810 = vunpack.c.l.b16 %v1079
    %v1811 = vunpack.c.h.b16 %v1079
    %v1812 = vunpack.c.l.b16 %v1080
    %v1813 = vunpack.c.h.b16 %v1080
    %v1814 = vunpack.c.l.b16 %v1081
    %v1815 = vunpack.c.h.b16 %v1081
    %v1816 = vunpack.c.l.b16 %v1082
    %v1817 = vunpack.c.h.b16 %v1082
    %v1818 = vunpack.c.l.b16 %v1083
    %v1819 = vunpack.c.h.b16 %v1083
    %v1820 = vunpack.c.l.b16 %v1084
    %v1821 = vunpack.c.h.b16 %v1084
    %v1822 = vunpack.c.l.b16 %v1085
    %v1823 = vunpack.c.h.b16 %v1085
    %v1824 = vunpack.c.l.b16 %v1086
    %v1825 = vunpack.c.h.b16 %v1086
    %v1826 = vunpack.c.l.b16 %v1087
    %v1827 = vunpack.c.h.b16 %v1087
    %v1828 = vunpack.c.l.b16 %v1088
    %v1829 = vunpack.c.h.b16 %v1088
    %v1830 = vunpack.c.l.b16 %v1089
    %v1831 = vunpack.c.h.b16 %v1089
    %v1832 = vunpack.c.l.b16 %v1090
    %v1833 = vunpack.c.h.b16 %v1090
    %v1834 = vunpack.c.l.b16 %v1091
    %v1835 = vunpack.c.h.b16 %v1091
    %v1836 = vunpack.c.l.b16 %v1092
    %v1837 = vunpack.c.h.b16 %v1092
    %v1838 = vunpack.c.l.b16 %v1093
    %v1839 = vunpack.c.h.b16 %v1093
    %v1840 = vunpack.c.l.b16 %v1094
    %v1841 = vunpack.c.h.b16 %v1094
    %v1842 = vunpack.c.l.b16 %v1095
    %v1843 = vunpack.c.h.b16 %v1095
    %v1844 = vunpack.c.l.b16 %v1096
    %v1845 = vunpack.c.h.b16 %v1096
    %v1846 = vunpack.c.l.b16 %v1097
    %v1847 = vunpack.c.h.b16 %v1097
    %v1848 = vunpack.c.l.b16 %v1098
    %v1849 = vunpack.c.h.b16 %v1098
    %v1850 = vunpack.c.l.b16 %v1099
    %v1851 = vunpack.c.h.b16 %v1099
    %v1852 = vunpack.c.l.b16 %v1100
    %v1853 = vunpack.c.h.b16 %v1100
    %v1854 = vunpack.c.l.b16 %v1101
    %v1855 = vunpack.c.h.b16 %v1101
    %v1856 = vunpack.c.l.b16 %v1102
    %v1857 = vunpack.c.h.b16 %v1102
    %v1858 = vunpack.c.l.b16 %v1103
    %v1859 = vunpack.c.h.b16 %v1103
    %v1860 = vunpack.c.l.b16 %v1104
    %v1861 = vunpack.c.h.b16 %v1104
    %v1862 = vunpack.c.l.b16 %v1105
    %v1863 = vunpack.c.h.b16 %v1105
    %v1864 = vunpack.c.l.b16 %v1106
    %v1865 = vunpack.c.h.b16 %v1106
    %v1866 = vunpack.c.l.b16 %v1107
    %v1867 = vunpack.c.h.b16 %v1107
    %v1868 = vunpack.c.l.b16 %v1108
    %v1869 = vunpack.c.h.b16 %v1108
    %v1870 = vunpack.c.l.b16 %v1109
    %v1871 = vunpack.c.h.b16 %v1109
    %v1872 = vunpack.c.l.b16 %v1110
    %v1873 = vunpack.c.h.b16 %v1110
    %v1874 = vunpack.c.l.b16 %v1111
    %v1875 = vunpack.c.h.b16 %v1111
    %v1876 = vunpack.c.l.b16 %v1112
    %v1877 = vunpack.c.h.b16 %v1112
    %v1878 = vunpack.c.l.b16 %v1113
    %v1879 = vunpack.c.h.b16 %v1113
    %v1880 = vunpack.c.l.b16 %v1114
    %v1881 = vunpack.c.h.b16 %v1114
    %v1882 = vunpack.c.l.b16 %v1115
    %v1883 = vunpack.c.h.b16 %v1115
    %v1884 = vunpack.c.l.b16 %v1116
    %v1885 = vunpack.c.h.b16 %v1116
    %v1886 = vunpack.c.l.b16 %v1117
    %v1887 = vunpack.c.h.b16 %v1117
    %v1888 = vunpack.c.l.b16 %v1118
    %v1889 = vunpack.c.h.b16 %v1118
    %v1890 = vunpack.c.l.b16 %v1119
    %v1891 = vunpack.c.h.b16 %v1119
    %v1892 = vunpack.c.l.b16 %v1120
    %v1893 = vunpack.c.h.b16 %v1120
    %v1894 = vunpack.c.l.b16 %v1121
    %v1895 = vunpack.c.h.b16 %v1121
    %v1896 = vunpack.c.l.b16 %v1122
    %v1897 = vunpack.c.h.b16 %v1122
    %v1898 = vunpack.c.l.b16 %v1123
    %v1899 = vunpack.c.h.b16 %v1123
    %v1900 = vunpack.c.l.b16 %v1124
    %v1901 = vunpack.c.h.b16 %v1124
    %v1902 = vunpack.c.l.b16 %v1125
    %v1903 = vunpack.c.h.b16 %v1125
    %v1904 = vunpack.c.l.b16 %v1126
    %v1905 = vunpack.c.h.b16 %v1126
    %v1906 = vunpack.c.l.b16 %v1127
    %v1907 = vunpack.c.h.b16 %v1127
    %v1908 = vunpack.c.l.b16 %v1128
    %v1909 = vunpack.c.h.b16 %v1128
    %v1910 = vunpack.c.l.b16 %v1129
    %v1911 = vunpack.c.h.b16 %v1129
    %v1912 = vunpack.c.l.b16 %v1130
    %v1913 = vunpack.c.h.b16 %v1130
    %v1914 = vunpack.c.l.b16 %v1131
    %v1915 = vunpack.c.h.b16 %v1131
    %v1916 = vunpack.c.l.b16 %v1132
    %v1917 = vunpack.c.h.b16 %v1132
    %v1918 = vunpack.c.l.b16 %v1133
    %v1919 = vunpack.c.h.b16 %v1133
    %v1920 = vunpack.c.l.b16 %v1134
    %v1921 = vunpack.c.h.b16 %v1134
    %v1922 = vunpack.c.l.b16 %v1135
    %v1923 = vunpack.c.h.b16 %v1135
    %v1924 = vunpack.c.l.b16 %v1136
    %v1925 = vunpack.c.h.b16 %v1136
    %v1926 = vunpack.c.l.b16 %v1137
    %v1927 = vunpack.c.h.b16 %v1137
    %v1928 = vunpack.c.l.b16 %v1138
    %v1929 = vunpack.c.h.b16 %v1138
    %v1930 = vunpack.c.l.b16 %v1139
    %v1931 = vunpack.c.h.b16 %v1139
    %v1932 = vunpack.c.l.b16 %v1140
    %v1933 = vunpack.c.h.b16 %v1140
    %v1934 = vunpack.c.l.b16 %v1141
    %v1935 = vunpack.c.h.b16 %v1141
    %v1936 = vunpack.c.l.b16 %v1142
    %v1937 = vunpack.c.h.b16 %v1142
    %v1938 = vunpack.c.l.b16 %v1143
    %v1939 = vunpack.c.h.b16 %v1143
    %v1940 = vunpack.c.l.b16 %v1144
    %v1941 = vunpack.c.h.b16 %v1144
    %v1942 = vunpack.c.l.b16 %v1145
    %v1943 = vunpack.c.h.b16 %v1145
    %v1944 = vunpack.c.l.b16 %v1146
    %v1945 = vunpack.c.h.b16 %v1146
    %v1946 = vunpack.c.l.b16 %v1147
    %v1947 = vunpack.c.h.b16 %v1147
    %v1948 = vunpack.c.l.b16 %v1148
    %v1949 = vunpack.c.h.b16 %v1148
    %v1950 = vunpack.c.l.b16 %v1149
    %v1951 = vunpack.c.h.b16 %v1149
    %v1952 = vunpack.c.l.b16 %v1150
    %v1953 = vunpack.c.h.b16 %v1150
    %v1954 = vunpack.c.l.b16 %v1151
    %v1955 = vunpack.c.h.b16 %v1151
    %v1956 = vunpack.c.l.b16 %v1152
    %v1957 = vunpack.c.h.b16 %v1152
    %v1958 = vunpack.c.l.b16 %v1153
    %v1959 = vunpack.c.h.b16 %v1153
    %v1960 = vunpack.c.l.b16 %v1154
    %v1961 = vunpack.c.h.b16 %v1154
    %v1962 = vunpack.c.l.b16 %v1155
    %v1963 = vunpack.c.h.b16 %v1155
    %v1964 = vunpack.c.l.b16 %v1156
    %v1965 = vunpack.c.h.b16 %v1156
    %v1966 = vunpack.c.l.b16 %v1157
    %v1967 = vunpack.c.h.b16 %v1157
    %v1968 = vunpack.c.l.b16 %v1158
    %v1969 = vunpack.c.h.b16 %v1158
    %v1970 = vunpack.c.l.b16 %v1159
    %v1971 = vunpack.c.h.b16 %v1159
    %v1972 = vunpack.c.l.b16 %v1160
    %v1973 = vunpack.c.h.b16 %v1160
    %v1974 = vunpack.c.l.b16 %v1161
    %v1975 = vunpack.c.h.b16 %v1161
    %v1976 = vunpack.c.l.b16 %v1162
    %v1977 = vunpack.c.h.b16 %v1162
    %v1978 = vunpack.c.l.b16 %v1163
    %v1979 = vunpack.c.h.b16 %v1163
    %v1980 = vunpack.c.l.b16 %v1164
    %v1981 = vunpack.c.h.b16 %v1164
    %v1982 = vunpack.c.l.b16 %v1165
    %v1983 = vunpack.c.h.b16 %v1165
    %v1984 = vunpack.c.l.b16 %v1166
    %v1985 = vunpack.c.h.b16 %v1166
    %v1986 = vunpack.c.l.b16 %v1167
    %v1987 = vunpack.c.h.b16 %v1167
    %v1988 = vunpack.c.l.b16 %v1168
    %v1989 = vunpack.c.h.b16 %v1168
    %v1990 = vunpack.c.l.b16 %v1169
    %v1991 = vunpack.c.h.b16 %v1169
    %v1992 = vunpack.c.l.b16 %v1170
    %v1993 = vunpack.c.h.b16 %v1170
    %v1994 = vunpack.c.l.b16 %v1171
    %v1995 = vunpack.c.h.b16 %v1171
    %v1996 = vunpack.c.l.b16 %v1172
    %v1997 = vunpack.c.h.b16 %v1172
    %v1998 = vunpack.c.l.b16 %v1173
    %v1999 = vunpack.c.h.b16 %v1173
    %v2000 = vunpack.c.l.b16 %v1174
    %v2001 = vunpack.c.h.b16 %v1174
    %v2002 = vunpack.c.l.b16 %v1175
    %v2003 = vunpack.c.h.b16 %v1175
    %v2004 = vunpack.c.l.b16 %v1176
    %v2005 = vunpack.c.h.b16 %v1176
    %v2006 = vunpack.c.l.b16 %v1177
    %v2007 = vunpack.c.h.b16 %v1177
    %v2008 = vunpack.c.l.b16 %v1178
    %v2009 = vunpack.c.h.b16 %v1178
    %v2010 = vunpack.c.l.b16 %v1179
    %v2011 = vunpack.c.h.b16 %v1179
    %v2012 = vunpack.c.l.b16 %v1180
    %v2013 = vunpack.c.h.b16 %v1180
    %v2014 = vunpack.c.l.b16 %v1181
    %v2015 = vunpack.c.h.b16 %v1181
    %v2016 = vunpack.c.l.b16 %v1182
    %v2017 = vunpack.c.h.b16 %v1182
    %v2018 = vunpack.c.l.b16 %v1183
    %v2019 = vunpack.c.h.b16 %v1183
    %v2020 = vunpack.c.l.b16 %v1184
    %v2021 = vunpack.c.h.b16 %v1184
    %v2022 = vunpack.c.l.b16 %v1185
    %v2023 = vunpack.c.h.b16 %v1185
    %v2024 = vunpack.c.l.b16 %v1186
    %v2025 = vunpack.c.h.b16 %v1186
    %v2026 = vunpack.c.l.b16 %v1187
    %v2027 = vunpack.c.h.b16 %v1187
    %v2028 = vunpack.c.l.b16 %v1188
    %v2029 = vunpack.c.h.b16 %v1188
    %v2030 = vunpack.c.l.b16 %v1189
    %v2031 = vunpack.c.h.b16 %v1189
    %v2032 = vunpack.c.l.b16 %v1190
    %v2033 = vunpack.c.h.b16 %v1190
    %v2034 = vunpack.c.l.b16 %v1191
    %v2035 = vunpack.c.h.b16 %v1191
    %v2036 = vunpack.c.l.b16 %v1192
    %v2037 = vunpack.c.h.b16 %v1192
    %v2038 = vunpack.c.l.b16 %v1193
    %v2039 = vunpack.c.h.b16 %v1193
    %v2040 = vunpack.c.l.b16 %v1194
    %v2041 = vunpack.c.h.b16 %v1194
    %v2042 = vunpack.c.l.b16 %v1195
    %v2043 = vunpack.c.h.b16 %v1195
    %v2044 = vunpack.c.l.b16 %v1196
    %v2045 = vunpack.c.h.b16 %v1196
    %v2046 = vunpack.c.l.b16 %v1197
    %v2047 = vunpack.c.h.b16 %v1197
    %v2048 = vunpack.c.l.b16 %v1198
    %v2049 = vunpack.c.h.b16 %v1198
    %v2050 = vunpack.c.l.b16 %v1199
    %v2051 = vunpack.c.h.b16 %v1199
    %v2052 = vunpack.c.l.b16 %v1200
    %v2053 = vunpack.c.h.b16 %v1200
    %v2054 = vunpack.c.l.b16 %v1201
    %v2055 = vunpack.c.h.b16 %v1201
    %v2056 = vunpack.c.l.b16 %v1202
    %v2057 = vunpack.c.h.b16 %v1202
    %v2058 = vunpack.c.l.b16 %v1203
    %v2059 = vunpack.c.h.b16 %v1203
    %v2060 = vunpack.c.l.b16 %v1204
    %v2061 = vunpack.c.h.b16 %v1204
    %v2062 = vunpack.c.l.b16 %v1205
    %v2063 = vunpack.c.h.b16 %v1205
    %v2064 = vunpack.c.l.b16 %v1206
    %v2065 = vunpack.c.h.b16 %v1206
    %v2066 = vunpack.c.l.b16 %v1207
    %v2067 = vunpack.c.h.b16 %v1207
    %v2068 = vunpack.c.l.b16 %v1208
    %v2069 = vunpack.c.h.b16 %v1208
    %v2070 = vunpack.c.l.b16 %v1209
    %v2071 = vunpack.c.h.b16 %v1209
    %v2072 = vunpack.c.l.b16 %v1210
    %v2073 = vunpack.c.h.b16 %v1210
    %v2074 = vunpack.c.l.b16 %v1211
    %v2075 = vunpack.c.h.b16 %v1211
    %v2076 = vunpack.c.l.b16 %v1212
    %v2077 = vunpack.c.h.b16 %v1212
    %v2078 = vunpack.c.l.b16 %v1213
    %v2079 = vunpack.c.h.b16 %v1213
    %v2080 = vunpack.c.l.b16 %v1214
    %v2081 = vunpack.c.h.b16 %v1214
    %v2082 = vunpack.c.l.b16 %v1215
    %v2083 = vunpack.c.h.b16 %v1215
    %v2084 = vunpack.c.l.b16 %v1216
    %v2085 = vunpack.c.h.b16 %v1216
    %v2086 = vunpack.c.l.b16 %v1217
    %v2087 = vunpack.c.h.b16 %v1217
    %v2088 = vunpack.c.l.b16 %v1218
    %v2089 = vunpack.c.h.b16 %v1218
    %v2090 = vunpack.c.l.b16 %v1219
    %v2091 = vunpack.c.h.b16 %v1219
    %v2092 = vunpack.c.l.b16 %v1220
    %v2093 = vunpack.c.h.b16 %v1220
    %v2094 = vunpack.c.l.b16 %v1221
    %v2095 = vunpack.c.h.b16 %v1221
    %v2096 = vunpack.c.l.b16 %v1222
    %v2097 = vunpack.c.h.b16 %v1222
    %v2098 = vunpack.c.l.b16 %v1223
    %v2099 = vunpack.c.h.b16 %v1223
    %v2100 = vunpack.c.l.b16 %v1224
    %v2101 = vunpack.c.h.b16 %v1224
    %v2102 = vunpack.c.l.b16 %v1225
    %v2103 = vunpack.c.h.b16 %v1225
    %v2104 = vunpack.c.l.b16 %v1226
    %v2105 = vunpack.c.h.b16 %v1226
    %v2106 = vunpack.c.l.b16 %v1227
    %v2107 = vunpack.c.h.b16 %v1227
    %v2108 = vunpack.c.l.b16 %v1228
    %v2109 = vunpack.c.h.b16 %v1228
    %v2110 = vunpack.c.l.b16 %v1229
    %v2111 = vunpack.c.h.b16 %v1229
    %v2112 = vunpack.c.l.b16 %v1230
    %v2113 = vunpack.c.h.b16 %v1230
    %v2114 = vunpack.c.l.b16 %v1231
    %v2115 = vunpack.c.h.b16 %v1231
    %v2116 = vunpack.c.l.b16 %v1232
    %v2117 = vunpack.c.h.b16 %v1232
    %v2118 = vunpack.c.l.b16 %v1233
    %v2119 = vunpack.c.h.b16 %v1233
    %v2120 = vunpack.c.l.b16 %v1234
    %v2121 = vunpack.c.h.b16 %v1234
    %v2122 = vunpack.c.l.b16 %v1235
    %v2123 = vunpack.c.h.b16 %v1235
    %v2124 = vunpack.c.l.b16 %v1236
    %v2125 = vunpack.c.h.b16 %v1236
    %v2126 = vunpack.c.l.b16 %v1237
    %v2127 = vunpack.c.h.b16 %v1237
    %v2128 = vunpack.c.l.b16 %v1238
    %v2129 = vunpack.c.h.b16 %v1238
    %v2130 = vunpack.c.l.b16 %v1239
    %v2131 = vunpack.c.h.b16 %v1239
    %v2132 = vunpack.c.l.b16 %v1240
    %v2133 = vunpack.c.h.b16 %v1240
    %v2134 = vunpack.c.l.b16 %v1241
    %v2135 = vunpack.c.h.b16 %v1241
    %v2136 = vunpack.c.l.b16 %v1242
    %v2137 = vunpack.c.h.b16 %v1242
    %v2138 = vunpack.c.l.b16 %v1243
    %v2139 = vunpack.c.h.b16 %v1243
    %v2140 = vunpack.c.l.b16 %v1244
    %v2141 = vunpack.c.h.b16 %v1244
    %v2142 = vunpack.c.l.b16 %v1245
    %v2143 = vunpack.c.h.b16 %v1245
    %v2144 = vunpack.c.l.b16 %v1246
    %v2145 = vunpack.c.h.b16 %v1246
    %v2146 = vunpack.c.l.b16 %v1247
    %v2147 = vunpack.c.h.b16 %v1247
    %v2148 = vunpack.c.l.b16 %v1248
    %v2149 = vunpack.c.h.b16 %v1248
    %v2150 = vunpack.c.l.b16 %v1249
    %v2151 = vunpack.c.h.b16 %v1249
    %v2152 = vpack.c.b16 %v1582, %v1576
    %v2153 = vpack.c.b16 %v1583, %v1577
    %v2154 = vpack.c.b16 %v1584, %v1578
    %v2155 = vpack.c.b16 %v1585, %v1579
    %v2156 = vpack.c.b16 %v1586, %v1580
    %v2157 = vpack.c.b16 %v1587, %v1581
    %v2158 = vpack.c.b16 %v1594, %v1588
    %v2159 = vpack.c.b16 %v1595, %v1589
    %v2160 = vpack.c.b16 %v1596, %v1590
    %v2161 = vpack.c.b16 %v1597, %v1591
    %v2162 = vpack.c.b16 %v1598, %v1592
    %v2163 = vpack.c.b16 %v1599, %v1593
    %v2164 = vpack.c.b16 %v1606, %v1600
    %v2165 = vpack.c.b16 %v1607, %v1601
    %v2166 = vpack.c.b16 %v1608, %v1602
    %v2167 = vpack.c.b16 %v1609, %v1603
    %v2168 = vpack.c.b16 %v1610, %v1604
    %v2169 = vpack.c.b16 %v1611, %v1605
    %v2170 = vpack.c.b16 %v1618, %v1612
    %v2171 = vpack.c.b16 %v1619, %v1613
    %v2172 = vpack.c.b16 %v1620, %v1614
    %v2173 = vpack.c.b16 %v1621, %v1615
    %v2174 = vpack.c.b16 %v1622, %v1616
    %v2175 = vpack.c.b16 %v1623, %v1617
    %v2176 = vpack.c.b16 %v1630, %v1624
    %v2177 = vpack.c.b16 %v1631, %v1625
    %v2178 = vpack.c.b16 %v1632, %v1626
    %v2179 = vpack.c.b16 %v1633, %v1627
    %v2180 = vpack.c.b16 %v1634, %v1628
    %v2181 = vpack.c.b16 %v1635, %v1629
    %v2182 = vpack.c.b16 %v1642, %v1636
    %v2183 = vpack.c.b16 %v1643, %v1637
    %v2184 = vpack.c.b16 %v1644, %v1638
    %v2185 = vpack.c.b16 %v1645, %v1639
    %v2186 = vpack.c.b16 %v1646, %v1640
    %v2187 = vpack.c.b16 %v1647, %v1641
    %v2188 = vpack.c.b16 %v1654, %v1648
    %v2189 = vpack.c.b16 %v1655, %v1649
    %v2190 = vpack.c.b16 %v1656, %v1650
    %v2191 = vpack.c.b16 %v1657, %v1651
    %v2192 = vpack.c.b16 %v1658, %v1652
    %v2193 = vpack.c.b16 %v1659, %v1653
    %v2194 = vpack.c.b16 %v1666, %v1660
    %v2195 = vpack.c.b16 %v1667, %v1661
    %v2196 = vpack.c.b16 %v1668, %v1662
    %v2197 = vpack.c.b16 %v1669, %v1663
    %v2198 = vpack.c.b16 %v1670, %v1664
    %v2199 = vpack.c.b16 %v1671, %v1665
    %v2200 = vpack.c.b16 %v1678, %v1672
    %v2201 = vpack.c.b16 %v1679, %v1673
    %v2202 = vpack.c.b16 %v1680, %v1674
    %v2203 = vpack.c.b16 %v1681, %v1675
    %v2204 = vpack.c.b16 %v1682, %v1676
    %v2205 = vpack.c.b16 %v1683, %v1677
    %v2206 = vpack.c.b16 %v1690, %v1684
    %v2207 = vpack.c.b16 %v1691, %v1685
    %v2208 = vpack.c.b16 %v1692, %v1686
    %v2209 = vpack.c.b16 %v1693, %v1687
    %v2210 = vpack.c.b16 %v1694, %v1688
    %v2211 = vpack.c.b16 %v1695, %v1689
    %v2212 = vpack.c.b16 %v1702, %v1696
    %v2213 = vpack.c.b16 %v1703, %v1697
    %v2214 = vpack.c.b16 %v1704, %v1698
    %v2215 = vpack.c.b16 %v1705, %v1699
    %v2216 = vpack.c.b16 %v1706, %v1700
    %v2217 = vpack.c.b16 %v1707, %v1701
    %v2218 = vpack.c.b16 %v1714, %v1708
    %v2219 = vpack.c.b16 %v1715, %v1709
    %v2220 = vpack.c.b16 %v1716, %v1710
    %v2221 = vpack.c.b16 %v1717, %v1711
    %v2222 = vpack.c.b16 %v1718, %v1712
    %v2223 = vpack.c.b16 %v1719, %v1713
    %v2224 = vpack.c.b16 %v1726, %v1720
    %v2225 = vpack.c.b16 %v1727, %v1721
    %v2226 = vpack.c.b16 %v1728, %v1722
    %v2227 = vpack.c.b16 %v1729, %v1723
    %v2228 = vpack.c.b16 %v1730, %v1724
    %v2229 = vpack.c.b16 %v1731, %v1725
    %v2230 = vpack.c.b16 %v1738, %v1732
    %v2231 = vpack.c.b16 %v1739, %v1733
    %v2232 = vpack.c.b16 %v1740, %v1734
    %v2233 = vpack.c.b16 %v1741, %v1735
    %v2234 = vpack.c.b16 %v1742, %v1736
    %v2235 = vpack.c.b16 %v1743, %v1737
    %v2236 = vpack.c.b16 %v1750, %v1744
    %v2237 = vpack.c.b16 %v1751, %v1745
    %v2238 = vpack.c.b16 %v1752, %v1746
    %v2239 = vpack.c.b16 %v1753, %v1747
    %v2240 = vpack.c.b16 %v1754, %v1748
    %v2241 = vpack.c.b16 %v1755, %v1749
    %v2242 = vpack.c.b16 %v1762, %v1756
    %v2243 = vpack.c.b16 %v1763, %v1757
    %v2244 = vpack.c.b16 %v1764, %v1758
    %v2245 = vpack.c.b16 %v1765, %v1759
    %v2246 = vpack.c.b16 %v1766, %v1760
    %v2247 = vpack.c.b16 %v1767, %v1761
    %v2248 = vpack.c.b16 %v1774, %v1768
    %v2249 = vpack.c.b16 %v1775, %v1769
    %v2250 = vpack.c.b16 %v1776, %v1770
    %v2251 = vpack.c.b16 %v1777, %v1771
    %v2252 = vpack.c.b16 %v1778, %v1772
    %v2253 = vpack.c.b16 %v1779, %v1773
    %v2254 = vpack.c.b16 %v1786, %v1780
    %v2255 = vpack.c.b16 %v1787, %v1781
    %v2256 = vpack.c.b16 %v1788, %v1782
    %v2257 = vpack.c.b16 %v1789, %v1783
    %v2258 = vpack.c.b16 %v1790, %v1784
    %v2259 = vpack.c.b16 %v1791, %v1785
    %v2260 = vpack.c.b16 %v1798, %v1792
    %v2261 = vpack.c.b16 %v1799, %v1793
    %v2262 = vpack.c.b16 %v1800, %v1794
    %v2263 = vpack.c.b16 %v1801, %v1795
    %v2264 = vpack.c.b16 %v1802, %v1796
    %v2265 = vpack.c.b16 %v1803, %v1797
    %v2266 = vpack.c.b16 %v1810, %v1804
    %v2267 = vpack.c.b16 %v1811, %v1805
    %v2268 = vpack.c.b16 %v1812, %v1806
    %v2269 = vpack.c.b16 %v1813, %v1807
    %v2270 = vpack.c.b16 %v1814, %v1808
    %v2271 = vpack.c.b16 %v1815, %v1809
    %v2272 = vpack.c.b16 %v1822, %v1816
    %v2273 = vpack.c.b16 %v1823, %v1817
    %v2274 = vpack.c.b16 %v1824, %v1818
    %v2275 = vpack.c.b16 %v1825, %v1819
    %v2276 = vpack.c.b16 %v1826, %v1820
    %v2277 = vpack.c.b16 %v1827, %v1821
    %v2278 = vpack.c.b16 %v1834, %v1828
    %v2279 = vpack.c.b16 %v1835, %v1829
    %v2280 = vpack.c.b16 %v1836, %v1830
    %v2281 = vpack.c.b16 %v1837, %v1831
    %v2282 = vpack.c.b16 %v1838, %v1832
    %v2283 = vpack.c.b16 %v1839, %v1833
    %v2284 = vpack.c.b16 %v1846, %v1840
    %v2285 = vpack.c.b16 %v1847, %v1841
    %v2286 = vpack.c.b16 %v1848, %v1842
    %v2287 = vpack.c.b16 %v1849, %v1843
    %v2288 = vpack.c.b16 %v1850, %v1844
    %v2289 = vpack.c.b16 %v1851, %v1845
    %v2290 = vpack.c.b16 %v1858, %v1852
    %v2291 = vpack.c.b16 %v1859, %v1853
    %v2292 = vpack.c.b16 %v1860, %v1854
    %v2293 = vpack.c.b16 %v1861, %v1855
    %v2294 = vpack.c.b16 %v1862, %v1856
    %v2295 = vpack.c.b16 %v1863, %v1857
    %v2296 = vpack.c.b16 %v1870, %v1864
    %v2297 = vpack.c.b16 %v1871, %v1865
    %v2298 = vpack.c.b16 %v1872, %v1866
    %v2299 = vpack.c.b16 %v1873, %v1867
    %v2300 = vpack.c.b16 %v1874, %v1868
    %v2301 = vpack.c.b16 %v1875, %v1869
    %v2302 = vpack.c.b16 %v1882, %v1876
    %v2303 = vpack.c.b16 %v1883, %v1877
    %v2304 = vpack.c.b16 %v1884, %v1878
    %v2305 = vpack.c.b16 %v1885, %v1879
    %v2306 = vpack.c.b16 %v1886, %v1880
    %v2307 = vpack.c.b16 %v1887, %v1881
    %v2308 = vpack.c.b16 %v1894, %v1888
    %v2309 = vpack.c.b16 %v1895, %v1889
    %v2310 = vpack.c.b16 %v1896, %v1890
    %v2311 = vpack.c.b16 %v1897, %v1891
    %v2312 = vpack.c.b16 %v1898, %v1892
    %v2313 = vpack.c.b16 %v1899, %v1893
    %v2314 = vpack.c.b16 %v1906, %v1900
    %v2315 = vpack.c.b16 %v1907, %v1901
    %v2316 = vpack.c.b16 %v1908, %v1902
    %v2317 = vpack.c.b16 %v1909, %v1903
    %v2318 = vpack.c.b16 %v1910, %v1904
    %v2319 = vpack.c.b16 %v1911, %v1905
    %v2320 = vpack.c.b16 %v1918, %v1912
    %v2321 = vpack.c.b16 %v1919, %v1913
    %v2322 = vpack.c.b16 %v1920, %v1914
    %v2323 = vpack.c.b16 %v1921, %v1915
    %v2324 = vpack.c.b16 %v1922, %v1916
    %v2325 = vpack.c.b16 %v1923, %v1917
    %v2326 = vpack.c.b16 %v1930, %v1924
    %v2327 = vpack.c.b16 %v1931, %v1925
    %v2328 = vpack.c.b16 %v1932, %v1926
    %v2329 = vpack.c.b16 %v1933, %v1927
    %v2330 = vpack.c.b16 %v1934, %v1928
    %v2331 = vpack.c.b16 %v1935, %v1929
    %v2332 = vpack.c.b16 %v1942, %v1936
    %v2333 = vpack.c.b16 %v1943, %v1937
    %v2334 = vpack.c.b16 %v1944, %v1938
    %v2335 = vpack.c.b16 %v1945, %v1939
    %v2336 = vpack.c.b16 %v1946, %v1940
    %v2337 = vpack.c.b16 %v1947, %v1941
    %v2338 = vpack.c.b16 %v1954, %v1948
    %v2339 = vpack.c.b16 %v1955, %v1949
    %v2340 = vpack.c.b16 %v1956, %v1950
    %v2341 = vpack.c.b16 %v1957, %v1951
    %v2342 = vpack.c.b16 %v1958, %v1952
    %v2343 = vpack.c.b16 %v1959, %v1953
    %v2344 = vpack.c.b16 %v1966, %v1960
    %v2345 = vpack.c.b16 %v1967, %v1961
    %v2346 = vpack.c.b16 %v1968, %v1962
    %v2347 = vpack.c.b16 %v1969, %v1963
    %v2348 = vpack.c.b16 %v1970, %v1964
    %v2349 = vpack.c.b16 %v1971, %v1965
    %v2350 = vpack.c.b16 %v1978, %v1972
    %v2351 = vpack.c.b16 %v1979, %v1973
    %v2352 = vpack.c.b16 %v1980, %v1974
    %v2353 = vpack.c.b16 %v1981, %v1975
    %v2354 = vpack.c.b16 %v1982, %v1976
    %v2355 = vpack.c.b16 %v1983, %v1977
    %v2356 = vpack.c.b16 %v1990, %v1984
    %v2357 = vpack.c.b16 %v1991, %v1985
    %v2358 = vpack.c.b16 %v1992, %v1986
    %v2359 = vpack.c.b16 %v1993, %v1987
    %v2360 = vpack.c.b16 %v1994, %v1988
    %v2361 = vpack.c.b16 %v1995, %v1989
    %v2362 = vpack.c.b16 %v2002, %v1996
    %v2363 = vpack.c.b16 %v2003, %v1997
    %v2364 = vpack.c.b16 %v2004, %v1998
    %v2365 = vpack.c.b16 %v2005, %v1999
    %v2366 = vpack.c.b16 %v2006, %v2000
    %v2367 = vpack.c.b16 %v2007, %v2001
    %v2368 = vpack.c.b16 %v2014, %v2008
    %v2369 = vpack.c.b16 %v2015, %v2009
    %v2370 = vpack.c.b16 %v2016, %v2010
    %v2371 = vpack.c.b16 %v2017, %v2011
    %v2372 = vpack.c.b16 %v2018, %v2012
    %v2373 = vpack.c.b16 %v2019, %v2013
    %v2374 = vpack.c.b16 %v2026, %v2020
    %v2375 = vpack.c.b16 %v2027, %v2021
    %v2376 = vpack.c.b16 %v2028, %v2022
    %v2377 = vpack.c.b16 %v2029, %v2023
    %v2378 = vpack.c.b16 %v2030, %v2024
    %v2379 = vpack.c.b16 %v2031, %v2025
    %v2380 = vpack.c.b16 %v2038, %v2032
    %v2381 = vpack.c.b16 %v2039, %v2033
    %v2382 = vpack.c.b16 %v2040, %v2034
    %v2383 = vpack.c.b16 %v2041, %v2035
    %v2384 = vpack.c.b16 %v2042, %v2036
    %v2385 = vpack.c.b16 %v2043, %v2037
    %v2386 = vpack.c.b16 %v2050, %v2044
    %v2387 = vpack.c.b16 %v2051, %v2045
    %v2388 = vpack.c.b16 %v2052, %v2046
    %v2389 = vpack.c.b16 %v2053, %v2047
    %v2390 = vpack.c.b16 %v2054, %v2048
    %v2391 = vpack.c.b16 %v2055, %v2049
    %v2392 = vpack.c.b16 %v2062, %v2056
    %v2393 = vpack.c.b16 %v2063, %v2057
    %v2394 = vpack.c.b16 %v2064, %v2058
    %v2395 = vpack.c.b16 %v2065, %v2059
    %v2396 = vpack.c.b16 %v2066, %v2060
    %v2397 = vpack.c.b16 %v2067, %v2061
    %v2398 = vpack.c.b16 %v2074, %v2068
    %v2399 = vpack.c.b16 %v2075, %v2069
    %v2400 = vpack.c.b16 %v2076, %v2070
    %v2401 = vpack.c.b16 %v2077, %v2071
    %v2402 = vpack.c.b16 %v2078, %v2072
    %v2403 = vpack.c.b16 %v2079, %v2073
    %v2404 = vpack.c.b16 %v2086, %v2080
    %v2405 = vpack.c.b16 %v2087, %v2081
    %v2406 = vpack.c.b16 %v2088, %v2082
    %v2407 = vpack.c.b16 %v2089, %v2083
    %v2408 = vpack.c.b16 %v2090, %v2084
    %v2409 = vpack.c.b16 %v2091, %v2085
    %v2410 = vpack.c.b16 %v2098, %v2092
    %v2411 = vpack.c.b16 %v2099, %v2093
    %v2412 = vpack.c.b16 %v2100, %v2094
    %v2413 = vpack.c.b16 %v2101, %v2095
    %v2414 = vpack.c.b16 %v2102, %v2096
    %v2415 = vpack.c.b16 %v2103, %v2097
    %v2416 = vpack.c.b16 %v2110, %v2104
    %v2417 = vpack.c.b16 %v2111, %v2105
    %v2418 = vpack.c.b16 %v2112, %v2106
    %v2419 = vpack.c.b16 %v2113, %v2107
    %v2420 = vpack.c.b16 %v2114, %v2108
    %v2421 = vpack.c.b16 %v2115, %v2109
    %v2422 = vpack.c.b16 %v2122, %v2116
    %v2423 = vpack.c.b16 %v2123, %v2117
    %v2424 = vpack.c.b16 %v2124, %v2118
    %v2425 = vpack.c.b16 %v2125, %v2119
    %v2426 = vpack.c.b16 %v2126, %v2120
    %v2427 = vpack.c.b16 %v2127, %v2121
    %v2428 = vpack.c.b16 %v2134, %v2128
    %v2429 = vpack.c.b16 %v2135, %v2129
    %v2430 = vpack.c.b16 %v2136, %v2130
    %v2431 = vpack.c.b16 %v2137, %v2131
    %v2432 = vpack.c.b16 %v2138, %v2132
    %v2433 = vpack.c.b16 %v2139, %v2133
    %v2434 = vpack.c.b16 %v2146, %v2140
    %v2435 = vpack.c.b16 %v2147, %v2141
    %v2436 = vpack.c.b16 %v2148, %v2142
    %v2437 = vpack.c.b16 %v2149, %v2143
    %v2438 = vpack.c.b16 %v2150, %v2144
    %v2439 = vpack.c.b16 %v2151, %v2145
    %2728 = vmatprep.subr.bf16.mxu0 %v2153
    %2729 = vmatpush1.bf16.msra.mxu0 %v2152
    %2730 = vmatprep.subr.bf16.mxu0 %v2159
    %2731 = vmatpush1.bf16.msra.mxu0 %v2158
    %2732 = vmatprep.subr.bf16.mxu0 %v2165
    %2733 = vmatpush1.bf16.msra.mxu0 %v2164
    %2734 = vmatprep.subr.bf16.mxu0 %v2171
    %2735 = vmatpush1.bf16.msra.mxu0 %v2170
    %2736 = vmatprep.subr.bf16.mxu0 %v2177
    %2737 = vmatpush1.bf16.msra.mxu0 %v2176
    %2738 = vmatprep.subr.bf16.mxu0 %v2183
    %2739 = vmatpush1.bf16.msra.mxu0 %v2182
    %2740 = vmatprep.subr.bf16.mxu0 %v2189
    %2741 = vmatpush1.bf16.msra.mxu0 %v2188
    %2742 = vmatprep.subr.bf16.mxu0 %v2195
    %2743 = vmatpush1.bf16.msra.mxu0 %v2194
    %2744 = vmatprep.subr.bf16.mxu0 %v2201
    %2745 = vmatpush1.bf16.msra.mxu0 %v2200
    %2746 = vmatprep.subr.bf16.mxu0 %v2207
    %2747 = vmatpush1.bf16.msra.mxu0 %v2206
    %2748 = vmatprep.subr.bf16.mxu0 %v2213
    %2749 = vmatpush1.bf16.msra.mxu0 %v2212
    %2750 = vmatprep.subr.bf16.mxu0 %v2219
    %2751 = vmatpush1.bf16.msra.mxu0 %v2218
    %2752 = vmatprep.subr.bf16.mxu0 %v2225
    %2753 = vmatpush1.bf16.msra.mxu0 %v2224
    %2754 = vmatprep.subr.bf16.mxu0 %v2231
    %2755 = vmatpush1.bf16.msra.mxu0 %v2230
    %2756 = vmatprep.subr.bf16.mxu0 %v2237
    %2757 = vmatpush1.bf16.msra.mxu0 %v2236
    %2758 = vmatprep.subr.bf16.mxu0 %v2243
    %2759 = vmatpush1.bf16.msra.mxu0 %v2242
    %2760 = vmatprep.mubr.bf16.mxu0 %v1251
    %2761 = vmatmul.mubr.bf16.gmra.mrb[0].mxu0 %v1250
    %v2762 = vpop.f32.mrb[0].mxu0
    %v2763 = vadd.f32 %v1261, %v2762
    %v2764 = vpop.f32.mrb[0].mxu0
    %v2765 = vadd.f32 %v1265, %v2764
    %v2766 = vpop.f32.mrb[0].mxu0
    %v2767 = vpop.f32.mrb[0].mxu0
    %2768 = vdwg.mxu0
    %2769 = vmatprep.subr.bf16.mxu0 %v2249
    %2770 = vmatpush1.bf16.msra.mxu0 %v2248
    %2771 = vmatprep.subr.bf16.mxu0 %v2255
    %2772 = vmatpush1.bf16.msra.mxu0 %v2254
    %2773 = vmatprep.subr.bf16.mxu0 %v2261
    %2774 = vmatpush1.bf16.msra.mxu0 %v2260
    %2775 = vmatprep.subr.bf16.mxu0 %v2267
    %2776 = vmatpush1.bf16.msra.mxu0 %v2266
    %2777 = vmatprep.subr.bf16.mxu0 %v2273
    %2778 = vmatpush1.bf16.msra.mxu0 %v2272
    %2779 = vmatprep.subr.bf16.mxu0 %v2279
    %2780 = vmatpush1.bf16.msra.mxu0 %v2278
    %2781 = vmatprep.subr.bf16.mxu0 %v2285
    %2782 = vmatpush1.bf16.msra.mxu0 %v2284
    %2783 = vmatprep.subr.bf16.mxu0 %v2291
    %2784 = vmatpush1.bf16.msra.mxu0 %v2290
    %2785 = vmatprep.subr.bf16.mxu0 %v2297
    %2786 = vmatpush1.bf16.msra.mxu0 %v2296
    %2787 = vmatprep.subr.bf16.mxu0 %v2303
    %2788 = vmatpush1.bf16.msra.mxu0 %v2302
    %2789 = vmatprep.subr.bf16.mxu0 %v2309
    %2790 = vmatpush1.bf16.msra.mxu0 %v2308
    %2791 = vmatprep.subr.bf16.mxu0 %v2315
    %2792 = vmatpush1.bf16.msra.mxu0 %v2314
    %2793 = vmatprep.subr.bf16.mxu0 %v2321
    %2794 = vmatpush1.bf16.msra.mxu0 %v2320
    %2795 = vmatprep.subr.bf16.mxu0 %v2327
    %2796 = vmatpush1.bf16.msra.mxu0 %v2326
    %2797 = vmatprep.subr.bf16.mxu0 %v2333
    %2798 = vmatpush1.bf16.msra.mxu0 %v2332
    %2799 = vmatprep.subr.bf16.mxu0 %v2339
    %2800 = vmatpush1.bf16.msra.mxu0 %v2338
    %2801 = vmatprep.mubr.bf16.mxu0 %v1253
    %2802 = vmatmul.mubr.bf16.gmra.mrb[0].mxu0 %v1252
    %v2803 = vpop.f32.mrb[0].mxu0
    %v2804 = vadd.f32 %v2763, %v2803
    %v2805 = vpop.f32.mrb[0].mxu0
    %v2806 = vadd.f32 %v2765, %v2805
    %v2807 = vpop.f32.mrb[0].mxu0
    %v2808 = vpop.f32.mrb[0].mxu0
    %2809 = vdwg.mxu0
    %2810 = vmatprep.subr.bf16.mxu0 %v2345
    %2811 = vmatpush1.bf16.msra.mxu0 %v2344
    %2812 = vmatprep.subr.bf16.mxu0 %v2351
    %2813 = vmatpush1.bf16.msra.mxu0 %v2350
    %2814 = vmatprep.subr.bf16.mxu0 %v2357
    %2815 = vmatpush1.bf16.msra.mxu0 %v2356
    %2816 = vmatprep.subr.bf16.mxu0 %v2363
    %2817 = vmatpush1.bf16.msra.mxu0 %v2362
    %2818 = vmatprep.subr.bf16.mxu0 %v2369
    %2819 = vmatpush1.bf16.msra.mxu0 %v2368
    %2820 = vmatprep.subr.bf16.mxu0 %v2375
    %2821 = vmatpush1.bf16.msra.mxu0 %v2374
    %2822 = vmatprep.subr.bf16.mxu0 %v2381
    %2823 = vmatpush1.bf16.msra.mxu0 %v2380
    %2824 = vmatprep.subr.bf16.mxu0 %v2387
    %2825 = vmatpush1.bf16.msra.mxu0 %v2386
    %2826 = vmatprep.subr.bf16.mxu0 %v2393
    %2827 = vmatpush1.bf16.msra.mxu0 %v2392
    %2828 = vmatprep.subr.bf16.mxu0 %v2399
    %2829 = vmatpush1.bf16.msra.mxu0 %v2398
    %2830 = vmatprep.subr.bf16.mxu0 %v2405
    %2831 = vmatpush1.bf16.msra.mxu0 %v2404
    %2832 = vmatprep.subr.bf16.mxu0 %v2411
    %2833 = vmatpush1.bf16.msra.mxu0 %v2410
    %2834 = vmatprep.subr.bf16.mxu0 %v2417
    %2835 = vmatpush1.bf16.msra.mxu0 %v2416
    %2836 = vmatprep.subr.bf16.mxu0 %v2423
    %2837 = vmatpush1.bf16.msra.mxu0 %v2422
    %2838 = vmatprep.subr.bf16.mxu0 %v2429
    %2839 = vmatpush1.bf16.msra.mxu0 %v2428
    %2840 = vmatprep.subr.bf16.mxu0 %v2435
    %2841 = vmatpush1.bf16.msra.mxu0 %v2434
    %2842 = vmatprep.mubr.bf16.mxu0 %v1255
    %2843 = vmatmul.mubr.bf16.gmra.mrb[0].mxu0 %v1254
    %v2844 = vpop.f32.mrb[0].mxu0
    %v2845 = vadd.f32 %v2804, %v2844
    %v2846 = vpop.f32.mrb[0].mxu0
    %v2847 = vadd.f32 %v2806, %v2846
    %v2848 = vpop.f32.mrb[0].mxu0
    %v2849 = vpop.f32.mrb[0].mxu0
    %2850 = vdwg.mxu0
    %2851 = vmatprep.subr.bf16.mxu0 %v2155
    %2852 = vmatpush1.bf16.msra.mxu0 %v2154
    %2853 = vmatprep.subr.bf16.mxu0 %v2161
    %2854 = vmatpush1.bf16.msra.mxu0 %v2160
    %2855 = vmatprep.subr.bf16.mxu0 %v2167
    %2856 = vmatpush1.bf16.msra.mxu0 %v2166
    %2857 = vmatprep.subr.bf16.mxu0 %v2173
    %2858 = vmatpush1.bf16.msra.mxu0 %v2172
    %2859 = vmatprep.subr.bf16.mxu0 %v2179
    %2860 = vmatpush1.bf16.msra.mxu0 %v2178
    %2861 = vmatprep.subr.bf16.mxu0 %v2185
    %2862 = vmatpush1.bf16.msra.mxu0 %v2184
    %2863 = vmatprep.subr.bf16.mxu0 %v2191
    %2864 = vmatpush1.bf16.msra.mxu0 %v2190
    %2865 = vmatprep.subr.bf16.mxu0 %v2197
    %2866 = vmatpush1.bf16.msra.mxu0 %v2196
    %2867 = vmatprep.subr.bf16.mxu0 %v2203
    %2868 = vmatpush1.bf16.msra.mxu0 %v2202
    %2869 = vmatprep.subr.bf16.mxu0 %v2209
    %2870 = vmatpush1.bf16.msra.mxu0 %v2208
    %2871 = vmatprep.subr.bf16.mxu0 %v2215
    %2872 = vmatpush1.bf16.msra.mxu0 %v2214
    %2873 = vmatprep.subr.bf16.mxu0 %v2221
    %2874 = vmatpush1.bf16.msra.mxu0 %v2220
    %2875 = vmatprep.subr.bf16.mxu0 %v2227
    %2876 = vmatpush1.bf16.msra.mxu0 %v2226
    %2877 = vmatprep.subr.bf16.mxu0 %v2233
    %2878 = vmatpush1.bf16.msra.mxu0 %v2232
    %2879 = vmatprep.subr.bf16.mxu0 %v2239
    %2880 = vmatpush1.bf16.msra.mxu0 %v2238
    %2881 = vmatprep.subr.bf16.mxu0 %v2245
    %2882 = vmatpush1.bf16.msra.mxu0 %v2244
    %2883 = vmatprep.mubr.bf16.mxu0 %v1251
    %2884 = vmatmul.mubr.bf16.gmra.mrb[0].mxu0 %v1250
    %v2885 = vpop.f32.mrb[0].mxu0
    %v2886 = vadd.f32 %v1269, %v2885
    %v2887 = vpop.f32.mrb[0].mxu0
    %v2888 = vadd.f32 %v1273, %v2887
    %v2889 = vpop.f32.mrb[0].mxu0
    %v2890 = vpop.f32.mrb[0].mxu0
    %2891 = vdwg.mxu0
    %2892 = vmatprep.subr.bf16.mxu0 %v2251
    %2893 = vmatpush1.bf16.msra.mxu0 %v2250
    %2894 = vmatprep.subr.bf16.mxu0 %v2257
    %2895 = vmatpush1.bf16.msra.mxu0 %v2256
    %2896 = vmatprep.subr.bf16.mxu0 %v2263
    %2897 = vmatpush1.bf16.msra.mxu0 %v2262
    %2898 = vmatprep.subr.bf16.mxu0 %v2269
    %2899 = vmatpush1.bf16.msra.mxu0 %v2268
    %2900 = vmatprep.subr.bf16.mxu0 %v2275
    %2901 = vmatpush1.bf16.msra.mxu0 %v2274
    %2902 = vmatprep.subr.bf16.mxu0 %v2281
    %2903 = vmatpush1.bf16.msra.mxu0 %v2280
    %2904 = vmatprep.subr.bf16.mxu0 %v2287
    %2905 = vmatpush1.bf16.msra.mxu0 %v2286
    %2906 = vmatprep.subr.bf16.mxu0 %v2293
    %2907 = vmatpush1.bf16.msra.mxu0 %v2292
    %2908 = vmatprep.subr.bf16.mxu0 %v2299
    %2909 = vmatpush1.bf16.msra.mxu0 %v2298
    %2910 = vmatprep.subr.bf16.mxu0 %v2305
    %2911 = vmatpush1.bf16.msra.mxu0 %v2304
    %2912 = vmatprep.subr.bf16.mxu0 %v2311
    %2913 = vmatpush1.bf16.msra.mxu0 %v2310
    %2914 = vmatprep.subr.bf16.mxu0 %v2317
    %2915 = vmatpush1.bf16.msra.mxu0 %v2316
    %2916 = vmatprep.subr.bf16.mxu0 %v2323
    %2917 = vmatpush1.bf16.msra.mxu0 %v2322
    %2918 = vmatprep.subr.bf16.mxu0 %v2329
    %2919 = vmatpush1.bf16.msra.mxu0 %v2328
    %2920 = vmatprep.subr.bf16.mxu0 %v2335
    %2921 = vmatpush1.bf16.msra.mxu0 %v2334
    %2922 = vmatprep.subr.bf16.mxu0 %v2341
    %2923 = vmatpush1.bf16.msra.mxu0 %v2340
    %2924 = vmatprep.mubr.bf16.mxu0 %v1253
    %2925 = vmatmul.mubr.bf16.gmra.mrb[0].mxu0 %v1252
    %v2926 = vpop.f32.mrb[0].mxu0
    %v2927 = vadd.f32 %v2886, %v2926
    %v2928 = vpop.f32.mrb[0].mxu0
    %v2929 = vadd.f32 %v2888, %v2928
    %v2930 = vpop.f32.mrb[0].mxu0
    %v2931 = vpop.f32.mrb[0].mxu0
    %2932 = vdwg.mxu0
    %2933 = vmatprep.subr.bf16.mxu0 %v2347
    %2934 = vmatpush1.bf16.msra.mxu0 %v2346
    %2935 = vmatprep.subr.bf16.mxu0 %v2353
    %2936 = vmatpush1.bf16.msra.mxu0 %v2352
    %2937 = vmatprep.subr.bf16.mxu0 %v2359
    %2938 = vmatpush1.bf16.msra.mxu0 %v2358
    %2939 = vmatprep.subr.bf16.mxu0 %v2365
    %2940 = vmatpush1.bf16.msra.mxu0 %v2364
    %2941 = vmatprep.subr.bf16.mxu0 %v2371
    %2942 = vmatpush1.bf16.msra.mxu0 %v2370
    %2943 = vmatprep.subr.bf16.mxu0 %v2377
    %2944 = vmatpush1.bf16.msra.mxu0 %v2376
    %2945 = vmatprep.subr.bf16.mxu0 %v2383
    %2946 = vmatpush1.bf16.msra.mxu0 %v2382
    %2947 = vmatprep.subr.bf16.mxu0 %v2389
    %2948 = vmatpush1.bf16.msra.mxu0 %v2388
    %2949 = vmatprep.subr.bf16.mxu0 %v2395
    %2950 = vmatpush1.bf16.msra.mxu0 %v2394
    %2951 = vmatprep.subr.bf16.mxu0 %v2401
    %2952 = vmatpush1.bf16.msra.mxu0 %v2400
    %2953 = vmatprep.subr.bf16.mxu0 %v2407
    %2954 = vmatpush1.bf16.msra.mxu0 %v2406
    %2955 = vmatprep.subr.bf16.mxu0 %v2413
    %2956 = vmatpush1.bf16.msra.mxu0 %v2412
    %2957 = vmatprep.subr.bf16.mxu0 %v2419
    %2958 = vmatpush1.bf16.msra.mxu0 %v2418
    %2959 = vmatprep.subr.bf16.mxu0 %v2425
    %2960 = vmatpush1.bf16.msra.mxu0 %v2424
    %2961 = vmatprep.subr.bf16.mxu0 %v2431
    %2962 = vmatpush1.bf16.msra.mxu0 %v2430
    %2963 = vmatprep.subr.bf16.mxu0 %v2437
    %2964 = vmatpush1.bf16.msra.mxu0 %v2436
    %2965 = vmatprep.mubr.bf16.mxu0 %v1255
    %2966 = vmatmul.mubr.bf16.gmra.mrb[0].mxu0 %v1254
    %v2967 = vpop.f32.mrb[0].mxu0
    %v2968 = vadd.f32 %v2927, %v2967
    %v2969 = vpop.f32.mrb[0].mxu0
    %v2970 = vadd.f32 %v2929, %v2969
    %v2971 = vpop.f32.mrb[0].mxu0
    %v2972 = vpop.f32.mrb[0].mxu0
    %2973 = vdwg.mxu0
    %2974 = vmatprep.subr.bf16.mxu0 %v2157
    %2975 = vmatpush1.bf16.msra.mxu0 %v2156
    %2976 = vmatprep.subr.bf16.mxu0 %v2163
    %2977 = vmatpush1.bf16.msra.mxu0 %v2162
    %2978 = vmatprep.subr.bf16.mxu0 %v2169
    %2979 = vmatpush1.bf16.msra.mxu0 %v2168
    %2980 = vmatprep.subr.bf16.mxu0 %v2175
    %2981 = vmatpush1.bf16.msra.mxu0 %v2174
    %2982 = vmatprep.subr.bf16.mxu0 %v2181
    %2983 = vmatpush1.bf16.msra.mxu0 %v2180
    %2984 = vmatprep.subr.bf16.mxu0 %v2187
    %2985 = vmatpush1.bf16.msra.mxu0 %v2186
    %2986 = vmatprep.subr.bf16.mxu0 %v2193
    %2987 = vmatpush1.bf16.msra.mxu0 %v2192
    %2988 = vmatprep.subr.bf16.mxu0 %v2199
    %2989 = vmatpush1.bf16.msra.mxu0 %v2198
    %2990 = vmatprep.subr.bf16.mxu0 %v2205
    %2991 = vmatpush1.bf16.msra.mxu0 %v2204
    %2992 = vmatprep.subr.bf16.mxu0 %v2211
    %2993 = vmatpush1.bf16.msra.mxu0 %v2210
    %2994 = vmatprep.subr.bf16.mxu0 %v2217
    %2995 = vmatpush1.bf16.msra.mxu0 %v2216
    %2996 = vmatprep.subr.bf16.mxu0 %v2223
    %2997 = vmatpush1.bf16.msra.mxu0 %v2222
    %2998 = vmatprep.subr.bf16.mxu0 %v2229
    %2999 = vmatpush1.bf16.msra.mxu0 %v2228
    %3000 = vmatprep.subr.bf16.mxu0 %v2235
    %3001 = vmatpush1.bf16.msra.mxu0 %v2234
    %3002 = vmatprep.subr.bf16.mxu0 %v2241
    %3003 = vmatpush1.bf16.msra.mxu0 %v2240
    %3004 = vmatprep.subr.bf16.mxu0 %v2247
    %3005 = vmatpush1.bf16.msra.mxu0 %v2246
    %3006 = vmatprep.mubr.bf16.mxu0 %v1251
    %3007 = vmatmul.mubr.bf16.gmra.mrb[0].mxu0 %v1250
    %v3008 = vpop.f32.mrb[0].mxu0
    %v3009 = vadd.f32 %v1277, %v3008
    %v3010 = vpop.f32.mrb[0].mxu0
    %v3011 = vadd.f32 %v1281, %v3010
    %v3012 = vpop.f32.mrb[0].mxu0
    %v3013 = vpop.f32.mrb[0].mxu0
    %3014 = vdwg.mxu0
    %3015 = vmatprep.subr.bf16.mxu0 %v2253
    %3016 = vmatpush1.bf16.msra.mxu0 %v2252
    %3017 = vmatprep.subr.bf16.mxu0 %v2259
    %3018 = vmatpush1.bf16.msra.mxu0 %v2258
    %3019 = vmatprep.subr.bf16.mxu0 %v2265
    %3020 = vmatpush1.bf16.msra.mxu0 %v2264
    %3021 = vmatprep.subr.bf16.mxu0 %v2271
    %3022 = vmatpush1.bf16.msra.mxu0 %v2270
    %3023 = vmatprep.subr.bf16.mxu0 %v2277
    %3024 = vmatpush1.bf16.msra.mxu0 %v2276
    %3025 = vmatprep.subr.bf16.mxu0 %v2283
    %3026 = vmatpush1.bf16.msra.mxu0 %v2282
    %3027 = vmatprep.subr.bf16.mxu0 %v2289
    %3028 = vmatpush1.bf16.msra.mxu0 %v2288
    %3029 = vmatprep.subr.bf16.mxu0 %v2295
    %3030 = vmatpush1.bf16.msra.mxu0 %v2294
    %3031 = vmatprep.subr.bf16.mxu0 %v2301
    %3032 = vmatpush1.bf16.msra.mxu0 %v2300
    %3033 = vmatprep.subr.bf16.mxu0 %v2307
    %3034 = vmatpush1.bf16.msra.mxu0 %v2306
    %3035 = vmatprep.subr.bf16.mxu0 %v2313
    %3036 = vmatpush1.bf16.msra.mxu0 %v2312
    %3037 = vmatprep.subr.bf16.mxu0 %v2319
    %3038 = vmatpush1.bf16.msra.mxu0 %v2318
    %3039 = vmatprep.subr.bf16.mxu0 %v2325
    %3040 = vmatpush1.bf16.msra.mxu0 %v2324
    %3041 = vmatprep.subr.bf16.mxu0 %v2331
    %3042 = vmatpush1.bf16.msra.mxu0 %v2330
    %3043 = vmatprep.subr.bf16.mxu0 %v2337
    %3044 = vmatpush1.bf16.msra.mxu0 %v2336
    %3045 = vmatprep.subr.bf16.mxu0 %v2343
    %3046 = vmatpush1.bf16.msra.mxu0 %v2342
    %3047 = vmatprep.mubr.bf16.mxu0 %v1253
    %3048 = vmatmul.mubr.bf16.gmra.mrb[0].mxu0 %v1252
    %v3049 = vpop.f32.mrb[0].mxu0
    %v3050 = vadd.f32 %v3009, %v3049
    %v3051 = vpop.f32.mrb[0].mxu0
    %v3052 = vadd.f32 %v3011, %v3051
    %v3053 = vpop.f32.mrb[0].mxu0
    %v3054 = vpop.f32.mrb[0].mxu0
    %3055 = vdwg.mxu0
    %3056 = vmatprep.subr.bf16.mxu0 %v2349
    %3057 = vmatpush1.bf16.msra.mxu0 %v2348
    %3058 = vmatprep.subr.bf16.mxu0 %v2355
    %3059 = vmatpush1.bf16.msra.mxu0 %v2354
    %3060 = vmatprep.subr.bf16.mxu0 %v2361
    %3061 = vmatpush1.bf16.msra.mxu0 %v2360
    %3062 = vmatprep.subr.bf16.mxu0 %v2367
    %3063 = vmatpush1.bf16.msra.mxu0 %v2366
    %3064 = vmatprep.subr.bf16.mxu0 %v2373
    %3065 = vmatpush1.bf16.msra.mxu0 %v2372
    %3066 = vmatprep.subr.bf16.mxu0 %v2379
    %3067 = vmatpush1.bf16.msra.mxu0 %v2378
    %3068 = vmatprep.subr.bf16.mxu0 %v2385
    %3069 = vmatpush1.bf16.msra.mxu0 %v2384
    %3070 = vmatprep.subr.bf16.mxu0 %v2391
    %3071 = vmatpush1.bf16.msra.mxu0 %v2390
    %3072 = vmatprep.subr.bf16.mxu0 %v2397
    %3073 = vmatpush1.bf16.msra.mxu0 %v2396
    %3074 = vmatprep.subr.bf16.mxu0 %v2403
    %3075 = vmatpush1.bf16.msra.mxu0 %v2402
    %3076 = vmatprep.subr.bf16.mxu0 %v2409
    %3077 = vmatpush1.bf16.msra.mxu0 %v2408
    %3078 = vmatprep.subr.bf16.mxu0 %v2415
    %3079 = vmatpush1.bf16.msra.mxu0 %v2414
    %3080 = vmatprep.subr.bf16.mxu0 %v2421
    %3081 = vmatpush1.bf16.msra.mxu0 %v2420
    %3082 = vmatprep.subr.bf16.mxu0 %v2427
    %3083 = vmatpush1.bf16.msra.mxu0 %v2426
    %3084 = vmatprep.subr.bf16.mxu0 %v2433
    %3085 = vmatpush1.bf16.msra.mxu0 %v2432
    %3086 = vmatprep.subr.bf16.mxu0 %v2439
    %3087 = vmatpush1.bf16.msra.mxu0 %v2438
    %3088 = vmatprep.mubr.bf16.mxu0 %v1255
    %3089 = vmatmul.mubr.bf16.gmra.mrb[0].mxu0 %v1254
    %v3090 = vpop.f32.mrb[0].mxu0
    %v3091 = vadd.f32 %v3050, %v3090
    %v3092 = vpop.f32.mrb[0].mxu0
    %v3093 = vadd.f32 %v3052, %v3092
    %v3094 = vpop.f32.mrb[0].mxu0
    %v3095 = vpop.f32.mrb[0].mxu0
    %3096 = vdwg.mxu0
    %vm3097 = vcmp.gt.f32.partialorder %v2845, 0.0
    %vm3098 = vcmp.gt.f32.partialorder %v2847, 0.0
    %vm3099 = vcmp.gt.f32.partialorder %v2968, 0.0
    %vm3100 = vcmp.gt.f32.partialorder %v2970, 0.0
    %vm3101 = vcmp.gt.f32.partialorder %v3091, 0.0
    %vm3102 = vcmp.gt.f32.partialorder %v3093, 0.0
    %v3103 = vmul.f32 %v2845, 0.2
    %v3104 = vmul.f32 %v2847, 0.2
    %v3105 = vmul.f32 %v2968, 0.2
    %v3106 = vmul.f32 %v2970, 0.2
    %v3107 = vmul.f32 %v3091, 0.2
    %v3108 = vmul.f32 %v3093, 0.2
    %v3109 = vsel %vm3097, %v2845, %v3103
    %v3110 = vsel %vm3098, %v2847, %v3104
    %v3111 = vsel %vm3099, %v2968, %v3105
    %v3112 = vsel %vm3100, %v2970, %v3106
    %v3113 = vsel %vm3101, %v3091, %v3107
    %v3114 = vsel %vm3102, %v3093, %v3108
    %v3115 = vld [vmem:[%s8] sm:$0xff]
    %v3116 = vld [vmem:[%s8 + $0x8] sm:$0xf]
    %v3117 = vld [vmem:[%s8 + $0xc] sm:$0xff]
    %v3118 = vld [vmem:[%s8 + $0x14] sm:$0xf]
    %v3119 = vld [vmem:[%s8 + $0x18] sm:$0xff]
    %v3120 = vld [vmem:[%s8 + $0x20] sm:$0xf]
    %v3121 = vld [vmem:[%s8 + $0x24] sm:$0xff]
    %v3122 = vld [vmem:[%s8 + $0x2c] sm:$0xf]
    %v3123 = vld [vmem:[%s8 + $0x30] sm:$0xff]
    %v3124 = vld [vmem:[%s8 + $0x38] sm:$0xf]
    %v3125 = vld [vmem:[%s8 + $0x3c] sm:$0xff]
    %v3126 = vld [vmem:[%s8 + $0x44] sm:$0xf]
    %v3127 = vld [vmem:[%s8 + $0x48] sm:$0xff]
    %v3128 = vld [vmem:[%s8 + $0x50] sm:$0xf]
    %v3129 = vld [vmem:[%s8 + $0x54] sm:$0xff]
    %v3130 = vld [vmem:[%s8 + $0x5c] sm:$0xf]
    %v3131 = vld [vmem:[%s8 + $0x60] sm:$0xff]
    %v3132 = vld [vmem:[%s8 + $0x68] sm:$0xf]
    %v3133 = vld [vmem:[%s8 + $0x6c] sm:$0xff]
    %v3134 = vld [vmem:[%s8 + $0x74] sm:$0xf]
    %v3135 = vld [vmem:[%s8 + $0x78] sm:$0xff]
    %v3136 = vld [vmem:[%s8 + $0x80] sm:$0xf]
    %v3137 = vld [vmem:[%s8 + $0x84] sm:$0xff]
    %v3138 = vld [vmem:[%s8 + $0x8c] sm:$0xf]
    %v3139 = vld [vmem:[%s8 + $0x90] sm:$0xff]
    %v3140 = vld [vmem:[%s8 + $0x98] sm:$0xf]
    %v3141 = vld [vmem:[%s8 + $0x9c] sm:$0xff]
    %v3142 = vld [vmem:[%s8 + $0xa4] sm:$0xf]
    %v3143 = vld [vmem:[%s8 + $0xa8] sm:$0xff]
    %v3144 = vld [vmem:[%s8 + $0xb0] sm:$0xf]
    %v3145 = vld [vmem:[%s8 + $0xb4] sm:$0xff]
    %v3146 = vld [vmem:[%s8 + $0xbc] sm:$0xf]
    %v3147 = vld [vmem:[%s8 + $0xc0] sm:$0xff]
    %v3148 = vld [vmem:[%s8 + $0xc8] sm:$0xf]
    %v3149 = vld [vmem:[%s8 + $0xcc] sm:$0xff]
    %v3150 = vld [vmem:[%s8 + $0xd4] sm:$0xf]
    %v3151 = vld [vmem:[%s8 + $0xd8] sm:$0xff]
    %v3152 = vld [vmem:[%s8 + $0xe0] sm:$0xf]
    %v3153 = vld [vmem:[%s8 + $0xe4] sm:$0xff]
    %v3154 = vld [vmem:[%s8 + $0xec] sm:$0xf]
    %v3155 = vld [vmem:[%s8 + $0xf0] sm:$0xff]
    %v3156 = vld [vmem:[%s8 + $0xf8] sm:$0xf]
    %v3157 = vld [vmem:[%s8 + $0xfc] sm:$0xff]
    %v3158 = vld [vmem:[%s8 + $0x104] sm:$0xf]
    %v3159 = vld [vmem:[%s8 + $0x108] sm:$0xff]
    %v3160 = vld [vmem:[%s8 + $0x110] sm:$0xf]
    %v3161 = vld [vmem:[%s8 + $0x114] sm:$0xff]
    %v3162 = vld [vmem:[%s8 + $0x11c] sm:$0xf]
    %v3163 = vld [vmem:[%s8 + $0x120] sm:$0xff]
    %v3164 = vld [vmem:[%s8 + $0x128] sm:$0xf]
    %v3165 = vld [vmem:[%s8 + $0x12c] sm:$0xff]
    %v3166 = vld [vmem:[%s8 + $0x134] sm:$0xf]
    %v3167 = vld [vmem:[%s8 + $0x138] sm:$0xff]
    %v3168 = vld [vmem:[%s8 + $0x140] sm:$0xf]
    %v3169 = vld [vmem:[%s8 + $0x144] sm:$0xff]
    %v3170 = vld [vmem:[%s8 + $0x14c] sm:$0xf]
    %v3171 = vld [vmem:[%s8 + $0x150] sm:$0xff]
    %v3172 = vld [vmem:[%s8 + $0x158] sm:$0xf]
    %v3173 = vld [vmem:[%s8 + $0x15c] sm:$0xff]
    %v3174 = vld [vmem:[%s8 + $0x164] sm:$0xf]
    %v3175 = vld [vmem:[%s8 + $0x168] sm:$0xff]
    %v3176 = vld [vmem:[%s8 + $0x170] sm:$0xf]
    %v3177 = vld [vmem:[%s8 + $0x174] sm:$0xff]
    %v3178 = vld [vmem:[%s8 + $0x17c] sm:$0xf]
    %v3179 = vld [vmem:[%s8 + $0x180] sm:$0xff]
    %v3180 = vld [vmem:[%s8 + $0x188] sm:$0xf]
    %v3181 = vld [vmem:[%s8 + $0x18c] sm:$0xff]
    %v3182 = vld [vmem:[%s8 + $0x194] sm:$0xf]
    %v3183 = vld [vmem:[%s8 + $0x198] sm:$0xff]
    %v3184 = vld [vmem:[%s8 + $0x1a0] sm:$0xf]
    %v3185 = vld [vmem:[%s8 + $0x1a4] sm:$0xff]
    %v3186 = vld [vmem:[%s8 + $0x1ac] sm:$0xf]
    %v3187 = vld [vmem:[%s8 + $0x1b0] sm:$0xff]
    %v3188 = vld [vmem:[%s8 + $0x1b8] sm:$0xf]
    %v3189 = vld [vmem:[%s8 + $0x1bc] sm:$0xff]
    %v3190 = vld [vmem:[%s8 + $0x1c4] sm:$0xf]
    %v3191 = vld [vmem:[%s8 + $0x1c8] sm:$0xff]
    %v3192 = vld [vmem:[%s8 + $0x1d0] sm:$0xf]
    %v3193 = vld [vmem:[%s8 + $0x1d4] sm:$0xff]
    %v3194 = vld [vmem:[%s8 + $0x1dc] sm:$0xf]
    %v3195 = vld [vmem:[%s8 + $0x1e0] sm:$0xff]
    %v3196 = vld [vmem:[%s8 + $0x1e8] sm:$0xf]
    %v3197 = vld [vmem:[%s8 + $0x1ec] sm:$0xff]
    %v3198 = vld [vmem:[%s8 + $0x1f4] sm:$0xf]
    %v3199 = vld [vmem:[%s8 + $0x1f8] sm:$0xff]
    %v3200 = vld [vmem:[%s8 + $0x200] sm:$0xf]
    %v3201 = vld [vmem:[%s8 + $0x204] sm:$0xff]
    %v3202 = vld [vmem:[%s8 + $0x20c] sm:$0xf]
    %v3203 = vld [vmem:[%s8 + $0x210] sm:$0xff]
    %v3204 = vld [vmem:[%s8 + $0x218] sm:$0xf]
    %v3205 = vld [vmem:[%s8 + $0x21c] sm:$0xff]
    %v3206 = vld [vmem:[%s8 + $0x224] sm:$0xf]
    %v3207 = vld [vmem:[%s8 + $0x228] sm:$0xff]
    %v3208 = vld [vmem:[%s8 + $0x230] sm:$0xf]
    %v3209 = vld [vmem:[%s8 + $0x234] sm:$0xff]
    %v3210 = vld [vmem:[%s8 + $0x23c] sm:$0xf]
    %v3211 = vld [vmem:[%s8 + $0x240] sm:$0xff]
    %v3212 = vld [vmem:[%s8 + $0x248] sm:$0xf]
    %v3213 = vld [vmem:[%s8 + $0x24c] sm:$0xff]
    %v3214 = vld [vmem:[%s8 + $0x254] sm:$0xf]
    %v3215 = vld [vmem:[%s8 + $0x258] sm:$0xff]
    %v3216 = vld [vmem:[%s8 + $0x260] sm:$0xf]
    %v3217 = vld [vmem:[%s8 + $0x264] sm:$0xff]
    %v3218 = vld [vmem:[%s8 + $0x26c] sm:$0xf]
    %v3219 = vld [vmem:[%s8 + $0x270] sm:$0xff]
    %v3220 = vld [vmem:[%s8 + $0x278] sm:$0xf]
    %v3221 = vld [vmem:[%s8 + $0x27c] sm:$0xff]
    %v3222 = vld [vmem:[%s8 + $0x284] sm:$0xf]
    %v3223 = vld [vmem:[%s8 + $0x288] sm:$0xff]
    %v3224 = vld [vmem:[%s8 + $0x290] sm:$0xf]
    %v3225 = vld [vmem:[%s8 + $0x294] sm:$0xff]
    %v3226 = vld [vmem:[%s8 + $0x29c] sm:$0xf]
    %v3227 = vld [vmem:[%s8 + $0x2a0] sm:$0xff]
    %v3228 = vld [vmem:[%s8 + $0x2a8] sm:$0xf]
    %v3229 = vld [vmem:[%s8 + $0x2ac] sm:$0xff]
    %v3230 = vld [vmem:[%s8 + $0x2b4] sm:$0xf]
    %v3231 = vld [vmem:[%s8 + $0x2b8] sm:$0xff]
    %v3232 = vld [vmem:[%s8 + $0x2c0] sm:$0xf]
    %v3233 = vld [vmem:[%s8 + $0x2c4] sm:$0xff]
    %v3234 = vld [vmem:[%s8 + $0x2cc] sm:$0xf]
    %v3235 = vld [vmem:[%s8 + $0x2d0] sm:$0xff]
    %v3236 = vld [vmem:[%s8 + $0x2d8] sm:$0xf]
    %v3237 = vld [vmem:[%s8 + $0x2dc] sm:$0xff]
    %v3238 = vld [vmem:[%s8 + $0x2e4] sm:$0xf]
    %v3239 = vld [vmem:[%s8 + $0x2e8] sm:$0xff]
    %v3240 = vld [vmem:[%s8 + $0x2f0] sm:$0xf]
    %v3241 = vld [vmem:[%s8 + $0x2f4] sm:$0xff]
    %v3242 = vld [vmem:[%s8 + $0x2fc] sm:$0xf]
    %v3243 = vld [vmem:[%s8 + $0x300] sm:$0xff]
    %v3244 = vld [vmem:[%s8 + $0x308] sm:$0xf]
    %v3245 = vld [vmem:[%s8 + $0x30c] sm:$0xff]
    %v3246 = vld [vmem:[%s8 + $0x314] sm:$0xf]
    %v3247 = vld [vmem:[%s8 + $0x318] sm:$0xff]
    %v3248 = vld [vmem:[%s8 + $0x320] sm:$0xf]
    %v3249 = vld [vmem:[%s8 + $0x324] sm:$0xff]
    %v3250 = vld [vmem:[%s8 + $0x32c] sm:$0xf]
    %v3251 = vld [vmem:[%s8 + $0x330] sm:$0xff]
    %v3252 = vld [vmem:[%s8 + $0x338] sm:$0xf]
    %v3253 = vld [vmem:[%s8 + $0x33c] sm:$0xff]
    %v3254 = vld [vmem:[%s8 + $0x344] sm:$0xf]
    %v3255 = vld [vmem:[%s8 + $0x348] sm:$0xff]
    %v3256 = vld [vmem:[%s8 + $0x350] sm:$0xf]
    %v3257 = vld [vmem:[%s8 + $0x354] sm:$0xff]
    %v3258 = vld [vmem:[%s8 + $0x35c] sm:$0xf]
    %v3259 = vld [vmem:[%s8 + $0x360] sm:$0xff]
    %v3260 = vld [vmem:[%s8 + $0x368] sm:$0xf]
    %v3261 = vld [vmem:[%s8 + $0x36c] sm:$0xff]
    %v3262 = vld [vmem:[%s8 + $0x374] sm:$0xf]
    %v3263 = vld [vmem:[%s8 + $0x378] sm:$0xff]
    %v3264 = vld [vmem:[%s8 + $0x380] sm:$0xf]
    %v3265 = vld [vmem:[%s8 + $0x384] sm:$0xff]
    %v3266 = vld [vmem:[%s8 + $0x38c] sm:$0xf]
    %v3267 = vld [vmem:[%s8 + $0x390] sm:$0xff]
    %v3268 = vld [vmem:[%s8 + $0x398] sm:$0xf]
    %v3269 = vld [vmem:[%s8 + $0x39c] sm:$0xff]
    %v3270 = vld [vmem:[%s8 + $0x3a4] sm:$0xf]
    %v3271 = vld [vmem:[%s8 + $0x3a8] sm:$0xff]
    %v3272 = vld [vmem:[%s8 + $0x3b0] sm:$0xf]
    %v3273 = vld [vmem:[%s8 + $0x3b4] sm:$0xff]
    %v3274 = vld [vmem:[%s8 + $0x3bc] sm:$0xf]
    %v3275 = vld [vmem:[%s8 + $0x3c0] sm:$0xff]
    %v3276 = vld [vmem:[%s8 + $0x3c8] sm:$0xf]
    %v3277 = vld [vmem:[%s8 + $0x3cc] sm:$0xff]
    %v3278 = vld [vmem:[%s8 + $0x3d4] sm:$0xf]
    %v3279 = vld [vmem:[%s8 + $0x3d8] sm:$0xff]
    %v3280 = vld [vmem:[%s8 + $0x3e0] sm:$0xf]
    %v3281 = vld [vmem:[%s8 + $0x3e4] sm:$0xff]
    %v3282 = vld [vmem:[%s8 + $0x3ec] sm:$0xf]
    %v3283 = vld [vmem:[%s8 + $0x3f0] sm:$0xff]
    %v3284 = vld [vmem:[%s8 + $0x3f8] sm:$0xf]
    %v3285 = vld [vmem:[%s8 + $0x3fc] sm:$0xff]
    %v3286 = vld [vmem:[%s8 + $0x404] sm:$0xf]
    %v3287 = vld [vmem:[%s8 + $0x408] sm:$0xff]
    %v3288 = vld [vmem:[%s8 + $0x410] sm:$0xf]
    %v3289 = vld [vmem:[%s8 + $0x414] sm:$0xff]
    %v3290 = vld [vmem:[%s8 + $0x41c] sm:$0xf]
    %v3291 = vld [vmem:[%s8 + $0x420] sm:$0xff]
    %v3292 = vld [vmem:[%s8 + $0x428] sm:$0xf]
    %v3293 = vld [vmem:[%s8 + $0x42c] sm:$0xff]
    %v3294 = vld [vmem:[%s8 + $0x434] sm:$0xf]
    %v3295 = vld [vmem:[%s8 + $0x438] sm:$0xff]
    %v3296 = vld [vmem:[%s8 + $0x440] sm:$0xf]
    %v3297 = vld [vmem:[%s8 + $0x444] sm:$0xff]
    %v3298 = vld [vmem:[%s8 + $0x44c] sm:$0xf]
    %v3299 = vld [vmem:[%s8 + $0x450] sm:$0xff]
    %v3300 = vld [vmem:[%s8 + $0x458] sm:$0xf]
    %v3301 = vld [vmem:[%s8 + $0x45c] sm:$0xff]
    %v3302 = vld [vmem:[%s8 + $0x464] sm:$0xf]
    %v3303 = vld [vmem:[%s8 + $0x468] sm:$0xff]
    %v3304 = vld [vmem:[%s8 + $0x470] sm:$0xf]
    %v3305 = vld [vmem:[%s8 + $0x474] sm:$0xff]
    %v3306 = vld [vmem:[%s8 + $0x47c] sm:$0xf]
    %v3307 = vpack.c.bf16 %v3109, %v3109
    %v3308 = vpack.c.bf16 %v3110, %v3110
    %v3309 = vpack.c.bf16 %v3111, %v3111
    %v3310 = vpack.c.bf16 %v3112, %v3112
    %v3311 = vpack.c.bf16 %v3113, %v3113
    %v3312 = vpack.c.bf16 %v3114, %v3114
    %v3313 = vld [vmem:[#allocation16] sm:$0x7]
    %v3315 = vlaneseq
    %v3316 = vshrl.u32 %v3315, 7
    %v3317 = vsub.s32 0, %v3316
    %v3318 = vrot.slane %v3313, %v3317
    %v3319 = vlaneseq
    %v3320 = vshrl.u32 %v3319, 7
    %v3321 = vsub.s32 1, %v3320
    %v3322 = vrot.slane %v3313, %v3321
    %v3323 = vlaneseq
    %v3324 = vshrl.u32 %v3323, 7
    %v3325 = vsub.s32 2, %v3324
    %v3326 = vrot.slane %v3313, %v3325
    %v3522 = vunpack.c.l.b16 %v3115
    %v3523 = vunpack.c.h.b16 %v3115
    %v3524 = vunpack.c.l.b16 %v3116
    %v3525 = vunpack.c.l.b16 %v3117
    %v3526 = vunpack.c.h.b16 %v3117
    %v3527 = vunpack.c.l.b16 %v3118
    %v3528 = vunpack.c.l.b16 %v3119
    %v3529 = vunpack.c.h.b16 %v3119
    %v3530 = vunpack.c.l.b16 %v3120
    %v3531 = vunpack.c.l.b16 %v3121
    %v3532 = vunpack.c.h.b16 %v3121
    %v3533 = vunpack.c.l.b16 %v3122
    %v3534 = vunpack.c.l.b16 %v3123
    %v3535 = vunpack.c.h.b16 %v3123
    %v3536 = vunpack.c.l.b16 %v3124
    %v3537 = vunpack.c.l.b16 %v3125
    %v3538 = vunpack.c.h.b16 %v3125
    %v3539 = vunpack.c.l.b16 %v3126
    %v3540 = vunpack.c.l.b16 %v3127
    %v3541 = vunpack.c.h.b16 %v3127
    %v3542 = vunpack.c.l.b16 %v3128
    %v3543 = vunpack.c.l.b16 %v3129
    %v3544 = vunpack.c.h.b16 %v3129
    %v3545 = vunpack.c.l.b16 %v3130
    %v3546 = vunpack.c.l.b16 %v3131
    %v3547 = vunpack.c.h.b16 %v3131
    %v3548 = vunpack.c.l.b16 %v3132
    %v3549 = vunpack.c.l.b16 %v3133
    %v3550 = vunpack.c.h.b16 %v3133
    %v3551 = vunpack.c.l.b16 %v3134
    %v3552 = vunpack.c.l.b16 %v3135
    %v3553 = vunpack.c.h.b16 %v3135
    %v3554 = vunpack.c.l.b16 %v3136
    %v3555 = vunpack.c.l.b16 %v3137
    %v3556 = vunpack.c.h.b16 %v3137
    %v3557 = vunpack.c.l.b16 %v3138
    %v3558 = vunpack.c.l.b16 %v3139
    %v3559 = vunpack.c.h.b16 %v3139
    %v3560 = vunpack.c.l.b16 %v3140
    %v3561 = vunpack.c.l.b16 %v3141
    %v3562 = vunpack.c.h.b16 %v3141
    %v3563 = vunpack.c.l.b16 %v3142
    %v3564 = vunpack.c.l.b16 %v3143
    %v3565 = vunpack.c.h.b16 %v3143
    %v3566 = vunpack.c.l.b16 %v3144
    %v3567 = vunpack.c.l.b16 %v3145
    %v3568 = vunpack.c.h.b16 %v3145
    %v3569 = vunpack.c.l.b16 %v3146
    %v3570 = vunpack.c.l.b16 %v3147
    %v3571 = vunpack.c.h.b16 %v3147
    %v3572 = vunpack.c.l.b16 %v3148
    %v3573 = vunpack.c.l.b16 %v3149
    %v3574 = vunpack.c.h.b16 %v3149
    %v3575 = vunpack.c.l.b16 %v3150
    %v3576 = vunpack.c.l.b16 %v3151
    %v3577 = vunpack.c.h.b16 %v3151
    %v3578 = vunpack.c.l.b16 %v3152
    %v3579 = vunpack.c.l.b16 %v3153
    %v3580 = vunpack.c.h.b16 %v3153
    %v3581 = vunpack.c.l.b16 %v3154
    %v3582 = vunpack.c.l.b16 %v3155
    %v3583 = vunpack.c.h.b16 %v3155
    %v3584 = vunpack.c.l.b16 %v3156
    %v3585 = vunpack.c.l.b16 %v3157
    %v3586 = vunpack.c.h.b16 %v3157
    %v3587 = vunpack.c.l.b16 %v3158
    %v3588 = vunpack.c.l.b16 %v3159
    %v3589 = vunpack.c.h.b16 %v3159
    %v3590 = vunpack.c.l.b16 %v3160
    %v3591 = vunpack.c.l.b16 %v3161
    %v3592 = vunpack.c.h.b16 %v3161
    %v3593 = vunpack.c.l.b16 %v3162
    %v3594 = vunpack.c.l.b16 %v3163
    %v3595 = vunpack.c.h.b16 %v3163
    %v3596 = vunpack.c.l.b16 %v3164
    %v3597 = vunpack.c.l.b16 %v3165
    %v3598 = vunpack.c.h.b16 %v3165
    %v3599 = vunpack.c.l.b16 %v3166
    %v3600 = vunpack.c.l.b16 %v3167
    %v3601 = vunpack.c.h.b16 %v3167
    %v3602 = vunpack.c.l.b16 %v3168
    %v3603 = vunpack.c.l.b16 %v3169
    %v3604 = vunpack.c.h.b16 %v3169
    %v3605 = vunpack.c.l.b16 %v3170
    %v3606 = vunpack.c.l.b16 %v3171
    %v3607 = vunpack.c.h.b16 %v3171
    %v3608 = vunpack.c.l.b16 %v3172
    %v3609 = vunpack.c.l.b16 %v3173
    %v3610 = vunpack.c.h.b16 %v3173
    %v3611 = vunpack.c.l.b16 %v3174
    %v3612 = vunpack.c.l.b16 %v3175
    %v3613 = vunpack.c.h.b16 %v3175
    %v3614 = vunpack.c.l.b16 %v3176
    %v3615 = vunpack.c.l.b16 %v3177
    %v3616 = vunpack.c.h.b16 %v3177
    %v3617 = vunpack.c.l.b16 %v3178
    %v3618 = vunpack.c.l.b16 %v3179
    %v3619 = vunpack.c.h.b16 %v3179
    %v3620 = vunpack.c.l.b16 %v3180
    %v3621 = vunpack.c.l.b16 %v3181
    %v3622 = vunpack.c.h.b16 %v3181
    %v3623 = vunpack.c.l.b16 %v3182
    %v3624 = vunpack.c.l.b16 %v3183
    %v3625 = vunpack.c.h.b16 %v3183
    %v3626 = vunpack.c.l.b16 %v3184
    %v3627 = vunpack.c.l.b16 %v3185
    %v3628 = vunpack.c.h.b16 %v3185
    %v3629 = vunpack.c.l.b16 %v3186
    %v3630 = vunpack.c.l.b16 %v3187
    %v3631 = vunpack.c.h.b16 %v3187
    %v3632 = vunpack.c.l.b16 %v3188
    %v3633 = vunpack.c.l.b16 %v3189
    %v3634 = vunpack.c.h.b16 %v3189
    %v3635 = vunpack.c.l.b16 %v3190
    %v3636 = vunpack.c.l.b16 %v3191
    %v3637 = vunpack.c.h.b16 %v3191
    %v3638 = vunpack.c.l.b16 %v3192
    %v3639 = vunpack.c.l.b16 %v3193
    %v3640 = vunpack.c.h.b16 %v3193
    %v3641 = vunpack.c.l.b16 %v3194
    %v3642 = vunpack.c.l.b16 %v3195
    %v3643 = vunpack.c.h.b16 %v3195
    %v3644 = vunpack.c.l.b16 %v3196
    %v3645 = vunpack.c.l.b16 %v3197
    %v3646 = vunpack.c.h.b16 %v3197
    %v3647 = vunpack.c.l.b16 %v3198
    %v3648 = vunpack.c.l.b16 %v3199
    %v3649 = vunpack.c.h.b16 %v3199
    %v3650 = vunpack.c.l.b16 %v3200
    %v3651 = vunpack.c.l.b16 %v3201
    %v3652 = vunpack.c.h.b16 %v3201
    %v3653 = vunpack.c.l.b16 %v3202
    %v3654 = vunpack.c.l.b16 %v3203
    %v3655 = vunpack.c.h.b16 %v3203
    %v3656 = vunpack.c.l.b16 %v3204
    %v3657 = vunpack.c.l.b16 %v3205
    %v3658 = vunpack.c.h.b16 %v3205
    %v3659 = vunpack.c.l.b16 %v3206
    %v3660 = vunpack.c.l.b16 %v3207
    %v3661 = vunpack.c.h.b16 %v3207
    %v3662 = vunpack.c.l.b16 %v3208
    %v3663 = vunpack.c.l.b16 %v3209
    %v3664 = vunpack.c.h.b16 %v3209
    %v3665 = vunpack.c.l.b16 %v3210
    %v3666 = vunpack.c.l.b16 %v3211
    %v3667 = vunpack.c.h.b16 %v3211
    %v3668 = vunpack.c.l.b16 %v3212
    %v3669 = vunpack.c.l.b16 %v3213
    %v3670 = vunpack.c.h.b16 %v3213
    %v3671 = vunpack.c.l.b16 %v3214
    %v3672 = vunpack.c.l.b16 %v3215
    %v3673 = vunpack.c.h.b16 %v3215
    %v3674 = vunpack.c.l.b16 %v3216
    %v3675 = vunpack.c.l.b16 %v3217
    %v3676 = vunpack.c.h.b16 %v3217
    %v3677 = vunpack.c.l.b16 %v3218
    %v3678 = vunpack.c.l.b16 %v3219
    %v3679 = vunpack.c.h.b16 %v3219
    %v3680 = vunpack.c.l.b16 %v3220
    %v3681 = vunpack.c.l.b16 %v3221
    %v3682 = vunpack.c.h.b16 %v3221
    %v3683 = vunpack.c.l.b16 %v3222
    %v3684 = vunpack.c.l.b16 %v3223
    %v3685 = vunpack.c.h.b16 %v3223
    %v3686 = vunpack.c.l.b16 %v3224
    %v3687 = vunpack.c.l.b16 %v3225
    %v3688 = vunpack.c.h.b16 %v3225
    %v3689 = vunpack.c.l.b16 %v3226
    %v3690 = vunpack.c.l.b16 %v3227
    %v3691 = vunpack.c.h.b16 %v3227
    %v3692 = vunpack.c.l.b16 %v3228
    %v3693 = vunpack.c.l.b16 %v3229
    %v3694 = vunpack.c.h.b16 %v3229
    %v3695 = vunpack.c.l.b16 %v3230
    %v3696 = vunpack.c.l.b16 %v3231
    %v3697 = vunpack.c.h.b16 %v3231
    %v3698 = vunpack.c.l.b16 %v3232
    %v3699 = vunpack.c.l.b16 %v3233
    %v3700 = vunpack.c.h.b16 %v3233
    %v3701 = vunpack.c.l.b16 %v3234
    %v3702 = vunpack.c.l.b16 %v3235
    %v3703 = vunpack.c.h.b16 %v3235
    %v3704 = vunpack.c.l.b16 %v3236
    %v3705 = vunpack.c.l.b16 %v3237
    %v3706 = vunpack.c.h.b16 %v3237
    %v3707 = vunpack.c.l.b16 %v3238
    %v3708 = vunpack.c.l.b16 %v3239
    %v3709 = vunpack.c.h.b16 %v3239
    %v3710 = vunpack.c.l.b16 %v3240
    %v3711 = vunpack.c.l.b16 %v3241
    %v3712 = vunpack.c.h.b16 %v3241
    %v3713 = vunpack.c.l.b16 %v3242
    %v3714 = vunpack.c.l.b16 %v3243
    %v3715 = vunpack.c.h.b16 %v3243
    %v3716 = vunpack.c.l.b16 %v3244
    %v3717 = vunpack.c.l.b16 %v3245
    %v3718 = vunpack.c.h.b16 %v3245
    %v3719 = vunpack.c.l.b16 %v3246
    %v3720 = vunpack.c.l.b16 %v3247
    %v3721 = vunpack.c.h.b16 %v3247
    %v3722 = vunpack.c.l.b16 %v3248
    %v3723 = vunpack.c.l.b16 %v3249
    %v3724 = vunpack.c.h.b16 %v3249
    %v3725 = vunpack.c.l.b16 %v3250
    %v3726 = vunpack.c.l.b16 %v3251
    %v3727 = vunpack.c.h.b16 %v3251
    %v3728 = vunpack.c.l.b16 %v3252
    %v3729 = vunpack.c.l.b16 %v3253
    %v3730 = vunpack.c.h.b16 %v3253
    %v3731 = vunpack.c.l.b16 %v3254
    %v3732 = vunpack.c.l.b16 %v3255
    %v3733 = vunpack.c.h.b16 %v3255
    %v3734 = vunpack.c.l.b16 %v3256
    %v3735 = vunpack.c.l.b16 %v3257
    %v3736 = vunpack.c.h.b16 %v3257
    %v3737 = vunpack.c.l.b16 %v3258
    %v3738 = vunpack.c.l.b16 %v3259
    %v3739 = vunpack.c.h.b16 %v3259
    %v3740 = vunpack.c.l.b16 %v3260
    %v3741 = vunpack.c.l.b16 %v3261
    %v3742 = vunpack.c.h.b16 %v3261
    %v3743 = vunpack.c.l.b16 %v3262
    %v3744 = vunpack.c.l.b16 %v3263
    %v3745 = vunpack.c.h.b16 %v3263
    %v3746 = vunpack.c.l.b16 %v3264
    %v3747 = vunpack.c.l.b16 %v3265
    %v3748 = vunpack.c.h.b16 %v3265
    %v3749 = vunpack.c.l.b16 %v3266
    %v3750 = vunpack.c.l.b16 %v3267
    %v3751 = vunpack.c.h.b16 %v3267
    %v3752 = vunpack.c.l.b16 %v3268
    %v3753 = vunpack.c.l.b16 %v3269
    %v3754 = vunpack.c.h.b16 %v3269
    %v3755 = vunpack.c.l.b16 %v3270
    %v3756 = vunpack.c.l.b16 %v3271
    %v3757 = vunpack.c.h.b16 %v3271
    %v3758 = vunpack.c.l.b16 %v3272
    %v3759 = vunpack.c.l.b16 %v3273
    %v3760 = vunpack.c.h.b16 %v3273
    %v3761 = vunpack.c.l.b16 %v3274
    %v3762 = vunpack.c.l.b16 %v3275
    %v3763 = vunpack.c.h.b16 %v3275
    %v3764 = vunpack.c.l.b16 %v3276
    %v3765 = vunpack.c.l.b16 %v3277
    %v3766 = vunpack.c.h.b16 %v3277
    %v3767 = vunpack.c.l.b16 %v3278
    %v3768 = vunpack.c.l.b16 %v3279
    %v3769 = vunpack.c.h.b16 %v3279
    %v3770 = vunpack.c.l.b16 %v3280
    %v3771 = vunpack.c.l.b16 %v3281
    %v3772 = vunpack.c.h.b16 %v3281
    %v3773 = vunpack.c.l.b16 %v3282
    %v3774 = vunpack.c.l.b16 %v3283
    %v3775 = vunpack.c.h.b16 %v3283
    %v3776 = vunpack.c.l.b16 %v3284
    %v3777 = vunpack.c.l.b16 %v3285
    %v3778 = vunpack.c.h.b16 %v3285
    %v3779 = vunpack.c.l.b16 %v3286
    %v3780 = vunpack.c.l.b16 %v3287
    %v3781 = vunpack.c.h.b16 %v3287
    %v3782 = vunpack.c.l.b16 %v3288
    %v3783 = vunpack.c.l.b16 %v3289
    %v3784 = vunpack.c.h.b16 %v3289
    %v3785 = vunpack.c.l.b16 %v3290
    %v3786 = vunpack.c.l.b16 %v3291
    %v3787 = vunpack.c.h.b16 %v3291
    %v3788 = vunpack.c.l.b16 %v3292
    %v3789 = vunpack.c.l.b16 %v3293
    %v3790 = vunpack.c.h.b16 %v3293
    %v3791 = vunpack.c.l.b16 %v3294
    %v3792 = vunpack.c.l.b16 %v3295
    %v3793 = vunpack.c.h.b16 %v3295
    %v3794 = vunpack.c.l.b16 %v3296
    %v3795 = vunpack.c.l.b16 %v3297
    %v3796 = vunpack.c.h.b16 %v3297
    %v3797 = vunpack.c.l.b16 %v3298
    %v3798 = vunpack.c.l.b16 %v3299
    %v3799 = vunpack.c.h.b16 %v3299
    %v3800 = vunpack.c.l.b16 %v3300
    %v3801 = vunpack.c.l.b16 %v3301
    %v3802 = vunpack.c.h.b16 %v3301
    %v3803 = vunpack.c.l.b16 %v3302
    %v3804 = vunpack.c.l.b16 %v3303
    %v3805 = vunpack.c.h.b16 %v3303
    %v3806 = vunpack.c.l.b16 %v3304
    %v3807 = vunpack.c.l.b16 %v3305
    %v3808 = vunpack.c.h.b16 %v3305
    %v3809 = vunpack.c.l.b16 %v3306
    %v3810 = vpack.c.b16 %v3525, %v3522
    %v3811 = vpack.c.b16 %v3526, %v3523
    %v3812 = vpack.c.b16 %v3527, %v3524
    %v3813 = vpack.c.b16 %v3531, %v3528
    %v3814 = vpack.c.b16 %v3532, %v3529
    %v3815 = vpack.c.b16 %v3533, %v3530
    %v3816 = vpack.c.b16 %v3537, %v3534
    %v3817 = vpack.c.b16 %v3538, %v3535
    %v3818 = vpack.c.b16 %v3539, %v3536
    %v3819 = vpack.c.b16 %v3543, %v3540
    %v3820 = vpack.c.b16 %v3544, %v3541
    %v3821 = vpack.c.b16 %v3545, %v3542
    %v3822 = vpack.c.b16 %v3549, %v3546
    %v3823 = vpack.c.b16 %v3550, %v3547
    %v3824 = vpack.c.b16 %v3551, %v3548
    %v3825 = vpack.c.b16 %v3555, %v3552
    %v3826 = vpack.c.b16 %v3556, %v3553
    %v3827 = vpack.c.b16 %v3557, %v3554
    %v3828 = vpack.c.b16 %v3561, %v3558
    %v3829 = vpack.c.b16 %v3562, %v3559
    %v3830 = vpack.c.b16 %v3563, %v3560
    %v3831 = vpack.c.b16 %v3567, %v3564
    %v3832 = vpack.c.b16 %v3568, %v3565
    %v3833 = vpack.c.b16 %v3569, %v3566
    %v3834 = vpack.c.b16 %v3573, %v3570
    %v3835 = vpack.c.b16 %v3574, %v3571
    %v3836 = vpack.c.b16 %v3575, %v3572
    %v3837 = vpack.c.b16 %v3579, %v3576
    %v3838 = vpack.c.b16 %v3580, %v3577
    %v3839 = vpack.c.b16 %v3581, %v3578
    %v3840 = vpack.c.b16 %v3585, %v3582
    %v3841 = vpack.c.b16 %v3586, %v3583
    %v3842 = vpack.c.b16 %v3587, %v3584
    %v3843 = vpack.c.b16 %v3591, %v3588
    %v3844 = vpack.c.b16 %v3592, %v3589
    %v3845 = vpack.c.b16 %v3593, %v3590
    %v3846 = vpack.c.b16 %v3597, %v3594
    %v3847 = vpack.c.b16 %v3598, %v3595
    %v3848 = vpack.c.b16 %v3599, %v3596
    %v3849 = vpack.c.b16 %v3603, %v3600
    %v3850 = vpack.c.b16 %v3604, %v3601
    %v3851 = vpack.c.b16 %v3605, %v3602
    %v3852 = vpack.c.b16 %v3609, %v3606
    %v3853 = vpack.c.b16 %v3610, %v3607
    %v3854 = vpack.c.b16 %v3611, %v3608
    %v3855 = vpack.c.b16 %v3615, %v3612
    %v3856 = vpack.c.b16 %v3616, %v3613
    %v3857 = vpack.c.b16 %v3617, %v3614
    %v3858 = vpack.c.b16 %v3621, %v3618
    %v3859 = vpack.c.b16 %v3622, %v3619
    %v3860 = vpack.c.b16 %v3623, %v3620
    %v3861 = vpack.c.b16 %v3627, %v3624
    %v3862 = vpack.c.b16 %v3628, %v3625
    %v3863 = vpack.c.b16 %v3629, %v3626
    %v3864 = vpack.c.b16 %v3633, %v3630
    %v3865 = vpack.c.b16 %v3634, %v3631
    %v3866 = vpack.c.b16 %v3635, %v3632
    %v3867 = vpack.c.b16 %v3639, %v3636
    %v3868 = vpack.c.b16 %v3640, %v3637
    %v3869 = vpack.c.b16 %v3641, %v3638
    %v3870 = vpack.c.b16 %v3645, %v3642
    %v3871 = vpack.c.b16 %v3646, %v3643
    %v3872 = vpack.c.b16 %v3647, %v3644
    %v3873 = vpack.c.b16 %v3651, %v3648
    %v3874 = vpack.c.b16 %v3652, %v3649
    %v3875 = vpack.c.b16 %v3653, %v3650
    %v3876 = vpack.c.b16 %v3657, %v3654
    %v3877 = vpack.c.b16 %v3658, %v3655
    %v3878 = vpack.c.b16 %v3659, %v3656
    %v3879 = vpack.c.b16 %v3663, %v3660
    %v3880 = vpack.c.b16 %v3664, %v3661
    %v3881 = vpack.c.b16 %v3665, %v3662
    %v3882 = vpack.c.b16 %v3669, %v3666
    %v3883 = vpack.c.b16 %v3670, %v3667
    %v3884 = vpack.c.b16 %v3671, %v3668
    %v3885 = vpack.c.b16 %v3675, %v3672
    %v3886 = vpack.c.b16 %v3676, %v3673
    %v3887 = vpack.c.b16 %v3677, %v3674
    %v3888 = vpack.c.b16 %v3681, %v3678
    %v3889 = vpack.c.b16 %v3682, %v3679
    %v3890 = vpack.c.b16 %v3683, %v3680
    %v3891 = vpack.c.b16 %v3687, %v3684
    %v3892 = vpack.c.b16 %v3688, %v3685
    %v3893 = vpack.c.b16 %v3689, %v3686
    %v3894 = vpack.c.b16 %v3693, %v3690
    %v3895 = vpack.c.b16 %v3694, %v3691
    %v3896 = vpack.c.b16 %v3695, %v3692
    %v3897 = vpack.c.b16 %v3699, %v3696
    %v3898 = vpack.c.b16 %v3700, %v3697
    %v3899 = vpack.c.b16 %v3701, %v3698
    %v3900 = vpack.c.b16 %v3705, %v3702
    %v3901 = vpack.c.b16 %v3706, %v3703
    %v3902 = vpack.c.b16 %v3707, %v3704
    %v3903 = vpack.c.b16 %v3711, %v3708
    %v3904 = vpack.c.b16 %v3712, %v3709
    %v3905 = vpack.c.b16 %v3713, %v3710
    %v3906 = vpack.c.b16 %v3717, %v3714
    %v3907 = vpack.c.b16 %v3718, %v3715
    %v3908 = vpack.c.b16 %v3719, %v3716
    %v3909 = vpack.c.b16 %v3723, %v3720
    %v3910 = vpack.c.b16 %v3724, %v3721
    %v3911 = vpack.c.b16 %v3725, %v3722
    %v3912 = vpack.c.b16 %v3729, %v3726
    %v3913 = vpack.c.b16 %v3730, %v3727
    %v3914 = vpack.c.b16 %v3731, %v3728
    %v3915 = vpack.c.b16 %v3735, %v3732
    %v3916 = vpack.c.b16 %v3736, %v3733
    %v3917 = vpack.c.b16 %v3737, %v3734
    %v3918 = vpack.c.b16 %v3741, %v3738
    %v3919 = vpack.c.b16 %v3742, %v3739
    %v3920 = vpack.c.b16 %v3743, %v3740
    %v3921 = vpack.c.b16 %v3747, %v3744
    %v3922 = vpack.c.b16 %v3748, %v3745
    %v3923 = vpack.c.b16 %v3749, %v3746
    %v3924 = vpack.c.b16 %v3753, %v3750
    %v3925 = vpack.c.b16 %v3754, %v3751
    %v3926 = vpack.c.b16 %v3755, %v3752
    %v3927 = vpack.c.b16 %v3759, %v3756
    %v3928 = vpack.c.b16 %v3760, %v3757
    %v3929 = vpack.c.b16 %v3761, %v3758
    %v3930 = vpack.c.b16 %v3765, %v3762
    %v3931 = vpack.c.b16 %v3766, %v3763
    %v3932 = vpack.c.b16 %v3767, %v3764
    %v3933 = vpack.c.b16 %v3771, %v3768
    %v3934 = vpack.c.b16 %v3772, %v3769
    %v3935 = vpack.c.b16 %v3773, %v3770
    %v3936 = vpack.c.b16 %v3777, %v3774
    %v3937 = vpack.c.b16 %v3778, %v3775
    %v3938 = vpack.c.b16 %v3779, %v3776
    %v3939 = vpack.c.b16 %v3783, %v3780
    %v3940 = vpack.c.b16 %v3784, %v3781
    %v3941 = vpack.c.b16 %v3785, %v3782
    %v3942 = vpack.c.b16 %v3789, %v3786
    %v3943 = vpack.c.b16 %v3790, %v3787
    %v3944 = vpack.c.b16 %v3791, %v3788
    %v3945 = vpack.c.b16 %v3795, %v3792
    %v3946 = vpack.c.b16 %v3796, %v3793
    %v3947 = vpack.c.b16 %v3797, %v3794
    %v3948 = vpack.c.b16 %v3801, %v3798
    %v3949 = vpack.c.b16 %v3802, %v3799
    %v3950 = vpack.c.b16 %v3803, %v3800
    %v3951 = vpack.c.b16 %v3807, %v3804
    %v3952 = vpack.c.b16 %v3808, %v3805
    %v3953 = vpack.c.b16 %v3809, %v3806
    %4098 = vmatprep.subr.bf16.mxu0 %v3811
    %4099 = vmatpush1.bf16.msra.mxu0 %v3810
    %4100 = vmatprep.subr.bf16.mxu0 %v3814
    %4101 = vmatpush1.bf16.msra.mxu0 %v3813
    %4102 = vmatprep.subr.bf16.mxu0 %v3817
    %4103 = vmatpush1.bf16.msra.mxu0 %v3816
    %4104 = vmatprep.subr.bf16.mxu0 %v3820
    %4105 = vmatpush1.bf16.msra.mxu0 %v3819
    %4106 = vmatprep.subr.bf16.mxu0 %v3823
    %4107 = vmatpush1.bf16.msra.mxu0 %v3822
    %4108 = vmatprep.subr.bf16.mxu0 %v3826
    %4109 = vmatpush1.bf16.msra.mxu0 %v3825
    %4110 = vmatprep.subr.bf16.mxu0 %v3829
    %4111 = vmatpush1.bf16.msra.mxu0 %v3828
    %4112 = vmatprep.subr.bf16.mxu0 %v3832
    %4113 = vmatpush1.bf16.msra.mxu0 %v3831
    %4114 = vmatprep.subr.bf16.mxu0 %v3835
    %4115 = vmatpush1.bf16.msra.mxu0 %v3834
    %4116 = vmatprep.subr.bf16.mxu0 %v3838
    %4117 = vmatpush1.bf16.msra.mxu0 %v3837
    %4118 = vmatprep.subr.bf16.mxu0 %v3841
    %4119 = vmatpush1.bf16.msra.mxu0 %v3840
    %4120 = vmatprep.subr.bf16.mxu0 %v3844
    %4121 = vmatpush1.bf16.msra.mxu0 %v3843
    %4122 = vmatprep.subr.bf16.mxu0 %v3847
    %4123 = vmatpush1.bf16.msra.mxu0 %v3846
    %4124 = vmatprep.subr.bf16.mxu0 %v3850
    %4125 = vmatpush1.bf16.msra.mxu0 %v3849
    %4126 = vmatprep.subr.bf16.mxu0 %v3853
    %4127 = vmatpush1.bf16.msra.mxu0 %v3852
    %4128 = vmatprep.subr.bf16.mxu0 %v3856
    %4129 = vmatpush1.bf16.msra.mxu0 %v3855
    %4130 = vmatprep.mubr.bf16.mxu0 %v3308
    %4131 = vmatmul.mubr.bf16.gmra.mrb[0].mxu0 %v3307
    %v4132 = vpop.f32.mrb[0].mxu0
    %v4133 = vadd.f32 %v3318, %v4132
    %v4134 = vpop.f32.mrb[0].mxu0
    %v4135 = vadd.f32 %v3322, %v4134
    %v4136 = vpop.f32.mrb[0].mxu0
    %v4137 = vpop.f32.mrb[0].mxu0
    %4138 = vdwg.mxu0
    %4139 = vmatprep.subr.bf16.mxu0 %v3859
    %4140 = vmatpush1.bf16.msra.mxu0 %v3858
    %4141 = vmatprep.subr.bf16.mxu0 %v3862
    %4142 = vmatpush1.bf16.msra.mxu0 %v3861
    %4143 = vmatprep.subr.bf16.mxu0 %v3865
    %4144 = vmatpush1.bf16.msra.mxu0 %v3864
    %4145 = vmatprep.subr.bf16.mxu0 %v3868
    %4146 = vmatpush1.bf16.msra.mxu0 %v3867
    %4147 = vmatprep.subr.bf16.mxu0 %v3871
    %4148 = vmatpush1.bf16.msra.mxu0 %v3870
    %4149 = vmatprep.subr.bf16.mxu0 %v3874
    %4150 = vmatpush1.bf16.msra.mxu0 %v3873
    %4151 = vmatprep.subr.bf16.mxu0 %v3877
    %4152 = vmatpush1.bf16.msra.mxu0 %v3876
    %4153 = vmatprep.subr.bf16.mxu0 %v3880
    %4154 = vmatpush1.bf16.msra.mxu0 %v3879
    %4155 = vmatprep.subr.bf16.mxu0 %v3883
    %4156 = vmatpush1.bf16.msra.mxu0 %v3882
    %4157 = vmatprep.subr.bf16.mxu0 %v3886
    %4158 = vmatpush1.bf16.msra.mxu0 %v3885
    %4159 = vmatprep.subr.bf16.mxu0 %v3889
    %4160 = vmatpush1.bf16.msra.mxu0 %v3888
    %4161 = vmatprep.subr.bf16.mxu0 %v3892
    %4162 = vmatpush1.bf16.msra.mxu0 %v3891
    %4163 = vmatprep.subr.bf16.mxu0 %v3895
    %4164 = vmatpush1.bf16.msra.mxu0 %v3894
    %4165 = vmatprep.subr.bf16.mxu0 %v3898
    %4166 = vmatpush1.bf16.msra.mxu0 %v3897
    %4167 = vmatprep.subr.bf16.mxu0 %v3901
    %4168 = vmatpush1.bf16.msra.mxu0 %v3900
    %4169 = vmatprep.subr.bf16.mxu0 %v3904
    %4170 = vmatpush1.bf16.msra.mxu0 %v3903
    %4171 = vmatprep.mubr.bf16.mxu0 %v3310
    %4172 = vmatmul.mubr.bf16.gmra.mrb[0].mxu0 %v3309
    %v4173 = vpop.f32.mrb[0].mxu0
    %v4174 = vadd.f32 %v4133, %v4173
    %v4175 = vpop.f32.mrb[0].mxu0
    %v4176 = vadd.f32 %v4135, %v4175
    %v4177 = vpop.f32.mrb[0].mxu0
    %v4178 = vpop.f32.mrb[0].mxu0
    %4179 = vdwg.mxu0
    %4180 = vmatprep.subr.bf16.mxu0 %v3907
    %4181 = vmatpush1.bf16.msra.mxu0 %v3906
    %4182 = vmatprep.subr.bf16.mxu0 %v3910
    %4183 = vmatpush1.bf16.msra.mxu0 %v3909
    %4184 = vmatprep.subr.bf16.mxu0 %v3913
    %4185 = vmatpush1.bf16.msra.mxu0 %v3912
    %4186 = vmatprep.subr.bf16.mxu0 %v3916
    %4187 = vmatpush1.bf16.msra.mxu0 %v3915
    %4188 = vmatprep.subr.bf16.mxu0 %v3919
    %4189 = vmatpush1.bf16.msra.mxu0 %v3918
    %4190 = vmatprep.subr.bf16.mxu0 %v3922
    %4191 = vmatpush1.bf16.msra.mxu0 %v3921
    %4192 = vmatprep.subr.bf16.mxu0 %v3925
    %4193 = vmatpush1.bf16.msra.mxu0 %v3924
    %4194 = vmatprep.subr.bf16.mxu0 %v3928
    %4195 = vmatpush1.bf16.msra.mxu0 %v3927
    %4196 = vmatprep.subr.bf16.mxu0 %v3931
    %4197 = vmatpush1.bf16.msra.mxu0 %v3930
    %4198 = vmatprep.subr.bf16.mxu0 %v3934
    %4199 = vmatpush1.bf16.msra.mxu0 %v3933
    %4200 = vmatprep.subr.bf16.mxu0 %v3937
    %4201 = vmatpush1.bf16.msra.mxu0 %v3936
    %4202 = vmatprep.subr.bf16.mxu0 %v3940
    %4203 = vmatpush1.bf16.msra.mxu0 %v3939
    %4204 = vmatprep.subr.bf16.mxu0 %v3943
    %4205 = vmatpush1.bf16.msra.mxu0 %v3942
    %4206 = vmatprep.subr.bf16.mxu0 %v3946
    %4207 = vmatpush1.bf16.msra.mxu0 %v3945
    %4208 = vmatprep.subr.bf16.mxu0 %v3949
    %4209 = vmatpush1.bf16.msra.mxu0 %v3948
    %4210 = vmatprep.subr.bf16.mxu0 %v3952
    %4211 = vmatpush1.bf16.msra.mxu0 %v3951
    %4212 = vmatprep.mubr.bf16.mxu0 %v3312
    %4213 = vmatmul.mubr.bf16.gmra.mrb[0].mxu0 %v3311
    %v4214 = vpop.f32.mrb[0].mxu0
    %v4215 = vadd.f32 %v4174, %v4214
    %v4216 = vpop.f32.mrb[0].mxu0
    %v4217 = vadd.f32 %v4176, %v4216
    %v4218 = vpop.f32.mrb[0].mxu0
    %v4219 = vpop.f32.mrb[0].mxu0
    %4220 = vdwg.mxu0
    %4221 = vmatprep.subr.bf16.mxu0 0
    %4222 = vmatpush1.bf16.msra.mxu0 %v3812
    %4223 = vmatprep.subr.bf16.mxu0 0
    %4224 = vmatpush1.bf16.msra.mxu0 %v3815
    %4225 = vmatprep.subr.bf16.mxu0 0
    %4226 = vmatpush1.bf16.msra.mxu0 %v3818
    %4227 = vmatprep.subr.bf16.mxu0 0
    %4228 = vmatpush1.bf16.msra.mxu0 %v3821
    %4229 = vmatprep.subr.bf16.mxu0 0
    %4230 = vmatpush1.bf16.msra.mxu0 %v3824
    %4231 = vmatprep.subr.bf16.mxu0 0
    %4232 = vmatpush1.bf16.msra.mxu0 %v3827
    %4233 = vmatprep.subr.bf16.mxu0 0
    %4234 = vmatpush1.bf16.msra.mxu0 %v3830
    %4235 = vmatprep.subr.bf16.mxu0 0
    %4236 = vmatpush1.bf16.msra.mxu0 %v3833
    %4237 = vmatprep.subr.bf16.mxu0 0
    %4238 = vmatpush1.bf16.msra.mxu0 %v3836
    %4239 = vmatprep.subr.bf16.mxu0 0
    %4240 = vmatpush1.bf16.msra.mxu0 %v3839
    %4241 = vmatprep.subr.bf16.mxu0 0
    %4242 = vmatpush1.bf16.msra.mxu0 %v3842
    %4243 = vmatprep.subr.bf16.mxu0 0
    %4244 = vmatpush1.bf16.msra.mxu0 %v3845
    %4245 = vmatprep.subr.bf16.mxu0 0
    %4246 = vmatpush1.bf16.msra.mxu0 %v3848
    %4247 = vmatprep.subr.bf16.mxu0 0
    %4248 = vmatpush1.bf16.msra.mxu0 %v3851
    %4249 = vmatprep.subr.bf16.mxu0 0
    %4250 = vmatpush1.bf16.msra.mxu0 %v3854
    %4251 = vmatprep.subr.bf16.mxu0 0
    %4252 = vmatpush1.bf16.msra.mxu0 %v3857
    %4253 = vmatprep.mubr.bf16.mxu0 %v3308
    %4254 = vmatmul.mubr.bf16.gmra.mrb[0].mxu0 %v3307
    %v4255 = vpop.f32.mrb[0].mxu0
    %v4256 = vadd.f32 %v3326, %v4255
    %v4257 = vpop.f32.mrb[0].mxu0
    %v4258 = vpop.f32.mrb[0].mxu0
    %v4259 = vpop.f32.mrb[0].mxu0
    %4260 = vdwg.mxu0
    %4261 = vmatprep.subr.bf16.mxu0 0
    %4262 = vmatpush1.bf16.msra.mxu0 %v3860
    %4263 = vmatprep.subr.bf16.mxu0 0
    %4264 = vmatpush1.bf16.msra.mxu0 %v3863
    %4265 = vmatprep.subr.bf16.mxu0 0
    %4266 = vmatpush1.bf16.msra.mxu0 %v3866
    %4267 = vmatprep.subr.bf16.mxu0 0
    %4268 = vmatpush1.bf16.msra.mxu0 %v3869
    %4269 = vmatprep.subr.bf16.mxu0 0
    %4270 = vmatpush1.bf16.msra.mxu0 %v3872
    %4271 = vmatprep.subr.bf16.mxu0 0
    %4272 = vmatpush1.bf16.msra.mxu0 %v3875
    %4273 = vmatprep.subr.bf16.mxu0 0
    %4274 = vmatpush1.bf16.msra.mxu0 %v3878
    %4275 = vmatprep.subr.bf16.mxu0 0
    %4276 = vmatpush1.bf16.msra.mxu0 %v3881
    %4277 = vmatprep.subr.bf16.mxu0 0
    %4278 = vmatpush1.bf16.msra.mxu0 %v3884
    %4279 = vmatprep.subr.bf16.mxu0 0
    %4280 = vmatpush1.bf16.msra.mxu0 %v3887
    %4281 = vmatprep.subr.bf16.mxu0 0
    %4282 = vmatpush1.bf16.msra.mxu0 %v3890
    %4283 = vmatprep.subr.bf16.mxu0 0
    %4284 = vmatpush1.bf16.msra.mxu0 %v3893
    %4285 = vmatprep.subr.bf16.mxu0 0
    %4286 = vmatpush1.bf16.msra.mxu0 %v3896
    %4287 = vmatprep.subr.bf16.mxu0 0
    %4288 = vmatpush1.bf16.msra.mxu0 %v3899
    %4289 = vmatprep.subr.bf16.mxu0 0
    %4290 = vmatpush1.bf16.msra.mxu0 %v3902
    %4291 = vmatprep.subr.bf16.mxu0 0
    %4292 = vmatpush1.bf16.msra.mxu0 %v3905
    %4293 = vmatprep.mubr.bf16.mxu0 %v3310
    %4294 = vmatmul.mubr.bf16.gmra.mrb[0].mxu0 %v3309
    %v4295 = vpop.f32.mrb[0].mxu0
    %v4296 = vadd.f32 %v4256, %v4295
    %v4297 = vpop.f32.mrb[0].mxu0
    %v4298 = vpop.f32.mrb[0].mxu0
    %v4299 = vpop.f32.mrb[0].mxu0
    %4300 = vdwg.mxu0
    %4301 = vmatprep.subr.bf16.mxu0 0
    %4302 = vmatpush1.bf16.msra.mxu0 %v3908
    %4303 = vmatprep.subr.bf16.mxu0 0
    %4304 = vmatpush1.bf16.msra.mxu0 %v3911
    %4305 = vmatprep.subr.bf16.mxu0 0
    %4306 = vmatpush1.bf16.msra.mxu0 %v3914
    %4307 = vmatprep.subr.bf16.mxu0 0
    %4308 = vmatpush1.bf16.msra.mxu0 %v3917
    %4309 = vmatprep.subr.bf16.mxu0 0
    %4310 = vmatpush1.bf16.msra.mxu0 %v3920
    %4311 = vmatprep.subr.bf16.mxu0 0
    %4312 = vmatpush1.bf16.msra.mxu0 %v3923
    %4313 = vmatprep.subr.bf16.mxu0 0
    %4314 = vmatpush1.bf16.msra.mxu0 %v3926
    %4315 = vmatprep.subr.bf16.mxu0 0
    %4316 = vmatpush1.bf16.msra.mxu0 %v3929
    %4317 = vmatprep.subr.bf16.mxu0 0
    %4318 = vmatpush1.bf16.msra.mxu0 %v3932
    %4319 = vmatprep.subr.bf16.mxu0 0
    %4320 = vmatpush1.bf16.msra.mxu0 %v3935
    %4321 = vmatprep.subr.bf16.mxu0 0
    %4322 = vmatpush1.bf16.msra.mxu0 %v3938
    %4323 = vmatprep.subr.bf16.mxu0 0
    %4324 = vmatpush1.bf16.msra.mxu0 %v3941
    %4325 = vmatprep.subr.bf16.mxu0 0
    %4326 = vmatpush1.bf16.msra.mxu0 %v3944
    %4327 = vmatprep.subr.bf16.mxu0 0
    %4328 = vmatpush1.bf16.msra.mxu0 %v3947
    %4329 = vmatprep.subr.bf16.mxu0 0
    %4330 = vmatpush1.bf16.msra.mxu0 %v3950
    %4331 = vmatprep.subr.bf16.mxu0 0
    %4332 = vmatpush1.bf16.msra.mxu0 %v3953
    %4333 = vmatprep.mubr.bf16.mxu0 %v3312
    %4334 = vmatmul.mubr.bf16.gmra.mrb[0].mxu0 %v3311
    %v4335 = vpop.f32.mrb[0].mxu0
    %v4336 = vadd.f32 %v4296, %v4335
    %v4337 = vpop.f32.mrb[0].mxu0
    %v4338 = vpop.f32.mrb[0].mxu0
    %v4339 = vpop.f32.mrb[0].mxu0
    %4340 = vdwg.mxu0
    %vm4341 = vcmp.gt.f32.partialorder %v4215, 0.0
    %vm4342 = vcmp.gt.f32.partialorder %v4217, 0.0
    %vm4343 = vcmp.gt.f32.partialorder %v4336, 0.0
    %v4344 = vmul.f32 %v4215, 0.2
    %v4345 = vmul.f32 %v4217, 0.2
    %v4346 = vmul.f32 %v4336, 0.2
    %v4347 = vsel %vm4341, %v4215, %v4344
    %v4348 = vsel %vm4342, %v4217, %v4345
    %v4349 = vsel %vm4343, %v4336, %v4346
    %v4350 = vld [vmem:[%s10] sm:$0xff]
    %v4351 = vld [vmem:[%s10 + $0x8] sm:$0xff]
    %v4352 = vld [vmem:[%s10 + $0x10] sm:$0xff]
    %v4353 = vld [vmem:[%s10 + $0x18] sm:$0xff]
    %v4354 = vld [vmem:[%s10 + $0x20] sm:$0xff]
    %v4355 = vld [vmem:[%s10 + $0x28] sm:$0xff]
    %v4356 = vld [vmem:[%s10 + $0x30] sm:$0xff]
    %v4357 = vld [vmem:[%s10 + $0x38] sm:$0xff]
    %v4358 = vld [vmem:[%s10 + $0x40] sm:$0xff]
    %v4359 = vld [vmem:[%s10 + $0x48] sm:$0xff]
    %v4360 = vld [vmem:[%s10 + $0x50] sm:$0xff]
    %v4361 = vld [vmem:[%s10 + $0x58] sm:$0xff]
    %v4362 = vld [vmem:[%s10 + $0x60] sm:$0xff]
    %v4363 = vld [vmem:[%s10 + $0x68] sm:$0xff]
    %v4364 = vld [vmem:[%s10 + $0x70] sm:$0xff]
    %v4365 = vld [vmem:[%s10 + $0x78] sm:$0xff]
    %v4366 = vld [vmem:[%s10 + $0x80] sm:$0xff]
    %v4367 = vld [vmem:[%s10 + $0x88] sm:$0xff]
    %v4368 = vld [vmem:[%s10 + $0x90] sm:$0xff]
    %v4369 = vld [vmem:[%s10 + $0x98] sm:$0xff]
    %v4370 = vld [vmem:[%s10 + $0xa0] sm:$0xff]
    %v4371 = vld [vmem:[%s10 + $0xa8] sm:$0xff]
    %v4372 = vld [vmem:[%s10 + $0xb0] sm:$0xff]
    %v4373 = vld [vmem:[%s10 + $0xb8] sm:$0xff]
    %v4374 = vld [vmem:[%s10 + $0xc0] sm:$0xff]
    %v4375 = vld [vmem:[%s10 + $0xc8] sm:$0xff]
    %v4376 = vld [vmem:[%s10 + $0xd0] sm:$0xff]
    %v4377 = vld [vmem:[%s10 + $0xd8] sm:$0xff]
    %v4378 = vld [vmem:[%s10 + $0xe0] sm:$0xff]
    %v4379 = vld [vmem:[%s10 + $0xe8] sm:$0xff]
    %v4380 = vld [vmem:[%s10 + $0xf0] sm:$0xff]
    %v4381 = vld [vmem:[%s10 + $0xf8] sm:$0xff]
    %v4382 = vld [vmem:[%s10 + $0x100] sm:$0xff]
    %v4383 = vld [vmem:[%s10 + $0x108] sm:$0xff]
    %v4384 = vld [vmem:[%s10 + $0x110] sm:$0xff]
    %v4385 = vld [vmem:[%s10 + $0x118] sm:$0xff]
    %v4386 = vld [vmem:[%s10 + $0x120] sm:$0xff]
    %v4387 = vld [vmem:[%s10 + $0x128] sm:$0xff]
    %v4388 = vld [vmem:[%s10 + $0x130] sm:$0xff]
    %v4389 = vld [vmem:[%s10 + $0x138] sm:$0xff]
    %v4390 = vld [vmem:[%s10 + $0x140] sm:$0xff]
    %v4391 = vld [vmem:[%s10 + $0x148] sm:$0xff]
    %v4392 = vld [vmem:[%s10 + $0x150] sm:$0xff]
    %v4393 = vld [vmem:[%s10 + $0x158] sm:$0xff]
    %v4394 = vld [vmem:[%s10 + $0x160] sm:$0xff]
    %v4395 = vld [vmem:[%s10 + $0x168] sm:$0xff]
    %v4396 = vld [vmem:[%s10 + $0x170] sm:$0xff]
    %v4397 = vld [vmem:[%s10 + $0x178] sm:$0xff]
    %v4398 = vld [vmem:[#allocation17] sm:$0x1]
    %v4400 = vlaneseq
    %v4401 = vshrl.u32 %v4400, 7
    %v4402 = vsub.s32 0, %v4401
    %v4403 = vrot.slane %v4398, %v4402
    %4405 = vmatprep.subr.mxu0 0.0
    %4406 = vmatpush1.msra.mxu0 %v4350
    %4407 = vmatprep.subr.mxu0 0.0
    %4408 = vmatpush1.msra.mxu0 %v4351
    %4409 = vmatprep.subr.mxu0 0.0
    %4410 = vmatpush1.msra.mxu0 %v4352
    %4411 = vmatprep.subr.mxu0 0.0
    %4412 = vmatpush1.msra.mxu0 %v4353
    %4413 = vmatprep.subr.mxu0 0.0
    %4414 = vmatpush1.msra.mxu0 %v4354
    %4415 = vmatprep.subr.mxu0 0.0
    %4416 = vmatpush1.msra.mxu0 %v4355
    %4417 = vmatprep.subr.mxu0 0.0
    %4418 = vmatpush1.msra.mxu0 %v4356
    %4419 = vmatprep.subr.mxu0 0.0
    %4420 = vmatpush1.msra.mxu0 %v4357
    %4421 = vmatprep.subr.mxu0 0.0
    %4422 = vmatpush1.msra.mxu0 %v4358
    %4423 = vmatprep.subr.mxu0 0.0
    %4424 = vmatpush1.msra.mxu0 %v4359
    %4425 = vmatprep.subr.mxu0 0.0
    %4426 = vmatpush1.msra.mxu0 %v4360
    %4427 = vmatprep.subr.mxu0 0.0
    %4428 = vmatpush1.msra.mxu0 %v4361
    %4429 = vmatprep.subr.mxu0 0.0
    %4430 = vmatpush1.msra.mxu0 %v4362
    %4431 = vmatprep.subr.mxu0 0.0
    %4432 = vmatpush1.msra.mxu0 %v4363
    %4433 = vmatprep.subr.mxu0 0.0
    %4434 = vmatpush1.msra.mxu0 %v4364
    %4435 = vmatprep.subr.mxu0 0.0
    %4436 = vmatpush1.msra.mxu0 %v4365
    %4437 = vmatprep.subr.mxu0 0.0
    %4438 = vmatpush1.msra.mxu0 %v4366
    %4439 = vmatprep.subr.mxu0 0.0
    %4440 = vmatpush1.msra.mxu0 %v4367
    %4441 = vmatprep.subr.mxu0 0.0
    %4442 = vmatpush1.msra.mxu0 %v4368
    %4443 = vmatprep.subr.mxu0 0.0
    %4444 = vmatpush1.msra.mxu0 %v4369
    %4445 = vmatprep.subr.mxu0 0.0
    %4446 = vmatpush1.msra.mxu0 %v4370
    %4447 = vmatprep.subr.mxu0 0.0
    %4448 = vmatpush1.msra.mxu0 %v4371
    %4449 = vmatprep.subr.mxu0 0.0
    %4450 = vmatpush1.msra.mxu0 %v4372
    %4451 = vmatprep.subr.mxu0 0.0
    %4452 = vmatpush1.msra.mxu0 %v4373
    %4453 = vmatprep.subr.mxu0 0.0
    %4454 = vmatpush1.msra.mxu0 %v4374
    %4455 = vmatprep.subr.mxu0 0.0
    %4456 = vmatpush1.msra.mxu0 %v4375
    %4457 = vmatprep.subr.mxu0 0.0
    %4458 = vmatpush1.msra.mxu0 %v4376
    %4459 = vmatprep.subr.mxu0 0.0
    %4460 = vmatpush1.msra.mxu0 %v4377
    %4461 = vmatprep.subr.mxu0 0.0
    %4462 = vmatpush1.msra.mxu0 %v4378
    %4463 = vmatprep.subr.mxu0 0.0
    %4464 = vmatpush1.msra.mxu0 %v4379
    %4465 = vmatprep.subr.mxu0 0.0
    %4466 = vmatpush1.msra.mxu0 %v4380
    %4467 = vmatprep.subr.mxu0 0.0
    %4468 = vmatpush1.msra.mxu0 %v4381
    %4469 = vmatprep.mubr.f32.mxu0 %v4348
    %4470 = vmatmul.mubr.f32.gmra.mrb[0].mxu0 %v4347
    %v4471 = vpop.f32.mrb[0].mxu0
    %v4472 = vadd.f32 %v4403, %v4471
    %v4473 = vpop.f32.mrb[0].mxu0
    %4474 = vdwg.mxu0
    %4475 = vmatprep.subr.mxu0 0.0
    %4476 = vmatpush1.msra.mxu0 %v4382
    %4477 = vmatprep.subr.mxu0 0.0
    %4478 = vmatpush1.msra.mxu0 %v4383
    %4479 = vmatprep.subr.mxu0 0.0
    %4480 = vmatpush1.msra.mxu0 %v4384
    %4481 = vmatprep.subr.mxu0 0.0
    %4482 = vmatpush1.msra.mxu0 %v4385
    %4483 = vmatprep.subr.mxu0 0.0
    %4484 = vmatpush1.msra.mxu0 %v4386
    %4485 = vmatprep.subr.mxu0 0.0
    %4486 = vmatpush1.msra.mxu0 %v4387
    %4487 = vmatprep.subr.mxu0 0.0
    %4488 = vmatpush1.msra.mxu0 %v4388
    %4489 = vmatprep.subr.mxu0 0.0
    %4490 = vmatpush1.msra.mxu0 %v4389
    %4491 = vmatprep.subr.mxu0 0.0
    %4492 = vmatpush1.msra.mxu0 %v4390
    %4493 = vmatprep.subr.mxu0 0.0
    %4494 = vmatpush1.msra.mxu0 %v4391
    %4495 = vmatprep.subr.mxu0 0.0
    %4496 = vmatpush1.msra.mxu0 %v4392
    %4497 = vmatprep.subr.mxu0 0.0
    %4498 = vmatpush1.msra.mxu0 %v4393
    %4499 = vmatprep.subr.mxu0 0.0
    %4500 = vmatpush1.msra.mxu0 %v4394
    %4501 = vmatprep.subr.mxu0 0.0
    %4502 = vmatpush1.msra.mxu0 %v4395
    %4503 = vmatprep.subr.mxu0 0.0
    %4504 = vmatpush1.msra.mxu0 %v4396
    %4505 = vmatprep.subr.mxu0 0.0
    %4506 = vmatpush1.msra.mxu0 %v4397
    %4507 = vmatprep.subr.mxu0 0.0
    %4508 = vmatpush1.msra.mxu0 0.0
    %4509 = vmatprep.subr.mxu0 0.0
    %4510 = vmatpush1.msra.mxu0 0.0
    %4511 = vmatprep.subr.mxu0 0.0
    %4512 = vmatpush1.msra.mxu0 0.0
    %4513 = vmatprep.subr.mxu0 0.0
    %4514 = vmatpush1.msra.mxu0 0.0
    %4515 = vmatprep.subr.mxu0 0.0
    %4516 = vmatpush1.msra.mxu0 0.0
    %4517 = vmatprep.subr.mxu0 0.0
    %4518 = vmatpush1.msra.mxu0 0.0
    %4519 = vmatprep.subr.mxu0 0.0
    %4520 = vmatpush1.msra.mxu0 0.0
    %4521 = vmatprep.subr.mxu0 0.0
    %4522 = vmatpush1.msra.mxu0 0.0
    %4523 = vmatprep.subr.mxu0 0.0
    %4524 = vmatpush1.msra.mxu0 0.0
    %4525 = vmatprep.subr.mxu0 0.0
    %4526 = vmatpush1.msra.mxu0 0.0
    %4527 = vmatprep.subr.mxu0 0.0
    %4528 = vmatpush1.msra.mxu0 0.0
    %4529 = vmatprep.subr.mxu0 0.0
    %4530 = vmatpush1.msra.mxu0 0.0
    %4531 = vmatprep.subr.mxu0 0.0
    %4532 = vmatpush1.msra.mxu0 0.0
    %4533 = vmatprep.subr.mxu0 0.0
    %4534 = vmatpush1.msra.mxu0 0.0
    %4535 = vmatprep.subr.mxu0 0.0
    %4536 = vmatpush1.msra.mxu0 0.0
    %4537 = vmatprep.subr.mxu0 0.0
    %4538 = vmatpush1.msra.mxu0 0.0
    %4539 = vmatprep.mubr.f32.mxu0 0.0
    %4540 = vmatmul.mubr.f32.gmra.mrb[0].mxu0 %v4349
    %v4541 = vpop.f32.mrb[0].mxu0
    %v4542 = vadd.f32 %v4472, %v4541
    %v4543 = vpop.f32.mrb[0].mxu0
    %4544 = vdwg.mxu0
    %v4545 = vld [vmem:[%s12] sm:$0xff]
    %v4546 = vld [vmem:[%s12 + $0x8] sm:$0xff]
    %v4547 = vld [vmem:[%s12 + $0x10] sm:$0xff]
    %v4548 = vld [vmem:[%s12 + $0x18] sm:$0xff]
    %v4549 = vld [vmem:[%s12 + $0x20] sm:$0xff]
    %v4550 = vld [vmem:[%s12 + $0x28] sm:$0xff]
    %v4551 = vld [vmem:[%s12 + $0x30] sm:$0xff]
    %v4552 = vld [vmem:[%s12 + $0x38] sm:$0xff]
    %v4553 = vld [vmem:[%s12 + $0x40] sm:$0xff]
    %v4554 = vld [vmem:[%s12 + $0x48] sm:$0xff]
    %v4555 = vld [vmem:[%s12 + $0x50] sm:$0xff]
    %v4556 = vld [vmem:[%s12 + $0x58] sm:$0xff]
    %v4557 = vld [vmem:[%s12 + $0x60] sm:$0xff]
    %v4558 = vld [vmem:[%s12 + $0x68] sm:$0xff]
    %v4559 = vld [vmem:[%s12 + $0x70] sm:$0xff]
    %v4560 = vld [vmem:[%s12 + $0x78] sm:$0xff]
    %v4561 = vld [vmem:[%s12 + $0x80] sm:$0xff]
    %v4562 = vld [vmem:[%s12 + $0x88] sm:$0xff]
    %v4563 = vld [vmem:[%s12 + $0x90] sm:$0xff]
    %v4564 = vld [vmem:[%s12 + $0x98] sm:$0xff]
    %v4565 = vld [vmem:[%s12 + $0xa0] sm:$0xff]
    %v4566 = vld [vmem:[%s12 + $0xa8] sm:$0xff]
    %v4567 = vld [vmem:[%s12 + $0xb0] sm:$0xff]
    %v4568 = vld [vmem:[%s12 + $0xb8] sm:$0xff]
    %v4569 = vld [vmem:[%s12 + $0xc0] sm:$0xff]
    %v4570 = vld [vmem:[%s12 + $0xc8] sm:$0xff]
    %v4571 = vld [vmem:[%s12 + $0xd0] sm:$0xff]
    %v4572 = vld [vmem:[%s12 + $0xd8] sm:$0xff]
    %v4573 = vld [vmem:[%s12 + $0xe0] sm:$0xff]
    %v4574 = vld [vmem:[%s12 + $0xe8] sm:$0xff]
    %v4575 = vld [vmem:[%s12 + $0xf0] sm:$0xff]
    %v4576 = vld [vmem:[%s12 + $0xf8] sm:$0xff]
    %v4577 = vld [vmem:[%s12 + $0x100] sm:$0xff]
    %v4578 = vld [vmem:[%s12 + $0x108] sm:$0xff]
    %v4579 = vld [vmem:[%s12 + $0x110] sm:$0xff]
    %v4580 = vld [vmem:[%s12 + $0x118] sm:$0xff]
    %v4581 = vld [vmem:[%s12 + $0x120] sm:$0xff]
    %v4582 = vld [vmem:[%s12 + $0x128] sm:$0xff]
    %v4583 = vld [vmem:[%s12 + $0x130] sm:$0xff]
    %v4584 = vld [vmem:[%s12 + $0x138] sm:$0xff]
    %v4585 = vld [vmem:[%s12 + $0x140] sm:$0xff]
    %v4586 = vld [vmem:[%s12 + $0x148] sm:$0xff]
    %v4587 = vld [vmem:[%s12 + $0x150] sm:$0xff]
    %v4588 = vld [vmem:[%s12 + $0x158] sm:$0xff]
    %v4589 = vld [vmem:[%s12 + $0x160] sm:$0xff]
    %v4590 = vld [vmem:[%s12 + $0x168] sm:$0xff]
    %v4591 = vld [vmem:[%s12 + $0x170] sm:$0xff]
    %v4592 = vld [vmem:[%s12 + $0x178] sm:$0xff]
    %v4593 = vld [vmem:[#allocation19] sm:$0x1]
    %v4595 = vlaneseq
    %v4596 = vshrl.u32 %v4595, 7
    %v4597 = vsub.s32 0, %v4596
    %v4598 = vrot.slane %v4593, %v4597
    %4600 = vmatprep.subr.mxu0 0.0
    %4601 = vmatpush1.msra.mxu0 %v4545
    %4602 = vmatprep.subr.mxu0 0.0
    %4603 = vmatpush1.msra.mxu0 %v4546
    %4604 = vmatprep.subr.mxu0 0.0
    %4605 = vmatpush1.msra.mxu0 %v4547
    %4606 = vmatprep.subr.mxu0 0.0
    %4607 = vmatpush1.msra.mxu0 %v4548
    %4608 = vmatprep.subr.mxu0 0.0
    %4609 = vmatpush1.msra.mxu0 %v4549
    %4610 = vmatprep.subr.mxu0 0.0
    %4611 = vmatpush1.msra.mxu0 %v4550
    %4612 = vmatprep.subr.mxu0 0.0
    %4613 = vmatpush1.msra.mxu0 %v4551
    %4614 = vmatprep.subr.mxu0 0.0
    %4615 = vmatpush1.msra.mxu0 %v4552
    %4616 = vmatprep.subr.mxu0 0.0
    %4617 = vmatpush1.msra.mxu0 %v4553
    %4618 = vmatprep.subr.mxu0 0.0
    %4619 = vmatpush1.msra.mxu0 %v4554
    %4620 = vmatprep.subr.mxu0 0.0
    %4621 = vmatpush1.msra.mxu0 %v4555
    %4622 = vmatprep.subr.mxu0 0.0
    %4623 = vmatpush1.msra.mxu0 %v4556
    %4624 = vmatprep.subr.mxu0 0.0
    %4625 = vmatpush1.msra.mxu0 %v4557
    %4626 = vmatprep.subr.mxu0 0.0
    %4627 = vmatpush1.msra.mxu0 %v4558
    %4628 = vmatprep.subr.mxu0 0.0
    %4629 = vmatpush1.msra.mxu0 %v4559
    %4630 = vmatprep.subr.mxu0 0.0
    %4631 = vmatpush1.msra.mxu0 %v4560
    %4632 = vmatprep.subr.mxu0 0.0
    %4633 = vmatpush1.msra.mxu0 %v4561
    %4634 = vmatprep.subr.mxu0 0.0
    %4635 = vmatpush1.msra.mxu0 %v4562
    %4636 = vmatprep.subr.mxu0 0.0
    %4637 = vmatpush1.msra.mxu0 %v4563
    %4638 = vmatprep.subr.mxu0 0.0
    %4639 = vmatpush1.msra.mxu0 %v4564
    %4640 = vmatprep.subr.mxu0 0.0
    %4641 = vmatpush1.msra.mxu0 %v4565
    %4642 = vmatprep.subr.mxu0 0.0
    %4643 = vmatpush1.msra.mxu0 %v4566
    %4644 = vmatprep.subr.mxu0 0.0
    %4645 = vmatpush1.msra.mxu0 %v4567
    %4646 = vmatprep.subr.mxu0 0.0
    %4647 = vmatpush1.msra.mxu0 %v4568
    %4648 = vmatprep.subr.mxu0 0.0
    %4649 = vmatpush1.msra.mxu0 %v4569
    %4650 = vmatprep.subr.mxu0 0.0
    %4651 = vmatpush1.msra.mxu0 %v4570
    %4652 = vmatprep.subr.mxu0 0.0
    %4653 = vmatpush1.msra.mxu0 %v4571
    %4654 = vmatprep.subr.mxu0 0.0
    %4655 = vmatpush1.msra.mxu0 %v4572
    %4656 = vmatprep.subr.mxu0 0.0
    %4657 = vmatpush1.msra.mxu0 %v4573
    %4658 = vmatprep.subr.mxu0 0.0
    %4659 = vmatpush1.msra.mxu0 %v4574
    %4660 = vmatprep.subr.mxu0 0.0
    %4661 = vmatpush1.msra.mxu0 %v4575
    %4662 = vmatprep.subr.mxu0 0.0
    %4663 = vmatpush1.msra.mxu0 %v4576
    %4664 = vmatprep.mubr.f32.mxu0 %v4348
    %4665 = vmatmul.mubr.f32.gmra.mrb[0].mxu0 %v4347
    %v4666 = vpop.f32.mrb[0].mxu0
    %v4667 = vadd.f32 %v4598, %v4666
    %v4668 = vpop.f32.mrb[0].mxu0
    %4669 = vdwg.mxu0
    %4670 = vmatprep.subr.mxu0 0.0
    %4671 = vmatpush1.msra.mxu0 %v4577
    %4672 = vmatprep.subr.mxu0 0.0
    %4673 = vmatpush1.msra.mxu0 %v4578
    %4674 = vmatprep.subr.mxu0 0.0
    %4675 = vmatpush1.msra.mxu0 %v4579
    %4676 = vmatprep.subr.mxu0 0.0
    %4677 = vmatpush1.msra.mxu0 %v4580
    %4678 = vmatprep.subr.mxu0 0.0
    %4679 = vmatpush1.msra.mxu0 %v4581
    %4680 = vmatprep.subr.mxu0 0.0
    %4681 = vmatpush1.msra.mxu0 %v4582
    %4682 = vmatprep.subr.mxu0 0.0
    %4683 = vmatpush1.msra.mxu0 %v4583
    %4684 = vmatprep.subr.mxu0 0.0
    %4685 = vmatpush1.msra.mxu0 %v4584
    %4686 = vmatprep.subr.mxu0 0.0
    %4687 = vmatpush1.msra.mxu0 %v4585
    %4688 = vmatprep.subr.mxu0 0.0
    %4689 = vmatpush1.msra.mxu0 %v4586
    %4690 = vmatprep.subr.mxu0 0.0
    %4691 = vmatpush1.msra.mxu0 %v4587
    %4692 = vmatprep.subr.mxu0 0.0
    %4693 = vmatpush1.msra.mxu0 %v4588
    %4694 = vmatprep.subr.mxu0 0.0
    %4695 = vmatpush1.msra.mxu0 %v4589
    %4696 = vmatprep.subr.mxu0 0.0
    %4697 = vmatpush1.msra.mxu0 %v4590
    %4698 = vmatprep.subr.mxu0 0.0
    %4699 = vmatpush1.msra.mxu0 %v4591
    %4700 = vmatprep.subr.mxu0 0.0
    %4701 = vmatpush1.msra.mxu0 %v4592
    %4702 = vmatprep.subr.mxu0 0.0
    %4703 = vmatpush1.msra.mxu0 0.0
    %4704 = vmatprep.subr.mxu0 0.0
    %4705 = vmatpush1.msra.mxu0 0.0
    %4706 = vmatprep.subr.mxu0 0.0
    %4707 = vmatpush1.msra.mxu0 0.0
    %4708 = vmatprep.subr.mxu0 0.0
    %4709 = vmatpush1.msra.mxu0 0.0
    %4710 = vmatprep.subr.mxu0 0.0
    %4711 = vmatpush1.msra.mxu0 0.0
    %4712 = vmatprep.subr.mxu0 0.0
    %4713 = vmatpush1.msra.mxu0 0.0
    %4714 = vmatprep.subr.mxu0 0.0
    %4715 = vmatpush1.msra.mxu0 0.0
    %4716 = vmatprep.subr.mxu0 0.0
    %4717 = vmatpush1.msra.mxu0 0.0
    %4718 = vmatprep.subr.mxu0 0.0
    %4719 = vmatpush1.msra.mxu0 0.0
    %4720 = vmatprep.subr.mxu0 0.0
    %4721 = vmatpush1.msra.mxu0 0.0
    %4722 = vmatprep.subr.mxu0 0.0
    %4723 = vmatpush1.msra.mxu0 0.0
    %4724 = vmatprep.subr.mxu0 0.0
    %4725 = vmatpush1.msra.mxu0 0.0
    %4726 = vmatprep.subr.mxu0 0.0
    %4727 = vmatpush1.msra.mxu0 0.0
    %4728 = vmatprep.subr.mxu0 0.0
    %4729 = vmatpush1.msra.mxu0 0.0
    %4730 = vmatprep.subr.mxu0 0.0
    %4731 = vmatpush1.msra.mxu0 0.0
    %4732 = vmatprep.subr.mxu0 0.0
    %4733 = vmatpush1.msra.mxu0 0.0
    %4734 = vmatprep.mubr.f32.mxu0 0.0
    %4735 = vmatmul.mubr.f32.gmra.mrb[0].mxu0 %v4349
    %v4736 = vpop.f32.mrb[0].mxu0
    %v4737 = vadd.f32 %v4667, %v4736
    %v4738 = vpop.f32.mrb[0].mxu0
    %4739 = vdwg.mxu0
    %v4740 = vld [vmem:[#allocation7] sm:$0x3]
    %v4741 = vmul.f32 %v4737, 1.442695
    %v4742 = vpow.pop %v4741
    %v4743 = vmul.f32 %v4740, %v4742
    %v4744 = vadd.f32 %v4542, %v4743
    %v4745 = vld [vmem:[#allocation20] sm:$0xff]
    %v4746 = vld [vmem:[#allocation20 + $0x8] sm:$0xff]
    %v4747 = vld [vmem:[#allocation20 + $0x10] sm:$0xff]
    %v4748 = vld [vmem:[#allocation20 + $0x18] sm:$0xff]
    %v4749 = vld [vmem:[#allocation20 + $0x20] sm:$0xff]
    %v4750 = vld [vmem:[#allocation20 + $0x28] sm:$0xff]
    %v4751 = vld [vmem:[#allocation20 + $0x30] sm:$0xff]
    %v4752 = vld [vmem:[#allocation20 + $0x38] sm:$0xff]
    %v4753 = vld [vmem:[#allocation20 + $0x40] sm:$0xff]
    %v4754 = vld [vmem:[#allocation20 + $0x48] sm:$0xff]
    %v4755 = vld [vmem:[#allocation20 + $0x50] sm:$0xff]
    %v4756 = vld [vmem:[#allocation20 + $0x58] sm:$0xff]
    %v4757 = vld [vmem:[#allocation22] sm:$0x77]
    %v4758 = vld [vmem:[#allocation22 + $0x8] sm:$0x7]
    %v4761 = vcombine.high %v4757, %v4757
    %v4762 = vsel %vm357, %v4757, 0
    %v4764 = vsel %vm357, %v4761, 0
    %v4766 = vsel %vm357, %v4758, 0
    %4768 = vmatprep.subr.mxu0 %v4764
    %4769 = vmatpush1.msra.mxu0 %v4762
    %4770 = vmatprep.subr.mxu0 0.0
    %4771 = vmatpush1.msra.mxu0 0.0
    %4772 = vmatprep.subr.mxu0 0.0
    %4773 = vmatpush1.msra.mxu0 0.0
    %4774 = vmatprep.subr.mxu0 0.0
    %4775 = vmatpush1.msra.mxu0 0.0
    %4776 = vmatprep.subr.mxu0 0.0
    %4777 = vmatpush1.msra.mxu0 0.0
    %4778 = vmatprep.subr.mxu0 0.0
    %4779 = vmatpush1.msra.mxu0 0.0
    %4780 = vmatprep.subr.mxu0 0.0
    %4781 = vmatpush1.msra.mxu0 0.0
    %4782 = vmatprep.subr.mxu0 0.0
    %4783 = vmatpush1.msra.mxu0 0.0
    %4784 = vmatprep.subr.mxu0 0.0
    %4785 = vmatpush1.msra.mxu0 0.0
    %4786 = vmatprep.subr.mxu0 0.0
    %4787 = vmatpush1.msra.mxu0 0.0
    %4788 = vmatprep.subr.mxu0 0.0
    %4789 = vmatpush1.msra.mxu0 0.0
    %4790 = vmatprep.subr.mxu0 0.0
    %4791 = vmatpush1.msra.mxu0 0.0
    %4792 = vmatprep.subr.mxu0 0.0
    %4793 = vmatpush1.msra.mxu0 0.0
    %4794 = vmatprep.subr.mxu0 0.0
    %4795 = vmatpush1.msra.mxu0 0.0
    %4796 = vmatprep.subr.mxu0 0.0
    %4797 = vmatpush1.msra.mxu0 0.0
    %4798 = vmatprep.subr.mxu0 0.0
    %4799 = vmatpush1.msra.mxu0 0.0
    %4800 = vmatprep.subr.mxu0 0.0
    %4801 = vmatpush1.msra.mxu0 0.0
    %4802 = vmatprep.subr.mxu0 0.0
    %4803 = vmatpush1.msra.mxu0 0.0
    %4804 = vmatprep.subr.mxu0 0.0
    %4805 = vmatpush1.msra.mxu0 0.0
    %4806 = vmatprep.subr.mxu0 0.0
    %4807 = vmatpush1.msra.mxu0 0.0
    %4808 = vmatprep.subr.mxu0 0.0
    %4809 = vmatpush1.msra.mxu0 0.0
    %4810 = vmatprep.subr.mxu0 0.0
    %4811 = vmatpush1.msra.mxu0 0.0
    %4812 = vmatprep.subr.mxu0 0.0
    %4813 = vmatpush1.msra.mxu0 0.0
    %4814 = vmatprep.subr.mxu0 0.0
    %4815 = vmatpush1.msra.mxu0 0.0
    %4816 = vmatprep.subr.mxu0 0.0
    %4817 = vmatpush1.msra.mxu0 0.0
    %4818 = vmatprep.subr.mxu0 0.0
    %4819 = vmatpush1.msra.mxu0 0.0
    %4820 = vmatprep.subr.mxu0 0.0
    %4821 = vmatpush1.msra.mxu0 0.0
    %4822 = vmatprep.subr.mxu0 0.0
    %4823 = vmatpush1.msra.mxu0 0.0
    %4824 = vmatprep.subr.mxu0 0.0
    %4825 = vmatpush1.msra.mxu0 0.0
    %4826 = vmatprep.subr.mxu0 0.0
    %4827 = vmatpush1.msra.mxu0 0.0
    %4828 = vmatprep.subr.mxu0 0.0
    %4829 = vmatpush1.msra.mxu0 0.0
    %4830 = vmatprep.subr.mxu0 0.0
    %4831 = vmatpush1.msra.mxu0 0.0
    %4832 = vmatprep.mubr.f32.mxu0 0.0
    %4833 = vmatmul.mubr.f32.gmra.mrb[0].mxu0 %v355
    %v4834 = vpop.f32.mrb[0].mxu0
    %v4835 = vadd.f32 0.0, %v4834
    %v4836 = vpop.f32.mrb[0].mxu0
    %v4837 = vadd.f32 0.0, %v4836
    %4838 = vdwg.mxu0
    %4839 = vmatprep.subr.mxu0 0.0
    %4840 = vmatpush1.msra.mxu0 %v4766
    %4841 = vmatprep.subr.mxu0 0.0
    %4842 = vmatpush1.msra.mxu0 0.0
    %4843 = vmatprep.subr.mxu0 0.0
    %4844 = vmatpush1.msra.mxu0 0.0
    %4845 = vmatprep.subr.mxu0 0.0
    %4846 = vmatpush1.msra.mxu0 0.0
    %4847 = vmatprep.subr.mxu0 0.0
    %4848 = vmatpush1.msra.mxu0 0.0
    %4849 = vmatprep.subr.mxu0 0.0
    %4850 = vmatpush1.msra.mxu0 0.0
    %4851 = vmatprep.subr.mxu0 0.0
    %4852 = vmatpush1.msra.mxu0 0.0
    %4853 = vmatprep.subr.mxu0 0.0
    %4854 = vmatpush1.msra.mxu0 0.0
    %4855 = vmatprep.subr.mxu0 0.0
    %4856 = vmatpush1.msra.mxu0 0.0
    %4857 = vmatprep.subr.mxu0 0.0
    %4858 = vmatpush1.msra.mxu0 0.0
    %4859 = vmatprep.subr.mxu0 0.0
    %4860 = vmatpush1.msra.mxu0 0.0
    %4861 = vmatprep.subr.mxu0 0.0
    %4862 = vmatpush1.msra.mxu0 0.0
    %4863 = vmatprep.subr.mxu0 0.0
    %4864 = vmatpush1.msra.mxu0 0.0
    %4865 = vmatprep.subr.mxu0 0.0
    %4866 = vmatpush1.msra.mxu0 0.0
    %4867 = vmatprep.subr.mxu0 0.0
    %4868 = vmatpush1.msra.mxu0 0.0
    %4869 = vmatprep.subr.mxu0 0.0
    %4870 = vmatpush1.msra.mxu0 0.0
    %4871 = vmatprep.subr.mxu0 0.0
    %4872 = vmatpush1.msra.mxu0 0.0
    %4873 = vmatprep.subr.mxu0 0.0
    %4874 = vmatpush1.msra.mxu0 0.0
    %4875 = vmatprep.subr.mxu0 0.0
    %4876 = vmatpush1.msra.mxu0 0.0
    %4877 = vmatprep.subr.mxu0 0.0
    %4878 = vmatpush1.msra.mxu0 0.0
    %4879 = vmatprep.subr.mxu0 0.0
    %4880 = vmatpush1.msra.mxu0 0.0
    %4881 = vmatprep.subr.mxu0 0.0
    %4882 = vmatpush1.msra.mxu0 0.0
    %4883 = vmatprep.subr.mxu0 0.0
    %4884 = vmatpush1.msra.mxu0 0.0
    %4885 = vmatprep.subr.mxu0 0.0
    %4886 = vmatpush1.msra.mxu0 0.0
    %4887 = vmatprep.subr.mxu0 0.0
    %4888 = vmatpush1.msra.mxu0 0.0
    %4889 = vmatprep.subr.mxu0 0.0
    %4890 = vmatpush1.msra.mxu0 0.0
    %4891 = vmatprep.subr.mxu0 0.0
    %4892 = vmatpush1.msra.mxu0 0.0
    %4893 = vmatprep.subr.mxu0 0.0
    %4894 = vmatpush1.msra.mxu0 0.0
    %4895 = vmatprep.subr.mxu0 0.0
    %4896 = vmatpush1.msra.mxu0 0.0
    %4897 = vmatprep.subr.mxu0 0.0
    %4898 = vmatpush1.msra.mxu0 0.0
    %4899 = vmatprep.subr.mxu0 0.0
    %4900 = vmatpush1.msra.mxu0 0.0
    %4901 = vmatprep.subr.mxu0 0.0
    %4902 = vmatpush1.msra.mxu0 0.0
    %4903 = vmatprep.mubr.f32.mxu0 0.0
    %4904 = vmatmul.mubr.f32.gmra.mrb[0].mxu0 %v355
    %v4905 = vpop.f32.mrb[0].mxu0
    %v4906 = vadd.f32 0.0, %v4905
    %v4907 = vpop.f32.mrb[0].mxu0
    %4908 = vdwg.mxu0
    %vm4909 = vcmask 261120
    %v4911 = vsel %vm4909, %v4744, 0
    %4913 = vmatprep.subr.mxu0 %v4746
    %4914 = vmatpush1.msra.mxu0 %v4745
    %4915 = vmatprep.subr.mxu0 %v4749
    %4916 = vmatpush1.msra.mxu0 %v4748
    %4917 = vmatprep.subr.mxu0 %v4752
    %4918 = vmatpush1.msra.mxu0 %v4751
    %4919 = vmatprep.subr.mxu0 %v4755
    %4920 = vmatpush1.msra.mxu0 %v4754
    %4921 = vmatprep.subr.mxu0 0.0
    %4922 = vmatpush1.msra.mxu0 0.0
    %4923 = vmatprep.subr.mxu0 0.0
    %4924 = vmatpush1.msra.mxu0 0.0
    %4925 = vmatprep.subr.mxu0 0.0
    %4926 = vmatpush1.msra.mxu0 0.0
    %4927 = vmatprep.subr.mxu0 0.0
    %4928 = vmatpush1.msra.mxu0 0.0
    %4929 = vmatprep.subr.mxu0 0.0
    %4930 = vmatpush1.msra.mxu0 0.0
    %4931 = vmatprep.subr.mxu0 0.0
    %4932 = vmatpush1.msra.mxu0 0.0
    %4933 = vmatprep.subr.mxu0 0.0
    %4934 = vmatpush1.msra.mxu0 0.0
    %4935 = vmatprep.subr.mxu0 0.0
    %4936 = vmatpush1.msra.mxu0 0.0
    %4937 = vmatprep.subr.mxu0 0.0
    %4938 = vmatpush1.msra.mxu0 0.0
    %4939 = vmatprep.subr.mxu0 0.0
    %4940 = vmatpush1.msra.mxu0 0.0
    %4941 = vmatprep.subr.mxu0 0.0
    %4942 = vmatpush1.msra.mxu0 0.0
    %4943 = vmatprep.subr.mxu0 0.0
    %4944 = vmatpush1.msra.mxu0 0.0
    %4945 = vmatprep.subr.mxu0 0.0
    %4946 = vmatpush1.msra.mxu0 0.0
    %4947 = vmatprep.subr.mxu0 0.0
    %4948 = vmatpush1.msra.mxu0 0.0
    %4949 = vmatprep.subr.mxu0 0.0
    %4950 = vmatpush1.msra.mxu0 0.0
    %4951 = vmatprep.subr.mxu0 0.0
    %4952 = vmatpush1.msra.mxu0 0.0
    %4953 = vmatprep.subr.mxu0 0.0
    %4954 = vmatpush1.msra.mxu0 0.0
    %4955 = vmatprep.subr.mxu0 0.0
    %4956 = vmatpush1.msra.mxu0 0.0
    %4957 = vmatprep.subr.mxu0 0.0
    %4958 = vmatpush1.msra.mxu0 0.0
    %4959 = vmatprep.subr.mxu0 0.0
    %4960 = vmatpush1.msra.mxu0 0.0
    %4961 = vmatprep.subr.mxu0 0.0
    %4962 = vmatpush1.msra.mxu0 0.0
    %4963 = vmatprep.subr.mxu0 0.0
    %4964 = vmatpush1.msra.mxu0 0.0
    %4965 = vmatprep.subr.mxu0 0.0
    %4966 = vmatpush1.msra.mxu0 0.0
    %4967 = vmatprep.subr.mxu0 0.0
    %4968 = vmatpush1.msra.mxu0 0.0
    %4969 = vmatprep.subr.mxu0 0.0
    %4970 = vmatpush1.msra.mxu0 0.0
    %4971 = vmatprep.subr.mxu0 0.0
    %4972 = vmatpush1.msra.mxu0 0.0
    %4973 = vmatprep.subr.mxu0 0.0
    %4974 = vmatpush1.msra.mxu0 0.0
    %4975 = vmatprep.subr.mxu0 0.0
    %4976 = vmatpush1.msra.mxu0 0.0
    %4977 = vmatprep.mubr.f32.mxu0 0.0
    %4978 = vmatmul.mubr.f32.gmra.mrb[0].mxu0 %v4911
    %v4979 = vpop.f32.mrb[0].mxu0
    %v4980 = vadd.f32 %v4835, %v4979
    %v4981 = vpop.f32.mrb[0].mxu0
    %v4982 = vadd.f32 %v4837, %v4981
    %4983 = vdwg.mxu0
    %4984 = vmatprep.subr.mxu0 0.0
    %4985 = vmatpush1.msra.mxu0 %v4747
    %4986 = vmatprep.subr.mxu0 0.0
    %4987 = vmatpush1.msra.mxu0 %v4750
    %4988 = vmatprep.subr.mxu0 0.0
    %4989 = vmatpush1.msra.mxu0 %v4753
    %4990 = vmatprep.subr.mxu0 0.0
    %4991 = vmatpush1.msra.mxu0 %v4756
    %4992 = vmatprep.subr.mxu0 0.0
    %4993 = vmatpush1.msra.mxu0 0.0
    %4994 = vmatprep.subr.mxu0 0.0
    %4995 = vmatpush1.msra.mxu0 0.0
    %4996 = vmatprep.subr.mxu0 0.0
    %4997 = vmatpush1.msra.mxu0 0.0
    %4998 = vmatprep.subr.mxu0 0.0
    %4999 = vmatpush1.msra.mxu0 0.0
    %5000 = vmatprep.subr.mxu0 0.0
    %5001 = vmatpush1.msra.mxu0 0.0
    %5002 = vmatprep.subr.mxu0 0.0
    %5003 = vmatpush1.msra.mxu0 0.0
    %5004 = vmatprep.subr.mxu0 0.0
    %5005 = vmatpush1.msra.mxu0 0.0
    %5006 = vmatprep.subr.mxu0 0.0
    %5007 = vmatpush1.msra.mxu0 0.0
    %5008 = vmatprep.subr.mxu0 0.0
    %5009 = vmatpush1.msra.mxu0 0.0
    %5010 = vmatprep.subr.mxu0 0.0
    %5011 = vmatpush1.msra.mxu0 0.0
    %5012 = vmatprep.subr.mxu0 0.0
    %5013 = vmatpush1.msra.mxu0 0.0
    %5014 = vmatprep.subr.mxu0 0.0
    %5015 = vmatpush1.msra.mxu0 0.0
    %5016 = vmatprep.subr.mxu0 0.0
    %5017 = vmatpush1.msra.mxu0 0.0
    %5018 = vmatprep.subr.mxu0 0.0
    %5019 = vmatpush1.msra.mxu0 0.0
    %5020 = vmatprep.subr.mxu0 0.0
    %5021 = vmatpush1.msra.mxu0 0.0
    %5022 = vmatprep.subr.mxu0 0.0
    %5023 = vmatpush1.msra.mxu0 0.0
    %5024 = vmatprep.subr.mxu0 0.0
    %5025 = vmatpush1.msra.mxu0 0.0
    %5026 = vmatprep.subr.mxu0 0.0
    %5027 = vmatpush1.msra.mxu0 0.0
    %5028 = vmatprep.subr.mxu0 0.0
    %5029 = vmatpush1.msra.mxu0 0.0
    %5030 = vmatprep.subr.mxu0 0.0
    %5031 = vmatpush1.msra.mxu0 0.0
    %5032 = vmatprep.subr.mxu0 0.0
    %5033 = vmatpush1.msra.mxu0 0.0
    %5034 = vmatprep.subr.mxu0 0.0
    %5035 = vmatpush1.msra.mxu0 0.0
    %5036 = vmatprep.subr.mxu0 0.0
    %5037 = vmatpush1.msra.mxu0 0.0
    %5038 = vmatprep.subr.mxu0 0.0
    %5039 = vmatpush1.msra.mxu0 0.0
    %5040 = vmatprep.subr.mxu0 0.0
    %5041 = vmatpush1.msra.mxu0 0.0
    %5042 = vmatprep.subr.mxu0 0.0
    %5043 = vmatpush1.msra.mxu0 0.0
    %5044 = vmatprep.subr.mxu0 0.0
    %5045 = vmatpush1.msra.mxu0 0.0
    %5046 = vmatprep.subr.mxu0 0.0
    %5047 = vmatpush1.msra.mxu0 0.0
    %5048 = vmatprep.mubr.f32.mxu0 0.0
    %5049 = vmatmul.mubr.f32.gmra.mrb[0].mxu0 %v4911
    %v5050 = vpop.f32.mrb[0].mxu0
    %v5051 = vadd.f32 %v4906, %v5050
    %v5052 = vpop.f32.mrb[0].mxu0
    %5053 = vdwg.mxu0
    %v5054 = vld [vmem:[#allocation23] sm:$0x7]
    %v5056 = vlaneseq
    %v5057 = vshrl.u32 %v5056, 7
    %v5058 = vsub.s32 0, %v5057
    %v5059 = vrot.slane %v5054, %v5058
    %v5060 = vlaneseq
    %v5061 = vshrl.u32 %v5060, 7
    %v5062 = vsub.s32 1, %v5061
    %v5063 = vrot.slane %v5054, %v5062
    %v5064 = vlaneseq
    %v5065 = vshrl.u32 %v5064, 7
    %v5066 = vsub.s32 2, %v5065
    %v5067 = vrot.slane %v5054, %v5066
    %v5071 = vadd.f32 %v4980, %v5059
    %v5072 = vadd.f32 %v4982, %v5063
    %v5073 = vadd.f32 %v5051, %v5067
    %v5074 = vmax.f32 %v5071, 0.0
    %v5075 = vmax.f32 %v5072, 0.0
    %v5076 = vmax.f32 %v5073, 0.0
    %v5077 = vld [vmem:[#allocation25] sm:$0xff]
    %v5078 = vld [vmem:[#allocation25 + $0x8] sm:$0xf]
    %v5079 = vld [vmem:[#allocation25 + $0xc] sm:$0xff]
    %v5080 = vld [vmem:[#allocation25 + $0x14] sm:$0xf]
    %v5081 = vld [vmem:[#allocation25 + $0x18] sm:$0xff]
    %v5082 = vld [vmem:[#allocation25 + $0x20] sm:$0xf]
    %v5083 = vld [vmem:[#allocation25 + $0x24] sm:$0xff]
    %v5084 = vld [vmem:[#allocation25 + $0x2c] sm:$0xf]
    %v5085 = vld [vmem:[#allocation25 + $0x30] sm:$0xff]
    %v5086 = vld [vmem:[#allocation25 + $0x38] sm:$0xf]
    %v5087 = vld [vmem:[#allocation25 + $0x3c] sm:$0xff]
    %v5088 = vld [vmem:[#allocation25 + $0x44] sm:$0xf]
    %v5089 = vld [vmem:[#allocation25 + $0x48] sm:$0xff]
    %v5090 = vld [vmem:[#allocation25 + $0x50] sm:$0xf]
    %v5091 = vld [vmem:[#allocation25 + $0x54] sm:$0xff]
    %v5092 = vld [vmem:[#allocation25 + $0x5c] sm:$0xf]
    %v5093 = vld [vmem:[#allocation25 + $0x60] sm:$0xff]
    %v5094 = vld [vmem:[#allocation25 + $0x68] sm:$0xf]
    %v5095 = vld [vmem:[#allocation25 + $0x6c] sm:$0xff]
    %v5096 = vld [vmem:[#allocation25 + $0x74] sm:$0xf]
    %v5097 = vld [vmem:[#allocation25 + $0x78] sm:$0xff]
    %v5098 = vld [vmem:[#allocation25 + $0x80] sm:$0xf]
    %v5099 = vld [vmem:[#allocation25 + $0x84] sm:$0xff]
    %v5100 = vld [vmem:[#allocation25 + $0x8c] sm:$0xf]
    %v5101 = vld [vmem:[#allocation25 + $0x90] sm:$0xff]
    %v5102 = vld [vmem:[#allocation25 + $0x98] sm:$0xf]
    %v5103 = vld [vmem:[#allocation25 + $0x9c] sm:$0xff]
    %v5104 = vld [vmem:[#allocation25 + $0xa4] sm:$0xf]
    %v5105 = vld [vmem:[#allocation25 + $0xa8] sm:$0xff]
    %v5106 = vld [vmem:[#allocation25 + $0xb0] sm:$0xf]
    %v5107 = vld [vmem:[#allocation25 + $0xb4] sm:$0xff]
    %v5108 = vld [vmem:[#allocation25 + $0xbc] sm:$0xf]
    %v5109 = vld [vmem:[#allocation25 + $0xc0] sm:$0xff]
    %v5110 = vld [vmem:[#allocation25 + $0xc8] sm:$0xf]
    %v5111 = vld [vmem:[#allocation25 + $0xcc] sm:$0xff]
    %v5112 = vld [vmem:[#allocation25 + $0xd4] sm:$0xf]
    %v5113 = vld [vmem:[#allocation25 + $0xd8] sm:$0xff]
    %v5114 = vld [vmem:[#allocation25 + $0xe0] sm:$0xf]
    %v5115 = vld [vmem:[#allocation25 + $0xe4] sm:$0xff]
    %v5116 = vld [vmem:[#allocation25 + $0xec] sm:$0xf]
    %v5117 = vld [vmem:[#allocation25 + $0xf0] sm:$0xff]
    %v5118 = vld [vmem:[#allocation25 + $0xf8] sm:$0xf]
    %v5119 = vld [vmem:[#allocation25 + $0xfc] sm:$0xff]
    %v5120 = vld [vmem:[#allocation25 + $0x104] sm:$0xf]
    %v5121 = vld [vmem:[#allocation25 + $0x108] sm:$0xff]
    %v5122 = vld [vmem:[#allocation25 + $0x110] sm:$0xf]
    %v5123 = vld [vmem:[#allocation25 + $0x114] sm:$0xff]
    %v5124 = vld [vmem:[#allocation25 + $0x11c] sm:$0xf]
    %v5125 = vld [vmem:[#allocation25 + $0x120] sm:$0xff]
    %v5126 = vld [vmem:[#allocation25 + $0x128] sm:$0xf]
    %v5127 = vld [vmem:[#allocation25 + $0x12c] sm:$0xff]
    %v5128 = vld [vmem:[#allocation25 + $0x134] sm:$0xf]
    %v5129 = vld [vmem:[#allocation25 + $0x138] sm:$0xff]
    %v5130 = vld [vmem:[#allocation25 + $0x140] sm:$0xf]
    %v5131 = vld [vmem:[#allocation25 + $0x144] sm:$0xff]
    %v5132 = vld [vmem:[#allocation25 + $0x14c] sm:$0xf]
    %v5133 = vld [vmem:[#allocation25 + $0x150] sm:$0xff]
    %v5134 = vld [vmem:[#allocation25 + $0x158] sm:$0xf]
    %v5135 = vld [vmem:[#allocation25 + $0x15c] sm:$0xff]
    %v5136 = vld [vmem:[#allocation25 + $0x164] sm:$0xf]
    %v5137 = vld [vmem:[#allocation25 + $0x168] sm:$0xff]
    %v5138 = vld [vmem:[#allocation25 + $0x170] sm:$0xf]
    %v5139 = vld [vmem:[#allocation25 + $0x174] sm:$0xff]
    %v5140 = vld [vmem:[#allocation25 + $0x17c] sm:$0xf]
    %v5141 = vld [vmem:[#allocation25 + $0x180] sm:$0xff]
    %v5142 = vld [vmem:[#allocation25 + $0x188] sm:$0xf]
    %v5143 = vld [vmem:[#allocation25 + $0x18c] sm:$0xff]
    %v5144 = vld [vmem:[#allocation25 + $0x194] sm:$0xf]
    %v5145 = vld [vmem:[#allocation25 + $0x198] sm:$0xff]
    %v5146 = vld [vmem:[#allocation25 + $0x1a0] sm:$0xf]
    %v5147 = vld [vmem:[#allocation25 + $0x1a4] sm:$0xff]
    %v5148 = vld [vmem:[#allocation25 + $0x1ac] sm:$0xf]
    %v5149 = vld [vmem:[#allocation25 + $0x1b0] sm:$0xff]
    %v5150 = vld [vmem:[#allocation25 + $0x1b8] sm:$0xf]
    %v5151 = vld [vmem:[#allocation25 + $0x1bc] sm:$0xff]
    %v5152 = vld [vmem:[#allocation25 + $0x1c4] sm:$0xf]
    %v5153 = vld [vmem:[#allocation25 + $0x1c8] sm:$0xff]
    %v5154 = vld [vmem:[#allocation25 + $0x1d0] sm:$0xf]
    %v5155 = vld [vmem:[#allocation25 + $0x1d4] sm:$0xff]
    %v5156 = vld [vmem:[#allocation25 + $0x1dc] sm:$0xf]
    %v5157 = vld [vmem:[#allocation25 + $0x1e0] sm:$0xff]
    %v5158 = vld [vmem:[#allocation25 + $0x1e8] sm:$0xf]
    %v5159 = vld [vmem:[#allocation25 + $0x1ec] sm:$0xff]
    %v5160 = vld [vmem:[#allocation25 + $0x1f4] sm:$0xf]
    %v5161 = vld [vmem:[#allocation25 + $0x1f8] sm:$0xff]
    %v5162 = vld [vmem:[#allocation25 + $0x200] sm:$0xf]
    %v5163 = vld [vmem:[#allocation25 + $0x204] sm:$0xff]
    %v5164 = vld [vmem:[#allocation25 + $0x20c] sm:$0xf]
    %v5165 = vld [vmem:[#allocation25 + $0x210] sm:$0xff]
    %v5166 = vld [vmem:[#allocation25 + $0x218] sm:$0xf]
    %v5167 = vld [vmem:[#allocation25 + $0x21c] sm:$0xff]
    %v5168 = vld [vmem:[#allocation25 + $0x224] sm:$0xf]
    %v5169 = vld [vmem:[#allocation25 + $0x228] sm:$0xff]
    %v5170 = vld [vmem:[#allocation25 + $0x230] sm:$0xf]
    %v5171 = vld [vmem:[#allocation25 + $0x234] sm:$0xff]
    %v5172 = vld [vmem:[#allocation25 + $0x23c] sm:$0xf]
    %v5173 = vpack.c.bf16 %v5074, %v5074
    %v5174 = vpack.c.bf16 %v5075, %v5075
    %v5175 = vpack.c.bf16 %v5076, %v5076
    %v5176 = vld [vmem:[#allocation26] sm:$0x7]
    %v5178 = vlaneseq
    %v5179 = vshrl.u32 %v5178, 7
    %v5180 = vsub.s32 0, %v5179
    %v5181 = vrot.slane %v5176, %v5180
    %v5182 = vlaneseq
    %v5183 = vshrl.u32 %v5182, 7
    %v5184 = vsub.s32 1, %v5183
    %v5185 = vrot.slane %v5176, %v5184
    %v5186 = vlaneseq
    %v5187 = vshrl.u32 %v5186, 7
    %v5188 = vsub.s32 2, %v5187
    %v5189 = vrot.slane %v5176, %v5188
    %v5289 = vunpack.c.l.b16 %v5077
    %v5290 = vunpack.c.h.b16 %v5077
    %v5291 = vunpack.c.l.b16 %v5078
    %v5292 = vunpack.c.l.b16 %v5079
    %v5293 = vunpack.c.h.b16 %v5079
    %v5294 = vunpack.c.l.b16 %v5080
    %v5295 = vunpack.c.l.b16 %v5081
    %v5296 = vunpack.c.h.b16 %v5081
    %v5297 = vunpack.c.l.b16 %v5082
    %v5298 = vunpack.c.l.b16 %v5083
    %v5299 = vunpack.c.h.b16 %v5083
    %v5300 = vunpack.c.l.b16 %v5084
    %v5301 = vunpack.c.l.b16 %v5085
    %v5302 = vunpack.c.h.b16 %v5085
    %v5303 = vunpack.c.l.b16 %v5086
    %v5304 = vunpack.c.l.b16 %v5087
    %v5305 = vunpack.c.h.b16 %v5087
    %v5306 = vunpack.c.l.b16 %v5088
    %v5307 = vunpack.c.l.b16 %v5089
    %v5308 = vunpack.c.h.b16 %v5089
    %v5309 = vunpack.c.l.b16 %v5090
    %v5310 = vunpack.c.l.b16 %v5091
    %v5311 = vunpack.c.h.b16 %v5091
    %v5312 = vunpack.c.l.b16 %v5092
    %v5313 = vunpack.c.l.b16 %v5093
    %v5314 = vunpack.c.h.b16 %v5093
    %v5315 = vunpack.c.l.b16 %v5094
    %v5316 = vunpack.c.l.b16 %v5095
    %v5317 = vunpack.c.h.b16 %v5095
    %v5318 = vunpack.c.l.b16 %v5096
    %v5319 = vunpack.c.l.b16 %v5097
    %v5320 = vunpack.c.h.b16 %v5097
    %v5321 = vunpack.c.l.b16 %v5098
    %v5322 = vunpack.c.l.b16 %v5099
    %v5323 = vunpack.c.h.b16 %v5099
    %v5324 = vunpack.c.l.b16 %v5100
    %v5325 = vunpack.c.l.b16 %v5101
    %v5326 = vunpack.c.h.b16 %v5101
    %v5327 = vunpack.c.l.b16 %v5102
    %v5328 = vunpack.c.l.b16 %v5103
    %v5329 = vunpack.c.h.b16 %v5103
    %v5330 = vunpack.c.l.b16 %v5104
    %v5331 = vunpack.c.l.b16 %v5105
    %v5332 = vunpack.c.h.b16 %v5105
    %v5333 = vunpack.c.l.b16 %v5106
    %v5334 = vunpack.c.l.b16 %v5107
    %v5335 = vunpack.c.h.b16 %v5107
    %v5336 = vunpack.c.l.b16 %v5108
    %v5337 = vunpack.c.l.b16 %v5109
    %v5338 = vunpack.c.h.b16 %v5109
    %v5339 = vunpack.c.l.b16 %v5110
    %v5340 = vunpack.c.l.b16 %v5111
    %v5341 = vunpack.c.h.b16 %v5111
    %v5342 = vunpack.c.l.b16 %v5112
    %v5343 = vunpack.c.l.b16 %v5113
    %v5344 = vunpack.c.h.b16 %v5113
    %v5345 = vunpack.c.l.b16 %v5114
    %v5346 = vunpack.c.l.b16 %v5115
    %v5347 = vunpack.c.h.b16 %v5115
    %v5348 = vunpack.c.l.b16 %v5116
    %v5349 = vunpack.c.l.b16 %v5117
    %v5350 = vunpack.c.h.b16 %v5117
    %v5351 = vunpack.c.l.b16 %v5118
    %v5352 = vunpack.c.l.b16 %v5119
    %v5353 = vunpack.c.h.b16 %v5119
    %v5354 = vunpack.c.l.b16 %v5120
    %v5355 = vunpack.c.l.b16 %v5121
    %v5356 = vunpack.c.h.b16 %v5121
    %v5357 = vunpack.c.l.b16 %v5122
    %v5358 = vunpack.c.l.b16 %v5123
    %v5359 = vunpack.c.h.b16 %v5123
    %v5360 = vunpack.c.l.b16 %v5124
    %v5361 = vunpack.c.l.b16 %v5125
    %v5362 = vunpack.c.h.b16 %v5125
    %v5363 = vunpack.c.l.b16 %v5126
    %v5364 = vunpack.c.l.b16 %v5127
    %v5365 = vunpack.c.h.b16 %v5127
    %v5366 = vunpack.c.l.b16 %v5128
    %v5367 = vunpack.c.l.b16 %v5129
    %v5368 = vunpack.c.h.b16 %v5129
    %v5369 = vunpack.c.l.b16 %v5130
    %v5370 = vunpack.c.l.b16 %v5131
    %v5371 = vunpack.c.h.b16 %v5131
    %v5372 = vunpack.c.l.b16 %v5132
    %v5373 = vunpack.c.l.b16 %v5133
    %v5374 = vunpack.c.h.b16 %v5133
    %v5375 = vunpack.c.l.b16 %v5134
    %v5376 = vunpack.c.l.b16 %v5135
    %v5377 = vunpack.c.h.b16 %v5135
    %v5378 = vunpack.c.l.b16 %v5136
    %v5379 = vunpack.c.l.b16 %v5137
    %v5380 = vunpack.c.h.b16 %v5137
    %v5381 = vunpack.c.l.b16 %v5138
    %v5382 = vunpack.c.l.b16 %v5139
    %v5383 = vunpack.c.h.b16 %v5139
    %v5384 = vunpack.c.l.b16 %v5140
    %v5385 = vunpack.c.l.b16 %v5141
    %v5386 = vunpack.c.h.b16 %v5141
    %v5387 = vunpack.c.l.b16 %v5142
    %v5388 = vunpack.c.l.b16 %v5143
    %v5389 = vunpack.c.h.b16 %v5143
    %v5390 = vunpack.c.l.b16 %v5144
    %v5391 = vunpack.c.l.b16 %v5145
    %v5392 = vunpack.c.h.b16 %v5145
    %v5393 = vunpack.c.l.b16 %v5146
    %v5394 = vunpack.c.l.b16 %v5147
    %v5395 = vunpack.c.h.b16 %v5147
    %v5396 = vunpack.c.l.b16 %v5148
    %v5397 = vunpack.c.l.b16 %v5149
    %v5398 = vunpack.c.h.b16 %v5149
    %v5399 = vunpack.c.l.b16 %v5150
    %v5400 = vunpack.c.l.b16 %v5151
    %v5401 = vunpack.c.h.b16 %v5151
    %v5402 = vunpack.c.l.b16 %v5152
    %v5403 = vunpack.c.l.b16 %v5153
    %v5404 = vunpack.c.h.b16 %v5153
    %v5405 = vunpack.c.l.b16 %v5154
    %v5406 = vunpack.c.l.b16 %v5155
    %v5407 = vunpack.c.h.b16 %v5155
    %v5408 = vunpack.c.l.b16 %v5156
    %v5409 = vunpack.c.l.b16 %v5157
    %v5410 = vunpack.c.h.b16 %v5157
    %v5411 = vunpack.c.l.b16 %v5158
    %v5412 = vunpack.c.l.b16 %v5159
    %v5413 = vunpack.c.h.b16 %v5159
    %v5414 = vunpack.c.l.b16 %v5160
    %v5415 = vunpack.c.l.b16 %v5161
    %v5416 = vunpack.c.h.b16 %v5161
    %v5417 = vunpack.c.l.b16 %v5162
    %v5418 = vunpack.c.l.b16 %v5163
    %v5419 = vunpack.c.h.b16 %v5163
    %v5420 = vunpack.c.l.b16 %v5164
    %v5421 = vunpack.c.l.b16 %v5165
    %v5422 = vunpack.c.h.b16 %v5165
    %v5423 = vunpack.c.l.b16 %v5166
    %v5424 = vunpack.c.l.b16 %v5167
    %v5425 = vunpack.c.h.b16 %v5167
    %v5426 = vunpack.c.l.b16 %v5168
    %v5427 = vunpack.c.l.b16 %v5169
    %v5428 = vunpack.c.h.b16 %v5169
    %v5429 = vunpack.c.l.b16 %v5170
    %v5430 = vunpack.c.l.b16 %v5171
    %v5431 = vunpack.c.h.b16 %v5171
    %v5432 = vunpack.c.l.b16 %v5172
    %v5433 = vpack.c.b16 %v5292, %v5289
    %v5434 = vpack.c.b16 %v5293, %v5290
    %v5435 = vpack.c.b16 %v5294, %v5291
    %v5436 = vpack.c.b16 %v5298, %v5295
    %v5437 = vpack.c.b16 %v5299, %v5296
    %v5438 = vpack.c.b16 %v5300, %v5297
    %v5439 = vpack.c.b16 %v5304, %v5301
    %v5440 = vpack.c.b16 %v5305, %v5302
    %v5441 = vpack.c.b16 %v5306, %v5303
    %v5442 = vpack.c.b16 %v5310, %v5307
    %v5443 = vpack.c.b16 %v5311, %v5308
    %v5444 = vpack.c.b16 %v5312, %v5309
    %v5445 = vpack.c.b16 %v5316, %v5313
    %v5446 = vpack.c.b16 %v5317, %v5314
    %v5447 = vpack.c.b16 %v5318, %v5315
    %v5448 = vpack.c.b16 %v5322, %v5319
    %v5449 = vpack.c.b16 %v5323, %v5320
    %v5450 = vpack.c.b16 %v5324, %v5321
    %v5451 = vpack.c.b16 %v5328, %v5325
    %v5452 = vpack.c.b16 %v5329, %v5326
    %v5453 = vpack.c.b16 %v5330, %v5327
    %v5454 = vpack.c.b16 %v5334, %v5331
    %v5455 = vpack.c.b16 %v5335, %v5332
    %v5456 = vpack.c.b16 %v5336, %v5333
    %v5457 = vpack.c.b16 %v5340, %v5337
    %v5458 = vpack.c.b16 %v5341, %v5338
    %v5459 = vpack.c.b16 %v5342, %v5339
    %v5460 = vpack.c.b16 %v5346, %v5343
    %v5461 = vpack.c.b16 %v5347, %v5344
    %v5462 = vpack.c.b16 %v5348, %v5345
    %v5463 = vpack.c.b16 %v5352, %v5349
    %v5464 = vpack.c.b16 %v5353, %v5350
    %v5465 = vpack.c.b16 %v5354, %v5351
    %v5466 = vpack.c.b16 %v5358, %v5355
    %v5467 = vpack.c.b16 %v5359, %v5356
    %v5468 = vpack.c.b16 %v5360, %v5357
    %v5469 = vpack.c.b16 %v5364, %v5361
    %v5470 = vpack.c.b16 %v5365, %v5362
    %v5471 = vpack.c.b16 %v5366, %v5363
    %v5472 = vpack.c.b16 %v5370, %v5367
    %v5473 = vpack.c.b16 %v5371, %v5368
    %v5474 = vpack.c.b16 %v5372, %v5369
    %v5475 = vpack.c.b16 %v5376, %v5373
    %v5476 = vpack.c.b16 %v5377, %v5374
    %v5477 = vpack.c.b16 %v5378, %v5375
    %v5478 = vpack.c.b16 %v5382, %v5379
    %v5479 = vpack.c.b16 %v5383, %v5380
    %v5480 = vpack.c.b16 %v5384, %v5381
    %v5481 = vpack.c.b16 %v5388, %v5385
    %v5482 = vpack.c.b16 %v5389, %v5386
    %v5483 = vpack.c.b16 %v5390, %v5387
    %v5484 = vpack.c.b16 %v5394, %v5391
    %v5485 = vpack.c.b16 %v5395, %v5392
    %v5486 = vpack.c.b16 %v5396, %v5393
    %v5487 = vpack.c.b16 %v5400, %v5397
    %v5488 = vpack.c.b16 %v5401, %v5398
    %v5489 = vpack.c.b16 %v5402, %v5399
    %v5490 = vpack.c.b16 %v5406, %v5403
    %v5491 = vpack.c.b16 %v5407, %v5404
    %v5492 = vpack.c.b16 %v5408, %v5405
    %v5493 = vpack.c.b16 %v5412, %v5409
    %v5494 = vpack.c.b16 %v5413, %v5410
    %v5495 = vpack.c.b16 %v5414, %v5411
    %v5496 = vpack.c.b16 %v5418, %v5415
    %v5497 = vpack.c.b16 %v5419, %v5416
    %v5498 = vpack.c.b16 %v5420, %v5417
    %v5499 = vpack.c.b16 %v5424, %v5421
    %v5500 = vpack.c.b16 %v5425, %v5422
    %v5501 = vpack.c.b16 %v5426, %v5423
    %v5502 = vpack.c.b16 %v5430, %v5427
    %v5503 = vpack.c.b16 %v5431, %v5428
    %v5504 = vpack.c.b16 %v5432, %v5429
    %5577 = vmatprep.subr.bf16.mxu0 %v5434
    %5578 = vmatpush1.bf16.msra.mxu0 %v5433
    %5579 = vmatprep.subr.bf16.mxu0 %v5437
    %5580 = vmatpush1.bf16.msra.mxu0 %v5436
    %5581 = vmatprep.subr.bf16.mxu0 %v5440
    %5582 = vmatpush1.bf16.msra.mxu0 %v5439
    %5583 = vmatprep.subr.bf16.mxu0 %v5443
    %5584 = vmatpush1.bf16.msra.mxu0 %v5442
    %5585 = vmatprep.subr.bf16.mxu0 %v5446
    %5586 = vmatpush1.bf16.msra.mxu0 %v5445
    %5587 = vmatprep.subr.bf16.mxu0 %v5449
    %5588 = vmatpush1.bf16.msra.mxu0 %v5448
    %5589 = vmatprep.subr.bf16.mxu0 %v5452
    %5590 = vmatpush1.bf16.msra.mxu0 %v5451
    %5591 = vmatprep.subr.bf16.mxu0 %v5455
    %5592 = vmatpush1.bf16.msra.mxu0 %v5454
    %5593 = vmatprep.subr.bf16.mxu0 %v5458
    %5594 = vmatpush1.bf16.msra.mxu0 %v5457
    %5595 = vmatprep.subr.bf16.mxu0 %v5461
    %5596 = vmatpush1.bf16.msra.mxu0 %v5460
    %5597 = vmatprep.subr.bf16.mxu0 %v5464
    %5598 = vmatpush1.bf16.msra.mxu0 %v5463
    %5599 = vmatprep.subr.bf16.mxu0 %v5467
    %5600 = vmatpush1.bf16.msra.mxu0 %v5466
    %5601 = vmatprep.subr.bf16.mxu0 %v5470
    %5602 = vmatpush1.bf16.msra.mxu0 %v5469
    %5603 = vmatprep.subr.bf16.mxu0 %v5473
    %5604 = vmatpush1.bf16.msra.mxu0 %v5472
    %5605 = vmatprep.subr.bf16.mxu0 %v5476
    %5606 = vmatpush1.bf16.msra.mxu0 %v5475
    %5607 = vmatprep.subr.bf16.mxu0 %v5479
    %5608 = vmatpush1.bf16.msra.mxu0 %v5478
    %5609 = vmatprep.mubr.bf16.mxu0 %v5174
    %5610 = vmatmul.mubr.bf16.gmra.mrb[0].mxu0 %v5173
    %v5611 = vpop.f32.mrb[0].mxu0
    %v5612 = vadd.f32 %v5181, %v5611
    %v5613 = vpop.f32.mrb[0].mxu0
    %v5614 = vadd.f32 %v5185, %v5613
    %v5615 = vpop.f32.mrb[0].mxu0
    %v5616 = vpop.f32.mrb[0].mxu0
    %5617 = vdwg.mxu0
    %5618 = vmatprep.subr.bf16.mxu0 %v5482
    %5619 = vmatpush1.bf16.msra.mxu0 %v5481
    %5620 = vmatprep.subr.bf16.mxu0 %v5485
    %5621 = vmatpush1.bf16.msra.mxu0 %v5484
    %5622 = vmatprep.subr.bf16.mxu0 %v5488
    %5623 = vmatpush1.bf16.msra.mxu0 %v5487
    %5624 = vmatprep.subr.bf16.mxu0 %v5491
    %5625 = vmatpush1.bf16.msra.mxu0 %v5490
    %5626 = vmatprep.subr.bf16.mxu0 %v5494
    %5627 = vmatpush1.bf16.msra.mxu0 %v5493
    %5628 = vmatprep.subr.bf16.mxu0 %v5497
    %5629 = vmatpush1.bf16.msra.mxu0 %v5496
    %5630 = vmatprep.subr.bf16.mxu0 %v5500
    %5631 = vmatpush1.bf16.msra.mxu0 %v5499
    %5632 = vmatprep.subr.bf16.mxu0 %v5503
    %5633 = vmatpush1.bf16.msra.mxu0 %v5502
    %5634 = vmatprep.subr.bf16.mxu0 0
    %5635 = vmatpush1.bf16.msra.mxu0 0
    %5636 = vmatprep.subr.bf16.mxu0 0
    %5637 = vmatpush1.bf16.msra.mxu0 0
    %5638 = vmatprep.subr.bf16.mxu0 0
    %5639 = vmatpush1.bf16.msra.mxu0 0
    %5640 = vmatprep.subr.bf16.mxu0 0
    %5641 = vmatpush1.bf16.msra.mxu0 0
    %5642 = vmatprep.subr.bf16.mxu0 0
    %5643 = vmatpush1.bf16.msra.mxu0 0
    %5644 = vmatprep.subr.bf16.mxu0 0
    %5645 = vmatpush1.bf16.msra.mxu0 0
    %5646 = vmatprep.subr.bf16.mxu0 0
    %5647 = vmatpush1.bf16.msra.mxu0 0
    %5648 = vmatprep.subr.bf16.mxu0 0
    %5649 = vmatpush1.bf16.msra.mxu0 0
    %5650 = vmatprep.mubr.bf16.mxu0 0
    %5651 = vmatmul.mubr.bf16.gmra.mrb[0].mxu0 %v5175
    %v5652 = vpop.f32.mrb[0].mxu0
    %v5653 = vadd.f32 %v5612, %v5652
    %v5654 = vpop.f32.mrb[0].mxu0
    %v5655 = vadd.f32 %v5614, %v5654
    %v5656 = vpop.f32.mrb[0].mxu0
    %v5657 = vpop.f32.mrb[0].mxu0
    %5658 = vdwg.mxu0
    %5659 = vmatprep.subr.bf16.mxu0 0
    %5660 = vmatpush1.bf16.msra.mxu0 %v5435
    %5661 = vmatprep.subr.bf16.mxu0 0
    %5662 = vmatpush1.bf16.msra.mxu0 %v5438
    %5663 = vmatprep.subr.bf16.mxu0 0
    %5664 = vmatpush1.bf16.msra.mxu0 %v5441
    %5665 = vmatprep.subr.bf16.mxu0 0
    %5666 = vmatpush1.bf16.msra.mxu0 %v5444
    %5667 = vmatprep.subr.bf16.mxu0 0
    %5668 = vmatpush1.bf16.msra.mxu0 %v5447
    %5669 = vmatprep.subr.bf16.mxu0 0
    %5670 = vmatpush1.bf16.msra.mxu0 %v5450
    %5671 = vmatprep.subr.bf16.mxu0 0
    %5672 = vmatpush1.bf16.msra.mxu0 %v5453
    %5673 = vmatprep.subr.bf16.mxu0 0
    %5674 = vmatpush1.bf16.msra.mxu0 %v5456
    %5675 = vmatprep.subr.bf16.mxu0 0
    %5676 = vmatpush1.bf16.msra.mxu0 %v5459
    %5677 = vmatprep.subr.bf16.mxu0 0
    %5678 = vmatpush1.bf16.msra.mxu0 %v5462
    %5679 = vmatprep.subr.bf16.mxu0 0
    %5680 = vmatpush1.bf16.msra.mxu0 %v5465
    %5681 = vmatprep.subr.bf16.mxu0 0
    %5682 = vmatpush1.bf16.msra.mxu0 %v5468
    %5683 = vmatprep.subr.bf16.mxu0 0
    %5684 = vmatpush1.bf16.msra.mxu0 %v5471
    %5685 = vmatprep.subr.bf16.mxu0 0
    %5686 = vmatpush1.bf16.msra.mxu0 %v5474
    %5687 = vmatprep.subr.bf16.mxu0 0
    %5688 = vmatpush1.bf16.msra.mxu0 %v5477
    %5689 = vmatprep.subr.bf16.mxu0 0
    %5690 = vmatpush1.bf16.msra.mxu0 %v5480
    %5691 = vmatprep.mubr.bf16.mxu0 %v5174
    %5692 = vmatmul.mubr.bf16.gmra.mrb[0].mxu0 %v5173
    %v5693 = vpop.f32.mrb[0].mxu0
    %v5694 = vadd.f32 %v5189, %v5693
    %v5695 = vpop.f32.mrb[0].mxu0
    %v5696 = vpop.f32.mrb[0].mxu0
    %v5697 = vpop.f32.mrb[0].mxu0
    %5698 = vdwg.mxu0
    %5699 = vmatprep.subr.bf16.mxu0 0
    %5700 = vmatpush1.bf16.msra.mxu0 %v5483
    %5701 = vmatprep.subr.bf16.mxu0 0
    %5702 = vmatpush1.bf16.msra.mxu0 %v5486
    %5703 = vmatprep.subr.bf16.mxu0 0
    %5704 = vmatpush1.bf16.msra.mxu0 %v5489
    %5705 = vmatprep.subr.bf16.mxu0 0
    %5706 = vmatpush1.bf16.msra.mxu0 %v5492
    %5707 = vmatprep.subr.bf16.mxu0 0
    %5708 = vmatpush1.bf16.msra.mxu0 %v5495
    %5709 = vmatprep.subr.bf16.mxu0 0
    %5710 = vmatpush1.bf16.msra.mxu0 %v5498
    %5711 = vmatprep.subr.bf16.mxu0 0
    %5712 = vmatpush1.bf16.msra.mxu0 %v5501
    %5713 = vmatprep.subr.bf16.mxu0 0
    %5714 = vmatpush1.bf16.msra.mxu0 %v5504
    %5715 = vmatprep.subr.bf16.mxu0 0
    %5716 = vmatpush1.bf16.msra.mxu0 0
    %5717 = vmatprep.subr.bf16.mxu0 0
    %5718 = vmatpush1.bf16.msra.mxu0 0
    %5719 = vmatprep.subr.bf16.mxu0 0
    %5720 = vmatpush1.bf16.msra.mxu0 0
    %5721 = vmatprep.subr.bf16.mxu0 0
    %5722 = vmatpush1.bf16.msra.mxu0 0
    %5723 = vmatprep.subr.bf16.mxu0 0
    %5724 = vmatpush1.bf16.msra.mxu0 0
    %5725 = vmatprep.subr.bf16.mxu0 0
    %5726 = vmatpush1.bf16.msra.mxu0 0
    %5727 = vmatprep.subr.bf16.mxu0 0
    %5728 = vmatpush1.bf16.msra.mxu0 0
    %5729 = vmatprep.subr.bf16.mxu0 0
    %5730 = vmatpush1.bf16.msra.mxu0 0
    %5731 = vmatprep.mubr.bf16.mxu0 0
    %5732 = vmatmul.mubr.bf16.gmra.mrb[0].mxu0 %v5175
    %v5733 = vpop.f32.mrb[0].mxu0
    %v5734 = vadd.f32 %v5694, %v5733
    %v5735 = vpop.f32.mrb[0].mxu0
    %v5736 = vpop.f32.mrb[0].mxu0
    %v5737 = vpop.f32.mrb[0].mxu0
    %5738 = vdwg.mxu0
    %v5739 = vmax.f32 %v5653, 0.0
    %v5740 = vmax.f32 %v5655, 0.0
    %v5741 = vmax.f32 %v5734, 0.0
    %v5742 = vld [vmem:[#allocation28] sm:$0xff]
    %v5743 = vld [vmem:[#allocation28 + $0x8] sm:$0xff]
    %v5744 = vld [vmem:[#allocation28 + $0x10] sm:$0xff]
    %v5745 = vld [vmem:[#allocation28 + $0x18] sm:$0xff]
    %v5746 = vld [vmem:[#allocation28 + $0x20] sm:$0xff]
    %v5747 = vld [vmem:[#allocation28 + $0x28] sm:$0xff]
    %v5748 = vld [vmem:[#allocation28 + $0x30] sm:$0xff]
    %v5749 = vld [vmem:[#allocation28 + $0x38] sm:$0xff]
    %v5750 = vld [vmem:[#allocation28 + $0x40] sm:$0xff]
    %v5751 = vld [vmem:[#allocation28 + $0x48] sm:$0xff]
    %v5752 = vld [vmem:[#allocation28 + $0x50] sm:$0xff]
    %v5753 = vld [vmem:[#allocation28 + $0x58] sm:$0xff]
    %v5754 = vld [vmem:[#allocation28 + $0x60] sm:$0xff]
    %v5755 = vld [vmem:[#allocation28 + $0x68] sm:$0xff]
    %v5756 = vld [vmem:[#allocation28 + $0x70] sm:$0xff]
    %v5757 = vld [vmem:[#allocation28 + $0x78] sm:$0xff]
    %v5758 = vld [vmem:[#allocation28 + $0x80] sm:$0xff]
    %v5759 = vld [vmem:[#allocation28 + $0x88] sm:$0xff]
    %v5760 = vld [vmem:[#allocation28 + $0x90] sm:$0xff]
    %v5761 = vld [vmem:[#allocation28 + $0x98] sm:$0xff]
    %v5762 = vld [vmem:[#allocation28 + $0xa0] sm:$0xff]
    %v5763 = vld [vmem:[#allocation28 + $0xa8] sm:$0xff]
    %v5764 = vld [vmem:[#allocation28 + $0xb0] sm:$0xff]
    %v5765 = vld [vmem:[#allocation28 + $0xb8] sm:$0xff]
    %v5766 = vld [vmem:[#allocation28 + $0xc0] sm:$0xff]
    %v5767 = vld [vmem:[#allocation28 + $0xc8] sm:$0xff]
    %v5768 = vld [vmem:[#allocation28 + $0xd0] sm:$0xff]
    %v5769 = vld [vmem:[#allocation28 + $0xd8] sm:$0xff]
    %v5770 = vld [vmem:[#allocation28 + $0xe0] sm:$0xff]
    %v5771 = vld [vmem:[#allocation28 + $0xe8] sm:$0xff]
    %v5772 = vld [vmem:[#allocation28 + $0xf0] sm:$0xff]
    %v5773 = vld [vmem:[#allocation28 + $0xf8] sm:$0xff]
    %v5774 = vld [vmem:[#allocation28 + $0x100] sm:$0xff]
    %v5775 = vld [vmem:[#allocation28 + $0x108] sm:$0xff]
    %v5776 = vld [vmem:[#allocation28 + $0x110] sm:$0xff]
    %v5777 = vld [vmem:[#allocation28 + $0x118] sm:$0xff]
    %v5778 = vld [vmem:[#allocation28 + $0x120] sm:$0xff]
    %v5779 = vld [vmem:[#allocation28 + $0x128] sm:$0xff]
    %v5780 = vld [vmem:[#allocation28 + $0x130] sm:$0xff]
    %v5781 = vld [vmem:[#allocation28 + $0x138] sm:$0xff]
    %v5782 = vld [vmem:[#allocation28 + $0x140] sm:$0xff]
    %v5783 = vld [vmem:[#allocation28 + $0x148] sm:$0xff]
    %v5784 = vld [vmem:[#allocation28 + $0x150] sm:$0xff]
    %v5785 = vld [vmem:[#allocation28 + $0x158] sm:$0xff]
    %v5786 = vld [vmem:[#allocation28 + $0x160] sm:$0xff]
    %v5787 = vld [vmem:[#allocation28 + $0x168] sm:$0xff]
    %v5788 = vld [vmem:[#allocation28 + $0x170] sm:$0xff]
    %v5789 = vld [vmem:[#allocation28 + $0x178] sm:$0xff]
    %v5790 = vld [vmem:[#allocation28 + $0x180] sm:$0xff]
    %v5791 = vld [vmem:[#allocation28 + $0x188] sm:$0xff]
    %v5792 = vld [vmem:[#allocation28 + $0x190] sm:$0xff]
    %v5793 = vld [vmem:[#allocation28 + $0x198] sm:$0xff]
    %v5794 = vld [vmem:[#allocation28 + $0x1a0] sm:$0xff]
    %v5795 = vld [vmem:[#allocation28 + $0x1a8] sm:$0xff]
    %v5796 = vld [vmem:[#allocation28 + $0x1b0] sm:$0xff]
    %v5797 = vld [vmem:[#allocation28 + $0x1b8] sm:$0xff]
    %v5798 = vld [vmem:[#allocation28 + $0x1c0] sm:$0xff]
    %v5799 = vld [vmem:[#allocation28 + $0x1c8] sm:$0xff]
    %v5800 = vld [vmem:[#allocation28 + $0x1d0] sm:$0xff]
    %v5801 = vld [vmem:[#allocation28 + $0x1d8] sm:$0xff]
    %v5802 = vld [vmem:[#allocation28 + $0x1e0] sm:$0xff]
    %v5803 = vld [vmem:[#allocation28 + $0x1e8] sm:$0xff]
    %v5804 = vld [vmem:[#allocation28 + $0x1f0] sm:$0xff]
    %v5805 = vld [vmem:[#allocation28 + $0x1f8] sm:$0xff]
    %v5806 = vld [vmem:[#allocation28 + $0x200] sm:$0xff]
    %v5807 = vld [vmem:[#allocation28 + $0x208] sm:$0xff]
    %v5808 = vld [vmem:[#allocation28 + $0x210] sm:$0xff]
    %v5809 = vld [vmem:[#allocation28 + $0x218] sm:$0xff]
    %v5810 = vld [vmem:[#allocation28 + $0x220] sm:$0xff]
    %v5811 = vld [vmem:[#allocation28 + $0x228] sm:$0xff]
    %v5812 = vld [vmem:[#allocation28 + $0x230] sm:$0xff]
    %v5813 = vld [vmem:[#allocation28 + $0x238] sm:$0xff]
    %v5814 = vld [vmem:[#allocation28 + $0x240] sm:$0xff]
    %v5815 = vld [vmem:[#allocation28 + $0x248] sm:$0xff]
    %v5816 = vld [vmem:[#allocation28 + $0x250] sm:$0xff]
    %v5817 = vld [vmem:[#allocation28 + $0x258] sm:$0xff]
    %v5818 = vld [vmem:[#allocation28 + $0x260] sm:$0xff]
    %v5819 = vld [vmem:[#allocation28 + $0x268] sm:$0xff]
    %v5820 = vld [vmem:[#allocation28 + $0x270] sm:$0xff]
    %v5821 = vld [vmem:[#allocation28 + $0x278] sm:$0xff]
    %v5822 = vld [vmem:[#allocation28 + $0x280] sm:$0xff]
    %v5823 = vld [vmem:[#allocation28 + $0x288] sm:$0xff]
    %v5824 = vld [vmem:[#allocation28 + $0x290] sm:$0xff]
    %v5825 = vld [vmem:[#allocation28 + $0x298] sm:$0xff]
    %v5826 = vld [vmem:[#allocation28 + $0x2a0] sm:$0xff]
    %v5827 = vld [vmem:[#allocation28 + $0x2a8] sm:$0xff]
    %v5828 = vld [vmem:[#allocation28 + $0x2b0] sm:$0xff]
    %v5829 = vld [vmem:[#allocation28 + $0x2b8] sm:$0xff]
    %v5830 = vld [vmem:[#allocation28 + $0x2c0] sm:$0xff]
    %v5831 = vld [vmem:[#allocation28 + $0x2c8] sm:$0xff]
    %v5832 = vld [vmem:[#allocation28 + $0x2d0] sm:$0xff]
    %v5833 = vld [vmem:[#allocation28 + $0x2d8] sm:$0xff]
    %v5834 = vld [vmem:[#allocation28 + $0x2e0] sm:$0xff]
    %v5835 = vld [vmem:[#allocation28 + $0x2e8] sm:$0xff]
    %v5836 = vld [vmem:[#allocation28 + $0x2f0] sm:$0xff]
    %v5837 = vld [vmem:[#allocation28 + $0x2f8] sm:$0xff]
    %v5838 = vld [vmem:[#allocation28 + $0x300] sm:$0xff]
    %v5839 = vld [vmem:[#allocation28 + $0x308] sm:$0xff]
    %v5840 = vld [vmem:[#allocation28 + $0x310] sm:$0xff]
    %v5841 = vld [vmem:[#allocation28 + $0x318] sm:$0xff]
    %v5842 = vld [vmem:[#allocation28 + $0x320] sm:$0xff]
    %v5843 = vld [vmem:[#allocation28 + $0x328] sm:$0xff]
    %v5844 = vld [vmem:[#allocation28 + $0x330] sm:$0xff]
    %v5845 = vld [vmem:[#allocation28 + $0x338] sm:$0xff]
    %v5846 = vld [vmem:[#allocation28 + $0x340] sm:$0xff]
    %v5847 = vld [vmem:[#allocation28 + $0x348] sm:$0xff]
    %v5848 = vld [vmem:[#allocation28 + $0x350] sm:$0xff]
    %v5849 = vld [vmem:[#allocation28 + $0x358] sm:$0xff]
    %v5850 = vld [vmem:[#allocation28 + $0x360] sm:$0xff]
    %v5851 = vld [vmem:[#allocation28 + $0x368] sm:$0xff]
    %v5852 = vld [vmem:[#allocation28 + $0x370] sm:$0xff]
    %v5853 = vld [vmem:[#allocation28 + $0x378] sm:$0xff]
    %v5854 = vld [vmem:[#allocation28 + $0x380] sm:$0xff]
    %v5855 = vld [vmem:[#allocation28 + $0x388] sm:$0xff]
    %v5856 = vld [vmem:[#allocation28 + $0x390] sm:$0xff]
    %v5857 = vld [vmem:[#allocation28 + $0x398] sm:$0xff]
    %v5858 = vld [vmem:[#allocation28 + $0x3a0] sm:$0xff]
    %v5859 = vld [vmem:[#allocation28 + $0x3a8] sm:$0xff]
    %v5860 = vld [vmem:[#allocation28 + $0x3b0] sm:$0xff]
    %v5861 = vld [vmem:[#allocation28 + $0x3b8] sm:$0xff]
    %v5862 = vld [vmem:[#allocation28 + $0x3c0] sm:$0xff]
    %v5863 = vld [vmem:[#allocation28 + $0x3c8] sm:$0xff]
    %v5864 = vld [vmem:[#allocation28 + $0x3d0] sm:$0xff]
    %v5865 = vld [vmem:[#allocation28 + $0x3d8] sm:$0xff]
    %v5866 = vld [vmem:[#allocation28 + $0x3e0] sm:$0xff]
    %v5867 = vld [vmem:[#allocation28 + $0x3e8] sm:$0xff]
    %v5868 = vld [vmem:[#allocation28 + $0x3f0] sm:$0xff]
    %v5869 = vld [vmem:[#allocation28 + $0x3f8] sm:$0xff]
    %v5870 = vld [vmem:[#allocation28 + $0x400] sm:$0xff]
    %v5871 = vld [vmem:[#allocation28 + $0x408] sm:$0xff]
    %v5872 = vld [vmem:[#allocation28 + $0x410] sm:$0xff]
    %v5873 = vld [vmem:[#allocation28 + $0x418] sm:$0xff]
    %v5874 = vld [vmem:[#allocation28 + $0x420] sm:$0xff]
    %v5875 = vld [vmem:[#allocation28 + $0x428] sm:$0xff]
    %v5876 = vld [vmem:[#allocation28 + $0x430] sm:$0xff]
    %v5877 = vld [vmem:[#allocation28 + $0x438] sm:$0xff]
    %v5878 = vld [vmem:[#allocation28 + $0x440] sm:$0xff]
    %v5879 = vld [vmem:[#allocation28 + $0x448] sm:$0xff]
    %v5880 = vld [vmem:[#allocation28 + $0x450] sm:$0xff]
    %v5881 = vld [vmem:[#allocation28 + $0x458] sm:$0xff]
    %v5882 = vld [vmem:[#allocation28 + $0x460] sm:$0xff]
    %v5883 = vld [vmem:[#allocation28 + $0x468] sm:$0xff]
    %v5884 = vld [vmem:[#allocation28 + $0x470] sm:$0xff]
    %v5885 = vld [vmem:[#allocation28 + $0x478] sm:$0xff]
    %v5886 = vpack.c.bf16 %v5739, %v5739
    %v5887 = vpack.c.bf16 %v5740, %v5740
    %v5888 = vpack.c.bf16 %v5741, %v5741
    %v5889 = vld [vmem:[#allocation29] sm:$0x3f]
    %v5891 = vlaneseq
    %v5892 = vshrl.u32 %v5891, 7
    %v5893 = vsub.s32 0, %v5892
    %v5894 = vrot.slane %v5889, %v5893
    %v5895 = vlaneseq
    %v5896 = vshrl.u32 %v5895, 7
    %v5897 = vsub.s32 1, %v5896
    %v5898 = vrot.slane %v5889, %v5897
    %v5899 = vlaneseq
    %v5900 = vshrl.u32 %v5899, 7
    %v5901 = vsub.s32 2, %v5900
    %v5902 = vrot.slane %v5889, %v5901
    %v5903 = vlaneseq
    %v5904 = vshrl.u32 %v5903, 7
    %v5905 = vsub.s32 3, %v5904
    %v5906 = vrot.slane %v5889, %v5905
    %v5907 = vlaneseq
    %v5908 = vshrl.u32 %v5907, 7
    %v5909 = vsub.s32 4, %v5908
    %v5910 = vrot.slane %v5889, %v5909
    %v5911 = vlaneseq
    %v5912 = vshrl.u32 %v5911, 7
    %v5913 = vsub.s32 5, %v5912
    %v5914 = vrot.slane %v5889, %v5913
    %v6065 = vunpack.c.l.b16 %v5742
    %v6066 = vunpack.c.h.b16 %v5742
    %v6067 = vunpack.c.l.b16 %v5743
    %v6068 = vunpack.c.h.b16 %v5743
    %v6069 = vunpack.c.l.b16 %v5744
    %v6070 = vunpack.c.h.b16 %v5744
    %v6071 = vunpack.c.l.b16 %v5745
    %v6072 = vunpack.c.h.b16 %v5745
    %v6073 = vunpack.c.l.b16 %v5746
    %v6074 = vunpack.c.h.b16 %v5746
    %v6075 = vunpack.c.l.b16 %v5747
    %v6076 = vunpack.c.h.b16 %v5747
    %v6077 = vunpack.c.l.b16 %v5748
    %v6078 = vunpack.c.h.b16 %v5748
    %v6079 = vunpack.c.l.b16 %v5749
    %v6080 = vunpack.c.h.b16 %v5749
    %v6081 = vunpack.c.l.b16 %v5750
    %v6082 = vunpack.c.h.b16 %v5750
    %v6083 = vunpack.c.l.b16 %v5751
    %v6084 = vunpack.c.h.b16 %v5751
    %v6085 = vunpack.c.l.b16 %v5752
    %v6086 = vunpack.c.h.b16 %v5752
    %v6087 = vunpack.c.l.b16 %v5753
    %v6088 = vunpack.c.h.b16 %v5753
    %v6089 = vunpack.c.l.b16 %v5754
    %v6090 = vunpack.c.h.b16 %v5754
    %v6091 = vunpack.c.l.b16 %v5755
    %v6092 = vunpack.c.h.b16 %v5755
    %v6093 = vunpack.c.l.b16 %v5756
    %v6094 = vunpack.c.h.b16 %v5756
    %v6095 = vunpack.c.l.b16 %v5757
    %v6096 = vunpack.c.h.b16 %v5757
    %v6097 = vunpack.c.l.b16 %v5758
    %v6098 = vunpack.c.h.b16 %v5758
    %v6099 = vunpack.c.l.b16 %v5759
    %v6100 = vunpack.c.h.b16 %v5759
    %v6101 = vunpack.c.l.b16 %v5760
    %v6102 = vunpack.c.h.b16 %v5760
    %v6103 = vunpack.c.l.b16 %v5761
    %v6104 = vunpack.c.h.b16 %v5761
    %v6105 = vunpack.c.l.b16 %v5762
    %v6106 = vunpack.c.h.b16 %v5762
    %v6107 = vunpack.c.l.b16 %v5763
    %v6108 = vunpack.c.h.b16 %v5763
    %v6109 = vunpack.c.l.b16 %v5764
    %v6110 = vunpack.c.h.b16 %v5764
    %v6111 = vunpack.c.l.b16 %v5765
    %v6112 = vunpack.c.h.b16 %v5765
    %v6113 = vunpack.c.l.b16 %v5766
    %v6114 = vunpack.c.h.b16 %v5766
    %v6115 = vunpack.c.l.b16 %v5767
    %v6116 = vunpack.c.h.b16 %v5767
    %v6117 = vunpack.c.l.b16 %v5768
    %v6118 = vunpack.c.h.b16 %v5768
    %v6119 = vunpack.c.l.b16 %v5769
    %v6120 = vunpack.c.h.b16 %v5769
    %v6121 = vunpack.c.l.b16 %v5770
    %v6122 = vunpack.c.h.b16 %v5770
    %v6123 = vunpack.c.l.b16 %v5771
    %v6124 = vunpack.c.h.b16 %v5771
    %v6125 = vunpack.c.l.b16 %v5772
    %v6126 = vunpack.c.h.b16 %v5772
    %v6127 = vunpack.c.l.b16 %v5773
    %v6128 = vunpack.c.h.b16 %v5773
    %v6129 = vunpack.c.l.b16 %v5774
    %v6130 = vunpack.c.h.b16 %v5774
    %v6131 = vunpack.c.l.b16 %v5775
    %v6132 = vunpack.c.h.b16 %v5775
    %v6133 = vunpack.c.l.b16 %v5776
    %v6134 = vunpack.c.h.b16 %v5776
    %v6135 = vunpack.c.l.b16 %v5777
    %v6136 = vunpack.c.h.b16 %v5777
    %v6137 = vunpack.c.l.b16 %v5778
    %v6138 = vunpack.c.h.b16 %v5778
    %v6139 = vunpack.c.l.b16 %v5779
    %v6140 = vunpack.c.h.b16 %v5779
    %v6141 = vunpack.c.l.b16 %v5780
    %v6142 = vunpack.c.h.b16 %v5780
    %v6143 = vunpack.c.l.b16 %v5781
    %v6144 = vunpack.c.h.b16 %v5781
    %v6145 = vunpack.c.l.b16 %v5782
    %v6146 = vunpack.c.h.b16 %v5782
    %v6147 = vunpack.c.l.b16 %v5783
    %v6148 = vunpack.c.h.b16 %v5783
    %v6149 = vunpack.c.l.b16 %v5784
    %v6150 = vunpack.c.h.b16 %v5784
    %v6151 = vunpack.c.l.b16 %v5785
    %v6152 = vunpack.c.h.b16 %v5785
    %v6153 = vunpack.c.l.b16 %v5786
    %v6154 = vunpack.c.h.b16 %v5786
    %v6155 = vunpack.c.l.b16 %v5787
    %v6156 = vunpack.c.h.b16 %v5787
    %v6157 = vunpack.c.l.b16 %v5788
    %v6158 = vunpack.c.h.b16 %v5788
    %v6159 = vunpack.c.l.b16 %v5789
    %v6160 = vunpack.c.h.b16 %v5789
    %v6161 = vunpack.c.l.b16 %v5790
    %v6162 = vunpack.c.h.b16 %v5790
    %v6163 = vunpack.c.l.b16 %v5791
    %v6164 = vunpack.c.h.b16 %v5791
    %v6165 = vunpack.c.l.b16 %v5792
    %v6166 = vunpack.c.h.b16 %v5792
    %v6167 = vunpack.c.l.b16 %v5793
    %v6168 = vunpack.c.h.b16 %v5793
    %v6169 = vunpack.c.l.b16 %v5794
    %v6170 = vunpack.c.h.b16 %v5794
    %v6171 = vunpack.c.l.b16 %v5795
    %v6172 = vunpack.c.h.b16 %v5795
    %v6173 = vunpack.c.l.b16 %v5796
    %v6174 = vunpack.c.h.b16 %v5796
    %v6175 = vunpack.c.l.b16 %v5797
    %v6176 = vunpack.c.h.b16 %v5797
    %v6177 = vunpack.c.l.b16 %v5798
    %v6178 = vunpack.c.h.b16 %v5798
    %v6179 = vunpack.c.l.b16 %v5799
    %v6180 = vunpack.c.h.b16 %v5799
    %v6181 = vunpack.c.l.b16 %v5800
    %v6182 = vunpack.c.h.b16 %v5800
    %v6183 = vunpack.c.l.b16 %v5801
    %v6184 = vunpack.c.h.b16 %v5801
    %v6185 = vunpack.c.l.b16 %v5802
    %v6186 = vunpack.c.h.b16 %v5802
    %v6187 = vunpack.c.l.b16 %v5803
    %v6188 = vunpack.c.h.b16 %v5803
    %v6189 = vunpack.c.l.b16 %v5804
    %v6190 = vunpack.c.h.b16 %v5804
    %v6191 = vunpack.c.l.b16 %v5805
    %v6192 = vunpack.c.h.b16 %v5805
    %v6193 = vunpack.c.l.b16 %v5806
    %v6194 = vunpack.c.h.b16 %v5806
    %v6195 = vunpack.c.l.b16 %v5807
    %v6196 = vunpack.c.h.b16 %v5807
    %v6197 = vunpack.c.l.b16 %v5808
    %v6198 = vunpack.c.h.b16 %v5808
    %v6199 = vunpack.c.l.b16 %v5809
    %v6200 = vunpack.c.h.b16 %v5809
    %v6201 = vunpack.c.l.b16 %v5810
    %v6202 = vunpack.c.h.b16 %v5810
    %v6203 = vunpack.c.l.b16 %v5811
    %v6204 = vunpack.c.h.b16 %v5811
    %v6205 = vunpack.c.l.b16 %v5812
    %v6206 = vunpack.c.h.b16 %v5812
    %v6207 = vunpack.c.l.b16 %v5813
    %v6208 = vunpack.c.h.b16 %v5813
    %v6209 = vunpack.c.l.b16 %v5814
    %v6210 = vunpack.c.h.b16 %v5814
    %v6211 = vunpack.c.l.b16 %v5815
    %v6212 = vunpack.c.h.b16 %v5815
    %v6213 = vunpack.c.l.b16 %v5816
    %v6214 = vunpack.c.h.b16 %v5816
    %v6215 = vunpack.c.l.b16 %v5817
    %v6216 = vunpack.c.h.b16 %v5817
    %v6217 = vunpack.c.l.b16 %v5818
    %v6218 = vunpack.c.h.b16 %v5818
    %v6219 = vunpack.c.l.b16 %v5819
    %v6220 = vunpack.c.h.b16 %v5819
    %v6221 = vunpack.c.l.b16 %v5820
    %v6222 = vunpack.c.h.b16 %v5820
    %v6223 = vunpack.c.l.b16 %v5821
    %v6224 = vunpack.c.h.b16 %v5821
    %v6225 = vunpack.c.l.b16 %v5822
    %v6226 = vunpack.c.h.b16 %v5822
    %v6227 = vunpack.c.l.b16 %v5823
    %v6228 = vunpack.c.h.b16 %v5823
    %v6229 = vunpack.c.l.b16 %v5824
    %v6230 = vunpack.c.h.b16 %v5824
    %v6231 = vunpack.c.l.b16 %v5825
    %v6232 = vunpack.c.h.b16 %v5825
    %v6233 = vunpack.c.l.b16 %v5826
    %v6234 = vunpack.c.h.b16 %v5826
    %v6235 = vunpack.c.l.b16 %v5827
    %v6236 = vunpack.c.h.b16 %v5827
    %v6237 = vunpack.c.l.b16 %v5828
    %v6238 = vunpack.c.h.b16 %v5828
    %v6239 = vunpack.c.l.b16 %v5829
    %v6240 = vunpack.c.h.b16 %v5829
    %v6241 = vunpack.c.l.b16 %v5830
    %v6242 = vunpack.c.h.b16 %v5830
    %v6243 = vunpack.c.l.b16 %v5831
    %v6244 = vunpack.c.h.b16 %v5831
    %v6245 = vunpack.c.l.b16 %v5832
    %v6246 = vunpack.c.h.b16 %v5832
    %v6247 = vunpack.c.l.b16 %v5833
    %v6248 = vunpack.c.h.b16 %v5833
    %v6249 = vunpack.c.l.b16 %v5834
    %v6250 = vunpack.c.h.b16 %v5834
    %v6251 = vunpack.c.l.b16 %v5835
    %v6252 = vunpack.c.h.b16 %v5835
    %v6253 = vunpack.c.l.b16 %v5836
    %v6254 = vunpack.c.h.b16 %v5836
    %v6255 = vunpack.c.l.b16 %v5837
    %v6256 = vunpack.c.h.b16 %v5837
    %v6257 = vunpack.c.l.b16 %v5838
    %v6258 = vunpack.c.h.b16 %v5838
    %v6259 = vunpack.c.l.b16 %v5839
    %v6260 = vunpack.c.h.b16 %v5839
    %v6261 = vunpack.c.l.b16 %v5840
    %v6262 = vunpack.c.h.b16 %v5840
    %v6263 = vunpack.c.l.b16 %v5841
    %v6264 = vunpack.c.h.b16 %v5841
    %v6265 = vunpack.c.l.b16 %v5842
    %v6266 = vunpack.c.h.b16 %v5842
    %v6267 = vunpack.c.l.b16 %v5843
    %v6268 = vunpack.c.h.b16 %v5843
    %v6269 = vunpack.c.l.b16 %v5844
    %v6270 = vunpack.c.h.b16 %v5844
    %v6271 = vunpack.c.l.b16 %v5845
    %v6272 = vunpack.c.h.b16 %v5845
    %v6273 = vunpack.c.l.b16 %v5846
    %v6274 = vunpack.c.h.b16 %v5846
    %v6275 = vunpack.c.l.b16 %v5847
    %v6276 = vunpack.c.h.b16 %v5847
    %v6277 = vunpack.c.l.b16 %v5848
    %v6278 = vunpack.c.h.b16 %v5848
    %v6279 = vunpack.c.l.b16 %v5849
    %v6280 = vunpack.c.h.b16 %v5849
    %v6281 = vunpack.c.l.b16 %v5850
    %v6282 = vunpack.c.h.b16 %v5850
    %v6283 = vunpack.c.l.b16 %v5851
    %v6284 = vunpack.c.h.b16 %v5851
    %v6285 = vunpack.c.l.b16 %v5852
    %v6286 = vunpack.c.h.b16 %v5852
    %v6287 = vunpack.c.l.b16 %v5853
    %v6288 = vunpack.c.h.b16 %v5853
    %v6289 = vunpack.c.l.b16 %v5854
    %v6290 = vunpack.c.h.b16 %v5854
    %v6291 = vunpack.c.l.b16 %v5855
    %v6292 = vunpack.c.h.b16 %v5855
    %v6293 = vunpack.c.l.b16 %v5856
    %v6294 = vunpack.c.h.b16 %v5856
    %v6295 = vunpack.c.l.b16 %v5857
    %v6296 = vunpack.c.h.b16 %v5857
    %v6297 = vunpack.c.l.b16 %v5858
    %v6298 = vunpack.c.h.b16 %v5858
    %v6299 = vunpack.c.l.b16 %v5859
    %v6300 = vunpack.c.h.b16 %v5859
    %v6301 = vunpack.c.l.b16 %v5860
    %v6302 = vunpack.c.h.b16 %v5860
    %v6303 = vunpack.c.l.b16 %v5861
    %v6304 = vunpack.c.h.b16 %v5861
    %v6305 = vunpack.c.l.b16 %v5862
    %v6306 = vunpack.c.h.b16 %v5862
    %v6307 = vunpack.c.l.b16 %v5863
    %v6308 = vunpack.c.h.b16 %v5863
    %v6309 = vunpack.c.l.b16 %v5864
    %v6310 = vunpack.c.h.b16 %v5864
    %v6311 = vunpack.c.l.b16 %v5865
    %v6312 = vunpack.c.h.b16 %v5865
    %v6313 = vunpack.c.l.b16 %v5866
    %v6314 = vunpack.c.h.b16 %v5866
    %v6315 = vunpack.c.l.b16 %v5867
    %v6316 = vunpack.c.h.b16 %v5867
    %v6317 = vunpack.c.l.b16 %v5868
    %v6318 = vunpack.c.h.b16 %v5868
    %v6319 = vunpack.c.l.b16 %v5869
    %v6320 = vunpack.c.h.b16 %v5869
    %v6321 = vunpack.c.l.b16 %v5870
    %v6322 = vunpack.c.h.b16 %v5870
    %v6323 = vunpack.c.l.b16 %v5871
    %v6324 = vunpack.c.h.b16 %v5871
    %v6325 = vunpack.c.l.b16 %v5872
    %v6326 = vunpack.c.h.b16 %v5872
    %v6327 = vunpack.c.l.b16 %v5873
    %v6328 = vunpack.c.h.b16 %v5873
    %v6329 = vunpack.c.l.b16 %v5874
    %v6330 = vunpack.c.h.b16 %v5874
    %v6331 = vunpack.c.l.b16 %v5875
    %v6332 = vunpack.c.h.b16 %v5875
    %v6333 = vunpack.c.l.b16 %v5876
    %v6334 = vunpack.c.h.b16 %v5876
    %v6335 = vunpack.c.l.b16 %v5877
    %v6336 = vunpack.c.h.b16 %v5877
    %v6337 = vunpack.c.l.b16 %v5878
    %v6338 = vunpack.c.h.b16 %v5878
    %v6339 = vunpack.c.l.b16 %v5879
    %v6340 = vunpack.c.h.b16 %v5879
    %v6341 = vunpack.c.l.b16 %v5880
    %v6342 = vunpack.c.h.b16 %v5880
    %v6343 = vunpack.c.l.b16 %v5881
    %v6344 = vunpack.c.h.b16 %v5881
    %v6345 = vunpack.c.l.b16 %v5882
    %v6346 = vunpack.c.h.b16 %v5882
    %v6347 = vunpack.c.l.b16 %v5883
    %v6348 = vunpack.c.h.b16 %v5883
    %v6349 = vunpack.c.l.b16 %v5884
    %v6350 = vunpack.c.h.b16 %v5884
    %v6351 = vunpack.c.l.b16 %v5885
    %v6352 = vunpack.c.h.b16 %v5885
    %v6353 = vpack.c.b16 %v6071, %v6065
    %v6354 = vpack.c.b16 %v6072, %v6066
    %v6355 = vpack.c.b16 %v6073, %v6067
    %v6356 = vpack.c.b16 %v6074, %v6068
    %v6357 = vpack.c.b16 %v6075, %v6069
    %v6358 = vpack.c.b16 %v6076, %v6070
    %v6359 = vpack.c.b16 %v6083, %v6077
    %v6360 = vpack.c.b16 %v6084, %v6078
    %v6361 = vpack.c.b16 %v6085, %v6079
    %v6362 = vpack.c.b16 %v6086, %v6080
    %v6363 = vpack.c.b16 %v6087, %v6081
    %v6364 = vpack.c.b16 %v6088, %v6082
    %v6365 = vpack.c.b16 %v6095, %v6089
    %v6366 = vpack.c.b16 %v6096, %v6090
    %v6367 = vpack.c.b16 %v6097, %v6091
    %v6368 = vpack.c.b16 %v6098, %v6092
    %v6369 = vpack.c.b16 %v6099, %v6093
    %v6370 = vpack.c.b16 %v6100, %v6094
    %v6371 = vpack.c.b16 %v6107, %v6101
    %v6372 = vpack.c.b16 %v6108, %v6102
    %v6373 = vpack.c.b16 %v6109, %v6103
    %v6374 = vpack.c.b16 %v6110, %v6104
    %v6375 = vpack.c.b16 %v6111, %v6105
    %v6376 = vpack.c.b16 %v6112, %v6106
    %v6377 = vpack.c.b16 %v6119, %v6113
    %v6378 = vpack.c.b16 %v6120, %v6114
    %v6379 = vpack.c.b16 %v6121, %v6115
    %v6380 = vpack.c.b16 %v6122, %v6116
    %v6381 = vpack.c.b16 %v6123, %v6117
    %v6382 = vpack.c.b16 %v6124, %v6118
    %v6383 = vpack.c.b16 %v6131, %v6125
    %v6384 = vpack.c.b16 %v6132, %v6126
    %v6385 = vpack.c.b16 %v6133, %v6127
    %v6386 = vpack.c.b16 %v6134, %v6128
    %v6387 = vpack.c.b16 %v6135, %v6129
    %v6388 = vpack.c.b16 %v6136, %v6130
    %v6389 = vpack.c.b16 %v6143, %v6137
    %v6390 = vpack.c.b16 %v6144, %v6138
    %v6391 = vpack.c.b16 %v6145, %v6139
    %v6392 = vpack.c.b16 %v6146, %v6140
    %v6393 = vpack.c.b16 %v6147, %v6141
    %v6394 = vpack.c.b16 %v6148, %v6142
    %v6395 = vpack.c.b16 %v6155, %v6149
    %v6396 = vpack.c.b16 %v6156, %v6150
    %v6397 = vpack.c.b16 %v6157, %v6151
    %v6398 = vpack.c.b16 %v6158, %v6152
    %v6399 = vpack.c.b16 %v6159, %v6153
    %v6400 = vpack.c.b16 %v6160, %v6154
    %v6401 = vpack.c.b16 %v6167, %v6161
    %v6402 = vpack.c.b16 %v6168, %v6162
    %v6403 = vpack.c.b16 %v6169, %v6163
    %v6404 = vpack.c.b16 %v6170, %v6164
    %v6405 = vpack.c.b16 %v6171, %v6165
    %v6406 = vpack.c.b16 %v6172, %v6166
    %v6407 = vpack.c.b16 %v6179, %v6173
    %v6408 = vpack.c.b16 %v6180, %v6174
    %v6409 = vpack.c.b16 %v6181, %v6175
    %v6410 = vpack.c.b16 %v6182, %v6176
    %v6411 = vpack.c.b16 %v6183, %v6177
    %v6412 = vpack.c.b16 %v6184, %v6178
    %v6413 = vpack.c.b16 %v6191, %v6185
    %v6414 = vpack.c.b16 %v6192, %v6186
    %v6415 = vpack.c.b16 %v6193, %v6187
    %v6416 = vpack.c.b16 %v6194, %v6188
    %v6417 = vpack.c.b16 %v6195, %v6189
    %v6418 = vpack.c.b16 %v6196, %v6190
    %v6419 = vpack.c.b16 %v6203, %v6197
    %v6420 = vpack.c.b16 %v6204, %v6198
    %v6421 = vpack.c.b16 %v6205, %v6199
    %v6422 = vpack.c.b16 %v6206, %v6200
    %v6423 = vpack.c.b16 %v6207, %v6201
    %v6424 = vpack.c.b16 %v6208, %v6202
    %v6425 = vpack.c.b16 %v6215, %v6209
    %v6426 = vpack.c.b16 %v6216, %v6210
    %v6427 = vpack.c.b16 %v6217, %v6211
    %v6428 = vpack.c.b16 %v6218, %v6212
    %v6429 = vpack.c.b16 %v6219, %v6213
    %v6430 = vpack.c.b16 %v6220, %v6214
    %v6431 = vpack.c.b16 %v6227, %v6221
    %v6432 = vpack.c.b16 %v6228, %v6222
    %v6433 = vpack.c.b16 %v6229, %v6223
    %v6434 = vpack.c.b16 %v6230, %v6224
    %v6435 = vpack.c.b16 %v6231, %v6225
    %v6436 = vpack.c.b16 %v6232, %v6226
    %v6437 = vpack.c.b16 %v6239, %v6233
    %v6438 = vpack.c.b16 %v6240, %v6234
    %v6439 = vpack.c.b16 %v6241, %v6235
    %v6440 = vpack.c.b16 %v6242, %v6236
    %v6441 = vpack.c.b16 %v6243, %v6237
    %v6442 = vpack.c.b16 %v6244, %v6238
    %v6443 = vpack.c.b16 %v6251, %v6245
    %v6444 = vpack.c.b16 %v6252, %v6246
    %v6445 = vpack.c.b16 %v6253, %v6247
    %v6446 = vpack.c.b16 %v6254, %v6248
    %v6447 = vpack.c.b16 %v6255, %v6249
    %v6448 = vpack.c.b16 %v6256, %v6250
    %v6449 = vpack.c.b16 %v6263, %v6257
    %v6450 = vpack.c.b16 %v6264, %v6258
    %v6451 = vpack.c.b16 %v6265, %v6259
    %v6452 = vpack.c.b16 %v6266, %v6260
    %v6453 = vpack.c.b16 %v6267, %v6261
    %v6454 = vpack.c.b16 %v6268, %v6262
    %v6455 = vpack.c.b16 %v6275, %v6269
    %v6456 = vpack.c.b16 %v6276, %v6270
    %v6457 = vpack.c.b16 %v6277, %v6271
    %v6458 = vpack.c.b16 %v6278, %v6272
    %v6459 = vpack.c.b16 %v6279, %v6273
    %v6460 = vpack.c.b16 %v6280, %v6274
    %v6461 = vpack.c.b16 %v6287, %v6281
    %v6462 = vpack.c.b16 %v6288, %v6282
    %v6463 = vpack.c.b16 %v6289, %v6283
    %v6464 = vpack.c.b16 %v6290, %v6284
    %v6465 = vpack.c.b16 %v6291, %v6285
    %v6466 = vpack.c.b16 %v6292, %v6286
    %v6467 = vpack.c.b16 %v6299, %v6293
    %v6468 = vpack.c.b16 %v6300, %v6294
    %v6469 = vpack.c.b16 %v6301, %v6295
    %v6470 = vpack.c.b16 %v6302, %v6296
    %v6471 = vpack.c.b16 %v6303, %v6297
    %v6472 = vpack.c.b16 %v6304, %v6298
    %v6473 = vpack.c.b16 %v6311, %v6305
    %v6474 = vpack.c.b16 %v6312, %v6306
    %v6475 = vpack.c.b16 %v6313, %v6307
    %v6476 = vpack.c.b16 %v6314, %v6308
    %v6477 = vpack.c.b16 %v6315, %v6309
    %v6478 = vpack.c.b16 %v6316, %v6310
    %v6479 = vpack.c.b16 %v6323, %v6317
    %v6480 = vpack.c.b16 %v6324, %v6318
    %v6481 = vpack.c.b16 %v6325, %v6319
    %v6482 = vpack.c.b16 %v6326, %v6320
    %v6483 = vpack.c.b16 %v6327, %v6321
    %v6484 = vpack.c.b16 %v6328, %v6322
    %v6485 = vpack.c.b16 %v6335, %v6329
    %v6486 = vpack.c.b16 %v6336, %v6330
    %v6487 = vpack.c.b16 %v6337, %v6331
    %v6488 = vpack.c.b16 %v6338, %v6332
    %v6489 = vpack.c.b16 %v6339, %v6333
    %v6490 = vpack.c.b16 %v6340, %v6334
    %v6491 = vpack.c.b16 %v6347, %v6341
    %v6492 = vpack.c.b16 %v6348, %v6342
    %v6493 = vpack.c.b16 %v6349, %v6343
    %v6494 = vpack.c.b16 %v6350, %v6344
    %v6495 = vpack.c.b16 %v6351, %v6345
    %v6496 = vpack.c.b16 %v6352, %v6346
    %6641 = vmatprep.subr.bf16.mxu0 %v6354
    %6642 = vmatpush1.bf16.msra.mxu0 %v6353
    %6643 = vmatprep.subr.bf16.mxu0 %v6360
    %6644 = vmatpush1.bf16.msra.mxu0 %v6359
    %6645 = vmatprep.subr.bf16.mxu0 %v6366
    %6646 = vmatpush1.bf16.msra.mxu0 %v6365
    %6647 = vmatprep.subr.bf16.mxu0 %v6372
    %6648 = vmatpush1.bf16.msra.mxu0 %v6371
    %6649 = vmatprep.subr.bf16.mxu0 %v6378
    %6650 = vmatpush1.bf16.msra.mxu0 %v6377
    %6651 = vmatprep.subr.bf16.mxu0 %v6384
    %6652 = vmatpush1.bf16.msra.mxu0 %v6383
    %6653 = vmatprep.subr.bf16.mxu0 %v6390
    %6654 = vmatpush1.bf16.msra.mxu0 %v6389
    %6655 = vmatprep.subr.bf16.mxu0 %v6396
    %6656 = vmatpush1.bf16.msra.mxu0 %v6395
    %6657 = vmatprep.subr.bf16.mxu0 %v6402
    %6658 = vmatpush1.bf16.msra.mxu0 %v6401
    %6659 = vmatprep.subr.bf16.mxu0 %v6408
    %6660 = vmatpush1.bf16.msra.mxu0 %v6407
    %6661 = vmatprep.subr.bf16.mxu0 %v6414
    %6662 = vmatpush1.bf16.msra.mxu0 %v6413
    %6663 = vmatprep.subr.bf16.mxu0 %v6420
    %6664 = vmatpush1.bf16.msra.mxu0 %v6419
    %6665 = vmatprep.subr.bf16.mxu0 %v6426
    %6666 = vmatpush1.bf16.msra.mxu0 %v6425
    %6667 = vmatprep.subr.bf16.mxu0 %v6432
    %6668 = vmatpush1.bf16.msra.mxu0 %v6431
    %6669 = vmatprep.subr.bf16.mxu0 %v6438
    %6670 = vmatpush1.bf16.msra.mxu0 %v6437
    %6671 = vmatprep.subr.bf16.mxu0 %v6444
    %6672 = vmatpush1.bf16.msra.mxu0 %v6443
    %6673 = vmatprep.mubr.bf16.mxu0 %v5887
    %6674 = vmatmul.mubr.bf16.gmra.mrb[0].mxu0 %v5886
    %v6675 = vpop.f32.mrb[0].mxu0
    %v6676 = vadd.f32 %v5894, %v6675
    %v6677 = vpop.f32.mrb[0].mxu0
    %v6678 = vadd.f32 %v5898, %v6677
    %v6679 = vpop.f32.mrb[0].mxu0
    %v6680 = vpop.f32.mrb[0].mxu0
    %6681 = vdwg.mxu0
    %6682 = vmatprep.subr.bf16.mxu0 %v6450
    %6683 = vmatpush1.bf16.msra.mxu0 %v6449
    %6684 = vmatprep.subr.bf16.mxu0 %v6456
    %6685 = vmatpush1.bf16.msra.mxu0 %v6455
    %6686 = vmatprep.subr.bf16.mxu0 %v6462
    %6687 = vmatpush1.bf16.msra.mxu0 %v6461
    %6688 = vmatprep.subr.bf16.mxu0 %v6468
    %6689 = vmatpush1.bf16.msra.mxu0 %v6467
    %6690 = vmatprep.subr.bf16.mxu0 %v6474
    %6691 = vmatpush1.bf16.msra.mxu0 %v6473
    %6692 = vmatprep.subr.bf16.mxu0 %v6480
    %6693 = vmatpush1.bf16.msra.mxu0 %v6479
    %6694 = vmatprep.subr.bf16.mxu0 %v6486
    %6695 = vmatpush1.bf16.msra.mxu0 %v6485
    %6696 = vmatprep.subr.bf16.mxu0 %v6492
    %6697 = vmatpush1.bf16.msra.mxu0 %v6491
    %6698 = vmatprep.subr.bf16.mxu0 0
    %6699 = vmatpush1.bf16.msra.mxu0 0
    %6700 = vmatprep.subr.bf16.mxu0 0
    %6701 = vmatpush1.bf16.msra.mxu0 0
    %6702 = vmatprep.subr.bf16.mxu0 0
    %6703 = vmatpush1.bf16.msra.mxu0 0
    %6704 = vmatprep.subr.bf16.mxu0 0
    %6705 = vmatpush1.bf16.msra.mxu0 0
    %6706 = vmatprep.subr.bf16.mxu0 0
    %6707 = vmatpush1.bf16.msra.mxu0 0
    %6708 = vmatprep.subr.bf16.mxu0 0
    %6709 = vmatpush1.bf16.msra.mxu0 0
    %6710 = vmatprep.subr.bf16.mxu0 0
    %6711 = vmatpush1.bf16.msra.mxu0 0
    %6712 = vmatprep.subr.bf16.mxu0 0
    %6713 = vmatpush1.bf16.msra.mxu0 0
    %6714 = vmatprep.mubr.bf16.mxu0 0
    %6715 = vmatmul.mubr.bf16.gmra.mrb[0].mxu0 %v5888
    %v6716 = vpop.f32.mrb[0].mxu0
    %v6717 = vadd.f32 %v6676, %v6716
    %v6718 = vpop.f32.mrb[0].mxu0
    %v6719 = vadd.f32 %v6678, %v6718
    %v6720 = vpop.f32.mrb[0].mxu0
    %v6721 = vpop.f32.mrb[0].mxu0
    %6722 = vdwg.mxu0
    %6723 = vmatprep.subr.bf16.mxu0 %v6356
    %6724 = vmatpush1.bf16.msra.mxu0 %v6355
    %6725 = vmatprep.subr.bf16.mxu0 %v6362
    %6726 = vmatpush1.bf16.msra.mxu0 %v6361
    %6727 = vmatprep.subr.bf16.mxu0 %v6368
    %6728 = vmatpush1.bf16.msra.mxu0 %v6367
    %6729 = vmatprep.subr.bf16.mxu0 %v6374
    %6730 = vmatpush1.bf16.msra.mxu0 %v6373
    %6731 = vmatprep.subr.bf16.mxu0 %v6380
    %6732 = vmatpush1.bf16.msra.mxu0 %v6379
    %6733 = vmatprep.subr.bf16.mxu0 %v6386
    %6734 = vmatpush1.bf16.msra.mxu0 %v6385
    %6735 = vmatprep.subr.bf16.mxu0 %v6392
    %6736 = vmatpush1.bf16.msra.mxu0 %v6391
    %6737 = vmatprep.subr.bf16.mxu0 %v6398
    %6738 = vmatpush1.bf16.msra.mxu0 %v6397
    %6739 = vmatprep.subr.bf16.mxu0 %v6404
    %6740 = vmatpush1.bf16.msra.mxu0 %v6403
    %6741 = vmatprep.subr.bf16.mxu0 %v6410
    %6742 = vmatpush1.bf16.msra.mxu0 %v6409
    %6743 = vmatprep.subr.bf16.mxu0 %v6416
    %6744 = vmatpush1.bf16.msra.mxu0 %v6415
    %6745 = vmatprep.subr.bf16.mxu0 %v6422
    %6746 = vmatpush1.bf16.msra.mxu0 %v6421
    %6747 = vmatprep.subr.bf16.mxu0 %v6428
    %6748 = vmatpush1.bf16.msra.mxu0 %v6427
    %6749 = vmatprep.subr.bf16.mxu0 %v6434
    %6750 = vmatpush1.bf16.msra.mxu0 %v6433
    %6751 = vmatprep.subr.bf16.mxu0 %v6440
    %6752 = vmatpush1.bf16.msra.mxu0 %v6439
    %6753 = vmatprep.subr.bf16.mxu0 %v6446
    %6754 = vmatpush1.bf16.msra.mxu0 %v6445
    %6755 = vmatprep.mubr.bf16.mxu0 %v5887
    %6756 = vmatmul.mubr.bf16.gmra.mrb[0].mxu0 %v5886
    %v6757 = vpop.f32.mrb[0].mxu0
    %v6758 = vadd.f32 %v5902, %v6757
    %v6759 = vpop.f32.mrb[0].mxu0
    %v6760 = vadd.f32 %v5906, %v6759
    %v6761 = vpop.f32.mrb[0].mxu0
    %v6762 = vpop.f32.mrb[0].mxu0
    %6763 = vdwg.mxu0
    %6764 = vmatprep.subr.bf16.mxu0 %v6452
    %6765 = vmatpush1.bf16.msra.mxu0 %v6451
    %6766 = vmatprep.subr.bf16.mxu0 %v6458
    %6767 = vmatpush1.bf16.msra.mxu0 %v6457
    %6768 = vmatprep.subr.bf16.mxu0 %v6464
    %6769 = vmatpush1.bf16.msra.mxu0 %v6463
    %6770 = vmatprep.subr.bf16.mxu0 %v6470
    %6771 = vmatpush1.bf16.msra.mxu0 %v6469
    %6772 = vmatprep.subr.bf16.mxu0 %v6476
    %6773 = vmatpush1.bf16.msra.mxu0 %v6475
    %6774 = vmatprep.subr.bf16.mxu0 %v6482
    %6775 = vmatpush1.bf16.msra.mxu0 %v6481
    %6776 = vmatprep.subr.bf16.mxu0 %v6488
    %6777 = vmatpush1.bf16.msra.mxu0 %v6487
    %6778 = vmatprep.subr.bf16.mxu0 %v6494
    %6779 = vmatpush1.bf16.msra.mxu0 %v6493
    %6780 = vmatprep.subr.bf16.mxu0 0
    %6781 = vmatpush1.bf16.msra.mxu0 0
    %6782 = vmatprep.subr.bf16.mxu0 0
    %6783 = vmatpush1.bf16.msra.mxu0 0
    %6784 = vmatprep.subr.bf16.mxu0 0
    %6785 = vmatpush1.bf16.msra.mxu0 0
    %6786 = vmatprep.subr.bf16.mxu0 0
    %6787 = vmatpush1.bf16.msra.mxu0 0
    %6788 = vmatprep.subr.bf16.mxu0 0
    %6789 = vmatpush1.bf16.msra.mxu0 0
    %6790 = vmatprep.subr.bf16.mxu0 0
    %6791 = vmatpush1.bf16.msra.mxu0 0
    %6792 = vmatprep.subr.bf16.mxu0 0
    %6793 = vmatpush1.bf16.msra.mxu0 0
    %6794 = vmatprep.subr.bf16.mxu0 0
    %6795 = vmatpush1.bf16.msra.mxu0 0
    %6796 = vmatprep.mubr.bf16.mxu0 0
    %6797 = vmatmul.mubr.bf16.gmra.mrb[0].mxu0 %v5888
    %v6798 = vpop.f32.mrb[0].mxu0
    %v6799 = vadd.f32 %v6758, %v6798
    %v6800 = vpop.f32.mrb[0].mxu0
    %v6801 = vadd.f32 %v6760, %v6800
    %v6802 = vpop.f32.mrb[0].mxu0
    %v6803 = vpop.f32.mrb[0].mxu0
    %6804 = vdwg.mxu0
    %6805 = vmatprep.subr.bf16.mxu0 %v6358
    %6806 = vmatpush1.bf16.msra.mxu0 %v6357
    %6807 = vmatprep.subr.bf16.mxu0 %v6364
    %6808 = vmatpush1.bf16.msra.mxu0 %v6363
    %6809 = vmatprep.subr.bf16.mxu0 %v6370
    %6810 = vmatpush1.bf16.msra.mxu0 %v6369
    %6811 = vmatprep.subr.bf16.mxu0 %v6376
    %6812 = vmatpush1.bf16.msra.mxu0 %v6375
    %6813 = vmatprep.subr.bf16.mxu0 %v6382
    %6814 = vmatpush1.bf16.msra.mxu0 %v6381
    %6815 = vmatprep.subr.bf16.mxu0 %v6388
    %6816 = vmatpush1.bf16.msra.mxu0 %v6387
    %6817 = vmatprep.subr.bf16.mxu0 %v6394
    %6818 = vmatpush1.bf16.msra.mxu0 %v6393
    %6819 = vmatprep.subr.bf16.mxu0 %v6400
    %6820 = vmatpush1.bf16.msra.mxu0 %v6399
    %6821 = vmatprep.subr.bf16.mxu0 %v6406
    %6822 = vmatpush1.bf16.msra.mxu0 %v6405
    %6823 = vmatprep.subr.bf16.mxu0 %v6412
    %6824 = vmatpush1.bf16.msra.mxu0 %v6411
    %6825 = vmatprep.subr.bf16.mxu0 %v6418
    %6826 = vmatpush1.bf16.msra.mxu0 %v6417
    %6827 = vmatprep.subr.bf16.mxu0 %v6424
    %6828 = vmatpush1.bf16.msra.mxu0 %v6423
    %6829 = vmatprep.subr.bf16.mxu0 %v6430
    %6830 = vmatpush1.bf16.msra.mxu0 %v6429
    %6831 = vmatprep.subr.bf16.mxu0 %v6436
    %6832 = vmatpush1.bf16.msra.mxu0 %v6435
    %6833 = vmatprep.subr.bf16.mxu0 %v6442
    %6834 = vmatpush1.bf16.msra.mxu0 %v6441
    %6835 = vmatprep.subr.bf16.mxu0 %v6448
    %6836 = vmatpush1.bf16.msra.mxu0 %v6447
    %6837 = vmatprep.mubr.bf16.mxu0 %v5887
    %6838 = vmatmul.mubr.bf16.gmra.mrb[0].mxu0 %v5886
    %v6839 = vpop.f32.mrb[0].mxu0
    %v6840 = vadd.f32 %v5910, %v6839
    %v6841 = vpop.f32.mrb[0].mxu0
    %v6842 = vadd.f32 %v5914, %v6841
    %v6843 = vpop.f32.mrb[0].mxu0
    %v6844 = vpop.f32.mrb[0].mxu0
    %6845 = vdwg.mxu0
    %6846 = vmatprep.subr.bf16.mxu0 %v6454
    %6847 = vmatpush1.bf16.msra.mxu0 %v6453
    %6848 = vmatprep.subr.bf16.mxu0 %v6460
    %6849 = vmatpush1.bf16.msra.mxu0 %v6459
    %6850 = vmatprep.subr.bf16.mxu0 %v6466
    %6851 = vmatpush1.bf16.msra.mxu0 %v6465
    %6852 = vmatprep.subr.bf16.mxu0 %v6472
    %6853 = vmatpush1.bf16.msra.mxu0 %v6471
    %6854 = vmatprep.subr.bf16.mxu0 %v6478
    %6855 = vmatpush1.bf16.msra.mxu0 %v6477
    %6856 = vmatprep.subr.bf16.mxu0 %v6484
    %6857 = vmatpush1.bf16.msra.mxu0 %v6483
    %6858 = vmatprep.subr.bf16.mxu0 %v6490
    %6859 = vmatpush1.bf16.msra.mxu0 %v6489
    %6860 = vmatprep.subr.bf16.mxu0 %v6496
    %6861 = vmatpush1.bf16.msra.mxu0 %v6495
    %6862 = vmatprep.subr.bf16.mxu0 0
    %6863 = vmatpush1.bf16.msra.mxu0 0
    %6864 = vmatprep.subr.bf16.mxu0 0
    %6865 = vmatpush1.bf16.msra.mxu0 0
    %6866 = vmatprep.subr.bf16.mxu0 0
    %6867 = vmatpush1.bf16.msra.mxu0 0
    %6868 = vmatprep.subr.bf16.mxu0 0
    %6869 = vmatpush1.bf16.msra.mxu0 0
    %6870 = vmatprep.subr.bf16.mxu0 0
    %6871 = vmatpush1.bf16.msra.mxu0 0
    %6872 = vmatprep.subr.bf16.mxu0 0
    %6873 = vmatpush1.bf16.msra.mxu0 0
    %6874 = vmatprep.subr.bf16.mxu0 0
    %6875 = vmatpush1.bf16.msra.mxu0 0
    %6876 = vmatprep.subr.bf16.mxu0 0
    %6877 = vmatpush1.bf16.msra.mxu0 0
    %6878 = vmatprep.mubr.bf16.mxu0 0
    %6879 = vmatmul.mubr.bf16.gmra.mrb[0].mxu0 %v5888
    %v6880 = vpop.f32.mrb[0].mxu0
    %v6881 = vadd.f32 %v6840, %v6880
    %v6882 = vpop.f32.mrb[0].mxu0
    %v6883 = vadd.f32 %v6842, %v6882
    %v6884 = vpop.f32.mrb[0].mxu0
    %v6885 = vpop.f32.mrb[0].mxu0
    %6886 = vdwg.mxu0
    %v6887 = vmax.f32 %v6717, 0.0
    %v6888 = vmax.f32 %v6719, 0.0
    %v6889 = vmax.f32 %v6799, 0.0
    %v6890 = vmax.f32 %v6801, 0.0
    %v6891 = vmax.f32 %v6881, 0.0
    %v6892 = vmax.f32 %v6883, 0.0
    %v6893 = vld [vmem:[%s21] sm:$0xf]
    %v6894 = vld [vmem:[%s21 + $0x4] sm:$0xf]
    %v6895 = vld [vmem:[%s21 + $0x8] sm:$0xf]
    %v6896 = vld [vmem:[%s21 + $0xc] sm:$0xf]
    %v6897 = vld [vmem:[%s21 + $0x10] sm:$0xf]
    %v6898 = vld [vmem:[%s21 + $0x14] sm:$0xf]
    %v6899 = vld [vmem:[%s21 + $0x18] sm:$0xf]
    %v6900 = vld [vmem:[%s21 + $0x1c] sm:$0xf]
    %v6901 = vld [vmem:[%s21 + $0x20] sm:$0xf]
    %v6902 = vld [vmem:[%s21 + $0x24] sm:$0xf]
    %v6903 = vld [vmem:[%s21 + $0x28] sm:$0xf]
    %v6904 = vld [vmem:[%s21 + $0x2c] sm:$0xf]
    %v6905 = vld [vmem:[%s21 + $0x30] sm:$0xf]
    %v6906 = vld [vmem:[%s21 + $0x34] sm:$0xf]
    %v6907 = vld [vmem:[%s21 + $0x38] sm:$0xf]
    %v6908 = vld [vmem:[%s21 + $0x3c] sm:$0xf]
    %v6909 = vld [vmem:[%s21 + $0x40] sm:$0xf]
    %v6910 = vld [vmem:[%s21 + $0x44] sm:$0xf]
    %v6911 = vld [vmem:[%s21 + $0x48] sm:$0xf]
    %v6912 = vld [vmem:[%s21 + $0x4c] sm:$0xf]
    %v6913 = vld [vmem:[%s21 + $0x50] sm:$0xf]
    %v6914 = vld [vmem:[%s21 + $0x54] sm:$0xf]
    %v6915 = vld [vmem:[%s21 + $0x58] sm:$0xf]
    %v6916 = vld [vmem:[%s21 + $0x5c] sm:$0xf]
    %v6917 = vld [vmem:[%s21 + $0x60] sm:$0xf]
    %v6918 = vld [vmem:[%s21 + $0x64] sm:$0xf]
    %v6919 = vld [vmem:[%s21 + $0x68] sm:$0xf]
    %v6920 = vld [vmem:[%s21 + $0x6c] sm:$0xf]
    %v6921 = vld [vmem:[%s21 + $0x70] sm:$0xf]
    %v6922 = vld [vmem:[%s21 + $0x74] sm:$0xf]
    %v6923 = vld [vmem:[%s21 + $0x78] sm:$0xf]
    %v6924 = vld [vmem:[%s21 + $0x7c] sm:$0xf]
    %v6925 = vld [vmem:[%s21 + $0x80] sm:$0xf]
    %v6926 = vld [vmem:[%s21 + $0x84] sm:$0xf]
    %v6927 = vld [vmem:[%s21 + $0x88] sm:$0xf]
    %v6928 = vld [vmem:[%s21 + $0x8c] sm:$0xf]
    %v6929 = vld [vmem:[%s21 + $0x90] sm:$0xf]
    %v6930 = vld [vmem:[%s21 + $0x94] sm:$0xf]
    %v6931 = vld [vmem:[%s21 + $0x98] sm:$0xf]
    %v6932 = vld [vmem:[%s21 + $0x9c] sm:$0xf]
    %v6933 = vld [vmem:[%s21 + $0xa0] sm:$0xf]
    %v6934 = vld [vmem:[%s21 + $0xa4] sm:$0xf]
    %v6935 = vld [vmem:[%s21 + $0xa8] sm:$0xf]
    %v6936 = vld [vmem:[%s21 + $0xac] sm:$0xf]
    %v6937 = vld [vmem:[%s21 + $0xb0] sm:$0xf]
    %v6938 = vld [vmem:[%s21 + $0xb4] sm:$0xf]
    %v6939 = vld [vmem:[%s21 + $0xb8] sm:$0xf]
    %v6940 = vld [vmem:[%s21 + $0xbc] sm:$0xf]
    %v6941 = vld [vmem:[%s21 + $0xc0] sm:$0xf]
    %v6942 = vld [vmem:[%s21 + $0xc4] sm:$0xf]
    %v6943 = vld [vmem:[%s21 + $0xc8] sm:$0xf]
    %v6944 = vld [vmem:[%s21 + $0xcc] sm:$0xf]
    %v6945 = vld [vmem:[%s21 + $0xd0] sm:$0xf]
    %v6946 = vld [vmem:[%s21 + $0xd4] sm:$0xf]
    %v6947 = vld [vmem:[%s21 + $0xd8] sm:$0xf]
    %v6948 = vld [vmem:[%s21 + $0xdc] sm:$0xf]
    %v6949 = vld [vmem:[%s21 + $0xe0] sm:$0xf]
    %v6950 = vld [vmem:[%s21 + $0xe4] sm:$0xf]
    %v6951 = vld [vmem:[%s21 + $0xe8] sm:$0xf]
    %v6952 = vld [vmem:[%s21 + $0xec] sm:$0xf]
    %v6953 = vld [vmem:[%s21 + $0xf0] sm:$0xf]
    %v6954 = vld [vmem:[%s21 + $0xf4] sm:$0xf]
    %v6955 = vld [vmem:[%s21 + $0xf8] sm:$0xf]
    %v6956 = vld [vmem:[%s21 + $0xfc] sm:$0xf]
    %v6957 = vld [vmem:[%s21 + $0x100] sm:$0xf]
    %v6958 = vld [vmem:[%s21 + $0x104] sm:$0xf]
    %v6959 = vld [vmem:[%s21 + $0x108] sm:$0xf]
    %v6960 = vld [vmem:[%s21 + $0x10c] sm:$0xf]
    %v6961 = vld [vmem:[%s21 + $0x110] sm:$0xf]
    %v6962 = vld [vmem:[%s21 + $0x114] sm:$0xf]
    %v6963 = vld [vmem:[%s21 + $0x118] sm:$0xf]
    %v6964 = vld [vmem:[%s21 + $0x11c] sm:$0xf]
    %v6965 = vld [vmem:[%s21 + $0x120] sm:$0xf]
    %v6966 = vld [vmem:[%s21 + $0x124] sm:$0xf]
    %v6967 = vld [vmem:[%s21 + $0x128] sm:$0xf]
    %v6968 = vld [vmem:[%s21 + $0x12c] sm:$0xf]
    %v6969 = vld [vmem:[%s21 + $0x130] sm:$0xf]
    %v6970 = vld [vmem:[%s21 + $0x134] sm:$0xf]
    %v6971 = vld [vmem:[%s21 + $0x138] sm:$0xf]
    %v6972 = vld [vmem:[%s21 + $0x13c] sm:$0xf]
    %v6973 = vld [vmem:[%s21 + $0x140] sm:$0xf]
    %v6974 = vld [vmem:[%s21 + $0x144] sm:$0xf]
    %v6975 = vld [vmem:[%s21 + $0x148] sm:$0xf]
    %v6976 = vld [vmem:[%s21 + $0x14c] sm:$0xf]
    %v6977 = vld [vmem:[%s21 + $0x150] sm:$0xf]
    %v6978 = vld [vmem:[%s21 + $0x154] sm:$0xf]
    %v6979 = vld [vmem:[%s21 + $0x158] sm:$0xf]
    %v6980 = vld [vmem:[%s21 + $0x15c] sm:$0xf]
    %v6981 = vld [vmem:[%s21 + $0x160] sm:$0xf]
    %v6982 = vld [vmem:[%s21 + $0x164] sm:$0xf]
    %v6983 = vld [vmem:[%s21 + $0x168] sm:$0xf]
    %v6984 = vld [vmem:[%s21 + $0x16c] sm:$0xf]
    %v6985 = vld [vmem:[%s21 + $0x170] sm:$0xf]
    %v6986 = vld [vmem:[%s21 + $0x174] sm:$0xf]
    %v6987 = vld [vmem:[%s21 + $0x178] sm:$0xf]
    %v6988 = vld [vmem:[%s21 + $0x17c] sm:$0xf]
    %v6989 = vpack.c.bf16 %v6887, %v6887
    %v6990 = vpack.c.bf16 %v6888, %v6888
    %v6991 = vpack.c.bf16 %v6889, %v6889
    %v6992 = vpack.c.bf16 %v6890, %v6890
    %v6993 = vpack.c.bf16 %v6891, %v6891
    %v6994 = vpack.c.bf16 %v6892, %v6892
    %v6995 = vld [vmem:[#allocation31] sm:$0x1]
    %v6997 = vlaneseq
    %v6998 = vshrl.u32 %v6997, 7
    %v6999 = vsub.s32 0, %v6998
    %v7000 = vrot.slane %v6995, %v6999
    %v7098 = vunpack.c.l.b16 %v6893
    %v7099 = vunpack.c.l.b16 %v6894
    %v7100 = vunpack.c.l.b16 %v6895
    %v7101 = vunpack.c.l.b16 %v6896
    %v7102 = vunpack.c.l.b16 %v6897
    %v7103 = vunpack.c.l.b16 %v6898
    %v7104 = vunpack.c.l.b16 %v6899
    %v7105 = vunpack.c.l.b16 %v6900
    %v7106 = vunpack.c.l.b16 %v6901
    %v7107 = vunpack.c.l.b16 %v6902
    %v7108 = vunpack.c.l.b16 %v6903
    %v7109 = vunpack.c.l.b16 %v6904
    %v7110 = vunpack.c.l.b16 %v6905
    %v7111 = vunpack.c.l.b16 %v6906
    %v7112 = vunpack.c.l.b16 %v6907
    %v7113 = vunpack.c.l.b16 %v6908
    %v7114 = vunpack.c.l.b16 %v6909
    %v7115 = vunpack.c.l.b16 %v6910
    %v7116 = vunpack.c.l.b16 %v6911
    %v7117 = vunpack.c.l.b16 %v6912
    %v7118 = vunpack.c.l.b16 %v6913
    %v7119 = vunpack.c.l.b16 %v6914
    %v7120 = vunpack.c.l.b16 %v6915
    %v7121 = vunpack.c.l.b16 %v6916
    %v7122 = vunpack.c.l.b16 %v6917
    %v7123 = vunpack.c.l.b16 %v6918
    %v7124 = vunpack.c.l.b16 %v6919
    %v7125 = vunpack.c.l.b16 %v6920
    %v7126 = vunpack.c.l.b16 %v6921
    %v7127 = vunpack.c.l.b16 %v6922
    %v7128 = vunpack.c.l.b16 %v6923
    %v7129 = vunpack.c.l.b16 %v6924
    %v7130 = vunpack.c.l.b16 %v6925
    %v7131 = vunpack.c.l.b16 %v6926
    %v7132 = vunpack.c.l.b16 %v6927
    %v7133 = vunpack.c.l.b16 %v6928
    %v7134 = vunpack.c.l.b16 %v6929
    %v7135 = vunpack.c.l.b16 %v6930
    %v7136 = vunpack.c.l.b16 %v6931
    %v7137 = vunpack.c.l.b16 %v6932
    %v7138 = vunpack.c.l.b16 %v6933
    %v7139 = vunpack.c.l.b16 %v6934
    %v7140 = vunpack.c.l.b16 %v6935
    %v7141 = vunpack.c.l.b16 %v6936
    %v7142 = vunpack.c.l.b16 %v6937
    %v7143 = vunpack.c.l.b16 %v6938
    %v7144 = vunpack.c.l.b16 %v6939
    %v7145 = vunpack.c.l.b16 %v6940
    %v7146 = vunpack.c.l.b16 %v6941
    %v7147 = vunpack.c.l.b16 %v6942
    %v7148 = vunpack.c.l.b16 %v6943
    %v7149 = vunpack.c.l.b16 %v6944
    %v7150 = vunpack.c.l.b16 %v6945
    %v7151 = vunpack.c.l.b16 %v6946
    %v7152 = vunpack.c.l.b16 %v6947
    %v7153 = vunpack.c.l.b16 %v6948
    %v7154 = vunpack.c.l.b16 %v6949
    %v7155 = vunpack.c.l.b16 %v6950
    %v7156 = vunpack.c.l.b16 %v6951
    %v7157 = vunpack.c.l.b16 %v6952
    %v7158 = vunpack.c.l.b16 %v6953
    %v7159 = vunpack.c.l.b16 %v6954
    %v7160 = vunpack.c.l.b16 %v6955
    %v7161 = vunpack.c.l.b16 %v6956
    %v7162 = vunpack.c.l.b16 %v6957
    %v7163 = vunpack.c.l.b16 %v6958
    %v7164 = vunpack.c.l.b16 %v6959
    %v7165 = vunpack.c.l.b16 %v6960
    %v7166 = vunpack.c.l.b16 %v6961
    %v7167 = vunpack.c.l.b16 %v6962
    %v7168 = vunpack.c.l.b16 %v6963
    %v7169 = vunpack.c.l.b16 %v6964
    %v7170 = vunpack.c.l.b16 %v6965
    %v7171 = vunpack.c.l.b16 %v6966
    %v7172 = vunpack.c.l.b16 %v6967
    %v7173 = vunpack.c.l.b16 %v6968
    %v7174 = vunpack.c.l.b16 %v6969
    %v7175 = vunpack.c.l.b16 %v6970
    %v7176 = vunpack.c.l.b16 %v6971
    %v7177 = vunpack.c.l.b16 %v6972
    %v7178 = vunpack.c.l.b16 %v6973
    %v7179 = vunpack.c.l.b16 %v6974
    %v7180 = vunpack.c.l.b16 %v6975
    %v7181 = vunpack.c.l.b16 %v6976
    %v7182 = vunpack.c.l.b16 %v6977
    %v7183 = vunpack.c.l.b16 %v6978
    %v7184 = vunpack.c.l.b16 %v6979
    %v7185 = vunpack.c.l.b16 %v6980
    %v7186 = vunpack.c.l.b16 %v6981
    %v7187 = vunpack.c.l.b16 %v6982
    %v7188 = vunpack.c.l.b16 %v6983
    %v7189 = vunpack.c.l.b16 %v6984
    %v7190 = vunpack.c.l.b16 %v6985
    %v7191 = vunpack.c.l.b16 %v6986
    %v7192 = vunpack.c.l.b16 %v6987
    %v7193 = vunpack.c.l.b16 %v6988
    %v7194 = vpack.c.b16 %v7099, %v7098
    %v7195 = vpack.c.b16 %v7101, %v7100
    %v7196 = vpack.c.b16 %v7103, %v7102
    %v7197 = vpack.c.b16 %v7105, %v7104
    %v7198 = vpack.c.b16 %v7107, %v7106
    %v7199 = vpack.c.b16 %v7109, %v7108
    %v7200 = vpack.c.b16 %v7111, %v7110
    %v7201 = vpack.c.b16 %v7113, %v7112
    %v7202 = vpack.c.b16 %v7115, %v7114
    %v7203 = vpack.c.b16 %v7117, %v7116
    %v7204 = vpack.c.b16 %v7119, %v7118
    %v7205 = vpack.c.b16 %v7121, %v7120
    %v7206 = vpack.c.b16 %v7123, %v7122
    %v7207 = vpack.c.b16 %v7125, %v7124
    %v7208 = vpack.c.b16 %v7127, %v7126
    %v7209 = vpack.c.b16 %v7129, %v7128
    %v7210 = vpack.c.b16 %v7131, %v7130
    %v7211 = vpack.c.b16 %v7133, %v7132
    %v7212 = vpack.c.b16 %v7135, %v7134
    %v7213 = vpack.c.b16 %v7137, %v7136
    %v7214 = vpack.c.b16 %v7139, %v7138
    %v7215 = vpack.c.b16 %v7141, %v7140
    %v7216 = vpack.c.b16 %v7143, %v7142
    %v7217 = vpack.c.b16 %v7145, %v7144
    %v7218 = vpack.c.b16 %v7147, %v7146
    %v7219 = vpack.c.b16 %v7149, %v7148
    %v7220 = vpack.c.b16 %v7151, %v7150
    %v7221 = vpack.c.b16 %v7153, %v7152
    %v7222 = vpack.c.b16 %v7155, %v7154
    %v7223 = vpack.c.b16 %v7157, %v7156
    %v7224 = vpack.c.b16 %v7159, %v7158
    %v7225 = vpack.c.b16 %v7161, %v7160
    %v7226 = vpack.c.b16 %v7163, %v7162
    %v7227 = vpack.c.b16 %v7165, %v7164
    %v7228 = vpack.c.b16 %v7167, %v7166
    %v7229 = vpack.c.b16 %v7169, %v7168
    %v7230 = vpack.c.b16 %v7171, %v7170
    %v7231 = vpack.c.b16 %v7173, %v7172
    %v7232 = vpack.c.b16 %v7175, %v7174
    %v7233 = vpack.c.b16 %v7177, %v7176
    %v7234 = vpack.c.b16 %v7179, %v7178
    %v7235 = vpack.c.b16 %v7181, %v7180
    %v7236 = vpack.c.b16 %v7183, %v7182
    %v7237 = vpack.c.b16 %v7185, %v7184
    %v7238 = vpack.c.b16 %v7187, %v7186
    %v7239 = vpack.c.b16 %v7189, %v7188
    %v7240 = vpack.c.b16 %v7191, %v7190
    %v7241 = vpack.c.b16 %v7193, %v7192
    %7290 = vmatprep.subr.bf16.mxu0 0
    %7291 = vmatpush1.bf16.msra.mxu0 %v7194
    %7292 = vmatprep.subr.bf16.mxu0 0
    %7293 = vmatpush1.bf16.msra.mxu0 %v7195
    %7294 = vmatprep.subr.bf16.mxu0 0
    %7295 = vmatpush1.bf16.msra.mxu0 %v7196
    %7296 = vmatprep.subr.bf16.mxu0 0
    %7297 = vmatpush1.bf16.msra.mxu0 %v7197
    %7298 = vmatprep.subr.bf16.mxu0 0
    %7299 = vmatpush1.bf16.msra.mxu0 %v7198
    %7300 = vmatprep.subr.bf16.mxu0 0
    %7301 = vmatpush1.bf16.msra.mxu0 %v7199
    %7302 = vmatprep.subr.bf16.mxu0 0
    %7303 = vmatpush1.bf16.msra.mxu0 %v7200
    %7304 = vmatprep.subr.bf16.mxu0 0
    %7305 = vmatpush1.bf16.msra.mxu0 %v7201
    %7306 = vmatprep.subr.bf16.mxu0 0
    %7307 = vmatpush1.bf16.msra.mxu0 %v7202
    %7308 = vmatprep.subr.bf16.mxu0 0
    %7309 = vmatpush1.bf16.msra.mxu0 %v7203
    %7310 = vmatprep.subr.bf16.mxu0 0
    %7311 = vmatpush1.bf16.msra.mxu0 %v7204
    %7312 = vmatprep.subr.bf16.mxu0 0
    %7313 = vmatpush1.bf16.msra.mxu0 %v7205
    %7314 = vmatprep.subr.bf16.mxu0 0
    %7315 = vmatpush1.bf16.msra.mxu0 %v7206
    %7316 = vmatprep.subr.bf16.mxu0 0
    %7317 = vmatpush1.bf16.msra.mxu0 %v7207
    %7318 = vmatprep.subr.bf16.mxu0 0
    %7319 = vmatpush1.bf16.msra.mxu0 %v7208
    %7320 = vmatprep.subr.bf16.mxu0 0
    %7321 = vmatpush1.bf16.msra.mxu0 %v7209
    %7322 = vmatprep.mubr.bf16.mxu0 %v6990
    %7323 = vmatmul.mubr.bf16.gmra.mrb[0].mxu0 %v6989
    %v7324 = vpop.f32.mrb[0].mxu0
    %v7325 = vadd.f32 %v7000, %v7324
    %v7326 = vpop.f32.mrb[0].mxu0
    %v7327 = vpop.f32.mrb[0].mxu0
    %v7328 = vpop.f32.mrb[0].mxu0
    %7329 = vdwg.mxu0
    %7330 = vmatprep.subr.bf16.mxu0 0
    %7331 = vmatpush1.bf16.msra.mxu0 %v7210
    %7332 = vmatprep.subr.bf16.mxu0 0
    %7333 = vmatpush1.bf16.msra.mxu0 %v7211
    %7334 = vmatprep.subr.bf16.mxu0 0
    %7335 = vmatpush1.bf16.msra.mxu0 %v7212
    %7336 = vmatprep.subr.bf16.mxu0 0
    %7337 = vmatpush1.bf16.msra.mxu0 %v7213
    %7338 = vmatprep.subr.bf16.mxu0 0
    %7339 = vmatpush1.bf16.msra.mxu0 %v7214
    %7340 = vmatprep.subr.bf16.mxu0 0
    %7341 = vmatpush1.bf16.msra.mxu0 %v7215
    %7342 = vmatprep.subr.bf16.mxu0 0
    %7343 = vmatpush1.bf16.msra.mxu0 %v7216
    %7344 = vmatprep.subr.bf16.mxu0 0
    %7345 = vmatpush1.bf16.msra.mxu0 %v7217
    %7346 = vmatprep.subr.bf16.mxu0 0
    %7347 = vmatpush1.bf16.msra.mxu0 %v7218
    %7348 = vmatprep.subr.bf16.mxu0 0
    %7349 = vmatpush1.bf16.msra.mxu0 %v7219
    %7350 = vmatprep.subr.bf16.mxu0 0
    %7351 = vmatpush1.bf16.msra.mxu0 %v7220
    %7352 = vmatprep.subr.bf16.mxu0 0
    %7353 = vmatpush1.bf16.msra.mxu0 %v7221
    %7354 = vmatprep.subr.bf16.mxu0 0
    %7355 = vmatpush1.bf16.msra.mxu0 %v7222
    %7356 = vmatprep.subr.bf16.mxu0 0
    %7357 = vmatpush1.bf16.msra.mxu0 %v7223
    %7358 = vmatprep.subr.bf16.mxu0 0
    %7359 = vmatpush1.bf16.msra.mxu0 %v7224
    %7360 = vmatprep.subr.bf16.mxu0 0
    %7361 = vmatpush1.bf16.msra.mxu0 %v7225
    %7362 = vmatprep.mubr.bf16.mxu0 %v6992
    %7363 = vmatmul.mubr.bf16.gmra.mrb[0].mxu0 %v6991
    %v7364 = vpop.f32.mrb[0].mxu0
    %v7365 = vadd.f32 %v7325, %v7364
    %v7366 = vpop.f32.mrb[0].mxu0
    %v7367 = vpop.f32.mrb[0].mxu0
    %v7368 = vpop.f32.mrb[0].mxu0
    %7369 = vdwg.mxu0
    %7370 = vmatprep.subr.bf16.mxu0 0
    %7371 = vmatpush1.bf16.msra.mxu0 %v7226
    %7372 = vmatprep.subr.bf16.mxu0 0
    %7373 = vmatpush1.bf16.msra.mxu0 %v7227
    %7374 = vmatprep.subr.bf16.mxu0 0
    %7375 = vmatpush1.bf16.msra.mxu0 %v7228
    %7376 = vmatprep.subr.bf16.mxu0 0
    %7377 = vmatpush1.bf16.msra.mxu0 %v7229
    %7378 = vmatprep.subr.bf16.mxu0 0
    %7379 = vmatpush1.bf16.msra.mxu0 %v7230
    %7380 = vmatprep.subr.bf16.mxu0 0
    %7381 = vmatpush1.bf16.msra.mxu0 %v7231
    %7382 = vmatprep.subr.bf16.mxu0 0
    %7383 = vmatpush1.bf16.msra.mxu0 %v7232
    %7384 = vmatprep.subr.bf16.mxu0 0
    %7385 = vmatpush1.bf16.msra.mxu0 %v7233
    %7386 = vmatprep.subr.bf16.mxu0 0
    %7387 = vmatpush1.bf16.msra.mxu0 %v7234
    %7388 = vmatprep.subr.bf16.mxu0 0
    %7389 = vmatpush1.bf16.msra.mxu0 %v7235
    %7390 = vmatprep.subr.bf16.mxu0 0
    %7391 = vmatpush1.bf16.msra.mxu0 %v7236
    %7392 = vmatprep.subr.bf16.mxu0 0
    %7393 = vmatpush1.bf16.msra.mxu0 %v7237
    %7394 = vmatprep.subr.bf16.mxu0 0
    %7395 = vmatpush1.bf16.msra.mxu0 %v7238
    %7396 = vmatprep.subr.bf16.mxu0 0
    %7397 = vmatpush1.bf16.msra.mxu0 %v7239
    %7398 = vmatprep.subr.bf16.mxu0 0
    %7399 = vmatpush1.bf16.msra.mxu0 %v7240
    %7400 = vmatprep.subr.bf16.mxu0 0
    %7401 = vmatpush1.bf16.msra.mxu0 %v7241
    %7402 = vmatprep.mubr.bf16.mxu0 %v6994
    %7403 = vmatmul.mubr.bf16.gmra.mrb[0].mxu0 %v6993
    %v7404 = vpop.f32.mrb[0].mxu0
    %v7405 = vadd.f32 %v7365, %v7404
    %v7406 = vpop.f32.mrb[0].mxu0
    %v7407 = vpop.f32.mrb[0].mxu0
    %v7408 = vpop.f32.mrb[0].mxu0
    %7409 = vdwg.mxu0
    %v7410 = vmax.f32 %v7405, 0.0
    %vm7411 = vcmask 697344
    %7412 = vst.msk [vmem:[#allocation32] sm:$0x3] %vm7411, %v7410
    // Predicated region
    $region170: #{vae_forward.1} parent=1 // pred_check
      _
    $region171: #{vae_forward.1} parent=1 // pred_check_branch
      %7414 = sbr.rel (0) target = $region173
    $region172: #{vae_forward.1} parent=1 // pred_region
      %s7416 = ssub.s32 32, 32
      %7417 = vsyncadd [#allocation4], %s7416
      %s7419 = sshll.u32 [#allocation32], 4
      %s7420 = int_to_ptr.vmem [resolvable:$true] %s7419
      %7422 = dma.vmem_to_hbm [thread:$0]  %s7420, 32, %s23, [#allocation4]
    $region173: #{vae_forward.1} parent=1 // pred_fallthru
      _
    // Predicated region
    $region174: #{vae_forward.1} parent=1 // pred_check
      _
    $region175: #{vae_forward.1} parent=1 // pred_check_branch
      %7424 = sbr.rel (0) target = $region177
    $region176: #{vae_forward.1} parent=1 // pred_region
      %7425 = dma.done [#allocation4], 32
    $region177: #{vae_forward.1} parent=1 // pred_fallthru
      _
    %7426 = vsyncpa [#allocation3], 1
    %7427 = vsyncpa [#allocation6], 1
    %7428 = vsyncpa [#allocation9], 1
    %7429 = vsyncpa [#allocation12], 1
    %7430 = vsyncpa [#allocation15], 1
    %7431 = vsyncpa [#allocation18], 1
    %7432 = vsyncpa [#allocation21], 1
    %7433 = vsyncpa [#allocation24], 1
    %7434 = vsyncpa [#allocation27], 1
    %7435 = vsyncpa [#allocation30], 1
    %7436 = vsyncpa [#allocation4], 1

</llo_original>
